<compile_context>
chip_gen: v7x
topology: tpu7x:2x2x1
jax: 0.10.0
libtpu: 0.0.40
codegen_flags: <defaults>
</compile_context>

<pallas_src>
import functools

import jax
import jax.numpy as jnp
from jax.experimental import pallas as pl
from jax.experimental.pallas import tpu as pltpu


# ------------------------- static tiling helpers -------------------------

def _round_up(x, m):
    return (x + m - 1) // m * m


def _pad_k(K):
    """Padded contraction size: multiple of 128; bumped to a multiple of 512 when no
    tile in [512, 1024] divides it (so a lane-aligned K tile always exists)."""
    kp = _round_up(K, 128)
    if kp > 1024 and all(kp % tk for tk in (1024, 896, 768, 640, 512)):
        kp = _round_up(kp, 512)
    return kp


def _pick_tk(kp):
    """K tile for an already-padded contraction size kp (= _pad_k(K))."""
    if kp <= 1024:
        return kp
    for tk in (1024, 896, 768, 640, 512):
        if kp % tk == 0:
            return tk
    raise ValueError(f"unsupported padded K: {kp}")


def _pick_tn(N):
    for tn in (512, 256, 128):
        if N % tn == 0:
            return tn
    return N


_COMPILER_PARAMS_MNK = pltpu.CompilerParams(
    dimension_semantics=("parallel", "parallel", "arbitrary"),
    vmem_limit_bytes=32 * 1024 * 1024)


# ------------------------- Pallas kernels -------------------------

def _matmul_bias_act_kernel(a_ref, b_ref, bias_ref, o_ref, acc_ref, *, relu):
    """Tiled matmul with f32 accumulator; bias (+ optional ReLU) epilogue."""
    k = pl.program_id(2)

    @pl.when(k == 0)
    def _():
        acc_ref[...] = jnp.zeros_like(acc_ref)

    acc_ref[...] += jnp.dot(a_ref[...], b_ref[...],
                            preferred_element_type=jnp.float32)

    @pl.when(k == pl.num_programs(2) - 1)
    def _():
        y = acc_ref[...] + bias_ref[...]
        if relu:
            y = jnp.maximum(y, 0.0)
        o_ref[...] = y.astype(o_ref.dtype)


def _conv_relu_pool_kernel(a_ref, b_ref, bias_ref, o_ref, acc_ref):
    """Fused im2col-conv matmul + bias + ReLU + 2x2 maxpool.

    a_ref:   (4, tm, tk) bf16 patches; leading dim = 2x2 pool-window position.
    acc_ref: (4, tm, tn) f32 accumulator (one slab per window position).
    """
    k = pl.program_id(2)

    @pl.when(k == 0)
    def _():
        acc_ref[...] = jnp.zeros_like(acc_ref)

    b = b_ref[...]
    for w in range(4):
        acc_ref[w] += jnp.dot(a_ref[w], b, preferred_element_type=jnp.float32)

    @pl.when(k == pl.num_programs(2) - 1)
    def _():
        # max over the 4 window positions; the shared bias add and the monotonic
        # ReLU commute with the max, so pool first (cheaper).
        y = jnp.maximum(jnp.maximum(acc_ref[0], acc_ref[1]),
                        jnp.maximum(acc_ref[2], acc_ref[3]))
        y = jnp.maximum(y + bias_ref[...], 0.0)
        o_ref[...] = y.astype(o_ref.dtype)


def _tail_kernel(x_ref, w2_ref, b2_ref, wc_ref, bc_ref, wp_ref, bp_ref,
                 p_ref, z_ref, f_ref):
    """Fused fc2(+ReLU) + cls_head_src + pro_head + F.normalize (all tiny)."""
    out4 = jnp.dot(x_ref[...], w2_ref[...], preferred_element_type=jnp.float32)
    out4 = jnp.maximum(out4 + b2_ref[...], 0.0)                       # (Mp, 2)
    f_ref[...] = out4

    p_ref[...] = jnp.dot(out4, wc_ref[...],
                         preferred_element_type=jnp.float32) + bc_ref[...]

    z = jnp.dot(out4, wp_ref[...],
                preferred_element_type=jnp.float32) + bp_ref[...]      # (Mp, 128)
    ss = jnp.sum(z * z, axis=1, keepdims=True)
    # F.normalize(p=2, dim=1, eps=1e-12): z / max(||z||, eps) == z * rsqrt(max(ss, eps^2))
    z_ref[...] = z * jax.lax.rsqrt(jnp.maximum(ss, 1e-24))


# ------------------------- kernel wrappers -------------------------

def matmul_bias_act(a, b, bias2d, *, relu):
    """a: (M, K); b: (Kp, N) bf16 with K pre-padded; bias2d: (1, N) f32 -> (M, N) f32."""
    M, K = a.shape
    Kp, N = b.shape
    tm = min(256, _round_up(M, 8))
    Mp = _round_up(M, tm)
    tn = _pick_tn(N)
    tk = _pick_tk(Kp)
    assert Kp % tk == 0 and N % tn == 0 and Kp >= K

    a = jnp.pad(a, ((0, Mp - M), (0, Kp - K))).astype(jnp.bfloat16)
    grid = (Mp // tm, N // tn, Kp // tk)

    out = pl.pallas_call(
        functools.partial(_matmul_bias_act_kernel, relu=relu),
        out_shape=jax.ShapeDtypeStruct((Mp, N), jnp.float32),
        grid=grid,
        in_specs=[
            pl.BlockSpec((tm, tk), lambda m, n, k: (m, k)),
            pl.BlockSpec((tk, tn), lambda m, n, k: (k, n)),
            pl.BlockSpec((1, tn), lambda m, n, k: (0, n)),
        ],
        out_specs=pl.BlockSpec((tm, tn), lambda m, n, k: (m, n)),
        scratch_shapes=[pltpu.VMEM((tm, tn), jnp.float32)],
        compiler_params=_COMPILER_PARAMS_MNK,
    )(a, b, bias2d.astype(jnp.float32))
    return out[:M]


def conv_relu_pool(x_nhwc, w_flat, bias2d, *, kh, kw):
    """Fused Conv2d(stride=1, pad=0) + bias + ReLU + MaxPool2d(2).

    x_nhwc: (N, H, W, C) bf16.
    w_flat: (Kp, OC) bf16, rows ordered (ki, kj, c), zero-padded from K = kh*kw*C.
    bias2d: (1, OC) f32.
    Returns (N, OH//2, OW//2, OC) bf16.
    """
    Nb, H, W, C = x_nhwc.shape
    OH, OW = H - kh + 1, W - kw + 1
    assert OH % 2 == 0 and OW % 2 == 0
    POH, POW = OH // 2, OW // 2
    K = kh * kw * C
    Kp, OC = w_flat.shape

    # im2col patches grouped by 2x2 pool-window position on a leading dim of 4.
    # TODO(synk): build these patches in VMEM inside the kernel (shifted-slice
    # accumulation) to avoid materializing the im2col blow-up in HBM.
    cols = [x_nhwc[:, ki:ki + OH, kj:kj + OW, :]
            for ki in range(kh) for kj in range(kw)]
    patches = jnp.concatenate(cols, axis=-1)                  # (N, OH, OW, K)
    M = Nb * POH * POW
    wins = [patches[:, di::2, dj::2, :][:, :POH, :POW, :].reshape(M, K)
            for di in (0, 1) for dj in (0, 1)]
    a = jnp.stack(wins, axis=0)                               # (4, M, K) bf16

    tm = min(256, _round_up(M, 8))
    Mp = _round_up(M, tm)
    tn = OC
    tk = _pick_tk(Kp)
    assert Kp % tk == 0 and Kp >= K

    a = jnp.pad(a, ((0, 0), (0, Mp - M), (0, Kp - K)))
    grid = (Mp // tm, OC // tn, Kp // tk)

    out = pl.pallas_call(
        _conv_relu_pool_kernel,
        out_shape=jax.ShapeDtypeStruct((Mp, OC), jnp.bfloat16),
        grid=grid,
        in_specs=[
            pl.BlockSpec((4, tm, tk), lambda m, n, k: (0, m, k)),
            pl.BlockSpec((tk, tn), lambda m, n, k: (k, n)),
            pl.BlockSpec((1, tn), lambda m, n, k: (0, n)),
        ],
        out_specs=pl.BlockSpec((tm, tn), lambda m, n, k: (m, n)),
        scratch_shapes=[pltpu.VMEM((4, tm, tn), jnp.float32)],
        compiler_params=_COMPILER_PARAMS_MNK,
    )(a, w_flat, bias2d.astype(jnp.float32))
    return out[:M].reshape(Nb, POH, POW, OC)


def tail_heads(out3, kp):
    """Fused fc2(+ReLU) + cls_head_src + pro_head + L2 normalize. out3: (M, 1024) f32."""
    M, D = out3.shape
    Mp = _round_up(M, 8)
    x = jnp.pad(out3, ((0, Mp - M), (0, 0)))

    def full(shape):
        return pl.BlockSpec(shape, lambda i: (0,) * len(shape))

    p, z, f = pl.pallas_call(
        _tail_kernel,
        out_shape=(jax.ShapeDtypeStruct((Mp, 10), jnp.float32),
                   jax.ShapeDtypeStruct((Mp, 128), jnp.float32),
                   jax.ShapeDtypeStruct((Mp, 2), jnp.float32)),
        grid=(1,),
        in_specs=[full((Mp, D)),
                  full((D, 2)), full((1, 2)),
                  full((2, 10)), full((1, 10)),
                  full((2, 128)), full((1, 128))],
        out_specs=(full((Mp, 10)), full((Mp, 128)), full((Mp, 2))),
        compiler_params=pltpu.CompilerParams(
            dimension_semantics=("arbitrary",),
            vmem_limit_bytes=32 * 1024 * 1024),
    )(x, kp['fc2_w'], kp['fc2_b'], kp['cls_w'], kp['cls_b'],
      kp['pro_w'], kp['pro_b'])
    return p[:M], z[:M], f[:M]


# ------------------------- parameters -------------------------

def init_params(key):
    """PyTorch-layout parameters with nn.Conv2d / nn.Linear default init."""
    ks = jax.random.split(key, 14)

    def lin(kw_, kb_, out_dim, in_dim):
        s = 1.0 / jnp.sqrt(in_dim)
        return (jax.random.uniform(kw_, (out_dim, in_dim), jnp.float32, -s, s),
                jax.random.uniform(kb_, (out_dim,), jnp.float32, -s, s))

    def conv(kw_, kb_, oc, ic, kk):
        s = 1.0 / jnp.sqrt(ic * kk * kk)
        return (jax.random.uniform(kw_, (oc, ic, kk, kk), jnp.float32, -s, s),
                jax.random.uniform(kb_, (oc,), jnp.float32, -s, s))

    p = {}
    p['conv1_w'], p['conv1_b'] = conv(ks[0], ks[1], 64, 3, 5)
    p['conv2_w'], p['conv2_b'] = conv(ks[2], ks[3], 128, 64, 5)
    p['fc1_w'], p['fc1_b'] = lin(ks[4], ks[5], 1024, 128 * 5 * 5)
    p['fc2_w'], p['fc2_b'] = lin(ks[6], ks[7], 2, 1024)
    p['cls_src_w'], p['cls_src_b'] = lin(ks[8], ks[9], 10, 2)
    p['cls_tgt_w'], p['cls_tgt_b'] = lin(ks[10], ks[11], 10, 2)  # unused by forward
    p['pro_w'], p['pro_b'] = lin(ks[12], ks[13], 128, 2)
    return p


def prepare_params(p):
    """One-time layout prep: flatten / permute / zero-pad / cast weights for kernels."""
    kp = {}
    # conv weights (OC, C, kh, kw) -> (Kp, OC) bf16, rows ordered (ki, kj, c).
    for name in ('conv1', 'conv2'):
        w = p[name + '_w']
        OC, C, kh, kw = w.shape
        K = kh * kw * C
        wf = jnp.transpose(w, (2, 3, 1, 0)).reshape(K, OC)
        Kp = _pad_k(K)
        kp[name + '_wf'] = jnp.pad(wf, ((0, Kp - K), (0, 0))).astype(jnp.bfloat16)
        kp[name + '_b'] = p[name + '_b'].reshape(1, OC).astype(jnp.float32)

    # fc1: (1024, 3200) with columns in PyTorch NCHW-flatten order (c, h, w)
    #   -> (3200, 1024) with rows in NHWC-flatten order (h, w, c), so the forward can
    #      flatten the NHWC conv output directly (no per-forward transpose of 13 MB).
    w1 = p['fc1_w'].reshape(1024, 128, 5, 5)
    w1 = jnp.transpose(w1, (2, 3, 1, 0)).reshape(5 * 5 * 128, 1024)
    Kp = _pad_k(5 * 5 * 128)
    kp['fc1_w'] = jnp.pad(w1, ((0, Kp - 3200), (0, 0))).astype(jnp.bfloat16)
    kp['fc1_b'] = p['fc1_b'].reshape(1, 1024).astype(jnp.float32)

    # tiny tail weights stay f32, pre-transposed to (in, out)
    kp['fc2_w'] = p['fc2_w'].T.astype(jnp.float32)
    kp['fc2_b'] = p['fc2_b'].reshape(1, 2).astype(jnp.float32)
    kp['cls_w'] = p['cls_src_w'].T.astype(jnp.float32)
    kp['cls_b'] = p['cls_src_b'].reshape(1, 10).astype(jnp.float32)
    kp['pro_w'] = p['pro_w'].T.astype(jnp.float32)
    kp['pro_b'] = p['pro_b'].reshape(1, 128).astype(jnp.float32)
    return kp


# ------------------------- forward -------------------------

@functools.partial(jax.jit, static_argnames=('mode',))
def convnetvis_forward(x_nchw, kparams, mode='test'):
    """Forward pass of ConvNetVis. x_nchw: (N, 3, 32, 32) f32 (PyTorch NCHW layout)."""
    Nb = x_nchw.shape[0]
    x = jnp.transpose(x_nchw, (0, 2, 3, 1)).astype(jnp.bfloat16)   # NHWC, bf16 MXU feed

    # conv1 + ReLU + 2x2 maxpool : (N,32,32,3) -> (N,14,14,64)
    out1 = conv_relu_pool(x, kparams['conv1_wf'], kparams['conv1_b'], kh=5, kw=5)
    # conv2 + ReLU + 2x2 maxpool : (N,14,14,64) -> (N,5,5,128)
    out2 = conv_relu_pool(out1, kparams['conv2_wf'], kparams['conv2_b'], kh=5, kw=5)

    # flatten in NHWC order; fc1_w rows were pre-permuted to match PyTorch's NCHW view()
    flat = out2.reshape(Nb, 5 * 5 * 128)
    out3 = matmul_bias_act(flat, kparams['fc1_w'], kparams['fc1_b'], relu=True)  # (N,1024)

    p, z, out4 = tail_heads(out3, kparams)
    if mode == 'test':
        return p
    elif mode == 'train':
        return p, z
    elif mode == 'p_f':
        return p, out4
    else:
        raise ValueError(mode)


# ------------------------- main -------------------------

if __name__ == "__main__":
    key = jax.random.PRNGKey(0)
    kx, kparam = jax.random.split(key)

    # fc1 expects 128*5*5 features => input spatial size is pinned to 32x32, imdim=3.
    x = jax.random.normal(kx, (2, 3, 32, 32), dtype=jnp.float32)
    params = init_params(kparam)
    kparams = prepare_params(params)   # one-time weight layout prep (no per-forward .T)

    p = convnetvis_forward(x, kparams, mode='test')
    p = jax.block_until_ready(p)
    assert p.shape == (2, 10) and p.dtype == jnp.float32

    p_tr, z_tr = convnetvis_forward(x, kparams, mode='train')
    jax.block_until_ready((p_tr, z_tr))
    assert p_tr.shape == (2, 10) and z_tr.shape == (2, 128)
    nrm = jnp.linalg.norm(z_tr, axis=1)
    assert bool(jnp.all(jnp.abs(nrm - 1.0) < 1e-2))   # F.normalize rows are unit norm

    p_pf, f_pf = convnetvis_forward(x, kparams, mode='p_f')
    jax.block_until_ready((p_pf, f_pf))
    assert f_pf.shape == (2, 2)

    print("KERNEL_OK")
</pallas_src>

<mosaic_0001>
module attributes {stable_mosaic.version = 11 : i64} {
  func.func @_conv_relu_pool_kernel(%arg0: i32, %arg1: i32, %arg2: i32, %arg3: memref<4x256x128xbf16, #tpu.memory_space<vmem>>, %arg4: memref<128x64xbf16, #tpu.memory_space<vmem>>, %arg5: memref<1x64xf32, #tpu.memory_space<vmem>>, %arg6: memref<256x64xbf16, #tpu.memory_space<vmem>>, %arg7: memref<4x256x64xf32, #tpu.memory_space<vmem>>) attributes {dimension_semantics = [#tpu.dimension_semantics<parallel>, #tpu.dimension_semantics<parallel>, #tpu.dimension_semantics<arbitrary>], iteration_bounds = array<i64: 2, 1, 1>, scalar_prefetch = 0 : i64, scratch_operands = 1 : i64, tpu.core_type = #tpu.core_type<tc>, window_params = [{transform_indices = @transform_0, window_bounds = array<i64: 4, 256, 128>}, {transform_indices = @transform_1, window_bounds = array<i64: 128, 64>}, {transform_indices = @transform_2, window_bounds = array<i64: 1, 64>}, {transform_indices = @transform_3, window_bounds = array<i64: 256, 64>}]} {
    %c0_i32 = arith.constant 0 : i32
    %0 = arith.cmpi eq, %arg2, %c0_i32 : i32
    %1 = arith.extui %0 : i1 to i32
    %c0_i32_0 = arith.constant 0 : i32
    %2 = arith.cmpi ne, %1, %c0_i32_0 : i32
    scf.if %2 {
      %cst_40 = arith.constant 0.000000e+00 : f32
      %43 = vector.broadcast %cst_40 : f32 to vector<4x256x64xf32>
      %c0_41 = arith.constant 0 : index
      %c0_42 = arith.constant 0 : index
      %c0_43 = arith.constant 0 : index
      %44 = vector.load %arg7[%c0_41, %c0_42, %c0_43] : memref<4x256x64xf32, #tpu.memory_space<vmem>>, vector<4x256x64xf32>
      tpu.vector_store %arg7[%c0_41, %c0_42, %c0_43], %43 {strides = array<i32>} : memref<4x256x64xf32, #tpu.memory_space<vmem>>, vector<4x256x64xf32>,
    } else {
    }
    %c0 = arith.constant 0 : index
    %c0_1 = arith.constant 0 : index
    %3 = vector.load %arg4[%c0, %c0_1] : memref<128x64xbf16, #tpu.memory_space<vmem>>, vector<128x64xbf16>
    %c0_2 = arith.constant 0 : index
    %c0_3 = arith.constant 0 : index
    %c0_4 = arith.constant 0 : index
    %4 = vector.load %arg7[%c0_2, %c0_3, %c0_4] : memref<4x256x64xf32, #tpu.memory_space<vmem>>, vector<1x256x64xf32>
    %5 = vector.shape_cast %4 : vector<1x256x64xf32> to vector<256x64xf32>
    %c0_5 = arith.constant 0 : index
    %c0_6 = arith.constant 0 : index
    %c0_7 = arith.constant 0 : index
    %6 = vector.load %arg3[%c0_5, %c0_6, %c0_7] : memref<4x256x128xbf16, #tpu.memory_space<vmem>>, vector<1x256x128xbf16>
    %7 = vector.shape_cast %6 : vector<1x256x128xbf16> to vector<256x128xbf16>
    %cst = arith.constant dense<0.000000e+00> : vector<256x64xf32>
    %8 = tpu.matmul %7, %3, %cst {dimension_numbers = #tpu.dot_dimension_numbers<[1], [0], [0], [1], [0, 0, 1, 1], [], []>} : vector<256x128xbf16>, vector<128x64xbf16>, vector<256x64xf32> -> vector<256x64xf32>
    %9 = arith.addf %5, %8 : vector<256x64xf32>
    %c0_8 = arith.constant 0 : index
    %c0_9 = arith.constant 0 : index
    %c0_10 = arith.constant 0 : index
    %10 = vector.load %arg7[%c0_8, %c0_9, %c0_10] : memref<4x256x64xf32, #tpu.memory_space<vmem>>, vector<1x256x64xf32>
    %11 = vector.shape_cast %10 : vector<1x256x64xf32> to vector<256x64xf32>
    %12 = vector.shape_cast %9 : vector<256x64xf32> to vector<1x256x64xf32>
    tpu.vector_store %arg7[%c0_8, %c0_9, %c0_10], %12 {strides = array<i32>} : memref<4x256x64xf32, #tpu.memory_space<vmem>>, vector<1x256x64xf32>,
    %c1 = arith.constant 1 : index
    %c0_11 = arith.constant 0 : index
    %c0_12 = arith.constant 0 : index
    %13 = vector.load %arg7[%c1, %c0_11, %c0_12] : memref<4x256x64xf32, #tpu.memory_space<vmem>>, vector<1x256x64xf32>
    %14 = vector.shape_cast %13 : vector<1x256x64xf32> to vector<256x64xf32>
    %c1_13 = arith.constant 1 : index
    %c0_14 = arith.constant 0 : index
    %c0_15 = arith.constant 0 : index
    %15 = vector.load %arg3[%c1_13, %c0_14, %c0_15] : memref<4x256x128xbf16, #tpu.memory_space<vmem>>, vector<1x256x128xbf16>
    %16 = vector.shape_cast %15 : vector<1x256x128xbf16> to vector<256x128xbf16>
    %cst_16 = arith.constant dense<0.000000e+00> : vector<256x64xf32>
    %17 = tpu.matmul %16, %3, %cst_16 {dimension_numbers = #tpu.dot_dimension_numbers<[1], [0], [0], [1], [0, 0, 1, 1], [], []>} : vector<256x128xbf16>, vector<128x64xbf16>, vector<256x64xf32> -> vector<256x64xf32>
    %18 = arith.addf %14, %17 : vector<256x64xf32>
    %c1_17 = arith.constant 1 : index
    %c0_18 = arith.constant 0 : index
    %c0_19 = arith.constant 0 : index
    %19 = vector.load %arg7[%c1_17, %c0_18, %c0_19] : memref<4x256x64xf32, #tpu.memory_space<vmem>>, vector<1x256x64xf32>
    %20 = vector.shape_cast %19 : vector<1x256x64xf32> to vector<256x64xf32>
    %21 = vector.shape_cast %18 : vector<256x64xf32> to vector<1x256x64xf32>
    tpu.vector_store %arg7[%c1_17, %c0_18, %c0_19], %21 {strides = array<i32>} : memref<4x256x64xf32, #tpu.memory_space<vmem>>, vector<1x256x64xf32>,
    %c2 = arith.constant 2 : index
    %c0_20 = arith.constant 0 : index
    %c0_21 = arith.constant 0 : index
    %22 = vector.load %arg7[%c2, %c0_20, %c0_21] : memref<4x256x64xf32, #tpu.memory_space<vmem>>, vector<1x256x64xf32>
    %23 = vector.shape_cast %22 : vector<1x256x64xf32> to vector<256x64xf32>
    %c2_22 = arith.constant 2 : index
    %c0_23 = arith.constant 0 : index
    %c0_24 = arith.constant 0 : index
    %24 = vector.load %arg3[%c2_22, %c0_23, %c0_24] : memref<4x256x128xbf16, #tpu.memory_space<vmem>>, vector<1x256x128xbf16>
    %25 = vector.shape_cast %24 : vector<1x256x128xbf16> to vector<256x128xbf16>
    %cst_25 = arith.constant dense<0.000000e+00> : vector<256x64xf32>
    %26 = tpu.matmul %25, %3, %cst_25 {dimension_numbers = #tpu.dot_dimension_numbers<[1], [0], [0], [1], [0, 0, 1, 1], [], []>} : vector<256x128xbf16>, vector<128x64xbf16>, vector<256x64xf32> -> vector<256x64xf32>
    %27 = arith.addf %23, %26 : vector<256x64xf32>
    %c2_26 = arith.constant 2 : index
    %c0_27 = arith.constant 0 : index
    %c0_28 = arith.constant 0 : index
    %28 = vector.load %arg7[%c2_26, %c0_27, %c0_28] : memref<4x256x64xf32, #tpu.memory_space<vmem>>, vector<1x256x64xf32>
    %29 = vector.shape_cast %28 : vector<1x256x64xf32> to vector<256x64xf32>
    %30 = vector.shape_cast %27 : vector<256x64xf32> to vector<1x256x64xf32>
    tpu.vector_store %arg7[%c2_26, %c0_27, %c0_28], %30 {strides = array<i32>} : memref<4x256x64xf32, #tpu.memory_space<vmem>>, vector<1x256x64xf32>,
    %c3 = arith.constant 3 : index
    %c0_29 = arith.constant 0 : index
    %c0_30 = arith.constant 0 : index
    %31 = vector.load %arg7[%c3, %c0_29, %c0_30] : memref<4x256x64xf32, #tpu.memory_space<vmem>>, vector<1x256x64xf32>
    %32 = vector.shape_cast %31 : vector<1x256x64xf32> to vector<256x64xf32>
    %c3_31 = arith.constant 3 : index
    %c0_32 = arith.constant 0 : index
    %c0_33 = arith.constant 0 : index
    %33 = vector.load %arg3[%c3_31, %c0_32, %c0_33] : memref<4x256x128xbf16, #tpu.memory_space<vmem>>, vector<1x256x128xbf16>
    %34 = vector.shape_cast %33 : vector<1x256x128xbf16> to vector<256x128xbf16>
    %cst_34 = arith.constant dense<0.000000e+00> : vector<256x64xf32>
    %35 = tpu.matmul %34, %3, %cst_34 {dimension_numbers = #tpu.dot_dimension_numbers<[1], [0], [0], [1], [0, 0, 1, 1], [], []>} : vector<256x128xbf16>, vector<128x64xbf16>, vector<256x64xf32> -> vector<256x64xf32>
    %36 = arith.addf %32, %35 : vector<256x64xf32>
    %c3_35 = arith.constant 3 : index
    %c0_36 = arith.constant 0 : index
    %c0_37 = arith.constant 0 : index
    %37 = vector.load %arg7[%c3_35, %c0_36, %c0_37] : memref<4x256x64xf32, #tpu.memory_space<vmem>>, vector<1x256x64xf32>
    %38 = vector.shape_cast %37 : vector<1x256x64xf32> to vector<256x64xf32>
    %39 = vector.shape_cast %36 : vector<256x64xf32> to vector<1x256x64xf32>
    tpu.vector_store %arg7[%c3_35, %c0_36, %c0_37], %39 {strides = array<i32>} : memref<4x256x64xf32, #tpu.memory_space<vmem>>, vector<1x256x64xf32>,
    %c0_i32_38 = arith.constant 0 : i32
    %40 = arith.cmpi eq, %arg2, %c0_i32_38 : i32
    %41 = arith.extui %40 : i1 to i32
    %c0_i32_39 = arith.constant 0 : i32
    %42 = arith.cmpi ne, %41, %c0_i32_39 : i32
    scf.if %42 {
      %c0_40 = arith.constant 0 : index
      %c0_41 = arith.constant 0 : index
      %c0_42 = arith.constant 0 : index
      %43 = vector.load %arg7[%c0_40, %c0_41, %c0_42] : memref<4x256x64xf32, #tpu.memory_space<vmem>>, vector<1x256x64xf32>
      %44 = vector.shape_cast %43 : vector<1x256x64xf32> to vector<256x64xf32>
      %c1_43 = arith.constant 1 : index
      %c0_44 = arith.constant 0 : index
      %c0_45 = arith.constant 0 : index
      %45 = vector.load %arg7[%c1_43, %c0_44, %c0_45] : memref<4x256x64xf32, #tpu.memory_space<vmem>>, vector<1x256x64xf32>
      %46 = vector.shape_cast %45 : vector<1x256x64xf32> to vector<256x64xf32>
      %47 = arith.maximumf %44, %46 : vector<256x64xf32>
      %c2_46 = arith.constant 2 : index
      %c0_47 = arith.constant 0 : index
      %c0_48 = arith.constant 0 : index
      %48 = vector.load %arg7[%c2_46, %c0_47, %c0_48] : memref<4x256x64xf32, #tpu.memory_space<vmem>>, vector<1x256x64xf32>
      %49 = vector.shape_cast %48 : vector<1x256x64xf32> to vector<256x64xf32>
      %c3_49 = arith.constant 3 : index
      %c0_50 = arith.constant 0 : index
      %c0_51 = arith.constant 0 : index
      %50 = vector.load %arg7[%c3_49, %c0_50, %c0_51] : memref<4x256x64xf32, #tpu.memory_space<vmem>>, vector<1x256x64xf32>
      %51 = vector.shape_cast %50 : vector<1x256x64xf32> to vector<256x64xf32>
      %52 = arith.maximumf %49, %51 : vector<256x64xf32>
      %53 = arith.maximumf %47, %52 : vector<256x64xf32>
      %c0_52 = arith.constant 0 : index
      %c0_53 = arith.constant 0 : index
      %54 = vector.load %arg5[%c0_52, %c0_53] : memref<1x64xf32, #tpu.memory_space<vmem>>, vector<1x64xf32>
      %55 = vector.broadcast %54 : vector<1x64xf32> to vector<256x64xf32>
      %56 = arith.addf %53, %55 : vector<256x64xf32>
      %cst_54 = arith.constant 0.000000e+00 : f32
      %57 = vector.broadcast %cst_54 : f32 to vector<256x64xf32>
      %58 = arith.maximumf %56, %57 : vector<256x64xf32>
      %59 = arith.truncf %58 : vector<256x64xf32> to vector<256x64xbf16>
      %c0_55 = arith.constant 0 : index
      %c0_56 = arith.constant 0 : index
      %60 = vector.load %arg6[%c0_55, %c0_56] : memref<256x64xbf16, #tpu.memory_space<vmem>>, vector<256x64xbf16>
      tpu.vector_store %arg6[%c0_55, %c0_56], %59 {strides = array<i32>} : memref<256x64xbf16, #tpu.memory_space<vmem>>, vector<256x64xbf16>,
    } else {
    }
    return
  }
  func.func @transform_0(%arg0: i32, %arg1: i32, %arg2: i32) -> (i32, i32, i32) {
    %c0_i32 = arith.constant 0 : i32
    %c0_i32_0 = arith.constant 0 : i32
    return %c0_i32, %arg0, %arg2 : i32, i32, i32
  }
  func.func @transform_1(%arg0: i32, %arg1: i32, %arg2: i32) -> (i32, i32) {
    %c0_i32 = arith.constant 0 : i32
    return %arg2, %arg1 : i32, i32
  }
  func.func @transform_2(%arg0: i32, %arg1: i32, %arg2: i32) -> (i32, i32) {
    %c0_i32 = arith.constant 0 : i32
    %c0_i32_0 = arith.constant 0 : i32
    return %c0_i32, %arg1 : i32, i32
  }
  func.func @transform_3(%arg0: i32, %arg1: i32, %arg2: i32) -> (i32, i32) {
    %c0_i32 = arith.constant 0 : i32
    return %arg0, %arg1 : i32, i32
  }
}

module attributes {stable_mosaic.version = 11 : i64} {
  func.func @_conv_relu_pool_kernel(%arg0: i32, %arg1: i32, %arg2: i32, %arg3: memref<4x56x1024xbf16, #tpu.memory_space<vmem>>, %arg4: memref<1024x128xbf16, #tpu.memory_space<vmem>>, %arg5: memref<1x128xf32, #tpu.memory_space<vmem>>, %arg6: memref<56x128xbf16, #tpu.memory_space<vmem>>, %arg7: memref<4x56x128xf32, #tpu.memory_space<vmem>>) attributes {dimension_semantics = [#tpu.dimension_semantics<parallel>, #tpu.dimension_semantics<parallel>, #tpu.dimension_semantics<arbitrary>], iteration_bounds = array<i64: 1, 1, 2>, scalar_prefetch = 0 : i64, scratch_operands = 1 : i64, tpu.core_type = #tpu.core_type<tc>, window_params = [{transform_indices = @transform_0, window_bounds = array<i64: 4, 56, 1024>}, {transform_indices = @transform_1, window_bounds = array<i64: 1024, 128>}, {transform_indices = @transform_2, window_bounds = array<i64: 1, 128>}, {transform_indices = @transform_3, window_bounds = array<i64: 56, 128>}]} {
    %c0_i32 = arith.constant 0 : i32
    %0 = arith.cmpi eq, %arg2, %c0_i32 : i32
    %1 = arith.extui %0 : i1 to i32
    %c0_i32_0 = arith.constant 0 : i32
    %2 = arith.cmpi ne, %1, %c0_i32_0 : i32
    scf.if %2 {
      %cst_39 = arith.constant 0.000000e+00 : f32
      %43 = vector.broadcast %cst_39 : f32 to vector<4x56x128xf32>
      %c0_40 = arith.constant 0 : index
      %c0_41 = arith.constant 0 : index
      %c0_42 = arith.constant 0 : index
      %44 = vector.load %arg7[%c0_40, %c0_41, %c0_42] : memref<4x56x128xf32, #tpu.memory_space<vmem>>, vector<4x56x128xf32>
      tpu.vector_store %arg7[%c0_40, %c0_41, %c0_42], %43 {strides = array<i32>} : memref<4x56x128xf32, #tpu.memory_space<vmem>>, vector<4x56x128xf32>,
    } else {
    }
    %c0 = arith.constant 0 : index
    %c0_1 = arith.constant 0 : index
    %3 = vector.load %arg4[%c0, %c0_1] : memref<1024x128xbf16, #tpu.memory_space<vmem>>, vector<1024x128xbf16>
    %c0_2 = arith.constant 0 : index
    %c0_3 = arith.constant 0 : index
    %c0_4 = arith.constant 0 : index
    %4 = vector.load %arg7[%c0_2, %c0_3, %c0_4] : memref<4x56x128xf32, #tpu.memory_space<vmem>>, vector<1x56x128xf32>
    %5 = vector.shape_cast %4 : vector<1x56x128xf32> to vector<56x128xf32>
    %c0_5 = arith.constant 0 : index
    %c0_6 = arith.constant 0 : index
    %c0_7 = arith.constant 0 : index
    %6 = vector.load %arg3[%c0_5, %c0_6, %c0_7] : memref<4x56x1024xbf16, #tpu.memory_space<vmem>>, vector<1x56x1024xbf16>
    %7 = vector.shape_cast %6 : vector<1x56x1024xbf16> to vector<56x1024xbf16>
    %cst = arith.constant dense<0.000000e+00> : vector<56x128xf32>
    %8 = tpu.matmul %7, %3, %cst {dimension_numbers = #tpu.dot_dimension_numbers<[1], [0], [0], [1], [0, 0, 1, 1], [], []>} : vector<56x1024xbf16>, vector<1024x128xbf16>, vector<56x128xf32> -> vector<56x128xf32>
    %9 = arith.addf %5, %8 : vector<56x128xf32>
    %c0_8 = arith.constant 0 : index
    %c0_9 = arith.constant 0 : index
    %c0_10 = arith.constant 0 : index
    %10 = vector.load %arg7[%c0_8, %c0_9, %c0_10] : memref<4x56x128xf32, #tpu.memory_space<vmem>>, vector<1x56x128xf32>
    %11 = vector.shape_cast %10 : vector<1x56x128xf32> to vector<56x128xf32>
    %12 = vector.shape_cast %9 : vector<56x128xf32> to vector<1x56x128xf32>
    tpu.vector_store %arg7[%c0_8, %c0_9, %c0_10], %12 {strides = array<i32>} : memref<4x56x128xf32, #tpu.memory_space<vmem>>, vector<1x56x128xf32>,
    %c1 = arith.constant 1 : index
    %c0_11 = arith.constant 0 : index
    %c0_12 = arith.constant 0 : index
    %13 = vector.load %arg7[%c1, %c0_11, %c0_12] : memref<4x56x128xf32, #tpu.memory_space<vmem>>, vector<1x56x128xf32>
    %14 = vector.shape_cast %13 : vector<1x56x128xf32> to vector<56x128xf32>
    %c1_13 = arith.constant 1 : index
    %c0_14 = arith.constant 0 : index
    %c0_15 = arith.constant 0 : index
    %15 = vector.load %arg3[%c1_13, %c0_14, %c0_15] : memref<4x56x1024xbf16, #tpu.memory_space<vmem>>, vector<1x56x1024xbf16>
    %16 = vector.shape_cast %15 : vector<1x56x1024xbf16> to vector<56x1024xbf16>
    %cst_16 = arith.constant dense<0.000000e+00> : vector<56x128xf32>
    %17 = tpu.matmul %16, %3, %cst_16 {dimension_numbers = #tpu.dot_dimension_numbers<[1], [0], [0], [1], [0, 0, 1, 1], [], []>} : vector<56x1024xbf16>, vector<1024x128xbf16>, vector<56x128xf32> -> vector<56x128xf32>
    %18 = arith.addf %14, %17 : vector<56x128xf32>
    %c1_17 = arith.constant 1 : index
    %c0_18 = arith.constant 0 : index
    %c0_19 = arith.constant 0 : index
    %19 = vector.load %arg7[%c1_17, %c0_18, %c0_19] : memref<4x56x128xf32, #tpu.memory_space<vmem>>, vector<1x56x128xf32>
    %20 = vector.shape_cast %19 : vector<1x56x128xf32> to vector<56x128xf32>
    %21 = vector.shape_cast %18 : vector<56x128xf32> to vector<1x56x128xf32>
    tpu.vector_store %arg7[%c1_17, %c0_18, %c0_19], %21 {strides = array<i32>} : memref<4x56x128xf32, #tpu.memory_space<vmem>>, vector<1x56x128xf32>,
    %c2 = arith.constant 2 : index
    %c0_20 = arith.constant 0 : index
    %c0_21 = arith.constant 0 : index
    %22 = vector.load %arg7[%c2, %c0_20, %c0_21] : memref<4x56x128xf32, #tpu.memory_space<vmem>>, vector<1x56x128xf32>
    %23 = vector.shape_cast %22 : vector<1x56x128xf32> to vector<56x128xf32>
    %c2_22 = arith.constant 2 : index
    %c0_23 = arith.constant 0 : index
    %c0_24 = arith.constant 0 : index
    %24 = vector.load %arg3[%c2_22, %c0_23, %c0_24] : memref<4x56x1024xbf16, #tpu.memory_space<vmem>>, vector<1x56x1024xbf16>
    %25 = vector.shape_cast %24 : vector<1x56x1024xbf16> to vector<56x1024xbf16>
    %cst_25 = arith.constant dense<0.000000e+00> : vector<56x128xf32>
    %26 = tpu.matmul %25, %3, %cst_25 {dimension_numbers = #tpu.dot_dimension_numbers<[1], [0], [0], [1], [0, 0, 1, 1], [], []>} : vector<56x1024xbf16>, vector<1024x128xbf16>, vector<56x128xf32> -> vector<56x128xf32>
    %27 = arith.addf %23, %26 : vector<56x128xf32>
    %c2_26 = arith.constant 2 : index
    %c0_27 = arith.constant 0 : index
    %c0_28 = arith.constant 0 : index
    %28 = vector.load %arg7[%c2_26, %c0_27, %c0_28] : memref<4x56x128xf32, #tpu.memory_space<vmem>>, vector<1x56x128xf32>
    %29 = vector.shape_cast %28 : vector<1x56x128xf32> to vector<56x128xf32>
    %30 = vector.shape_cast %27 : vector<56x128xf32> to vector<1x56x128xf32>
    tpu.vector_store %arg7[%c2_26, %c0_27, %c0_28], %30 {strides = array<i32>} : memref<4x56x128xf32, #tpu.memory_space<vmem>>, vector<1x56x128xf32>,
    %c3 = arith.constant 3 : index
    %c0_29 = arith.constant 0 : index
    %c0_30 = arith.constant 0 : index
    %31 = vector.load %arg7[%c3, %c0_29, %c0_30] : memref<4x56x128xf32, #tpu.memory_space<vmem>>, vector<1x56x128xf32>
    %32 = vector.shape_cast %31 : vector<1x56x128xf32> to vector<56x128xf32>
    %c3_31 = arith.constant 3 : index
    %c0_32 = arith.constant 0 : index
    %c0_33 = arith.constant 0 : index
    %33 = vector.load %arg3[%c3_31, %c0_32, %c0_33] : memref<4x56x1024xbf16, #tpu.memory_space<vmem>>, vector<1x56x1024xbf16>
    %34 = vector.shape_cast %33 : vector<1x56x1024xbf16> to vector<56x1024xbf16>
    %cst_34 = arith.constant dense<0.000000e+00> : vector<56x128xf32>
    %35 = tpu.matmul %34, %3, %cst_34 {dimension_numbers = #tpu.dot_dimension_numbers<[1], [0], [0], [1], [0, 0, 1, 1], [], []>} : vector<56x1024xbf16>, vector<1024x128xbf16>, vector<56x128xf32> -> vector<56x128xf32>
    %36 = arith.addf %32, %35 : vector<56x128xf32>
    %c3_35 = arith.constant 3 : index
    %c0_36 = arith.constant 0 : index
    %c0_37 = arith.constant 0 : index
    %37 = vector.load %arg7[%c3_35, %c0_36, %c0_37] : memref<4x56x128xf32, #tpu.memory_space<vmem>>, vector<1x56x128xf32>
    %38 = vector.shape_cast %37 : vector<1x56x128xf32> to vector<56x128xf32>
    %39 = vector.shape_cast %36 : vector<56x128xf32> to vector<1x56x128xf32>
    tpu.vector_store %arg7[%c3_35, %c0_36, %c0_37], %39 {strides = array<i32>} : memref<4x56x128xf32, #tpu.memory_space<vmem>>, vector<1x56x128xf32>,
    %c1_i32 = arith.constant 1 : i32
    %40 = arith.cmpi eq, %arg2, %c1_i32 : i32
    %41 = arith.extui %40 : i1 to i32
    %c0_i32_38 = arith.constant 0 : i32
    %42 = arith.cmpi ne, %41, %c0_i32_38 : i32
    scf.if %42 {
      %c0_39 = arith.constant 0 : index
      %c0_40 = arith.constant 0 : index
      %c0_41 = arith.constant 0 : index
      %43 = vector.load %arg7[%c0_39, %c0_40, %c0_41] : memref<4x56x128xf32, #tpu.memory_space<vmem>>, vector<1x56x128xf32>
      %44 = vector.shape_cast %43 : vector<1x56x128xf32> to vector<56x128xf32>
      %c1_42 = arith.constant 1 : index
      %c0_43 = arith.constant 0 : index
      %c0_44 = arith.constant 0 : index
      %45 = vector.load %arg7[%c1_42, %c0_43, %c0_44] : memref<4x56x128xf32, #tpu.memory_space<vmem>>, vector<1x56x128xf32>
      %46 = vector.shape_cast %45 : vector<1x56x128xf32> to vector<56x128xf32>
      %47 = arith.maximumf %44, %46 : vector<56x128xf32>
      %c2_45 = arith.constant 2 : index
      %c0_46 = arith.constant 0 : index
      %c0_47 = arith.constant 0 : index
      %48 = vector.load %arg7[%c2_45, %c0_46, %c0_47] : memref<4x56x128xf32, #tpu.memory_space<vmem>>, vector<1x56x128xf32>
      %49 = vector.shape_cast %48 : vector<1x56x128xf32> to vector<56x128xf32>
      %c3_48 = arith.constant 3 : index
      %c0_49 = arith.constant 0 : index
      %c0_50 = arith.constant 0 : index
      %50 = vector.load %arg7[%c3_48, %c0_49, %c0_50] : memref<4x56x128xf32, #tpu.memory_space<vmem>>, vector<1x56x128xf32>
      %51 = vector.shape_cast %50 : vector<1x56x128xf32> to vector<56x128xf32>
      %52 = arith.maximumf %49, %51 : vector<56x128xf32>
      %53 = arith.maximumf %47, %52 : vector<56x128xf32>
      %c0_51 = arith.constant 0 : index
      %c0_52 = arith.constant 0 : index
      %54 = vector.load %arg5[%c0_51, %c0_52] : memref<1x128xf32, #tpu.memory_space<vmem>>, vector<1x128xf32>
      %55 = vector.broadcast %54 : vector<1x128xf32> to vector<56x128xf32>
      %56 = arith.addf %53, %55 : vector<56x128xf32>
      %cst_53 = arith.constant 0.000000e+00 : f32
      %57 = vector.broadcast %cst_53 : f32 to vector<56x128xf32>
      %58 = arith.maximumf %56, %57 : vector<56x128xf32>
      %59 = arith.truncf %58 : vector<56x128xf32> to vector<56x128xbf16>
      %c0_54 = arith.constant 0 : index
      %c0_55 = arith.constant 0 : index
      %60 = vector.load %arg6[%c0_54, %c0_55] : memref<56x128xbf16, #tpu.memory_space<vmem>>, vector<56x128xbf16>
      tpu.vector_store %arg6[%c0_54, %c0_55], %59 {strides = array<i32>} : memref<56x128xbf16, #tpu.memory_space<vmem>>, vector<56x128xbf16>,
    } else {
    }
    return
  }
  func.func @transform_0(%arg0: i32, %arg1: i32, %arg2: i32) -> (i32, i32, i32) {
    %c0_i32 = arith.constant 0 : i32
    %c0_i32_0 = arith.constant 0 : i32
    return %c0_i32, %arg0, %arg2 : i32, i32, i32
  }
  func.func @transform_1(%arg0: i32, %arg1: i32, %arg2: i32) -> (i32, i32) {
    %c0_i32 = arith.constant 0 : i32
    return %arg2, %arg1 : i32, i32
  }
  func.func @transform_2(%arg0: i32, %arg1: i32, %arg2: i32) -> (i32, i32) {
    %c0_i32 = arith.constant 0 : i32
    %c0_i32_0 = arith.constant 0 : i32
    return %c0_i32, %arg1 : i32, i32
  }
  func.func @transform_3(%arg0: i32, %arg1: i32, %arg2: i32) -> (i32, i32) {
    %c0_i32 = arith.constant 0 : i32
    return %arg0, %arg1 : i32, i32
  }
}

module attributes {stable_mosaic.version = 11 : i64} {
  func.func @_matmul_bias_act_kernel(%arg0: i32, %arg1: i32, %arg2: i32, %arg3: memref<8x640xbf16, #tpu.memory_space<vmem>>, %arg4: memref<640x512xbf16, #tpu.memory_space<vmem>>, %arg5: memref<1x512xf32, #tpu.memory_space<vmem>>, %arg6: memref<8x512xf32, #tpu.memory_space<vmem>>, %arg7: memref<8x512xf32, #tpu.memory_space<vmem>>) attributes {dimension_semantics = [#tpu.dimension_semantics<parallel>, #tpu.dimension_semantics<parallel>, #tpu.dimension_semantics<arbitrary>], iteration_bounds = array<i64: 1, 2, 5>, scalar_prefetch = 0 : i64, scratch_operands = 1 : i64, tpu.core_type = #tpu.core_type<tc>, window_params = [{transform_indices = @transform_0, window_bounds = array<i64: 8, 640>}, {transform_indices = @transform_1, window_bounds = array<i64: 640, 512>}, {transform_indices = @transform_2, window_bounds = array<i64: 1, 512>}, {transform_indices = @transform_3, window_bounds = array<i64: 8, 512>}]} {
    %c0_i32 = arith.constant 0 : i32
    %0 = arith.cmpi eq, %arg2, %c0_i32 : i32
    %1 = arith.extui %0 : i1 to i32
    %c0_i32_0 = arith.constant 0 : i32
    %2 = arith.cmpi ne, %1, %c0_i32_0 : i32
    scf.if %2 {
      %cst_9 = arith.constant 0.000000e+00 : f32
      %12 = vector.broadcast %cst_9 : f32 to vector<8x512xf32>
      %c0_10 = arith.constant 0 : index
      %c0_11 = arith.constant 0 : index
      %13 = vector.load %arg7[%c0_10, %c0_11] : memref<8x512xf32, #tpu.memory_space<vmem>>, vector<8x512xf32>
      tpu.vector_store %arg7[%c0_10, %c0_11], %12 {strides = array<i32>} : memref<8x512xf32, #tpu.memory_space<vmem>>, vector<8x512xf32>,
    } else {
    }
    %c0 = arith.constant 0 : index
    %c0_1 = arith.constant 0 : index
    %3 = vector.load %arg7[%c0, %c0_1] : memref<8x512xf32, #tpu.memory_space<vmem>>, vector<8x512xf32>
    %c0_2 = arith.constant 0 : index
    %c0_3 = arith.constant 0 : index
    %4 = vector.load %arg3[%c0_2, %c0_3] : memref<8x640xbf16, #tpu.memory_space<vmem>>, vector<8x640xbf16>
    %c0_4 = arith.constant 0 : index
    %c0_5 = arith.constant 0 : index
    %5 = vector.load %arg4[%c0_4, %c0_5] : memref<640x512xbf16, #tpu.memory_space<vmem>>, vector<640x512xbf16>
    %cst = arith.constant dense<0.000000e+00> : vector<8x512xf32>
    %6 = tpu.matmul %4, %5, %cst {dimension_numbers = #tpu.dot_dimension_numbers<[1], [0], [0], [1], [0, 0, 1, 1], [], []>} : vector<8x640xbf16>, vector<640x512xbf16>, vector<8x512xf32> -> vector<8x512xf32>
    %7 = arith.addf %3, %6 : vector<8x512xf32>
    %c0_6 = arith.constant 0 : index
    %c0_7 = arith.constant 0 : index
    %8 = vector.load %arg7[%c0_6, %c0_7] : memref<8x512xf32, #tpu.memory_space<vmem>>, vector<8x512xf32>
    tpu.vector_store %arg7[%c0_6, %c0_7], %7 {strides = array<i32>} : memref<8x512xf32, #tpu.memory_space<vmem>>, vector<8x512xf32>,
    %c4_i32 = arith.constant 4 : i32
    %9 = arith.cmpi eq, %arg2, %c4_i32 : i32
    %10 = arith.extui %9 : i1 to i32
    %c0_i32_8 = arith.constant 0 : i32
    %11 = arith.cmpi ne, %10, %c0_i32_8 : i32
    scf.if %11 {
      %c0_9 = arith.constant 0 : index
      %c0_10 = arith.constant 0 : index
      %12 = vector.load %arg7[%c0_9, %c0_10] : memref<8x512xf32, #tpu.memory_space<vmem>>, vector<8x512xf32>
      %c0_11 = arith.constant 0 : index
      %c0_12 = arith.constant 0 : index
      %13 = vector.load %arg5[%c0_11, %c0_12] : memref<1x512xf32, #tpu.memory_space<vmem>>, vector<1x512xf32>
      %14 = vector.broadcast %13 : vector<1x512xf32> to vector<8x512xf32>
      %15 = arith.addf %12, %14 : vector<8x512xf32>
      %cst_13 = arith.constant 0.000000e+00 : f32
      %16 = vector.broadcast %cst_13 : f32 to vector<8x512xf32>
      %17 = arith.maximumf %15, %16 : vector<8x512xf32>
      %c0_14 = arith.constant 0 : index
      %c0_15 = arith.constant 0 : index
      %18 = vector.load %arg6[%c0_14, %c0_15] : memref<8x512xf32, #tpu.memory_space<vmem>>, vector<8x512xf32>
      tpu.vector_store %arg6[%c0_14, %c0_15], %17 {strides = array<i32>} : memref<8x512xf32, #tpu.memory_space<vmem>>, vector<8x512xf32>,
    } else {
    }
    return
  }
  func.func @transform_0(%arg0: i32, %arg1: i32, %arg2: i32) -> (i32, i32) {
    %c0_i32 = arith.constant 0 : i32
    return %arg0, %arg2 : i32, i32
  }
  func.func @transform_1(%arg0: i32, %arg1: i32, %arg2: i32) -> (i32, i32) {
    %c0_i32 = arith.constant 0 : i32
    return %arg2, %arg1 : i32, i32
  }
  func.func @transform_2(%arg0: i32, %arg1: i32, %arg2: i32) -> (i32, i32) {
    %c0_i32 = arith.constant 0 : i32
    %c0_i32_0 = arith.constant 0 : i32
    return %c0_i32, %arg1 : i32, i32
  }
  func.func @transform_3(%arg0: i32, %arg1: i32, %arg2: i32) -> (i32, i32) {
    %c0_i32 = arith.constant 0 : i32
    return %arg0, %arg1 : i32, i32
  }
}

module attributes {stable_mosaic.version = 11 : i64} {
  func.func @_tail_kernel(%arg0: i32, %arg1: memref<8x1024xf32, #tpu.memory_space<vmem>>, %arg2: memref<1024x2xf32, #tpu.memory_space<vmem>>, %arg3: memref<1x2xf32, #tpu.memory_space<vmem>>, %arg4: memref<2x10xf32, #tpu.memory_space<vmem>>, %arg5: memref<1x10xf32, #tpu.memory_space<vmem>>, %arg6: memref<2x128xf32, #tpu.memory_space<vmem>>, %arg7: memref<1x128xf32, #tpu.memory_space<vmem>>, %arg8: memref<8x10xf32, #tpu.memory_space<vmem>>, %arg9: memref<8x128xf32, #tpu.memory_space<vmem>>, %arg10: memref<8x2xf32, #tpu.memory_space<vmem>>) attributes {dimension_semantics = [#tpu.dimension_semantics<arbitrary>], iteration_bounds = array<i64: 1>, scalar_prefetch = 0 : i64, scratch_operands = 0 : i64, tpu.core_type = #tpu.core_type<tc>, window_params = [{pipeline_mode = #tpu.pipeline_mode<synchronous>, transform_indices = @transform_0, window_bounds = array<i64: 8, 1024>}, {pipeline_mode = #tpu.pipeline_mode<synchronous>, transform_indices = @transform_1, window_bounds = array<i64: 1024, 2>}, {pipeline_mode = #tpu.pipeline_mode<synchronous>, transform_indices = @transform_2, window_bounds = array<i64: 1, 2>}, {pipeline_mode = #tpu.pipeline_mode<synchronous>, transform_indices = @transform_3, window_bounds = array<i64: 2, 10>}, {pipeline_mode = #tpu.pipeline_mode<synchronous>, transform_indices = @transform_4, window_bounds = array<i64: 1, 10>}, {pipeline_mode = #tpu.pipeline_mode<synchronous>, transform_indices = @transform_5, window_bounds = array<i64: 2, 128>}, {pipeline_mode = #tpu.pipeline_mode<synchronous>, transform_indices = @transform_6, window_bounds = array<i64: 1, 128>}, {pipeline_mode = #tpu.pipeline_mode<synchronous>, transform_indices = @transform_7, window_bounds = array<i64: 8, 10>}, {pipeline_mode = #tpu.pipeline_mode<synchronous>, transform_indices = @transform_8, window_bounds = array<i64: 8, 128>}, {pipeline_mode = #tpu.pipeline_mode<synchronous>, transform_indices = @transform_9, window_bounds = array<i64: 8, 2>}]} {
    %c0 = arith.constant 0 : index
    %c0_0 = arith.constant 0 : index
    %0 = vector.load %arg1[%c0, %c0_0] : memref<8x1024xf32, #tpu.memory_space<vmem>>, vector<8x1024xf32>
    %c0_1 = arith.constant 0 : index
    %c0_2 = arith.constant 0 : index
    %1 = vector.load %arg2[%c0_1, %c0_2] : memref<1024x2xf32, #tpu.memory_space<vmem>>, vector<1024x2xf32>
    %cst = arith.constant dense<0.000000e+00> : vector<8x2xf32>
    %2 = tpu.matmul %0, %1, %cst {dimension_numbers = #tpu.dot_dimension_numbers<[1], [0], [0], [1], [0, 0, 1, 1], [], []>} : vector<8x1024xf32>, vector<1024x2xf32>, vector<8x2xf32> -> vector<8x2xf32>
    %c0_3 = arith.constant 0 : index
    %c0_4 = arith.constant 0 : index
    %3 = vector.load %arg3[%c0_3, %c0_4] : memref<1x2xf32, #tpu.memory_space<vmem>>, vector<1x2xf32>
    %4 = vector.broadcast %3 : vector<1x2xf32> to vector<8x2xf32>
    %5 = arith.addf %2, %4 : vector<8x2xf32>
    %cst_5 = arith.constant 0.000000e+00 : f32
    %6 = vector.broadcast %cst_5 : f32 to vector<8x2xf32>
    %7 = arith.maximumf %5, %6 : vector<8x2xf32>
    %c0_6 = arith.constant 0 : index
    %c0_7 = arith.constant 0 : index
    %8 = vector.load %arg10[%c0_6, %c0_7] : memref<8x2xf32, #tpu.memory_space<vmem>>, vector<8x2xf32>
    tpu.vector_store %arg10[%c0_6, %c0_7], %7 {strides = array<i32>} : memref<8x2xf32, #tpu.memory_space<vmem>>, vector<8x2xf32>,
    %c0_8 = arith.constant 0 : index
    %c0_9 = arith.constant 0 : index
    %9 = vector.load %arg4[%c0_8, %c0_9] : memref<2x10xf32, #tpu.memory_space<vmem>>, vector<2x10xf32>
    %cst_10 = arith.constant dense<0.000000e+00> : vector<8x10xf32>
    %10 = tpu.matmul %7, %9, %cst_10 {dimension_numbers = #tpu.dot_dimension_numbers<[1], [0], [0], [1], [0, 0, 1, 1], [], []>} : vector<8x2xf32>, vector<2x10xf32>, vector<8x10xf32> -> vector<8x10xf32>
    %c0_11 = arith.constant 0 : index
    %c0_12 = arith.constant 0 : index
    %11 = vector.load %arg5[%c0_11, %c0_12] : memref<1x10xf32, #tpu.memory_space<vmem>>, vector<1x10xf32>
    %12 = vector.broadcast %11 : vector<1x10xf32> to vector<8x10xf32>
    %13 = arith.addf %10, %12 : vector<8x10xf32>
    %c0_13 = arith.constant 0 : index
    %c0_14 = arith.constant 0 : index
    %14 = vector.load %arg8[%c0_13, %c0_14] : memref<8x10xf32, #tpu.memory_space<vmem>>, vector<8x10xf32>
    tpu.vector_store %arg8[%c0_13, %c0_14], %13 {strides = array<i32>} : memref<8x10xf32, #tpu.memory_space<vmem>>, vector<8x10xf32>,
    %c0_15 = arith.constant 0 : index
    %c0_16 = arith.constant 0 : index
    %15 = vector.load %arg6[%c0_15, %c0_16] : memref<2x128xf32, #tpu.memory_space<vmem>>, vector<2x128xf32>
    %cst_17 = arith.constant dense<0.000000e+00> : vector<8x128xf32>
    %16 = tpu.matmul %7, %15, %cst_17 {dimension_numbers = #tpu.dot_dimension_numbers<[1], [0], [0], [1], [0, 0, 1, 1], [], []>} : vector<8x2xf32>, vector<2x128xf32>, vector<8x128xf32> -> vector<8x128xf32>
    %c0_18 = arith.constant 0 : index
    %c0_19 = arith.constant 0 : index
    %17 = vector.load %arg7[%c0_18, %c0_19] : memref<1x128xf32, #tpu.memory_space<vmem>>, vector<1x128xf32>
    %18 = vector.broadcast %17 : vector<1x128xf32> to vector<8x128xf32>
    %19 = arith.addf %16, %18 : vector<8x128xf32>
    %20 = arith.mulf %19, %19 : vector<8x128xf32>
    %cst_20 = arith.constant dense<0.000000e+00> : vector<8xf32>
    %21 = vector.multi_reduction <add>, %20, %cst_20 [1] : vector<8x128xf32> to vector<8xf32>
    %22 = vector.shape_cast %21 : vector<8xf32> to vector<8x1xf32>
    %cst_21 = arith.constant 1.000000e-24 : f32
    %23 = vector.broadcast %cst_21 : f32 to vector<8x1xf32>
    %24 = arith.maximumf %22, %23 : vector<8x1xf32>
    %25 = math.rsqrt %24 : vector<8x1xf32>
    %26 = vector.broadcast %25 : vector<8x1xf32> to vector<8x128xf32>
    %27 = arith.mulf %19, %26 : vector<8x128xf32>
    %c0_22 = arith.constant 0 : index
    %c0_23 = arith.constant 0 : index
    %28 = vector.load %arg9[%c0_22, %c0_23] : memref<8x128xf32, #tpu.memory_space<vmem>>, vector<8x128xf32>
    tpu.vector_store %arg9[%c0_22, %c0_23], %27 {strides = array<i32>} : memref<8x128xf32, #tpu.memory_space<vmem>>, vector<8x128xf32>,
    return
  }
  func.func @transform_0(%arg0: i32) -> (i32, i32) {
    %c0_i32 = arith.constant 0 : i32
    %c0_i32_0 = arith.constant 0 : i32
    %c0_i32_1 = arith.constant 0 : i32
    return %c0_i32, %c0_i32_0 : i32, i32
  }
  func.func @transform_1(%arg0: i32) -> (i32, i32) {
    %c0_i32 = arith.constant 0 : i32
    %c0_i32_0 = arith.constant 0 : i32
    %c0_i32_1 = arith.constant 0 : i32
    return %c0_i32, %c0_i32_0 : i32, i32
  }
  func.func @transform_2(%arg0: i32) -> (i32, i32) {
    %c0_i32 = arith.constant 0 : i32
    %c0_i32_0 = arith.constant 0 : i32
    %c0_i32_1 = arith.constant 0 : i32
    return %c0_i32, %c0_i32_0 : i32, i32
  }
  func.func @transform_3(%arg0: i32) -> (i32, i32) {
    %c0_i32 = arith.constant 0 : i32
    %c0_i32_0 = arith.constant 0 : i32
    %c0_i32_1 = arith.constant 0 : i32
    return %c0_i32, %c0_i32_0 : i32, i32
  }
  func.func @transform_4(%arg0: i32) -> (i32, i32) {
    %c0_i32 = arith.constant 0 : i32
    %c0_i32_0 = arith.constant 0 : i32
    %c0_i32_1 = arith.constant 0 : i32
    return %c0_i32, %c0_i32_0 : i32, i32
  }
  func.func @transform_5(%arg0: i32) -> (i32, i32) {
    %c0_i32 = arith.constant 0 : i32
    %c0_i32_0 = arith.constant 0 : i32
    %c0_i32_1 = arith.constant 0 : i32
    return %c0_i32, %c0_i32_0 : i32, i32
  }
  func.func @transform_6(%arg0: i32) -> (i32, i32) {
    %c0_i32 = arith.constant 0 : i32
    %c0_i32_0 = arith.constant 0 : i32
    %c0_i32_1 = arith.constant 0 : i32
    return %c0_i32, %c0_i32_0 : i32, i32
  }
  func.func @transform_7(%arg0: i32) -> (i32, i32) {
    %c0_i32 = arith.constant 0 : i32
    %c0_i32_0 = arith.constant 0 : i32
    %c0_i32_1 = arith.constant 0 : i32
    return %c0_i32, %c0_i32_0 : i32, i32
  }
  func.func @transform_8(%arg0: i32) -> (i32, i32) {
    %c0_i32 = arith.constant 0 : i32
    %c0_i32_0 = arith.constant 0 : i32
    %c0_i32_1 = arith.constant 0 : i32
    return %c0_i32, %c0_i32_0 : i32, i32
  }
  func.func @transform_9(%arg0: i32) -> (i32, i32) {
    %c0_i32 = arith.constant 0 : i32
    %c0_i32_0 = arith.constant 0 : i32
    %c0_i32_1 = arith.constant 0 : i32
    return %c0_i32, %c0_i32_0 : i32, i32
  }
}

</mosaic_0001>

<llo_original>
// kernel: convnetvis_forward.4
$region0: #{convnetvis_forward.4}
  #allocation0 [shape = 'u32[]', space=smem, size = 0x4, offset = 0x4, fixed_abs, tag = 'smem constant byte address 0x4 - core index']
  #allocation1 [shape = 'u32[144,128]{1,0:T(1,128)}', space=vmem, size = 0x12000, scoped, tag = 'internal scratch']
  #allocation2 [shape = 'f32[4,256,64]{2,1,0:T(8,128)}', space=vmem, size = 0x80000, scoped, tag = 'scratch operand']
  %s0 = inlined_call_operand.vmem [shape: bf16[4,512,128], index: 0, kind: input, shape index: {}]
  %s1 = inlined_call_operand.vmem [shape: bf16[128,64], index: 1, kind: input, shape index: {}]
  %s2 = inlined_call_operand.vmem [shape: f32[1,64], index: 2, kind: input, shape index: {}]
  %s3 = inlined_call_operand.vmem [shape: bf16[512,64], index: 3, kind: output, shape index: {}]
  %s4 = sld [smem:[#allocation0]]
  $region94: #{convnetvis_forward.4} parent=0
    _
  %s6 = ssub.s32 1, %s4
  %s7 = scalar_select 0, %s6, %s4
  $region1: #{convnetvis_forward.4} parent=0
    #allocation3 [shape = 'u8[524288]{0}', space=vmem, size = 0x80000, scoped, tag = 'input window, operand 0']
    loop: start=0, step=1, limit=4
    $region2: #{convnetvis_forward.4} parent=1 // loop_pre_header
      _
    $region3: #{convnetvis_forward.4} parent=1 // loop_header
      %s9 = sphi 0, %s13
      %p10 = scmp.ge.s32.totalorder %s9, 4
      %s16 = sphi 0, %s35
      %s17 = sphi 0, %s31
      %s18 = sphi 0, %s27
      %s19 = sphi 0, %s16
      %s20 = sphi 0, %s17
      %s21 = sphi 0, %s18
      %s22 = sphi 0, %s19
      %s23 = sphi 0, %s20
      %s24 = sphi 0, %s21
      %s40 = sphi 0, %s42
      %s43 = sphi 0, %s40
      %s44 = sphi 0, %s43
      %s60 = sphi 0, %s44
      %s68 = sphi 0, %s70
      %s71 = sphi 0, %s68
      %s72 = sphi 0, %s71
      %s88 = sphi 0, %s72
      %s94 = sphi 0, %s96
      %s97 = sphi 0, %s94
      %s98 = sphi 0, %s97
      %s114 = sphi 0, %s98
      %s122 = sphi 0, %s124
      %s125 = sphi 0, %s122
      %s126 = sphi 0, %s125
      %s142 = sphi 0, %s126
    $region4: #{convnetvis_forward.4} parent=1 // loop_header_branch
      %12 = sbr.rel (%p10) target = $region8
    $region5: #{convnetvis_forward.4} parent=1 // loop_body
      %s14 = ssub.s32 %s9, 1
      %s15 = ssub.s32 %s9, 2
      %s25 = sadd.s32 1, %s18
      %p26 = scmp.ge.s32.totalorder %s25, 1
      %s27 = scalar_select %p26, 0, %s25
      %s28 = sadd.s32 1, %s17
      %s29 = scalar_select %p26, %s28, %s17
      %p30 = scmp.ge.s32.totalorder %s29, 1
      %s31 = scalar_select %p30, 0, %s29
      %s32 = sadd.s32 1, %s16
      %s33 = scalar_select %p30, %s32, %s16
      %p34 = scmp.ge.s32.totalorder %s33, 2
      %s35 = scalar_select %p34, 0, %s33
      %s36 = ssub.s32 %s16, %s35
      %s37 = ssub.s32 %s18, %s27
      %s38 = sor.u32 %s36, %s37
      %p39 = scmp.eq.s32.totalorder %s38, 0
      %s41 = sadd.s32 %s40, 1
      %s42 = scalar_select %p39, %s40, %s41
      %p45 = pneg %p39
      %p46 = scmp.eq.s32.totalorder %s9, 1
      %p47 = por %p45, %p46
      %p48 = scmp.ne.s32.totalorder %s40, %s43
      %p49 = scmp.eq.s32.totalorder %s9, 0
      %p50 = por %p48, %p49
      %p51 = scmp.ne.s32.totalorder %s40, %s43
      %p52 = scmp.eq.s32.totalorder %s14, 1
      %p53 = por %p51, %p52
      %p54 = scmp.ne.s32.totalorder %s43, %s44
      %p55 = scmp.eq.s32.totalorder %s14, 0
      %p56 = por %p54, %p55
      %p57 = scmp.ne.s32.totalorder %s43, %s44
      %p58 = scmp.eq.s32.totalorder %s15, 1
      %p59 = por %p57, %p58
      %p61 = scmp.ne.s32.totalorder %s44, %s60
      %p62 = scmp.eq.s32.totalorder %s15, 0
      %p63 = por %p61, %p62
      %s64 = ssub.s32 %s18, %s27
      %s65 = ssub.s32 %s17, %s31
      %s66 = sor.u32 %s64, %s65
      %p67 = scmp.eq.s32.totalorder %s66, 0
      %s69 = sadd.s32 %s68, 1
      %s70 = scalar_select %p67, %s68, %s69
      %p73 = pneg %p67
      %p74 = scmp.eq.s32.totalorder %s9, 1
      %p75 = por %p73, %p74
      %p76 = scmp.ne.s32.totalorder %s68, %s71
      %p77 = scmp.eq.s32.totalorder %s9, 0
      %p78 = por %p76, %p77
      %p79 = scmp.ne.s32.totalorder %s68, %s71
      %p80 = scmp.eq.s32.totalorder %s14, 1
      %p81 = por %p79, %p80
      %p82 = scmp.ne.s32.totalorder %s71, %s72
      %p83 = scmp.eq.s32.totalorder %s14, 0
      %p84 = por %p82, %p83
      %p85 = scmp.ne.s32.totalorder %s71, %s72
      %p86 = scmp.eq.s32.totalorder %s15, 1
      %p87 = por %p85, %p86
      %p89 = scmp.ne.s32.totalorder %s72, %s88
      %p90 = scmp.eq.s32.totalorder %s15, 0
      %p91 = por %p89, %p90
      %s92 = ssub.s32 %s17, %s31
      %p93 = scmp.eq.s32.totalorder %s92, 0
      %s95 = sadd.s32 %s94, 1
      %s96 = scalar_select %p93, %s94, %s95
      %p99 = pneg %p93
      %p100 = scmp.eq.s32.totalorder %s9, 1
      %p101 = por %p99, %p100
      %p102 = scmp.ne.s32.totalorder %s94, %s97
      %p103 = scmp.eq.s32.totalorder %s9, 0
      %p104 = por %p102, %p103
      %p105 = scmp.ne.s32.totalorder %s94, %s97
      %p106 = scmp.eq.s32.totalorder %s14, 1
      %p107 = por %p105, %p106
      %p108 = scmp.ne.s32.totalorder %s97, %s98
      %p109 = scmp.eq.s32.totalorder %s14, 0
      %p110 = por %p108, %p109
      %p111 = scmp.ne.s32.totalorder %s97, %s98
      %p112 = scmp.eq.s32.totalorder %s15, 1
      %p113 = por %p111, %p112
      %p115 = scmp.ne.s32.totalorder %s98, %s114
      %p116 = scmp.eq.s32.totalorder %s15, 0
      %p117 = por %p115, %p116
      %s118 = ssub.s32 %s16, %s35
      %s119 = ssub.s32 %s17, %s31
      %s120 = sor.u32 %s118, %s119
      %p121 = scmp.eq.s32.totalorder %s120, 0
      %s123 = sadd.s32 %s122, 1
      %s124 = scalar_select %p121, %s122, %s123
      %p127 = pneg %p121
      %p128 = scmp.eq.s32.totalorder %s9, 1
      %p129 = por %p127, %p128
      %p130 = scmp.ne.s32.totalorder %s122, %s125
      %p131 = scmp.eq.s32.totalorder %s9, 0
      %p132 = por %p130, %p131
      %p133 = scmp.ne.s32.totalorder %s122, %s125
      %p134 = scmp.eq.s32.totalorder %s14, 1
      %p135 = por %p133, %p134
      %p136 = scmp.ne.s32.totalorder %s125, %s126
      %p137 = scmp.eq.s32.totalorder %s14, 0
      %p138 = por %p136, %p137
      %p139 = scmp.ne.s32.totalorder %s125, %s126
      %p140 = scmp.eq.s32.totalorder %s15, 1
      %p141 = por %p139, %p140
      %p143 = scmp.ne.s32.totalorder %s126, %s142
      %p144 = scmp.eq.s32.totalorder %s15, 0
      %p145 = por %p143, %p144
      %p146 = scmp.le.s32.totalorder 1, %s9
      %p147 = scmp.lt.s32.totalorder %s9, 3
      %p148 = pnand %p146, %p147
      %p149 = pneg %p148
      // Predicated region
      $region9: #{convnetvis_forward.4} parent=5 // pred_check
        _
      $region10: #{convnetvis_forward.4} parent=5 // pred_check_branch
        %151 = sbr.rel (%p148) target = $region12
      $region11: #{convnetvis_forward.4} parent=5 // pred_region
        %s152 = ssub.s32 %s9, 1
        // Predicated region
        $region13: #{convnetvis_forward.4} parent=11 // pred_check
          %p153 = pneg %p84
        $region14: #{convnetvis_forward.4} parent=11 // pred_check_branch
          %155 = sbr.rel (%p153) target = $region16
        $region15: #{convnetvis_forward.4} parent=11 // pred_region
          %s156 = smul.u32 16, %s21
          %p157 = scmp.lt.s32.totalorder %s156, 15
          %s158 = scalar_select %p157, %s156, 15
          %p159 = scmp.lt.s32.totalorder %s20, 0
          %s160 = scalar_select %p159, %s20, 0
          %s161 = sadd.s32 %s160, %s158
          %s162 = smul.addr %s161, 4
          %s163 = scalar_lea.vmem %s1, %s162
          %s164 = smul.u32 16, %s21
        $region16: #{convnetvis_forward.4} parent=11 // pred_fallthru
          _
        // Predicated region
        $region17: #{convnetvis_forward.4} parent=11 // pred_check
          %p165 = pneg %p110
        $region18: #{convnetvis_forward.4} parent=11 // pred_check_branch
          %167 = sbr.rel (%p165) target = $region20
        $region19: #{convnetvis_forward.4} parent=11 // pred_region
          %p168 = scmp.lt.s32.totalorder %s20, 0
          %s169 = scalar_select %p168, %s20, 0
          %s170 = scalar_lea.vmem %s2, %s169
        $region20: #{convnetvis_forward.4} parent=11 // pred_fallthru
          _
      $region12: #{convnetvis_forward.4} parent=5 // pred_fallthru
        _
      %p171 = scmp.lt.s32.totalorder %s9, 2
      // Predicated region
      $region21: #{convnetvis_forward.4} parent=5 // pred_check
        %p172 = pneg %p171
      $region22: #{convnetvis_forward.4} parent=5 // pred_check_branch
        %174 = sbr.rel (%p172) target = $region24
      $region23: #{convnetvis_forward.4} parent=5 // pred_region
        // Predicated region
        $region25: #{convnetvis_forward.4} parent=23 // pred_check
          %p175 = pneg %p50
        $region26: #{convnetvis_forward.4} parent=23 // pred_check_branch
          %177 = sbr.rel (%p175) target = $region28
        $region27: #{convnetvis_forward.4} parent=23 // pred_region
          %s178 = sand.u32 %s40, 1
          %s179 = sand.u32 %s40, 1
          %s180 = smul.addr %s179, 512
          %s181 = scalar_lea.vmem [#allocation3], %s180
          %s182 = smul.u32 32, %s16
          %s183 = sadd.s32 %s18, %s182
          %s184 = smul.addr %s183, 4
          %s185 = scalar_lea.vmem %s0, %s184
          // Predicated region
          $region29: #{convnetvis_forward.4} parent=27 // pred_check
            _
          $region30: #{convnetvis_forward.4} parent=27 // pred_check_branch
            %187 = sbr.rel (0) target = $region32
          $region31: #{convnetvis_forward.4} parent=27 // pred_region
            // Predicated region
            $region33: #{convnetvis_forward.4} parent=31 // pred_check
              _
            $region34: #{convnetvis_forward.4} parent=31 // pred_check_branch
              %189 = sbr.rel target = $region36
            $region35: #{convnetvis_forward.4} parent=31 // pred_region
              // Predicated region
              $region48: #{convnetvis_forward.4} parent=35 // pred_check
                _
              $region49: #{convnetvis_forward.4} parent=35 // pred_check_branch
                %458 = sbr.rel (0) target = $region51
              $region50: #{convnetvis_forward.4} parent=35 // pred_region
                loop: start=0, step=1, limit=1
                $region52: #{convnetvis_forward.4} parent=50 // loop_pre_header
                  _
                $region53: #{convnetvis_forward.4} parent=50 // loop_header
                  %s460 = sphi 0, %s464
                  %p461 = scmp.ge.s32.totalorder %s460, 1
                  %s465 = sphi %s185, %s185
                  %s466 = sphi %s181, %s181
                $region54: #{convnetvis_forward.4} parent=50 // loop_header_branch
                  %463 = sbr.rel (%p461) target = $region58
                $region55: #{convnetvis_forward.4} parent=50 // loop_body
                  _
                $region56: #{convnetvis_forward.4} parent=50 // loop_footer
                  %s464 = sadd.s32 1, %s460
                $region57: #{convnetvis_forward.4} parent=50 // loop_footer_branch
                  %459 = sbr.rel target = $region53
                $region58: #{convnetvis_forward.4} parent=50 // loop_exit
                  _
                loop: start=0, step=1, limit=1
                $region59: #{convnetvis_forward.4} parent=50 // loop_pre_header
                  _
                $region60: #{convnetvis_forward.4} parent=50 // loop_header
                  %s469 = sphi 0, %s473
                  %p470 = scmp.ge.s32.totalorder %s469, 1
                  %s474 = sphi %s185, %s185
                  %s475 = sphi %s181, %s181
                $region61: #{convnetvis_forward.4} parent=50 // loop_header_branch
                  %472 = sbr.rel (%p470) target = $region65
                $region62: #{convnetvis_forward.4} parent=50 // loop_body
                  %v476 = vld [vmem:[%s474] sm:$0xf]
                  %477 = vst [vmem:[%s475] sm:$0xf] %v476
                  %v478 = vld [vmem:[%s474 + $0x4] sm:$0xf]
                  %479 = vst [vmem:[%s475 + $0x4] sm:$0xf] %v478
                  %v480 = vld [vmem:[%s474 + $0x8] sm:$0xf]
                  %481 = vst [vmem:[%s475 + $0x8] sm:$0xf] %v480
                  %v482 = vld [vmem:[%s474 + $0xc] sm:$0xf]
                  %483 = vst [vmem:[%s475 + $0xc] sm:$0xf] %v482
                  %v484 = vld [vmem:[%s474 + $0x10] sm:$0xf]
                  %485 = vst [vmem:[%s475 + $0x10] sm:$0xf] %v484
                  %v486 = vld [vmem:[%s474 + $0x14] sm:$0xf]
                  %487 = vst [vmem:[%s475 + $0x14] sm:$0xf] %v486
                  %v488 = vld [vmem:[%s474 + $0x18] sm:$0xf]
                  %489 = vst [vmem:[%s475 + $0x18] sm:$0xf] %v488
                  %v490 = vld [vmem:[%s474 + $0x1c] sm:$0xf]
                  %491 = vst [vmem:[%s475 + $0x1c] sm:$0xf] %v490
                  %v492 = vld [vmem:[%s474 + $0x20] sm:$0xf]
                  %493 = vst [vmem:[%s475 + $0x20] sm:$0xf] %v492
                  %v494 = vld [vmem:[%s474 + $0x24] sm:$0xf]
                  %495 = vst [vmem:[%s475 + $0x24] sm:$0xf] %v494
                  %v496 = vld [vmem:[%s474 + $0x28] sm:$0xf]
                  %497 = vst [vmem:[%s475 + $0x28] sm:$0xf] %v496
                  %v498 = vld [vmem:[%s474 + $0x2c] sm:$0xf]
                  %499 = vst [vmem:[%s475 + $0x2c] sm:$0xf] %v498
                  %v500 = vld [vmem:[%s474 + $0x30] sm:$0xf]
                  %501 = vst [vmem:[%s475 + $0x30] sm:$0xf] %v500
                  %v502 = vld [vmem:[%s474 + $0x34] sm:$0xf]
                  %503 = vst [vmem:[%s475 + $0x34] sm:$0xf] %v502
                  %v504 = vld [vmem:[%s474 + $0x38] sm:$0xf]
                  %505 = vst [vmem:[%s475 + $0x38] sm:$0xf] %v504
                  %v506 = vld [vmem:[%s474 + $0x3c] sm:$0xf]
                  %507 = vst [vmem:[%s475 + $0x3c] sm:$0xf] %v506
                  %v508 = vld [vmem:[%s474 + $0x40] sm:$0xf]
                  %509 = vst [vmem:[%s475 + $0x40] sm:$0xf] %v508
                  %v510 = vld [vmem:[%s474 + $0x44] sm:$0xf]
                  %511 = vst [vmem:[%s475 + $0x44] sm:$0xf] %v510
                  %v512 = vld [vmem:[%s474 + $0x48] sm:$0xf]
                  %513 = vst [vmem:[%s475 + $0x48] sm:$0xf] %v512
                  %v514 = vld [vmem:[%s474 + $0x4c] sm:$0xf]
                  %515 = vst [vmem:[%s475 + $0x4c] sm:$0xf] %v514
                  %v516 = vld [vmem:[%s474 + $0x50] sm:$0xf]
                  %517 = vst [vmem:[%s475 + $0x50] sm:$0xf] %v516
                  %v518 = vld [vmem:[%s474 + $0x54] sm:$0xf]
                  %519 = vst [vmem:[%s475 + $0x54] sm:$0xf] %v518
                  %v520 = vld [vmem:[%s474 + $0x58] sm:$0xf]
                  %521 = vst [vmem:[%s475 + $0x58] sm:$0xf] %v520
                  %v522 = vld [vmem:[%s474 + $0x5c] sm:$0xf]
                  %523 = vst [vmem:[%s475 + $0x5c] sm:$0xf] %v522
                  %v524 = vld [vmem:[%s474 + $0x60] sm:$0xf]
                  %525 = vst [vmem:[%s475 + $0x60] sm:$0xf] %v524
                  %v526 = vld [vmem:[%s474 + $0x64] sm:$0xf]
                  %527 = vst [vmem:[%s475 + $0x64] sm:$0xf] %v526
                  %v528 = vld [vmem:[%s474 + $0x68] sm:$0xf]
                  %529 = vst [vmem:[%s475 + $0x68] sm:$0xf] %v528
                  %v530 = vld [vmem:[%s474 + $0x6c] sm:$0xf]
                  %531 = vst [vmem:[%s475 + $0x6c] sm:$0xf] %v530
                  %v532 = vld [vmem:[%s474 + $0x70] sm:$0xf]
                  %533 = vst [vmem:[%s475 + $0x70] sm:$0xf] %v532
                  %v534 = vld [vmem:[%s474 + $0x74] sm:$0xf]
                  %535 = vst [vmem:[%s475 + $0x74] sm:$0xf] %v534
                  %v536 = vld [vmem:[%s474 + $0x78] sm:$0xf]
                  %537 = vst [vmem:[%s475 + $0x78] sm:$0xf] %v536
                  %v538 = vld [vmem:[%s474 + $0x7c] sm:$0xf]
                  %539 = vst [vmem:[%s475 + $0x7c] sm:$0xf] %v538
                  %v540 = vld [vmem:[%s474 + $0x100] sm:$0xf]
                  %541 = vst [vmem:[%s475 + $0x80] sm:$0xf] %v540
                  %v542 = vld [vmem:[%s474 + $0x104] sm:$0xf]
                  %543 = vst [vmem:[%s475 + $0x84] sm:$0xf] %v542
                  %v544 = vld [vmem:[%s474 + $0x108] sm:$0xf]
                  %545 = vst [vmem:[%s475 + $0x88] sm:$0xf] %v544
                  %v546 = vld [vmem:[%s474 + $0x10c] sm:$0xf]
                  %547 = vst [vmem:[%s475 + $0x8c] sm:$0xf] %v546
                  %v548 = vld [vmem:[%s474 + $0x110] sm:$0xf]
                  %549 = vst [vmem:[%s475 + $0x90] sm:$0xf] %v548
                  %v550 = vld [vmem:[%s474 + $0x114] sm:$0xf]
                  %551 = vst [vmem:[%s475 + $0x94] sm:$0xf] %v550
                  %v552 = vld [vmem:[%s474 + $0x118] sm:$0xf]
                  %553 = vst [vmem:[%s475 + $0x98] sm:$0xf] %v552
                  %v554 = vld [vmem:[%s474 + $0x11c] sm:$0xf]
                  %555 = vst [vmem:[%s475 + $0x9c] sm:$0xf] %v554
                  %v556 = vld [vmem:[%s474 + $0x120] sm:$0xf]
                  %557 = vst [vmem:[%s475 + $0xa0] sm:$0xf] %v556
                  %v558 = vld [vmem:[%s474 + $0x124] sm:$0xf]
                  %559 = vst [vmem:[%s475 + $0xa4] sm:$0xf] %v558
                  %v560 = vld [vmem:[%s474 + $0x128] sm:$0xf]
                  %561 = vst [vmem:[%s475 + $0xa8] sm:$0xf] %v560
                  %v562 = vld [vmem:[%s474 + $0x12c] sm:$0xf]
                  %563 = vst [vmem:[%s475 + $0xac] sm:$0xf] %v562
                  %v564 = vld [vmem:[%s474 + $0x130] sm:$0xf]
                  %565 = vst [vmem:[%s475 + $0xb0] sm:$0xf] %v564
                  %v566 = vld [vmem:[%s474 + $0x134] sm:$0xf]
                  %567 = vst [vmem:[%s475 + $0xb4] sm:$0xf] %v566
                  %v568 = vld [vmem:[%s474 + $0x138] sm:$0xf]
                  %569 = vst [vmem:[%s475 + $0xb8] sm:$0xf] %v568
                  %v570 = vld [vmem:[%s474 + $0x13c] sm:$0xf]
                  %571 = vst [vmem:[%s475 + $0xbc] sm:$0xf] %v570
                  %v572 = vld [vmem:[%s474 + $0x140] sm:$0xf]
                  %573 = vst [vmem:[%s475 + $0xc0] sm:$0xf] %v572
                  %v574 = vld [vmem:[%s474 + $0x144] sm:$0xf]
                  %575 = vst [vmem:[%s475 + $0xc4] sm:$0xf] %v574
                  %v576 = vld [vmem:[%s474 + $0x148] sm:$0xf]
                  %577 = vst [vmem:[%s475 + $0xc8] sm:$0xf] %v576
                  %v578 = vld [vmem:[%s474 + $0x14c] sm:$0xf]
                  %579 = vst [vmem:[%s475 + $0xcc] sm:$0xf] %v578
                  %v580 = vld [vmem:[%s474 + $0x150] sm:$0xf]
                  %581 = vst [vmem:[%s475 + $0xd0] sm:$0xf] %v580
                  %v582 = vld [vmem:[%s474 + $0x154] sm:$0xf]
                  %583 = vst [vmem:[%s475 + $0xd4] sm:$0xf] %v582
                  %v584 = vld [vmem:[%s474 + $0x158] sm:$0xf]
                  %585 = vst [vmem:[%s475 + $0xd8] sm:$0xf] %v584
                  %v586 = vld [vmem:[%s474 + $0x15c] sm:$0xf]
                  %587 = vst [vmem:[%s475 + $0xdc] sm:$0xf] %v586
                  %v588 = vld [vmem:[%s474 + $0x160] sm:$0xf]
                  %589 = vst [vmem:[%s475 + $0xe0] sm:$0xf] %v588
                  %v590 = vld [vmem:[%s474 + $0x164] sm:$0xf]
                  %591 = vst [vmem:[%s475 + $0xe4] sm:$0xf] %v590
                  %v592 = vld [vmem:[%s474 + $0x168] sm:$0xf]
                  %593 = vst [vmem:[%s475 + $0xe8] sm:$0xf] %v592
                  %v594 = vld [vmem:[%s474 + $0x16c] sm:$0xf]
                  %595 = vst [vmem:[%s475 + $0xec] sm:$0xf] %v594
                  %v596 = vld [vmem:[%s474 + $0x170] sm:$0xf]
                  %597 = vst [vmem:[%s475 + $0xf0] sm:$0xf] %v596
                  %v598 = vld [vmem:[%s474 + $0x174] sm:$0xf]
                  %599 = vst [vmem:[%s475 + $0xf4] sm:$0xf] %v598
                  %v600 = vld [vmem:[%s474 + $0x178] sm:$0xf]
                  %601 = vst [vmem:[%s475 + $0xf8] sm:$0xf] %v600
                  %v602 = vld [vmem:[%s474 + $0x17c] sm:$0xf]
                  %603 = vst [vmem:[%s475 + $0xfc] sm:$0xf] %v602
                  %v604 = vld [vmem:[%s474 + $0x200] sm:$0xf]
                  %605 = vst [vmem:[%s475 + $0x100] sm:$0xf] %v604
                  %v606 = vld [vmem:[%s474 + $0x204] sm:$0xf]
                  %607 = vst [vmem:[%s475 + $0x104] sm:$0xf] %v606
                  %v608 = vld [vmem:[%s474 + $0x208] sm:$0xf]
                  %609 = vst [vmem:[%s475 + $0x108] sm:$0xf] %v608
                  %v610 = vld [vmem:[%s474 + $0x20c] sm:$0xf]
                  %611 = vst [vmem:[%s475 + $0x10c] sm:$0xf] %v610
                  %v612 = vld [vmem:[%s474 + $0x210] sm:$0xf]
                  %613 = vst [vmem:[%s475 + $0x110] sm:$0xf] %v612
                  %v614 = vld [vmem:[%s474 + $0x214] sm:$0xf]
                  %615 = vst [vmem:[%s475 + $0x114] sm:$0xf] %v614
                  %v616 = vld [vmem:[%s474 + $0x218] sm:$0xf]
                  %617 = vst [vmem:[%s475 + $0x118] sm:$0xf] %v616
                  %v618 = vld [vmem:[%s474 + $0x21c] sm:$0xf]
                  %619 = vst [vmem:[%s475 + $0x11c] sm:$0xf] %v618
                  %v620 = vld [vmem:[%s474 + $0x220] sm:$0xf]
                  %621 = vst [vmem:[%s475 + $0x120] sm:$0xf] %v620
                  %v622 = vld [vmem:[%s474 + $0x224] sm:$0xf]
                  %623 = vst [vmem:[%s475 + $0x124] sm:$0xf] %v622
                  %v624 = vld [vmem:[%s474 + $0x228] sm:$0xf]
                  %625 = vst [vmem:[%s475 + $0x128] sm:$0xf] %v624
                  %v626 = vld [vmem:[%s474 + $0x22c] sm:$0xf]
                  %627 = vst [vmem:[%s475 + $0x12c] sm:$0xf] %v626
                  %v628 = vld [vmem:[%s474 + $0x230] sm:$0xf]
                  %629 = vst [vmem:[%s475 + $0x130] sm:$0xf] %v628
                  %v630 = vld [vmem:[%s474 + $0x234] sm:$0xf]
                  %631 = vst [vmem:[%s475 + $0x134] sm:$0xf] %v630
                  %v632 = vld [vmem:[%s474 + $0x238] sm:$0xf]
                  %633 = vst [vmem:[%s475 + $0x138] sm:$0xf] %v632
                  %v634 = vld [vmem:[%s474 + $0x23c] sm:$0xf]
                  %635 = vst [vmem:[%s475 + $0x13c] sm:$0xf] %v634
                  %v636 = vld [vmem:[%s474 + $0x240] sm:$0xf]
                  %637 = vst [vmem:[%s475 + $0x140] sm:$0xf] %v636
                  %v638 = vld [vmem:[%s474 + $0x244] sm:$0xf]
                  %639 = vst [vmem:[%s475 + $0x144] sm:$0xf] %v638
                  %v640 = vld [vmem:[%s474 + $0x248] sm:$0xf]
                  %641 = vst [vmem:[%s475 + $0x148] sm:$0xf] %v640
                  %v642 = vld [vmem:[%s474 + $0x24c] sm:$0xf]
                  %643 = vst [vmem:[%s475 + $0x14c] sm:$0xf] %v642
                  %v644 = vld [vmem:[%s474 + $0x250] sm:$0xf]
                  %645 = vst [vmem:[%s475 + $0x150] sm:$0xf] %v644
                  %v646 = vld [vmem:[%s474 + $0x254] sm:$0xf]
                  %647 = vst [vmem:[%s475 + $0x154] sm:$0xf] %v646
                  %v648 = vld [vmem:[%s474 + $0x258] sm:$0xf]
                  %649 = vst [vmem:[%s475 + $0x158] sm:$0xf] %v648
                  %v650 = vld [vmem:[%s474 + $0x25c] sm:$0xf]
                  %651 = vst [vmem:[%s475 + $0x15c] sm:$0xf] %v650
                  %v652 = vld [vmem:[%s474 + $0x260] sm:$0xf]
                  %653 = vst [vmem:[%s475 + $0x160] sm:$0xf] %v652
                  %v654 = vld [vmem:[%s474 + $0x264] sm:$0xf]
                  %655 = vst [vmem:[%s475 + $0x164] sm:$0xf] %v654
                  %v656 = vld [vmem:[%s474 + $0x268] sm:$0xf]
                  %657 = vst [vmem:[%s475 + $0x168] sm:$0xf] %v656
                  %v658 = vld [vmem:[%s474 + $0x26c] sm:$0xf]
                  %659 = vst [vmem:[%s475 + $0x16c] sm:$0xf] %v658
                  %v660 = vld [vmem:[%s474 + $0x270] sm:$0xf]
                  %661 = vst [vmem:[%s475 + $0x170] sm:$0xf] %v660
                  %v662 = vld [vmem:[%s474 + $0x274] sm:$0xf]
                  %663 = vst [vmem:[%s475 + $0x174] sm:$0xf] %v662
                  %v664 = vld [vmem:[%s474 + $0x278] sm:$0xf]
                  %665 = vst [vmem:[%s475 + $0x178] sm:$0xf] %v664
                  %v666 = vld [vmem:[%s474 + $0x27c] sm:$0xf]
                  %667 = vst [vmem:[%s475 + $0x17c] sm:$0xf] %v666
                  %v668 = vld [vmem:[%s474 + $0x300] sm:$0xf]
                  %669 = vst [vmem:[%s475 + $0x180] sm:$0xf] %v668
                  %v670 = vld [vmem:[%s474 + $0x304] sm:$0xf]
                  %671 = vst [vmem:[%s475 + $0x184] sm:$0xf] %v670
                  %v672 = vld [vmem:[%s474 + $0x308] sm:$0xf]
                  %673 = vst [vmem:[%s475 + $0x188] sm:$0xf] %v672
                  %v674 = vld [vmem:[%s474 + $0x30c] sm:$0xf]
                  %675 = vst [vmem:[%s475 + $0x18c] sm:$0xf] %v674
                  %v676 = vld [vmem:[%s474 + $0x310] sm:$0xf]
                  %677 = vst [vmem:[%s475 + $0x190] sm:$0xf] %v676
                  %v678 = vld [vmem:[%s474 + $0x314] sm:$0xf]
                  %679 = vst [vmem:[%s475 + $0x194] sm:$0xf] %v678
                  %v680 = vld [vmem:[%s474 + $0x318] sm:$0xf]
                  %681 = vst [vmem:[%s475 + $0x198] sm:$0xf] %v680
                  %v682 = vld [vmem:[%s474 + $0x31c] sm:$0xf]
                  %683 = vst [vmem:[%s475 + $0x19c] sm:$0xf] %v682
                  %v684 = vld [vmem:[%s474 + $0x320] sm:$0xf]
                  %685 = vst [vmem:[%s475 + $0x1a0] sm:$0xf] %v684
                  %v686 = vld [vmem:[%s474 + $0x324] sm:$0xf]
                  %687 = vst [vmem:[%s475 + $0x1a4] sm:$0xf] %v686
                  %v688 = vld [vmem:[%s474 + $0x328] sm:$0xf]
                  %689 = vst [vmem:[%s475 + $0x1a8] sm:$0xf] %v688
                  %v690 = vld [vmem:[%s474 + $0x32c] sm:$0xf]
                  %691 = vst [vmem:[%s475 + $0x1ac] sm:$0xf] %v690
                  %v692 = vld [vmem:[%s474 + $0x330] sm:$0xf]
                  %693 = vst [vmem:[%s475 + $0x1b0] sm:$0xf] %v692
                  %v694 = vld [vmem:[%s474 + $0x334] sm:$0xf]
                  %695 = vst [vmem:[%s475 + $0x1b4] sm:$0xf] %v694
                  %v696 = vld [vmem:[%s474 + $0x338] sm:$0xf]
                  %697 = vst [vmem:[%s475 + $0x1b8] sm:$0xf] %v696
                  %v698 = vld [vmem:[%s474 + $0x33c] sm:$0xf]
                  %699 = vst [vmem:[%s475 + $0x1bc] sm:$0xf] %v698
                  %v700 = vld [vmem:[%s474 + $0x340] sm:$0xf]
                  %701 = vst [vmem:[%s475 + $0x1c0] sm:$0xf] %v700
                  %v702 = vld [vmem:[%s474 + $0x344] sm:$0xf]
                  %703 = vst [vmem:[%s475 + $0x1c4] sm:$0xf] %v702
                  %v704 = vld [vmem:[%s474 + $0x348] sm:$0xf]
                  %705 = vst [vmem:[%s475 + $0x1c8] sm:$0xf] %v704
                  %v706 = vld [vmem:[%s474 + $0x34c] sm:$0xf]
                  %707 = vst [vmem:[%s475 + $0x1cc] sm:$0xf] %v706
                  %v708 = vld [vmem:[%s474 + $0x350] sm:$0xf]
                  %709 = vst [vmem:[%s475 + $0x1d0] sm:$0xf] %v708
                  %v710 = vld [vmem:[%s474 + $0x354] sm:$0xf]
                  %711 = vst [vmem:[%s475 + $0x1d4] sm:$0xf] %v710
                  %v712 = vld [vmem:[%s474 + $0x358] sm:$0xf]
                  %713 = vst [vmem:[%s475 + $0x1d8] sm:$0xf] %v712
                  %v714 = vld [vmem:[%s474 + $0x35c] sm:$0xf]
                  %715 = vst [vmem:[%s475 + $0x1dc] sm:$0xf] %v714
                  %v716 = vld [vmem:[%s474 + $0x360] sm:$0xf]
                  %717 = vst [vmem:[%s475 + $0x1e0] sm:$0xf] %v716
                  %v718 = vld [vmem:[%s474 + $0x364] sm:$0xf]
                  %719 = vst [vmem:[%s475 + $0x1e4] sm:$0xf] %v718
                  %v720 = vld [vmem:[%s474 + $0x368] sm:$0xf]
                  %721 = vst [vmem:[%s475 + $0x1e8] sm:$0xf] %v720
                  %v722 = vld [vmem:[%s474 + $0x36c] sm:$0xf]
                  %723 = vst [vmem:[%s475 + $0x1ec] sm:$0xf] %v722
                  %v724 = vld [vmem:[%s474 + $0x370] sm:$0xf]
                  %725 = vst [vmem:[%s475 + $0x1f0] sm:$0xf] %v724
                  %v726 = vld [vmem:[%s474 + $0x374] sm:$0xf]
                  %727 = vst [vmem:[%s475 + $0x1f4] sm:$0xf] %v726
                  %v728 = vld [vmem:[%s474 + $0x378] sm:$0xf]
                  %729 = vst [vmem:[%s475 + $0x1f8] sm:$0xf] %v728
                  %v730 = vld [vmem:[%s474 + $0x37c] sm:$0xf]
                  %731 = vst [vmem:[%s475 + $0x1fc] sm:$0xf] %v730
                $region63: #{convnetvis_forward.4} parent=50 // loop_footer
                  %s473 = sadd.s32 1, %s469
                $region64: #{convnetvis_forward.4} parent=50 // loop_footer_branch
                  %468 = sbr.rel target = $region60
                $region65: #{convnetvis_forward.4} parent=50 // loop_exit
                  _
              $region51: #{convnetvis_forward.4} parent=35 // pred_fallthru
                _
            $region36: #{convnetvis_forward.4} parent=31 // pred_fallthru
              _
            // Predicated region
            $region37: #{convnetvis_forward.4} parent=31 // pred_check
              _
            $region38: #{convnetvis_forward.4} parent=31 // pred_check_branch
              %191 = sbr.rel (0) target = $region40
            $region39: #{convnetvis_forward.4} parent=31 // pred_region
              loop: start=0, step=1, limit=1
              $region41: #{convnetvis_forward.4} parent=39 // loop_pre_header
                _
              $region42: #{convnetvis_forward.4} parent=39 // loop_header
                %s194 = sphi 0, %s198
                %p195 = scmp.ge.s32.totalorder %s194, 1
                %s199 = sphi %s185, %s185
                %s200 = sphi %s181, %s181
              $region43: #{convnetvis_forward.4} parent=39 // loop_header_branch
                %197 = sbr.rel (%p195) target = $region47
              $region44: #{convnetvis_forward.4} parent=39 // loop_body
                %v201 = vld [vmem:[%s199] sm:$0xf]
                %202 = vst [vmem:[%s200] sm:$0xf] %v201
                %v203 = vld [vmem:[%s199 + $0x4] sm:$0xf]
                %204 = vst [vmem:[%s200 + $0x4] sm:$0xf] %v203
                %v205 = vld [vmem:[%s199 + $0x8] sm:$0xf]
                %206 = vst [vmem:[%s200 + $0x8] sm:$0xf] %v205
                %v207 = vld [vmem:[%s199 + $0xc] sm:$0xf]
                %208 = vst [vmem:[%s200 + $0xc] sm:$0xf] %v207
                %v209 = vld [vmem:[%s199 + $0x10] sm:$0xf]
                %210 = vst [vmem:[%s200 + $0x10] sm:$0xf] %v209
                %v211 = vld [vmem:[%s199 + $0x14] sm:$0xf]
                %212 = vst [vmem:[%s200 + $0x14] sm:$0xf] %v211
                %v213 = vld [vmem:[%s199 + $0x18] sm:$0xf]
                %214 = vst [vmem:[%s200 + $0x18] sm:$0xf] %v213
                %v215 = vld [vmem:[%s199 + $0x1c] sm:$0xf]
                %216 = vst [vmem:[%s200 + $0x1c] sm:$0xf] %v215
                %v217 = vld [vmem:[%s199 + $0x20] sm:$0xf]
                %218 = vst [vmem:[%s200 + $0x20] sm:$0xf] %v217
                %v219 = vld [vmem:[%s199 + $0x24] sm:$0xf]
                %220 = vst [vmem:[%s200 + $0x24] sm:$0xf] %v219
                %v221 = vld [vmem:[%s199 + $0x28] sm:$0xf]
                %222 = vst [vmem:[%s200 + $0x28] sm:$0xf] %v221
                %v223 = vld [vmem:[%s199 + $0x2c] sm:$0xf]
                %224 = vst [vmem:[%s200 + $0x2c] sm:$0xf] %v223
                %v225 = vld [vmem:[%s199 + $0x30] sm:$0xf]
                %226 = vst [vmem:[%s200 + $0x30] sm:$0xf] %v225
                %v227 = vld [vmem:[%s199 + $0x34] sm:$0xf]
                %228 = vst [vmem:[%s200 + $0x34] sm:$0xf] %v227
                %v229 = vld [vmem:[%s199 + $0x38] sm:$0xf]
                %230 = vst [vmem:[%s200 + $0x38] sm:$0xf] %v229
                %v231 = vld [vmem:[%s199 + $0x3c] sm:$0xf]
                %232 = vst [vmem:[%s200 + $0x3c] sm:$0xf] %v231
                %v233 = vld [vmem:[%s199 + $0x40] sm:$0xf]
                %234 = vst [vmem:[%s200 + $0x40] sm:$0xf] %v233
                %v235 = vld [vmem:[%s199 + $0x44] sm:$0xf]
                %236 = vst [vmem:[%s200 + $0x44] sm:$0xf] %v235
                %v237 = vld [vmem:[%s199 + $0x48] sm:$0xf]
                %238 = vst [vmem:[%s200 + $0x48] sm:$0xf] %v237
                %v239 = vld [vmem:[%s199 + $0x4c] sm:$0xf]
                %240 = vst [vmem:[%s200 + $0x4c] sm:$0xf] %v239
                %v241 = vld [vmem:[%s199 + $0x50] sm:$0xf]
                %242 = vst [vmem:[%s200 + $0x50] sm:$0xf] %v241
                %v243 = vld [vmem:[%s199 + $0x54] sm:$0xf]
                %244 = vst [vmem:[%s200 + $0x54] sm:$0xf] %v243
                %v245 = vld [vmem:[%s199 + $0x58] sm:$0xf]
                %246 = vst [vmem:[%s200 + $0x58] sm:$0xf] %v245
                %v247 = vld [vmem:[%s199 + $0x5c] sm:$0xf]
                %248 = vst [vmem:[%s200 + $0x5c] sm:$0xf] %v247
                %v249 = vld [vmem:[%s199 + $0x60] sm:$0xf]
                %250 = vst [vmem:[%s200 + $0x60] sm:$0xf] %v249
                %v251 = vld [vmem:[%s199 + $0x64] sm:$0xf]
                %252 = vst [vmem:[%s200 + $0x64] sm:$0xf] %v251
                %v253 = vld [vmem:[%s199 + $0x68] sm:$0xf]
                %254 = vst [vmem:[%s200 + $0x68] sm:$0xf] %v253
                %v255 = vld [vmem:[%s199 + $0x6c] sm:$0xf]
                %256 = vst [vmem:[%s200 + $0x6c] sm:$0xf] %v255
                %v257 = vld [vmem:[%s199 + $0x70] sm:$0xf]
                %258 = vst [vmem:[%s200 + $0x70] sm:$0xf] %v257
                %v259 = vld [vmem:[%s199 + $0x74] sm:$0xf]
                %260 = vst [vmem:[%s200 + $0x74] sm:$0xf] %v259
                %v261 = vld [vmem:[%s199 + $0x78] sm:$0xf]
                %262 = vst [vmem:[%s200 + $0x78] sm:$0xf] %v261
                %v263 = vld [vmem:[%s199 + $0x7c] sm:$0xf]
                %264 = vst [vmem:[%s200 + $0x7c] sm:$0xf] %v263
                %v265 = vld [vmem:[%s199 + $0x100] sm:$0xf]
                %266 = vst [vmem:[%s200 + $0x80] sm:$0xf] %v265
                %v267 = vld [vmem:[%s199 + $0x104] sm:$0xf]
                %268 = vst [vmem:[%s200 + $0x84] sm:$0xf] %v267
                %v269 = vld [vmem:[%s199 + $0x108] sm:$0xf]
                %270 = vst [vmem:[%s200 + $0x88] sm:$0xf] %v269
                %v271 = vld [vmem:[%s199 + $0x10c] sm:$0xf]
                %272 = vst [vmem:[%s200 + $0x8c] sm:$0xf] %v271
                %v273 = vld [vmem:[%s199 + $0x110] sm:$0xf]
                %274 = vst [vmem:[%s200 + $0x90] sm:$0xf] %v273
                %v275 = vld [vmem:[%s199 + $0x114] sm:$0xf]
                %276 = vst [vmem:[%s200 + $0x94] sm:$0xf] %v275
                %v277 = vld [vmem:[%s199 + $0x118] sm:$0xf]
                %278 = vst [vmem:[%s200 + $0x98] sm:$0xf] %v277
                %v279 = vld [vmem:[%s199 + $0x11c] sm:$0xf]
                %280 = vst [vmem:[%s200 + $0x9c] sm:$0xf] %v279
                %v281 = vld [vmem:[%s199 + $0x120] sm:$0xf]
                %282 = vst [vmem:[%s200 + $0xa0] sm:$0xf] %v281
                %v283 = vld [vmem:[%s199 + $0x124] sm:$0xf]
                %284 = vst [vmem:[%s200 + $0xa4] sm:$0xf] %v283
                %v285 = vld [vmem:[%s199 + $0x128] sm:$0xf]
                %286 = vst [vmem:[%s200 + $0xa8] sm:$0xf] %v285
                %v287 = vld [vmem:[%s199 + $0x12c] sm:$0xf]
                %288 = vst [vmem:[%s200 + $0xac] sm:$0xf] %v287
                %v289 = vld [vmem:[%s199 + $0x130] sm:$0xf]
                %290 = vst [vmem:[%s200 + $0xb0] sm:$0xf] %v289
                %v291 = vld [vmem:[%s199 + $0x134] sm:$0xf]
                %292 = vst [vmem:[%s200 + $0xb4] sm:$0xf] %v291
                %v293 = vld [vmem:[%s199 + $0x138] sm:$0xf]
                %294 = vst [vmem:[%s200 + $0xb8] sm:$0xf] %v293
                %v295 = vld [vmem:[%s199 + $0x13c] sm:$0xf]
                %296 = vst [vmem:[%s200 + $0xbc] sm:$0xf] %v295
                %v297 = vld [vmem:[%s199 + $0x140] sm:$0xf]
                %298 = vst [vmem:[%s200 + $0xc0] sm:$0xf] %v297
                %v299 = vld [vmem:[%s199 + $0x144] sm:$0xf]
                %300 = vst [vmem:[%s200 + $0xc4] sm:$0xf] %v299
                %v301 = vld [vmem:[%s199 + $0x148] sm:$0xf]
                %302 = vst [vmem:[%s200 + $0xc8] sm:$0xf] %v301
                %v303 = vld [vmem:[%s199 + $0x14c] sm:$0xf]
                %304 = vst [vmem:[%s200 + $0xcc] sm:$0xf] %v303
                %v305 = vld [vmem:[%s199 + $0x150] sm:$0xf]
                %306 = vst [vmem:[%s200 + $0xd0] sm:$0xf] %v305
                %v307 = vld [vmem:[%s199 + $0x154] sm:$0xf]
                %308 = vst [vmem:[%s200 + $0xd4] sm:$0xf] %v307
                %v309 = vld [vmem:[%s199 + $0x158] sm:$0xf]
                %310 = vst [vmem:[%s200 + $0xd8] sm:$0xf] %v309
                %v311 = vld [vmem:[%s199 + $0x15c] sm:$0xf]
                %312 = vst [vmem:[%s200 + $0xdc] sm:$0xf] %v311
                %v313 = vld [vmem:[%s199 + $0x160] sm:$0xf]
                %314 = vst [vmem:[%s200 + $0xe0] sm:$0xf] %v313
                %v315 = vld [vmem:[%s199 + $0x164] sm:$0xf]
                %316 = vst [vmem:[%s200 + $0xe4] sm:$0xf] %v315
                %v317 = vld [vmem:[%s199 + $0x168] sm:$0xf]
                %318 = vst [vmem:[%s200 + $0xe8] sm:$0xf] %v317
                %v319 = vld [vmem:[%s199 + $0x16c] sm:$0xf]
                %320 = vst [vmem:[%s200 + $0xec] sm:$0xf] %v319
                %v321 = vld [vmem:[%s199 + $0x170] sm:$0xf]
                %322 = vst [vmem:[%s200 + $0xf0] sm:$0xf] %v321
                %v323 = vld [vmem:[%s199 + $0x174] sm:$0xf]
                %324 = vst [vmem:[%s200 + $0xf4] sm:$0xf] %v323
                %v325 = vld [vmem:[%s199 + $0x178] sm:$0xf]
                %326 = vst [vmem:[%s200 + $0xf8] sm:$0xf] %v325
                %v327 = vld [vmem:[%s199 + $0x17c] sm:$0xf]
                %328 = vst [vmem:[%s200 + $0xfc] sm:$0xf] %v327
                %v329 = vld [vmem:[%s199 + $0x200] sm:$0xf]
                %330 = vst [vmem:[%s200 + $0x100] sm:$0xf] %v329
                %v331 = vld [vmem:[%s199 + $0x204] sm:$0xf]
                %332 = vst [vmem:[%s200 + $0x104] sm:$0xf] %v331
                %v333 = vld [vmem:[%s199 + $0x208] sm:$0xf]
                %334 = vst [vmem:[%s200 + $0x108] sm:$0xf] %v333
                %v335 = vld [vmem:[%s199 + $0x20c] sm:$0xf]
                %336 = vst [vmem:[%s200 + $0x10c] sm:$0xf] %v335
                %v337 = vld [vmem:[%s199 + $0x210] sm:$0xf]
                %338 = vst [vmem:[%s200 + $0x110] sm:$0xf] %v337
                %v339 = vld [vmem:[%s199 + $0x214] sm:$0xf]
                %340 = vst [vmem:[%s200 + $0x114] sm:$0xf] %v339
                %v341 = vld [vmem:[%s199 + $0x218] sm:$0xf]
                %342 = vst [vmem:[%s200 + $0x118] sm:$0xf] %v341
                %v343 = vld [vmem:[%s199 + $0x21c] sm:$0xf]
                %344 = vst [vmem:[%s200 + $0x11c] sm:$0xf] %v343
                %v345 = vld [vmem:[%s199 + $0x220] sm:$0xf]
                %346 = vst [vmem:[%s200 + $0x120] sm:$0xf] %v345
                %v347 = vld [vmem:[%s199 + $0x224] sm:$0xf]
                %348 = vst [vmem:[%s200 + $0x124] sm:$0xf] %v347
                %v349 = vld [vmem:[%s199 + $0x228] sm:$0xf]
                %350 = vst [vmem:[%s200 + $0x128] sm:$0xf] %v349
                %v351 = vld [vmem:[%s199 + $0x22c] sm:$0xf]
                %352 = vst [vmem:[%s200 + $0x12c] sm:$0xf] %v351
                %v353 = vld [vmem:[%s199 + $0x230] sm:$0xf]
                %354 = vst [vmem:[%s200 + $0x130] sm:$0xf] %v353
                %v355 = vld [vmem:[%s199 + $0x234] sm:$0xf]
                %356 = vst [vmem:[%s200 + $0x134] sm:$0xf] %v355
                %v357 = vld [vmem:[%s199 + $0x238] sm:$0xf]
                %358 = vst [vmem:[%s200 + $0x138] sm:$0xf] %v357
                %v359 = vld [vmem:[%s199 + $0x23c] sm:$0xf]
                %360 = vst [vmem:[%s200 + $0x13c] sm:$0xf] %v359
                %v361 = vld [vmem:[%s199 + $0x240] sm:$0xf]
                %362 = vst [vmem:[%s200 + $0x140] sm:$0xf] %v361
                %v363 = vld [vmem:[%s199 + $0x244] sm:$0xf]
                %364 = vst [vmem:[%s200 + $0x144] sm:$0xf] %v363
                %v365 = vld [vmem:[%s199 + $0x248] sm:$0xf]
                %366 = vst [vmem:[%s200 + $0x148] sm:$0xf] %v365
                %v367 = vld [vmem:[%s199 + $0x24c] sm:$0xf]
                %368 = vst [vmem:[%s200 + $0x14c] sm:$0xf] %v367
                %v369 = vld [vmem:[%s199 + $0x250] sm:$0xf]
                %370 = vst [vmem:[%s200 + $0x150] sm:$0xf] %v369
                %v371 = vld [vmem:[%s199 + $0x254] sm:$0xf]
                %372 = vst [vmem:[%s200 + $0x154] sm:$0xf] %v371
                %v373 = vld [vmem:[%s199 + $0x258] sm:$0xf]
                %374 = vst [vmem:[%s200 + $0x158] sm:$0xf] %v373
                %v375 = vld [vmem:[%s199 + $0x25c] sm:$0xf]
                %376 = vst [vmem:[%s200 + $0x15c] sm:$0xf] %v375
                %v377 = vld [vmem:[%s199 + $0x260] sm:$0xf]
                %378 = vst [vmem:[%s200 + $0x160] sm:$0xf] %v377
                %v379 = vld [vmem:[%s199 + $0x264] sm:$0xf]
                %380 = vst [vmem:[%s200 + $0x164] sm:$0xf] %v379
                %v381 = vld [vmem:[%s199 + $0x268] sm:$0xf]
                %382 = vst [vmem:[%s200 + $0x168] sm:$0xf] %v381
                %v383 = vld [vmem:[%s199 + $0x26c] sm:$0xf]
                %384 = vst [vmem:[%s200 + $0x16c] sm:$0xf] %v383
                %v385 = vld [vmem:[%s199 + $0x270] sm:$0xf]
                %386 = vst [vmem:[%s200 + $0x170] sm:$0xf] %v385
                %v387 = vld [vmem:[%s199 + $0x274] sm:$0xf]
                %388 = vst [vmem:[%s200 + $0x174] sm:$0xf] %v387
                %v389 = vld [vmem:[%s199 + $0x278] sm:$0xf]
                %390 = vst [vmem:[%s200 + $0x178] sm:$0xf] %v389
                %v391 = vld [vmem:[%s199 + $0x27c] sm:$0xf]
                %392 = vst [vmem:[%s200 + $0x17c] sm:$0xf] %v391
                %v393 = vld [vmem:[%s199 + $0x300] sm:$0xf]
                %394 = vst [vmem:[%s200 + $0x180] sm:$0xf] %v393
                %v395 = vld [vmem:[%s199 + $0x304] sm:$0xf]
                %396 = vst [vmem:[%s200 + $0x184] sm:$0xf] %v395
                %v397 = vld [vmem:[%s199 + $0x308] sm:$0xf]
                %398 = vst [vmem:[%s200 + $0x188] sm:$0xf] %v397
                %v399 = vld [vmem:[%s199 + $0x30c] sm:$0xf]
                %400 = vst [vmem:[%s200 + $0x18c] sm:$0xf] %v399
                %v401 = vld [vmem:[%s199 + $0x310] sm:$0xf]
                %402 = vst [vmem:[%s200 + $0x190] sm:$0xf] %v401
                %v403 = vld [vmem:[%s199 + $0x314] sm:$0xf]
                %404 = vst [vmem:[%s200 + $0x194] sm:$0xf] %v403
                %v405 = vld [vmem:[%s199 + $0x318] sm:$0xf]
                %406 = vst [vmem:[%s200 + $0x198] sm:$0xf] %v405
                %v407 = vld [vmem:[%s199 + $0x31c] sm:$0xf]
                %408 = vst [vmem:[%s200 + $0x19c] sm:$0xf] %v407
                %v409 = vld [vmem:[%s199 + $0x320] sm:$0xf]
                %410 = vst [vmem:[%s200 + $0x1a0] sm:$0xf] %v409
                %v411 = vld [vmem:[%s199 + $0x324] sm:$0xf]
                %412 = vst [vmem:[%s200 + $0x1a4] sm:$0xf] %v411
                %v413 = vld [vmem:[%s199 + $0x328] sm:$0xf]
                %414 = vst [vmem:[%s200 + $0x1a8] sm:$0xf] %v413
                %v415 = vld [vmem:[%s199 + $0x32c] sm:$0xf]
                %416 = vst [vmem:[%s200 + $0x1ac] sm:$0xf] %v415
                %v417 = vld [vmem:[%s199 + $0x330] sm:$0xf]
                %418 = vst [vmem:[%s200 + $0x1b0] sm:$0xf] %v417
                %v419 = vld [vmem:[%s199 + $0x334] sm:$0xf]
                %420 = vst [vmem:[%s200 + $0x1b4] sm:$0xf] %v419
                %v421 = vld [vmem:[%s199 + $0x338] sm:$0xf]
                %422 = vst [vmem:[%s200 + $0x1b8] sm:$0xf] %v421
                %v423 = vld [vmem:[%s199 + $0x33c] sm:$0xf]
                %424 = vst [vmem:[%s200 + $0x1bc] sm:$0xf] %v423
                %v425 = vld [vmem:[%s199 + $0x340] sm:$0xf]
                %426 = vst [vmem:[%s200 + $0x1c0] sm:$0xf] %v425
                %v427 = vld [vmem:[%s199 + $0x344] sm:$0xf]
                %428 = vst [vmem:[%s200 + $0x1c4] sm:$0xf] %v427
                %v429 = vld [vmem:[%s199 + $0x348] sm:$0xf]
                %430 = vst [vmem:[%s200 + $0x1c8] sm:$0xf] %v429
                %v431 = vld [vmem:[%s199 + $0x34c] sm:$0xf]
                %432 = vst [vmem:[%s200 + $0x1cc] sm:$0xf] %v431
                %v433 = vld [vmem:[%s199 + $0x350] sm:$0xf]
                %434 = vst [vmem:[%s200 + $0x1d0] sm:$0xf] %v433
                %v435 = vld [vmem:[%s199 + $0x354] sm:$0xf]
                %436 = vst [vmem:[%s200 + $0x1d4] sm:$0xf] %v435
                %v437 = vld [vmem:[%s199 + $0x358] sm:$0xf]
                %438 = vst [vmem:[%s200 + $0x1d8] sm:$0xf] %v437
                %v439 = vld [vmem:[%s199 + $0x35c] sm:$0xf]
                %440 = vst [vmem:[%s200 + $0x1dc] sm:$0xf] %v439
                %v441 = vld [vmem:[%s199 + $0x360] sm:$0xf]
                %442 = vst [vmem:[%s200 + $0x1e0] sm:$0xf] %v441
                %v443 = vld [vmem:[%s199 + $0x364] sm:$0xf]
                %444 = vst [vmem:[%s200 + $0x1e4] sm:$0xf] %v443
                %v445 = vld [vmem:[%s199 + $0x368] sm:$0xf]
                %446 = vst [vmem:[%s200 + $0x1e8] sm:$0xf] %v445
                %v447 = vld [vmem:[%s199 + $0x36c] sm:$0xf]
                %448 = vst [vmem:[%s200 + $0x1ec] sm:$0xf] %v447
                %v449 = vld [vmem:[%s199 + $0x370] sm:$0xf]
                %450 = vst [vmem:[%s200 + $0x1f0] sm:$0xf] %v449
                %v451 = vld [vmem:[%s199 + $0x374] sm:$0xf]
                %452 = vst [vmem:[%s200 + $0x1f4] sm:$0xf] %v451
                %v453 = vld [vmem:[%s199 + $0x378] sm:$0xf]
                %454 = vst [vmem:[%s200 + $0x1f8] sm:$0xf] %v453
                %v455 = vld [vmem:[%s199 + $0x37c] sm:$0xf]
                %456 = vst [vmem:[%s200 + $0x1fc] sm:$0xf] %v455
              $region45: #{convnetvis_forward.4} parent=39 // loop_footer
                %s198 = sadd.s32 1, %s194
              $region46: #{convnetvis_forward.4} parent=39 // loop_footer_branch
                %193 = sbr.rel target = $region42
              $region47: #{convnetvis_forward.4} parent=39 // loop_exit
                _
            $region40: #{convnetvis_forward.4} parent=31 // pred_fallthru
              _
          $region32: #{convnetvis_forward.4} parent=27 // pred_fallthru
            _
          %732 = vnop
        $region28: #{convnetvis_forward.4} parent=23 // pred_fallthru
          _
      $region24: #{convnetvis_forward.4} parent=5 // pred_fallthru
        _
      %p733 = scmp.le.s32.totalorder 1, %s9
      %p734 = scmp.lt.s32.totalorder %s9, 3
      %p735 = pnand %p733, %p734
      %p736 = pneg %p735
      // Predicated region
      $region66: #{convnetvis_forward.4} parent=5 // pred_check
        _
      $region67: #{convnetvis_forward.4} parent=5 // pred_check_branch
        %738 = sbr.rel (%p735) target = $region69
      $region68: #{convnetvis_forward.4} parent=5 // pred_region
        %s739 = ssub.s32 %s9, 1
        %s740 = sand.u32 %s43, 1
        %s741 = sand.u32 %s43, 1
        %s742 = smul.addr %s741, 512
        %s743 = scalar_lea.vmem [#allocation3], %s742
        // Predicated region
        $region70: #{convnetvis_forward.4} parent=68 // pred_check
          %p744 = pneg %p56
        $region71: #{convnetvis_forward.4} parent=68 // pred_check_branch
          %746 = sbr.rel (%p744) target = $region73
        $region72: #{convnetvis_forward.4} parent=68 // pred_region
          _
        $region73: #{convnetvis_forward.4} parent=68 // pred_fallthru
          _
        %s747 = sand.u32 %s43, 1
        %s748 = sand.u32 %s43, 1
        %s749 = smul.addr %s748, 512
        %s750 = scalar_lea.vmem [#allocation3], %s749
        %p751 = pneg %p56
        %p752 = pneg %p53
        %s753 = smul.u32 16, %s21
        %p754 = scmp.lt.s32.totalorder %s753, 15
        %s755 = scalar_select %p754, %s753, 15
        %p756 = scmp.lt.s32.totalorder %s20, 0
        %s757 = scalar_select %p756, %s20, 0
        %s758 = sadd.s32 %s757, %s755
        %s759 = smul.addr %s758, 4
        %s760 = scalar_lea.vmem %s1, %s759
        %p761 = pneg %p84
        %p762 = pneg %p81
        %p763 = scmp.lt.s32.totalorder %s20, 0
        %s764 = scalar_select %p763, %s20, 0
        %s765 = scalar_lea.vmem %s2, %s764
        %p766 = pneg %p110
        %p767 = pneg %p107
        %p768 = pneg %p138
        %p769 = pneg %p135
        %s770 = smul.u32 32, %s19
        %p771 = scmp.lt.s32.totalorder %s770, 63
        %s772 = scalar_select %p771, %s770, 63
        %p773 = scmp.lt.s32.totalorder %s20, 0
        %s774 = scalar_select %p773, %s20, 0
        %s775 = sadd.s32 %s774, %s772
        %s776 = smul.addr %s775, 4
        %s777 = scalar_lea.vmem %s3, %s776
        %s778 = smul.u32 32, %s19
        %s779 = smul.u32 16, %s21
        %p780 = scmp.lt.s32.totalorder %s779, 15
        %s781 = scalar_select %p780, %s779, 15
        %p782 = scmp.lt.s32.totalorder %s20, 0
        %s783 = scalar_select %p782, %s20, 0
        %s784 = sadd.s32 %s783, %s781
        %s785 = smul.addr %s784, 4
        %s786 = scalar_lea.vmem %s1, %s785
        %s787 = smul.u32 16, %s21
        %p788 = scmp.lt.s32.totalorder %s20, 0
        %s789 = scalar_select %p788, %s20, 0
        %s790 = scalar_lea.vmem %s2, %s789
        %s791 = smul.u32 32, %s19
        %p792 = scmp.lt.s32.totalorder %s791, 63
        %s793 = scalar_select %p792, %s791, 63
        %p794 = scmp.lt.s32.totalorder %s20, 0
        %s795 = scalar_select %p794, %s20, 0
        %s796 = sadd.s32 %s795, %s793
        %s797 = smul.addr %s796, 4
        %s798 = scalar_lea.vmem %s3, %s797
        %s799 = smul.u32 32, %s19
        %p801 = scmp.eq.s32.totalorder %s21, 0
        // Predicated region
        $region74: #{convnetvis_forward.4} parent=68 // pred_check
          %p802 = pneg %p801
        $region75: #{convnetvis_forward.4} parent=68 // pred_check_branch
          %804 = sbr.rel (%p802) target = $region77
        $region76: #{convnetvis_forward.4} parent=68 // pred_region
          %vm805 = vcmask 523264
          %806 = vst.msk [vmem:[#allocation2] sm:$0xff] %vm805, 0.0
          %807 = vst.msk [vmem:[#allocation2 + $0x8] sm:$0xff] %vm805, 0.0
          %808 = vst.msk [vmem:[#allocation2 + $0x10] sm:$0xff] %vm805, 0.0
          %809 = vst.msk [vmem:[#allocation2 + $0x18] sm:$0xff] %vm805, 0.0
          %810 = vst.msk [vmem:[#allocation2 + $0x20] sm:$0xff] %vm805, 0.0
          %811 = vst.msk [vmem:[#allocation2 + $0x28] sm:$0xff] %vm805, 0.0
          %812 = vst.msk [vmem:[#allocation2 + $0x30] sm:$0xff] %vm805, 0.0
          %813 = vst.msk [vmem:[#allocation2 + $0x38] sm:$0xff] %vm805, 0.0
          %814 = vst.msk [vmem:[#allocation2 + $0x40] sm:$0xff] %vm805, 0.0
          %815 = vst.msk [vmem:[#allocation2 + $0x48] sm:$0xff] %vm805, 0.0
          %816 = vst.msk [vmem:[#allocation2 + $0x50] sm:$0xff] %vm805, 0.0
          %817 = vst.msk [vmem:[#allocation2 + $0x58] sm:$0xff] %vm805, 0.0
          %818 = vst.msk [vmem:[#allocation2 + $0x60] sm:$0xff] %vm805, 0.0
          %819 = vst.msk [vmem:[#allocation2 + $0x68] sm:$0xff] %vm805, 0.0
          %820 = vst.msk [vmem:[#allocation2 + $0x70] sm:$0xff] %vm805, 0.0
          %821 = vst.msk [vmem:[#allocation2 + $0x78] sm:$0xff] %vm805, 0.0
          %822 = vst.msk [vmem:[#allocation2 + $0x80] sm:$0xff] %vm805, 0.0
          %823 = vst.msk [vmem:[#allocation2 + $0x88] sm:$0xff] %vm805, 0.0
          %824 = vst.msk [vmem:[#allocation2 + $0x90] sm:$0xff] %vm805, 0.0
          %825 = vst.msk [vmem:[#allocation2 + $0x98] sm:$0xff] %vm805, 0.0
          %826 = vst.msk [vmem:[#allocation2 + $0xa0] sm:$0xff] %vm805, 0.0
          %827 = vst.msk [vmem:[#allocation2 + $0xa8] sm:$0xff] %vm805, 0.0
          %828 = vst.msk [vmem:[#allocation2 + $0xb0] sm:$0xff] %vm805, 0.0
          %829 = vst.msk [vmem:[#allocation2 + $0xb8] sm:$0xff] %vm805, 0.0
          %830 = vst.msk [vmem:[#allocation2 + $0xc0] sm:$0xff] %vm805, 0.0
          %831 = vst.msk [vmem:[#allocation2 + $0xc8] sm:$0xff] %vm805, 0.0
          %832 = vst.msk [vmem:[#allocation2 + $0xd0] sm:$0xff] %vm805, 0.0
          %833 = vst.msk [vmem:[#allocation2 + $0xd8] sm:$0xff] %vm805, 0.0
          %834 = vst.msk [vmem:[#allocation2 + $0xe0] sm:$0xff] %vm805, 0.0
          %835 = vst.msk [vmem:[#allocation2 + $0xe8] sm:$0xff] %vm805, 0.0
          %836 = vst.msk [vmem:[#allocation2 + $0xf0] sm:$0xff] %vm805, 0.0
          %837 = vst.msk [vmem:[#allocation2 + $0xf8] sm:$0xff] %vm805, 0.0
          %838 = vst.msk [vmem:[#allocation2 + $0x100] sm:$0xff] %vm805, 0.0
          %839 = vst.msk [vmem:[#allocation2 + $0x108] sm:$0xff] %vm805, 0.0
          %840 = vst.msk [vmem:[#allocation2 + $0x110] sm:$0xff] %vm805, 0.0
          %841 = vst.msk [vmem:[#allocation2 + $0x118] sm:$0xff] %vm805, 0.0
          %842 = vst.msk [vmem:[#allocation2 + $0x120] sm:$0xff] %vm805, 0.0
          %843 = vst.msk [vmem:[#allocation2 + $0x128] sm:$0xff] %vm805, 0.0
          %844 = vst.msk [vmem:[#allocation2 + $0x130] sm:$0xff] %vm805, 0.0
          %845 = vst.msk [vmem:[#allocation2 + $0x138] sm:$0xff] %vm805, 0.0
          %846 = vst.msk [vmem:[#allocation2 + $0x140] sm:$0xff] %vm805, 0.0
          %847 = vst.msk [vmem:[#allocation2 + $0x148] sm:$0xff] %vm805, 0.0
          %848 = vst.msk [vmem:[#allocation2 + $0x150] sm:$0xff] %vm805, 0.0
          %849 = vst.msk [vmem:[#allocation2 + $0x158] sm:$0xff] %vm805, 0.0
          %850 = vst.msk [vmem:[#allocation2 + $0x160] sm:$0xff] %vm805, 0.0
          %851 = vst.msk [vmem:[#allocation2 + $0x168] sm:$0xff] %vm805, 0.0
          %852 = vst.msk [vmem:[#allocation2 + $0x170] sm:$0xff] %vm805, 0.0
          %853 = vst.msk [vmem:[#allocation2 + $0x178] sm:$0xff] %vm805, 0.0
          %854 = vst.msk [vmem:[#allocation2 + $0x180] sm:$0xff] %vm805, 0.0
          %855 = vst.msk [vmem:[#allocation2 + $0x188] sm:$0xff] %vm805, 0.0
          %856 = vst.msk [vmem:[#allocation2 + $0x190] sm:$0xff] %vm805, 0.0
          %857 = vst.msk [vmem:[#allocation2 + $0x198] sm:$0xff] %vm805, 0.0
          %858 = vst.msk [vmem:[#allocation2 + $0x1a0] sm:$0xff] %vm805, 0.0
          %859 = vst.msk [vmem:[#allocation2 + $0x1a8] sm:$0xff] %vm805, 0.0
          %860 = vst.msk [vmem:[#allocation2 + $0x1b0] sm:$0xff] %vm805, 0.0
          %861 = vst.msk [vmem:[#allocation2 + $0x1b8] sm:$0xff] %vm805, 0.0
          %862 = vst.msk [vmem:[#allocation2 + $0x1c0] sm:$0xff] %vm805, 0.0
          %863 = vst.msk [vmem:[#allocation2 + $0x1c8] sm:$0xff] %vm805, 0.0
          %864 = vst.msk [vmem:[#allocation2 + $0x1d0] sm:$0xff] %vm805, 0.0
          %865 = vst.msk [vmem:[#allocation2 + $0x1d8] sm:$0xff] %vm805, 0.0
          %866 = vst.msk [vmem:[#allocation2 + $0x1e0] sm:$0xff] %vm805, 0.0
          %867 = vst.msk [vmem:[#allocation2 + $0x1e8] sm:$0xff] %vm805, 0.0
          %868 = vst.msk [vmem:[#allocation2 + $0x1f0] sm:$0xff] %vm805, 0.0
          %869 = vst.msk [vmem:[#allocation2 + $0x1f8] sm:$0xff] %vm805, 0.0
          %870 = vst.msk [vmem:[#allocation2 + $0x200] sm:$0xff] %vm805, 0.0
          %871 = vst.msk [vmem:[#allocation2 + $0x208] sm:$0xff] %vm805, 0.0
          %872 = vst.msk [vmem:[#allocation2 + $0x210] sm:$0xff] %vm805, 0.0
          %873 = vst.msk [vmem:[#allocation2 + $0x218] sm:$0xff] %vm805, 0.0
          %874 = vst.msk [vmem:[#allocation2 + $0x220] sm:$0xff] %vm805, 0.0
          %875 = vst.msk [vmem:[#allocation2 + $0x228] sm:$0xff] %vm805, 0.0
          %876 = vst.msk [vmem:[#allocation2 + $0x230] sm:$0xff] %vm805, 0.0
          %877 = vst.msk [vmem:[#allocation2 + $0x238] sm:$0xff] %vm805, 0.0
          %878 = vst.msk [vmem:[#allocation2 + $0x240] sm:$0xff] %vm805, 0.0
          %879 = vst.msk [vmem:[#allocation2 + $0x248] sm:$0xff] %vm805, 0.0
          %880 = vst.msk [vmem:[#allocation2 + $0x250] sm:$0xff] %vm805, 0.0
          %881 = vst.msk [vmem:[#allocation2 + $0x258] sm:$0xff] %vm805, 0.0
          %882 = vst.msk [vmem:[#allocation2 + $0x260] sm:$0xff] %vm805, 0.0
          %883 = vst.msk [vmem:[#allocation2 + $0x268] sm:$0xff] %vm805, 0.0
          %884 = vst.msk [vmem:[#allocation2 + $0x270] sm:$0xff] %vm805, 0.0
          %885 = vst.msk [vmem:[#allocation2 + $0x278] sm:$0xff] %vm805, 0.0
          %886 = vst.msk [vmem:[#allocation2 + $0x280] sm:$0xff] %vm805, 0.0
          %887 = vst.msk [vmem:[#allocation2 + $0x288] sm:$0xff] %vm805, 0.0
          %888 = vst.msk [vmem:[#allocation2 + $0x290] sm:$0xff] %vm805, 0.0
          %889 = vst.msk [vmem:[#allocation2 + $0x298] sm:$0xff] %vm805, 0.0
          %890 = vst.msk [vmem:[#allocation2 + $0x2a0] sm:$0xff] %vm805, 0.0
          %891 = vst.msk [vmem:[#allocation2 + $0x2a8] sm:$0xff] %vm805, 0.0
          %892 = vst.msk [vmem:[#allocation2 + $0x2b0] sm:$0xff] %vm805, 0.0
          %893 = vst.msk [vmem:[#allocation2 + $0x2b8] sm:$0xff] %vm805, 0.0
          %894 = vst.msk [vmem:[#allocation2 + $0x2c0] sm:$0xff] %vm805, 0.0
          %895 = vst.msk [vmem:[#allocation2 + $0x2c8] sm:$0xff] %vm805, 0.0
          %896 = vst.msk [vmem:[#allocation2 + $0x2d0] sm:$0xff] %vm805, 0.0
          %897 = vst.msk [vmem:[#allocation2 + $0x2d8] sm:$0xff] %vm805, 0.0
          %898 = vst.msk [vmem:[#allocation2 + $0x2e0] sm:$0xff] %vm805, 0.0
          %899 = vst.msk [vmem:[#allocation2 + $0x2e8] sm:$0xff] %vm805, 0.0
          %900 = vst.msk [vmem:[#allocation2 + $0x2f0] sm:$0xff] %vm805, 0.0
          %901 = vst.msk [vmem:[#allocation2 + $0x2f8] sm:$0xff] %vm805, 0.0
          %902 = vst.msk [vmem:[#allocation2 + $0x300] sm:$0xff] %vm805, 0.0
          %903 = vst.msk [vmem:[#allocation2 + $0x308] sm:$0xff] %vm805, 0.0
          %904 = vst.msk [vmem:[#allocation2 + $0x310] sm:$0xff] %vm805, 0.0
          %905 = vst.msk [vmem:[#allocation2 + $0x318] sm:$0xff] %vm805, 0.0
          %906 = vst.msk [vmem:[#allocation2 + $0x320] sm:$0xff] %vm805, 0.0
          %907 = vst.msk [vmem:[#allocation2 + $0x328] sm:$0xff] %vm805, 0.0
          %908 = vst.msk [vmem:[#allocation2 + $0x330] sm:$0xff] %vm805, 0.0
          %909 = vst.msk [vmem:[#allocation2 + $0x338] sm:$0xff] %vm805, 0.0
          %910 = vst.msk [vmem:[#allocation2 + $0x340] sm:$0xff] %vm805, 0.0
          %911 = vst.msk [vmem:[#allocation2 + $0x348] sm:$0xff] %vm805, 0.0
          %912 = vst.msk [vmem:[#allocation2 + $0x350] sm:$0xff] %vm805, 0.0
          %913 = vst.msk [vmem:[#allocation2 + $0x358] sm:$0xff] %vm805, 0.0
          %914 = vst.msk [vmem:[#allocation2 + $0x360] sm:$0xff] %vm805, 0.0
          %915 = vst.msk [vmem:[#allocation2 + $0x368] sm:$0xff] %vm805, 0.0
          %916 = vst.msk [vmem:[#allocation2 + $0x370] sm:$0xff] %vm805, 0.0
          %917 = vst.msk [vmem:[#allocation2 + $0x378] sm:$0xff] %vm805, 0.0
          %918 = vst.msk [vmem:[#allocation2 + $0x380] sm:$0xff] %vm805, 0.0
          %919 = vst.msk [vmem:[#allocation2 + $0x388] sm:$0xff] %vm805, 0.0
          %920 = vst.msk [vmem:[#allocation2 + $0x390] sm:$0xff] %vm805, 0.0
          %921 = vst.msk [vmem:[#allocation2 + $0x398] sm:$0xff] %vm805, 0.0
          %922 = vst.msk [vmem:[#allocation2 + $0x3a0] sm:$0xff] %vm805, 0.0
          %923 = vst.msk [vmem:[#allocation2 + $0x3a8] sm:$0xff] %vm805, 0.0
          %924 = vst.msk [vmem:[#allocation2 + $0x3b0] sm:$0xff] %vm805, 0.0
          %925 = vst.msk [vmem:[#allocation2 + $0x3b8] sm:$0xff] %vm805, 0.0
          %926 = vst.msk [vmem:[#allocation2 + $0x3c0] sm:$0xff] %vm805, 0.0
          %927 = vst.msk [vmem:[#allocation2 + $0x3c8] sm:$0xff] %vm805, 0.0
          %928 = vst.msk [vmem:[#allocation2 + $0x3d0] sm:$0xff] %vm805, 0.0
          %929 = vst.msk [vmem:[#allocation2 + $0x3d8] sm:$0xff] %vm805, 0.0
          %930 = vst.msk [vmem:[#allocation2 + $0x3e0] sm:$0xff] %vm805, 0.0
          %931 = vst.msk [vmem:[#allocation2 + $0x3e8] sm:$0xff] %vm805, 0.0
          %932 = vst.msk [vmem:[#allocation2 + $0x3f0] sm:$0xff] %vm805, 0.0
          %933 = vst.msk [vmem:[#allocation2 + $0x3f8] sm:$0xff] %vm805, 0.0
        $region77: #{convnetvis_forward.4} parent=68 // pred_fallthru
          _
        %v934 = vld [vmem:[%s786] sm:$0xf]
        %v935 = vld [vmem:[%s786 + $0x4] sm:$0xf]
        %v936 = vld [vmem:[%s786 + $0x8] sm:$0xf]
        %v937 = vld [vmem:[%s786 + $0xc] sm:$0xf]
        %v938 = vld [vmem:[%s786 + $0x10] sm:$0xf]
        %v939 = vld [vmem:[%s786 + $0x14] sm:$0xf]
        %v940 = vld [vmem:[%s786 + $0x18] sm:$0xf]
        %v941 = vld [vmem:[%s786 + $0x1c] sm:$0xf]
        %v942 = vld [vmem:[%s786 + $0x20] sm:$0xf]
        %v943 = vld [vmem:[%s786 + $0x24] sm:$0xf]
        %v944 = vld [vmem:[%s786 + $0x28] sm:$0xf]
        %v945 = vld [vmem:[%s786 + $0x2c] sm:$0xf]
        %v946 = vld [vmem:[%s786 + $0x30] sm:$0xf]
        %v947 = vld [vmem:[%s786 + $0x34] sm:$0xf]
        %v948 = vld [vmem:[%s786 + $0x38] sm:$0xf]
        %v949 = vld [vmem:[%s786 + $0x3c] sm:$0xf]
        %v950 = vld [vmem:[#allocation2] sm:$0xff]
        %v951 = vld [vmem:[#allocation2 + $0x8] sm:$0xff]
        %v952 = vld [vmem:[#allocation2 + $0x10] sm:$0xff]
        %v953 = vld [vmem:[#allocation2 + $0x18] sm:$0xff]
        %v954 = vld [vmem:[#allocation2 + $0x20] sm:$0xff]
        %v955 = vld [vmem:[#allocation2 + $0x28] sm:$0xff]
        %v956 = vld [vmem:[#allocation2 + $0x30] sm:$0xff]
        %v957 = vld [vmem:[#allocation2 + $0x38] sm:$0xff]
        %v958 = vld [vmem:[#allocation2 + $0x40] sm:$0xff]
        %v959 = vld [vmem:[#allocation2 + $0x48] sm:$0xff]
        %v960 = vld [vmem:[#allocation2 + $0x50] sm:$0xff]
        %v961 = vld [vmem:[#allocation2 + $0x58] sm:$0xff]
        %v962 = vld [vmem:[#allocation2 + $0x60] sm:$0xff]
        %v963 = vld [vmem:[#allocation2 + $0x68] sm:$0xff]
        %v964 = vld [vmem:[#allocation2 + $0x70] sm:$0xff]
        %v965 = vld [vmem:[#allocation2 + $0x78] sm:$0xff]
        %v966 = vld [vmem:[#allocation2 + $0x80] sm:$0xff]
        %v967 = vld [vmem:[#allocation2 + $0x88] sm:$0xff]
        %v968 = vld [vmem:[#allocation2 + $0x90] sm:$0xff]
        %v969 = vld [vmem:[#allocation2 + $0x98] sm:$0xff]
        %v970 = vld [vmem:[#allocation2 + $0xa0] sm:$0xff]
        %v971 = vld [vmem:[#allocation2 + $0xa8] sm:$0xff]
        %v972 = vld [vmem:[#allocation2 + $0xb0] sm:$0xff]
        %v973 = vld [vmem:[#allocation2 + $0xb8] sm:$0xff]
        %v974 = vld [vmem:[#allocation2 + $0xc0] sm:$0xff]
        %v975 = vld [vmem:[#allocation2 + $0xc8] sm:$0xff]
        %v976 = vld [vmem:[#allocation2 + $0xd0] sm:$0xff]
        %v977 = vld [vmem:[#allocation2 + $0xd8] sm:$0xff]
        %v978 = vld [vmem:[#allocation2 + $0xe0] sm:$0xff]
        %v979 = vld [vmem:[#allocation2 + $0xe8] sm:$0xff]
        %v980 = vld [vmem:[#allocation2 + $0xf0] sm:$0xff]
        %v981 = vld [vmem:[#allocation2 + $0xf8] sm:$0xff]
        %v982 = vld [vmem:[%s743] sm:$0xf]
        %v983 = vld [vmem:[%s743 + $0x4] sm:$0xf]
        %v984 = vld [vmem:[%s743 + $0x8] sm:$0xf]
        %v985 = vld [vmem:[%s743 + $0xc] sm:$0xf]
        %v986 = vld [vmem:[%s743 + $0x10] sm:$0xf]
        %v987 = vld [vmem:[%s743 + $0x14] sm:$0xf]
        %v988 = vld [vmem:[%s743 + $0x18] sm:$0xf]
        %v989 = vld [vmem:[%s743 + $0x1c] sm:$0xf]
        %v990 = vld [vmem:[%s743 + $0x20] sm:$0xf]
        %v991 = vld [vmem:[%s743 + $0x24] sm:$0xf]
        %v992 = vld [vmem:[%s743 + $0x28] sm:$0xf]
        %v993 = vld [vmem:[%s743 + $0x2c] sm:$0xf]
        %v994 = vld [vmem:[%s743 + $0x30] sm:$0xf]
        %v995 = vld [vmem:[%s743 + $0x34] sm:$0xf]
        %v996 = vld [vmem:[%s743 + $0x38] sm:$0xf]
        %v997 = vld [vmem:[%s743 + $0x3c] sm:$0xf]
        %v998 = vld [vmem:[%s743 + $0x40] sm:$0xf]
        %v999 = vld [vmem:[%s743 + $0x44] sm:$0xf]
        %v1000 = vld [vmem:[%s743 + $0x48] sm:$0xf]
        %v1001 = vld [vmem:[%s743 + $0x4c] sm:$0xf]
        %v1002 = vld [vmem:[%s743 + $0x50] sm:$0xf]
        %v1003 = vld [vmem:[%s743 + $0x54] sm:$0xf]
        %v1004 = vld [vmem:[%s743 + $0x58] sm:$0xf]
        %v1005 = vld [vmem:[%s743 + $0x5c] sm:$0xf]
        %v1006 = vld [vmem:[%s743 + $0x60] sm:$0xf]
        %v1007 = vld [vmem:[%s743 + $0x64] sm:$0xf]
        %v1008 = vld [vmem:[%s743 + $0x68] sm:$0xf]
        %v1009 = vld [vmem:[%s743 + $0x6c] sm:$0xf]
        %v1010 = vld [vmem:[%s743 + $0x70] sm:$0xf]
        %v1011 = vld [vmem:[%s743 + $0x74] sm:$0xf]
        %v1012 = vld [vmem:[%s743 + $0x78] sm:$0xf]
        %v1013 = vld [vmem:[%s743 + $0x7c] sm:$0xf]
        %v1046 = vunpack.c.l.b16 %v982
        %v1047 = vunpack.c.l.b16 %v983
        %v1048 = vunpack.c.l.b16 %v984
        %v1049 = vunpack.c.l.b16 %v985
        %v1050 = vunpack.c.l.b16 %v986
        %v1051 = vunpack.c.l.b16 %v987
        %v1052 = vunpack.c.l.b16 %v988
        %v1053 = vunpack.c.l.b16 %v989
        %v1054 = vunpack.c.l.b16 %v990
        %v1055 = vunpack.c.l.b16 %v991
        %v1056 = vunpack.c.l.b16 %v992
        %v1057 = vunpack.c.l.b16 %v993
        %v1058 = vunpack.c.l.b16 %v994
        %v1059 = vunpack.c.l.b16 %v995
        %v1060 = vunpack.c.l.b16 %v996
        %v1061 = vunpack.c.l.b16 %v997
        %v1062 = vunpack.c.l.b16 %v998
        %v1063 = vunpack.c.l.b16 %v999
        %v1064 = vunpack.c.l.b16 %v1000
        %v1065 = vunpack.c.l.b16 %v1001
        %v1066 = vunpack.c.l.b16 %v1002
        %v1067 = vunpack.c.l.b16 %v1003
        %v1068 = vunpack.c.l.b16 %v1004
        %v1069 = vunpack.c.l.b16 %v1005
        %v1070 = vunpack.c.l.b16 %v1006
        %v1071 = vunpack.c.l.b16 %v1007
        %v1072 = vunpack.c.l.b16 %v1008
        %v1073 = vunpack.c.l.b16 %v1009
        %v1074 = vunpack.c.l.b16 %v1010
        %v1075 = vunpack.c.l.b16 %v1011
        %v1076 = vunpack.c.l.b16 %v1012
        %v1077 = vunpack.c.l.b16 %v1013
        %v1078 = vpack.c.b16 %v1047, %v1046
        %v1079 = vpack.c.b16 %v1049, %v1048
        %v1080 = vpack.c.b16 %v1051, %v1050
        %v1081 = vpack.c.b16 %v1053, %v1052
        %v1082 = vpack.c.b16 %v1055, %v1054
        %v1083 = vpack.c.b16 %v1057, %v1056
        %v1084 = vpack.c.b16 %v1059, %v1058
        %v1085 = vpack.c.b16 %v1061, %v1060
        %v1086 = vpack.c.b16 %v1063, %v1062
        %v1087 = vpack.c.b16 %v1065, %v1064
        %v1088 = vpack.c.b16 %v1067, %v1066
        %v1089 = vpack.c.b16 %v1069, %v1068
        %v1090 = vpack.c.b16 %v1071, %v1070
        %v1091 = vpack.c.b16 %v1073, %v1072
        %v1092 = vpack.c.b16 %v1075, %v1074
        %v1093 = vpack.c.b16 %v1077, %v1076
        %v1126 = vunpack.c.l.b16 %v934
        %v1127 = vunpack.c.l.b16 %v935
        %v1128 = vunpack.c.l.b16 %v936
        %v1129 = vunpack.c.l.b16 %v937
        %v1130 = vunpack.c.l.b16 %v938
        %v1131 = vunpack.c.l.b16 %v939
        %v1132 = vunpack.c.l.b16 %v940
        %v1133 = vunpack.c.l.b16 %v941
        %v1134 = vunpack.c.l.b16 %v942
        %v1135 = vunpack.c.l.b16 %v943
        %v1136 = vunpack.c.l.b16 %v944
        %v1137 = vunpack.c.l.b16 %v945
        %v1138 = vunpack.c.l.b16 %v946
        %v1139 = vunpack.c.l.b16 %v947
        %v1140 = vunpack.c.l.b16 %v948
        %v1141 = vunpack.c.l.b16 %v949
        %v1142 = vpack.c.b16 %v1127, %v1126
        %v1143 = vpack.c.b16 %v1129, %v1128
        %v1144 = vpack.c.b16 %v1131, %v1130
        %v1145 = vpack.c.b16 %v1133, %v1132
        %v1146 = vpack.c.b16 %v1135, %v1134
        %v1147 = vpack.c.b16 %v1137, %v1136
        %v1148 = vpack.c.b16 %v1139, %v1138
        %v1149 = vpack.c.b16 %v1141, %v1140
        %1158 = vmatprep.subr.bf16.mxu0 0
        %1159 = vmatpush1.bf16.msra.mxu0 %v1142
        %1160 = vmatprep.subr.bf16.mxu0 0
        %1161 = vmatpush1.bf16.msra.mxu0 %v1143
        %1162 = vmatprep.subr.bf16.mxu0 0
        %1163 = vmatpush1.bf16.msra.mxu0 %v1144
        %1164 = vmatprep.subr.bf16.mxu0 0
        %1165 = vmatpush1.bf16.msra.mxu0 %v1145
        %1166 = vmatprep.subr.bf16.mxu0 0
        %1167 = vmatpush1.bf16.msra.mxu0 %v1146
        %1168 = vmatprep.subr.bf16.mxu0 0
        %1169 = vmatpush1.bf16.msra.mxu0 %v1147
        %1170 = vmatprep.subr.bf16.mxu0 0
        %1171 = vmatpush1.bf16.msra.mxu0 %v1148
        %1172 = vmatprep.subr.bf16.mxu0 0
        %1173 = vmatpush1.bf16.msra.mxu0 %v1149
        %1174 = vmatprep.subr.bf16.mxu0 0
        %1175 = vmatpush1.bf16.msra.mxu0 0
        %1176 = vmatprep.subr.bf16.mxu0 0
        %1177 = vmatpush1.bf16.msra.mxu0 0
        %1178 = vmatprep.subr.bf16.mxu0 0
        %1179 = vmatpush1.bf16.msra.mxu0 0
        %1180 = vmatprep.subr.bf16.mxu0 0
        %1181 = vmatpush1.bf16.msra.mxu0 0
        %1182 = vmatprep.subr.bf16.mxu0 0
        %1183 = vmatpush1.bf16.msra.mxu0 0
        %1184 = vmatprep.subr.bf16.mxu0 0
        %1185 = vmatpush1.bf16.msra.mxu0 0
        %1186 = vmatprep.subr.bf16.mxu0 0
        %1187 = vmatpush1.bf16.msra.mxu0 0
        %1188 = vmatprep.subr.bf16.mxu0 0
        %1189 = vmatpush1.bf16.msra.mxu0 0
        %1190 = vmatprep.mubr.bf16.mxu0 0
        %1191 = vmatmul.mubr.bf16.gmra.mrb[0].mxu0 %v1078
        %v1192 = vpop.f32.mrb[0].mxu0
        %v1193 = vadd.f32 0.0, %v1192
        %v1194 = vpop.f32.mrb[0].mxu0
        %v1195 = vpop.f32.mrb[0].mxu0
        %v1196 = vadd.f32 0.0, %v1195
        %v1197 = vpop.f32.mrb[0].mxu0
        %1198 = vmatprep.mubr.bf16.mxu0 0
        %1199 = vmatmul.mubr.bf16.gmra.mrb[0].mxu0 %v1079
        %v1200 = vpop.f32.mrb[0].mxu0
        %v1201 = vadd.f32 0.0, %v1200
        %v1202 = vpop.f32.mrb[0].mxu0
        %v1203 = vpop.f32.mrb[0].mxu0
        %v1204 = vadd.f32 0.0, %v1203
        %v1205 = vpop.f32.mrb[0].mxu0
        %1206 = vmatprep.mubr.bf16.mxu0 0
        %1207 = vmatmul.mubr.bf16.gmra.mrb[0].mxu0 %v1080
        %v1208 = vpop.f32.mrb[0].mxu0
        %v1209 = vadd.f32 0.0, %v1208
        %v1210 = vpop.f32.mrb[0].mxu0
        %v1211 = vpop.f32.mrb[0].mxu0
        %v1212 = vadd.f32 0.0, %v1211
        %v1213 = vpop.f32.mrb[0].mxu0
        %1214 = vmatprep.mubr.bf16.mxu0 0
        %1215 = vmatmul.mubr.bf16.gmra.mrb[0].mxu0 %v1081
        %v1216 = vpop.f32.mrb[0].mxu0
        %v1217 = vadd.f32 0.0, %v1216
        %v1218 = vpop.f32.mrb[0].mxu0
        %v1219 = vpop.f32.mrb[0].mxu0
        %v1220 = vadd.f32 0.0, %v1219
        %v1221 = vpop.f32.mrb[0].mxu0
        %1222 = vmatprep.mubr.bf16.mxu0 0
        %1223 = vmatmul.mubr.bf16.gmra.mrb[0].mxu0 %v1082
        %v1224 = vpop.f32.mrb[0].mxu0
        %v1225 = vadd.f32 0.0, %v1224
        %v1226 = vpop.f32.mrb[0].mxu0
        %v1227 = vpop.f32.mrb[0].mxu0
        %v1228 = vadd.f32 0.0, %v1227
        %v1229 = vpop.f32.mrb[0].mxu0
        %1230 = vmatprep.mubr.bf16.mxu0 0
        %1231 = vmatmul.mubr.bf16.gmra.mrb[0].mxu0 %v1083
        %v1232 = vpop.f32.mrb[0].mxu0
        %v1233 = vadd.f32 0.0, %v1232
        %v1234 = vpop.f32.mrb[0].mxu0
        %v1235 = vpop.f32.mrb[0].mxu0
        %v1236 = vadd.f32 0.0, %v1235
        %v1237 = vpop.f32.mrb[0].mxu0
        %1238 = vmatprep.mubr.bf16.mxu0 0
        %1239 = vmatmul.mubr.bf16.gmra.mrb[0].mxu0 %v1084
        %v1240 = vpop.f32.mrb[0].mxu0
        %v1241 = vadd.f32 0.0, %v1240
        %v1242 = vpop.f32.mrb[0].mxu0
        %v1243 = vpop.f32.mrb[0].mxu0
        %v1244 = vadd.f32 0.0, %v1243
        %v1245 = vpop.f32.mrb[0].mxu0
        %1246 = vmatprep.mubr.bf16.mxu0 0
        %1247 = vmatmul.mubr.bf16.gmra.mrb[0].mxu0 %v1085
        %v1248 = vpop.f32.mrb[0].mxu0
        %v1249 = vadd.f32 0.0, %v1248
        %v1250 = vpop.f32.mrb[0].mxu0
        %v1251 = vpop.f32.mrb[0].mxu0
        %v1252 = vadd.f32 0.0, %v1251
        %v1253 = vpop.f32.mrb[0].mxu0
        %1254 = vmatprep.mubr.bf16.mxu0 0
        %1255 = vmatmul.mubr.bf16.gmra.mrb[0].mxu0 %v1086
        %v1256 = vpop.f32.mrb[0].mxu0
        %v1257 = vadd.f32 0.0, %v1256
        %v1258 = vpop.f32.mrb[0].mxu0
        %v1259 = vpop.f32.mrb[0].mxu0
        %v1260 = vadd.f32 0.0, %v1259
        %v1261 = vpop.f32.mrb[0].mxu0
        %1262 = vmatprep.mubr.bf16.mxu0 0
        %1263 = vmatmul.mubr.bf16.gmra.mrb[0].mxu0 %v1087
        %v1264 = vpop.f32.mrb[0].mxu0
        %v1265 = vadd.f32 0.0, %v1264
        %v1266 = vpop.f32.mrb[0].mxu0
        %v1267 = vpop.f32.mrb[0].mxu0
        %v1268 = vadd.f32 0.0, %v1267
        %v1269 = vpop.f32.mrb[0].mxu0
        %1270 = vmatprep.mubr.bf16.mxu0 0
        %1271 = vmatmul.mubr.bf16.gmra.mrb[0].mxu0 %v1088
        %v1272 = vpop.f32.mrb[0].mxu0
        %v1273 = vadd.f32 0.0, %v1272
        %v1274 = vpop.f32.mrb[0].mxu0
        %v1275 = vpop.f32.mrb[0].mxu0
        %v1276 = vadd.f32 0.0, %v1275
        %v1277 = vpop.f32.mrb[0].mxu0
        %1278 = vmatprep.mubr.bf16.mxu0 0
        %1279 = vmatmul.mubr.bf16.gmra.mrb[0].mxu0 %v1089
        %v1280 = vpop.f32.mrb[0].mxu0
        %v1281 = vadd.f32 0.0, %v1280
        %v1282 = vpop.f32.mrb[0].mxu0
        %v1283 = vpop.f32.mrb[0].mxu0
        %v1284 = vadd.f32 0.0, %v1283
        %v1285 = vpop.f32.mrb[0].mxu0
        %1286 = vmatprep.mubr.bf16.mxu0 0
        %1287 = vmatmul.mubr.bf16.gmra.mrb[0].mxu0 %v1090
        %v1288 = vpop.f32.mrb[0].mxu0
        %v1289 = vadd.f32 0.0, %v1288
        %v1290 = vpop.f32.mrb[0].mxu0
        %v1291 = vpop.f32.mrb[0].mxu0
        %v1292 = vadd.f32 0.0, %v1291
        %v1293 = vpop.f32.mrb[0].mxu0
        %1294 = vmatprep.mubr.bf16.mxu0 0
        %1295 = vmatmul.mubr.bf16.gmra.mrb[0].mxu0 %v1091
        %v1296 = vpop.f32.mrb[0].mxu0
        %v1297 = vadd.f32 0.0, %v1296
        %v1298 = vpop.f32.mrb[0].mxu0
        %v1299 = vpop.f32.mrb[0].mxu0
        %v1300 = vadd.f32 0.0, %v1299
        %v1301 = vpop.f32.mrb[0].mxu0
        %1302 = vmatprep.mubr.bf16.mxu0 0
        %1303 = vmatmul.mubr.bf16.gmra.mrb[0].mxu0 %v1092
        %v1304 = vpop.f32.mrb[0].mxu0
        %v1305 = vadd.f32 0.0, %v1304
        %v1306 = vpop.f32.mrb[0].mxu0
        %v1307 = vpop.f32.mrb[0].mxu0
        %v1308 = vadd.f32 0.0, %v1307
        %v1309 = vpop.f32.mrb[0].mxu0
        %1310 = vmatprep.mubr.bf16.mxu0 0
        %1311 = vmatmul.mubr.bf16.gmra.mrb[0].mxu0 %v1093
        %v1312 = vpop.f32.mrb[0].mxu0
        %v1313 = vadd.f32 0.0, %v1312
        %v1314 = vpop.f32.mrb[0].mxu0
        %v1315 = vpop.f32.mrb[0].mxu0
        %v1316 = vadd.f32 0.0, %v1315
        %v1317 = vpop.f32.mrb[0].mxu0
        %1318 = vdwg.mxu0
        %v1319 = vadd.f32 %v950, %v1193
        %v1320 = vadd.f32 %v951, %v1196
        %v1321 = vadd.f32 %v952, %v1201
        %v1322 = vadd.f32 %v953, %v1204
        %v1323 = vadd.f32 %v954, %v1209
        %v1324 = vadd.f32 %v955, %v1212
        %v1325 = vadd.f32 %v956, %v1217
        %v1326 = vadd.f32 %v957, %v1220
        %v1327 = vadd.f32 %v958, %v1225
        %v1328 = vadd.f32 %v959, %v1228
        %v1329 = vadd.f32 %v960, %v1233
        %v1330 = vadd.f32 %v961, %v1236
        %v1331 = vadd.f32 %v962, %v1241
        %v1332 = vadd.f32 %v963, %v1244
        %v1333 = vadd.f32 %v964, %v1249
        %v1334 = vadd.f32 %v965, %v1252
        %v1335 = vadd.f32 %v966, %v1257
        %v1336 = vadd.f32 %v967, %v1260
        %v1337 = vadd.f32 %v968, %v1265
        %v1338 = vadd.f32 %v969, %v1268
        %v1339 = vadd.f32 %v970, %v1273
        %v1340 = vadd.f32 %v971, %v1276
        %v1341 = vadd.f32 %v972, %v1281
        %v1342 = vadd.f32 %v973, %v1284
        %v1343 = vadd.f32 %v974, %v1289
        %v1344 = vadd.f32 %v975, %v1292
        %v1345 = vadd.f32 %v976, %v1297
        %v1346 = vadd.f32 %v977, %v1300
        %v1347 = vadd.f32 %v978, %v1305
        %v1348 = vadd.f32 %v979, %v1308
        %v1349 = vadd.f32 %v980, %v1313
        %v1350 = vadd.f32 %v981, %v1316
        %vm1351 = vcmask 523264
        %1352 = vst.msk [vmem:[#allocation2] sm:$0xff] %vm1351, %v1319
        %1353 = vst.msk [vmem:[#allocation2 + $0x8] sm:$0xff] %vm1351, %v1320
        %1354 = vst.msk [vmem:[#allocation2 + $0x10] sm:$0xff] %vm1351, %v1321
        %1355 = vst.msk [vmem:[#allocation2 + $0x18] sm:$0xff] %vm1351, %v1322
        %1356 = vst.msk [vmem:[#allocation2 + $0x20] sm:$0xff] %vm1351, %v1323
        %1357 = vst.msk [vmem:[#allocation2 + $0x28] sm:$0xff] %vm1351, %v1324
        %1358 = vst.msk [vmem:[#allocation2 + $0x30] sm:$0xff] %vm1351, %v1325
        %1359 = vst.msk [vmem:[#allocation2 + $0x38] sm:$0xff] %vm1351, %v1326
        %1360 = vst.msk [vmem:[#allocation2 + $0x40] sm:$0xff] %vm1351, %v1327
        %1361 = vst.msk [vmem:[#allocation2 + $0x48] sm:$0xff] %vm1351, %v1328
        %1362 = vst.msk [vmem:[#allocation2 + $0x50] sm:$0xff] %vm1351, %v1329
        %1363 = vst.msk [vmem:[#allocation2 + $0x58] sm:$0xff] %vm1351, %v1330
        %1364 = vst.msk [vmem:[#allocation2 + $0x60] sm:$0xff] %vm1351, %v1331
        %1365 = vst.msk [vmem:[#allocation2 + $0x68] sm:$0xff] %vm1351, %v1332
        %1366 = vst.msk [vmem:[#allocation2 + $0x70] sm:$0xff] %vm1351, %v1333
        %1367 = vst.msk [vmem:[#allocation2 + $0x78] sm:$0xff] %vm1351, %v1334
        %1368 = vst.msk [vmem:[#allocation2 + $0x80] sm:$0xff] %vm1351, %v1335
        %1369 = vst.msk [vmem:[#allocation2 + $0x88] sm:$0xff] %vm1351, %v1336
        %1370 = vst.msk [vmem:[#allocation2 + $0x90] sm:$0xff] %vm1351, %v1337
        %1371 = vst.msk [vmem:[#allocation2 + $0x98] sm:$0xff] %vm1351, %v1338
        %1372 = vst.msk [vmem:[#allocation2 + $0xa0] sm:$0xff] %vm1351, %v1339
        %1373 = vst.msk [vmem:[#allocation2 + $0xa8] sm:$0xff] %vm1351, %v1340
        %1374 = vst.msk [vmem:[#allocation2 + $0xb0] sm:$0xff] %vm1351, %v1341
        %1375 = vst.msk [vmem:[#allocation2 + $0xb8] sm:$0xff] %vm1351, %v1342
        %1376 = vst.msk [vmem:[#allocation2 + $0xc0] sm:$0xff] %vm1351, %v1343
        %1377 = vst.msk [vmem:[#allocation2 + $0xc8] sm:$0xff] %vm1351, %v1344
        %1378 = vst.msk [vmem:[#allocation2 + $0xd0] sm:$0xff] %vm1351, %v1345
        %1379 = vst.msk [vmem:[#allocation2 + $0xd8] sm:$0xff] %vm1351, %v1346
        %1380 = vst.msk [vmem:[#allocation2 + $0xe0] sm:$0xff] %vm1351, %v1347
        %1381 = vst.msk [vmem:[#allocation2 + $0xe8] sm:$0xff] %vm1351, %v1348
        %1382 = vst.msk [vmem:[#allocation2 + $0xf0] sm:$0xff] %vm1351, %v1349
        %1383 = vst.msk [vmem:[#allocation2 + $0xf8] sm:$0xff] %vm1351, %v1350
        %s1384 = scalar_lea.vmem [#allocation2], 256
        %v1385 = vld [vmem:[%s1384] sm:$0xff]
        %v1386 = vld [vmem:[%s1384 + $0x8] sm:$0xff]
        %v1387 = vld [vmem:[%s1384 + $0x10] sm:$0xff]
        %v1388 = vld [vmem:[%s1384 + $0x18] sm:$0xff]
        %v1389 = vld [vmem:[%s1384 + $0x20] sm:$0xff]
        %v1390 = vld [vmem:[%s1384 + $0x28] sm:$0xff]
        %v1391 = vld [vmem:[%s1384 + $0x30] sm:$0xff]
        %v1392 = vld [vmem:[%s1384 + $0x38] sm:$0xff]
        %v1393 = vld [vmem:[%s1384 + $0x40] sm:$0xff]
        %v1394 = vld [vmem:[%s1384 + $0x48] sm:$0xff]
        %v1395 = vld [vmem:[%s1384 + $0x50] sm:$0xff]
        %v1396 = vld [vmem:[%s1384 + $0x58] sm:$0xff]
        %v1397 = vld [vmem:[%s1384 + $0x60] sm:$0xff]
        %v1398 = vld [vmem:[%s1384 + $0x68] sm:$0xff]
        %v1399 = vld [vmem:[%s1384 + $0x70] sm:$0xff]
        %v1400 = vld [vmem:[%s1384 + $0x78] sm:$0xff]
        %v1401 = vld [vmem:[%s1384 + $0x80] sm:$0xff]
        %v1402 = vld [vmem:[%s1384 + $0x88] sm:$0xff]
        %v1403 = vld [vmem:[%s1384 + $0x90] sm:$0xff]
        %v1404 = vld [vmem:[%s1384 + $0x98] sm:$0xff]
        %v1405 = vld [vmem:[%s1384 + $0xa0] sm:$0xff]
        %v1406 = vld [vmem:[%s1384 + $0xa8] sm:$0xff]
        %v1407 = vld [vmem:[%s1384 + $0xb0] sm:$0xff]
        %v1408 = vld [vmem:[%s1384 + $0xb8] sm:$0xff]
        %v1409 = vld [vmem:[%s1384 + $0xc0] sm:$0xff]
        %v1410 = vld [vmem:[%s1384 + $0xc8] sm:$0xff]
        %v1411 = vld [vmem:[%s1384 + $0xd0] sm:$0xff]
        %v1412 = vld [vmem:[%s1384 + $0xd8] sm:$0xff]
        %v1413 = vld [vmem:[%s1384 + $0xe0] sm:$0xff]
        %v1414 = vld [vmem:[%s1384 + $0xe8] sm:$0xff]
        %v1415 = vld [vmem:[%s1384 + $0xf0] sm:$0xff]
        %v1416 = vld [vmem:[%s1384 + $0xf8] sm:$0xff]
        %s1417 = scalar_lea.vmem %s743, 128 [#allocation3]
        %v1418 = vld [vmem:[%s1417] sm:$0xf]
        %v1419 = vld [vmem:[%s1417 + $0x4] sm:$0xf]
        %v1420 = vld [vmem:[%s1417 + $0x8] sm:$0xf]
        %v1421 = vld [vmem:[%s1417 + $0xc] sm:$0xf]
        %v1422 = vld [vmem:[%s1417 + $0x10] sm:$0xf]
        %v1423 = vld [vmem:[%s1417 + $0x14] sm:$0xf]
        %v1424 = vld [vmem:[%s1417 + $0x18] sm:$0xf]
        %v1425 = vld [vmem:[%s1417 + $0x1c] sm:$0xf]
        %v1426 = vld [vmem:[%s1417 + $0x20] sm:$0xf]
        %v1427 = vld [vmem:[%s1417 + $0x24] sm:$0xf]
        %v1428 = vld [vmem:[%s1417 + $0x28] sm:$0xf]
        %v1429 = vld [vmem:[%s1417 + $0x2c] sm:$0xf]
        %v1430 = vld [vmem:[%s1417 + $0x30] sm:$0xf]
        %v1431 = vld [vmem:[%s1417 + $0x34] sm:$0xf]
        %v1432 = vld [vmem:[%s1417 + $0x38] sm:$0xf]
        %v1433 = vld [vmem:[%s1417 + $0x3c] sm:$0xf]
        %v1434 = vld [vmem:[%s1417 + $0x40] sm:$0xf]
        %v1435 = vld [vmem:[%s1417 + $0x44] sm:$0xf]
        %v1436 = vld [vmem:[%s1417 + $0x48] sm:$0xf]
        %v1437 = vld [vmem:[%s1417 + $0x4c] sm:$0xf]
        %v1438 = vld [vmem:[%s1417 + $0x50] sm:$0xf]
        %v1439 = vld [vmem:[%s1417 + $0x54] sm:$0xf]
        %v1440 = vld [vmem:[%s1417 + $0x58] sm:$0xf]
        %v1441 = vld [vmem:[%s1417 + $0x5c] sm:$0xf]
        %v1442 = vld [vmem:[%s1417 + $0x60] sm:$0xf]
        %v1443 = vld [vmem:[%s1417 + $0x64] sm:$0xf]
        %v1444 = vld [vmem:[%s1417 + $0x68] sm:$0xf]
        %v1445 = vld [vmem:[%s1417 + $0x6c] sm:$0xf]
        %v1446 = vld [vmem:[%s1417 + $0x70] sm:$0xf]
        %v1447 = vld [vmem:[%s1417 + $0x74] sm:$0xf]
        %v1448 = vld [vmem:[%s1417 + $0x78] sm:$0xf]
        %v1449 = vld [vmem:[%s1417 + $0x7c] sm:$0xf]
        %v1482 = vunpack.c.l.b16 %v1418
        %v1483 = vunpack.c.l.b16 %v1419
        %v1484 = vunpack.c.l.b16 %v1420
        %v1485 = vunpack.c.l.b16 %v1421
        %v1486 = vunpack.c.l.b16 %v1422
        %v1487 = vunpack.c.l.b16 %v1423
        %v1488 = vunpack.c.l.b16 %v1424
        %v1489 = vunpack.c.l.b16 %v1425
        %v1490 = vunpack.c.l.b16 %v1426
        %v1491 = vunpack.c.l.b16 %v1427
        %v1492 = vunpack.c.l.b16 %v1428
        %v1493 = vunpack.c.l.b16 %v1429
        %v1494 = vunpack.c.l.b16 %v1430
        %v1495 = vunpack.c.l.b16 %v1431
        %v1496 = vunpack.c.l.b16 %v1432
        %v1497 = vunpack.c.l.b16 %v1433
        %v1498 = vunpack.c.l.b16 %v1434
        %v1499 = vunpack.c.l.b16 %v1435
        %v1500 = vunpack.c.l.b16 %v1436
        %v1501 = vunpack.c.l.b16 %v1437
        %v1502 = vunpack.c.l.b16 %v1438
        %v1503 = vunpack.c.l.b16 %v1439
        %v1504 = vunpack.c.l.b16 %v1440
        %v1505 = vunpack.c.l.b16 %v1441
        %v1506 = vunpack.c.l.b16 %v1442
        %v1507 = vunpack.c.l.b16 %v1443
        %v1508 = vunpack.c.l.b16 %v1444
        %v1509 = vunpack.c.l.b16 %v1445
        %v1510 = vunpack.c.l.b16 %v1446
        %v1511 = vunpack.c.l.b16 %v1447
        %v1512 = vunpack.c.l.b16 %v1448
        %v1513 = vunpack.c.l.b16 %v1449
        %v1514 = vpack.c.b16 %v1483, %v1482
        %v1515 = vpack.c.b16 %v1485, %v1484
        %v1516 = vpack.c.b16 %v1487, %v1486
        %v1517 = vpack.c.b16 %v1489, %v1488
        %v1518 = vpack.c.b16 %v1491, %v1490
        %v1519 = vpack.c.b16 %v1493, %v1492
        %v1520 = vpack.c.b16 %v1495, %v1494
        %v1521 = vpack.c.b16 %v1497, %v1496
        %v1522 = vpack.c.b16 %v1499, %v1498
        %v1523 = vpack.c.b16 %v1501, %v1500
        %v1524 = vpack.c.b16 %v1503, %v1502
        %v1525 = vpack.c.b16 %v1505, %v1504
        %v1526 = vpack.c.b16 %v1507, %v1506
        %v1527 = vpack.c.b16 %v1509, %v1508
        %v1528 = vpack.c.b16 %v1511, %v1510
        %v1529 = vpack.c.b16 %v1513, %v1512
        %1546 = vmatprep.subr.bf16.mxu0 0
        %1547 = vmatpush1.bf16.msra.mxu0 %v1142
        %1548 = vmatprep.subr.bf16.mxu0 0
        %1549 = vmatpush1.bf16.msra.mxu0 %v1143
        %1550 = vmatprep.subr.bf16.mxu0 0
        %1551 = vmatpush1.bf16.msra.mxu0 %v1144
        %1552 = vmatprep.subr.bf16.mxu0 0
        %1553 = vmatpush1.bf16.msra.mxu0 %v1145
        %1554 = vmatprep.subr.bf16.mxu0 0
        %1555 = vmatpush1.bf16.msra.mxu0 %v1146
        %1556 = vmatprep.subr.bf16.mxu0 0
        %1557 = vmatpush1.bf16.msra.mxu0 %v1147
        %1558 = vmatprep.subr.bf16.mxu0 0
        %1559 = vmatpush1.bf16.msra.mxu0 %v1148
        %1560 = vmatprep.subr.bf16.mxu0 0
        %1561 = vmatpush1.bf16.msra.mxu0 %v1149
        %1562 = vmatprep.subr.bf16.mxu0 0
        %1563 = vmatpush1.bf16.msra.mxu0 0
        %1564 = vmatprep.subr.bf16.mxu0 0
        %1565 = vmatpush1.bf16.msra.mxu0 0
        %1566 = vmatprep.subr.bf16.mxu0 0
        %1567 = vmatpush1.bf16.msra.mxu0 0
        %1568 = vmatprep.subr.bf16.mxu0 0
        %1569 = vmatpush1.bf16.msra.mxu0 0
        %1570 = vmatprep.subr.bf16.mxu0 0
        %1571 = vmatpush1.bf16.msra.mxu0 0
        %1572 = vmatprep.subr.bf16.mxu0 0
        %1573 = vmatpush1.bf16.msra.mxu0 0
        %1574 = vmatprep.subr.bf16.mxu0 0
        %1575 = vmatpush1.bf16.msra.mxu0 0
        %1576 = vmatprep.subr.bf16.mxu0 0
        %1577 = vmatpush1.bf16.msra.mxu0 0
        %1578 = vmatprep.mubr.bf16.mxu0 0
        %1579 = vmatmul.mubr.bf16.gmra.mrb[0].mxu0 %v1514
        %v1580 = vpop.f32.mrb[0].mxu0
        %v1581 = vadd.f32 0.0, %v1580
        %v1582 = vpop.f32.mrb[0].mxu0
        %v1583 = vpop.f32.mrb[0].mxu0
        %v1584 = vadd.f32 0.0, %v1583
        %v1585 = vpop.f32.mrb[0].mxu0
        %1586 = vmatprep.mubr.bf16.mxu0 0
        %1587 = vmatmul.mubr.bf16.gmra.mrb[0].mxu0 %v1515
        %v1588 = vpop.f32.mrb[0].mxu0
        %v1589 = vadd.f32 0.0, %v1588
        %v1590 = vpop.f32.mrb[0].mxu0
        %v1591 = vpop.f32.mrb[0].mxu0
        %v1592 = vadd.f32 0.0, %v1591
        %v1593 = vpop.f32.mrb[0].mxu0
        %1594 = vmatprep.mubr.bf16.mxu0 0
        %1595 = vmatmul.mubr.bf16.gmra.mrb[0].mxu0 %v1516
        %v1596 = vpop.f32.mrb[0].mxu0
        %v1597 = vadd.f32 0.0, %v1596
        %v1598 = vpop.f32.mrb[0].mxu0
        %v1599 = vpop.f32.mrb[0].mxu0
        %v1600 = vadd.f32 0.0, %v1599
        %v1601 = vpop.f32.mrb[0].mxu0
        %1602 = vmatprep.mubr.bf16.mxu0 0
        %1603 = vmatmul.mubr.bf16.gmra.mrb[0].mxu0 %v1517
        %v1604 = vpop.f32.mrb[0].mxu0
        %v1605 = vadd.f32 0.0, %v1604
        %v1606 = vpop.f32.mrb[0].mxu0
        %v1607 = vpop.f32.mrb[0].mxu0
        %v1608 = vadd.f32 0.0, %v1607
        %v1609 = vpop.f32.mrb[0].mxu0
        %1610 = vmatprep.mubr.bf16.mxu0 0
        %1611 = vmatmul.mubr.bf16.gmra.mrb[0].mxu0 %v1518
        %v1612 = vpop.f32.mrb[0].mxu0
        %v1613 = vadd.f32 0.0, %v1612
        %v1614 = vpop.f32.mrb[0].mxu0
        %v1615 = vpop.f32.mrb[0].mxu0
        %v1616 = vadd.f32 0.0, %v1615
        %v1617 = vpop.f32.mrb[0].mxu0
        %1618 = vmatprep.mubr.bf16.mxu0 0
        %1619 = vmatmul.mubr.bf16.gmra.mrb[0].mxu0 %v1519
        %v1620 = vpop.f32.mrb[0].mxu0
        %v1621 = vadd.f32 0.0, %v1620
        %v1622 = vpop.f32.mrb[0].mxu0
        %v1623 = vpop.f32.mrb[0].mxu0
        %v1624 = vadd.f32 0.0, %v1623
        %v1625 = vpop.f32.mrb[0].mxu0
        %1626 = vmatprep.mubr.bf16.mxu0 0
        %1627 = vmatmul.mubr.bf16.gmra.mrb[0].mxu0 %v1520
        %v1628 = vpop.f32.mrb[0].mxu0
        %v1629 = vadd.f32 0.0, %v1628
        %v1630 = vpop.f32.mrb[0].mxu0
        %v1631 = vpop.f32.mrb[0].mxu0
        %v1632 = vadd.f32 0.0, %v1631
        %v1633 = vpop.f32.mrb[0].mxu0
        %1634 = vmatprep.mubr.bf16.mxu0 0
        %1635 = vmatmul.mubr.bf16.gmra.mrb[0].mxu0 %v1521
        %v1636 = vpop.f32.mrb[0].mxu0
        %v1637 = vadd.f32 0.0, %v1636
        %v1638 = vpop.f32.mrb[0].mxu0
        %v1639 = vpop.f32.mrb[0].mxu0
        %v1640 = vadd.f32 0.0, %v1639
        %v1641 = vpop.f32.mrb[0].mxu0
        %1642 = vmatprep.mubr.bf16.mxu0 0
        %1643 = vmatmul.mubr.bf16.gmra.mrb[0].mxu0 %v1522
        %v1644 = vpop.f32.mrb[0].mxu0
        %v1645 = vadd.f32 0.0, %v1644
        %v1646 = vpop.f32.mrb[0].mxu0
        %v1647 = vpop.f32.mrb[0].mxu0
        %v1648 = vadd.f32 0.0, %v1647
        %v1649 = vpop.f32.mrb[0].mxu0
        %1650 = vmatprep.mubr.bf16.mxu0 0
        %1651 = vmatmul.mubr.bf16.gmra.mrb[0].mxu0 %v1523
        %v1652 = vpop.f32.mrb[0].mxu0
        %v1653 = vadd.f32 0.0, %v1652
        %v1654 = vpop.f32.mrb[0].mxu0
        %v1655 = vpop.f32.mrb[0].mxu0
        %v1656 = vadd.f32 0.0, %v1655
        %v1657 = vpop.f32.mrb[0].mxu0
        %1658 = vmatprep.mubr.bf16.mxu0 0
        %1659 = vmatmul.mubr.bf16.gmra.mrb[0].mxu0 %v1524
        %v1660 = vpop.f32.mrb[0].mxu0
        %v1661 = vadd.f32 0.0, %v1660
        %v1662 = vpop.f32.mrb[0].mxu0
        %v1663 = vpop.f32.mrb[0].mxu0
        %v1664 = vadd.f32 0.0, %v1663
        %v1665 = vpop.f32.mrb[0].mxu0
        %1666 = vmatprep.mubr.bf16.mxu0 0
        %1667 = vmatmul.mubr.bf16.gmra.mrb[0].mxu0 %v1525
        %v1668 = vpop.f32.mrb[0].mxu0
        %v1669 = vadd.f32 0.0, %v1668
        %v1670 = vpop.f32.mrb[0].mxu0
        %v1671 = vpop.f32.mrb[0].mxu0
        %v1672 = vadd.f32 0.0, %v1671
        %v1673 = vpop.f32.mrb[0].mxu0
        %1674 = vmatprep.mubr.bf16.mxu0 0
        %1675 = vmatmul.mubr.bf16.gmra.mrb[0].mxu0 %v1526
        %v1676 = vpop.f32.mrb[0].mxu0
        %v1677 = vadd.f32 0.0, %v1676
        %v1678 = vpop.f32.mrb[0].mxu0
        %v1679 = vpop.f32.mrb[0].mxu0
        %v1680 = vadd.f32 0.0, %v1679
        %v1681 = vpop.f32.mrb[0].mxu0
        %1682 = vmatprep.mubr.bf16.mxu0 0
        %1683 = vmatmul.mubr.bf16.gmra.mrb[0].mxu0 %v1527
        %v1684 = vpop.f32.mrb[0].mxu0
        %v1685 = vadd.f32 0.0, %v1684
        %v1686 = vpop.f32.mrb[0].mxu0
        %v1687 = vpop.f32.mrb[0].mxu0
        %v1688 = vadd.f32 0.0, %v1687
        %v1689 = vpop.f32.mrb[0].mxu0
        %1690 = vmatprep.mubr.bf16.mxu0 0
        %1691 = vmatmul.mubr.bf16.gmra.mrb[0].mxu0 %v1528
        %v1692 = vpop.f32.mrb[0].mxu0
        %v1693 = vadd.f32 0.0, %v1692
        %v1694 = vpop.f32.mrb[0].mxu0
        %v1695 = vpop.f32.mrb[0].mxu0
        %v1696 = vadd.f32 0.0, %v1695
        %v1697 = vpop.f32.mrb[0].mxu0
        %1698 = vmatprep.mubr.bf16.mxu0 0
        %1699 = vmatmul.mubr.bf16.gmra.mrb[0].mxu0 %v1529
        %v1700 = vpop.f32.mrb[0].mxu0
        %v1701 = vadd.f32 0.0, %v1700
        %v1702 = vpop.f32.mrb[0].mxu0
        %v1703 = vpop.f32.mrb[0].mxu0
        %v1704 = vadd.f32 0.0, %v1703
        %v1705 = vpop.f32.mrb[0].mxu0
        %1706 = vdwg.mxu0
        %v1707 = vadd.f32 %v1385, %v1581
        %v1708 = vadd.f32 %v1386, %v1584
        %v1709 = vadd.f32 %v1387, %v1589
        %v1710 = vadd.f32 %v1388, %v1592
        %v1711 = vadd.f32 %v1389, %v1597
        %v1712 = vadd.f32 %v1390, %v1600
        %v1713 = vadd.f32 %v1391, %v1605
        %v1714 = vadd.f32 %v1392, %v1608
        %v1715 = vadd.f32 %v1393, %v1613
        %v1716 = vadd.f32 %v1394, %v1616
        %v1717 = vadd.f32 %v1395, %v1621
        %v1718 = vadd.f32 %v1396, %v1624
        %v1719 = vadd.f32 %v1397, %v1629
        %v1720 = vadd.f32 %v1398, %v1632
        %v1721 = vadd.f32 %v1399, %v1637
        %v1722 = vadd.f32 %v1400, %v1640
        %v1723 = vadd.f32 %v1401, %v1645
        %v1724 = vadd.f32 %v1402, %v1648
        %v1725 = vadd.f32 %v1403, %v1653
        %v1726 = vadd.f32 %v1404, %v1656
        %v1727 = vadd.f32 %v1405, %v1661
        %v1728 = vadd.f32 %v1406, %v1664
        %v1729 = vadd.f32 %v1407, %v1669
        %v1730 = vadd.f32 %v1408, %v1672
        %v1731 = vadd.f32 %v1409, %v1677
        %v1732 = vadd.f32 %v1410, %v1680
        %v1733 = vadd.f32 %v1411, %v1685
        %v1734 = vadd.f32 %v1412, %v1688
        %v1735 = vadd.f32 %v1413, %v1693
        %v1736 = vadd.f32 %v1414, %v1696
        %v1737 = vadd.f32 %v1415, %v1701
        %v1738 = vadd.f32 %v1416, %v1704
        %1739 = vst.msk [vmem:[%s1384] sm:$0xff] %vm1351, %v1707
        %1740 = vst.msk [vmem:[%s1384 + $0x8] sm:$0xff] %vm1351, %v1708
        %1741 = vst.msk [vmem:[%s1384 + $0x10] sm:$0xff] %vm1351, %v1709
        %1742 = vst.msk [vmem:[%s1384 + $0x18] sm:$0xff] %vm1351, %v1710
        %1743 = vst.msk [vmem:[%s1384 + $0x20] sm:$0xff] %vm1351, %v1711
        %1744 = vst.msk [vmem:[%s1384 + $0x28] sm:$0xff] %vm1351, %v1712
        %1745 = vst.msk [vmem:[%s1384 + $0x30] sm:$0xff] %vm1351, %v1713
        %1746 = vst.msk [vmem:[%s1384 + $0x38] sm:$0xff] %vm1351, %v1714
        %1747 = vst.msk [vmem:[%s1384 + $0x40] sm:$0xff] %vm1351, %v1715
        %1748 = vst.msk [vmem:[%s1384 + $0x48] sm:$0xff] %vm1351, %v1716
        %1749 = vst.msk [vmem:[%s1384 + $0x50] sm:$0xff] %vm1351, %v1717
        %1750 = vst.msk [vmem:[%s1384 + $0x58] sm:$0xff] %vm1351, %v1718
        %1751 = vst.msk [vmem:[%s1384 + $0x60] sm:$0xff] %vm1351, %v1719
        %1752 = vst.msk [vmem:[%s1384 + $0x68] sm:$0xff] %vm1351, %v1720
        %1753 = vst.msk [vmem:[%s1384 + $0x70] sm:$0xff] %vm1351, %v1721
        %1754 = vst.msk [vmem:[%s1384 + $0x78] sm:$0xff] %vm1351, %v1722
        %1755 = vst.msk [vmem:[%s1384 + $0x80] sm:$0xff] %vm1351, %v1723
        %1756 = vst.msk [vmem:[%s1384 + $0x88] sm:$0xff] %vm1351, %v1724
        %1757 = vst.msk [vmem:[%s1384 + $0x90] sm:$0xff] %vm1351, %v1725
        %1758 = vst.msk [vmem:[%s1384 + $0x98] sm:$0xff] %vm1351, %v1726
        %1759 = vst.msk [vmem:[%s1384 + $0xa0] sm:$0xff] %vm1351, %v1727
        %1760 = vst.msk [vmem:[%s1384 + $0xa8] sm:$0xff] %vm1351, %v1728
        %1761 = vst.msk [vmem:[%s1384 + $0xb0] sm:$0xff] %vm1351, %v1729
        %1762 = vst.msk [vmem:[%s1384 + $0xb8] sm:$0xff] %vm1351, %v1730
        %1763 = vst.msk [vmem:[%s1384 + $0xc0] sm:$0xff] %vm1351, %v1731
        %1764 = vst.msk [vmem:[%s1384 + $0xc8] sm:$0xff] %vm1351, %v1732
        %1765 = vst.msk [vmem:[%s1384 + $0xd0] sm:$0xff] %vm1351, %v1733
        %1766 = vst.msk [vmem:[%s1384 + $0xd8] sm:$0xff] %vm1351, %v1734
        %1767 = vst.msk [vmem:[%s1384 + $0xe0] sm:$0xff] %vm1351, %v1735
        %1768 = vst.msk [vmem:[%s1384 + $0xe8] sm:$0xff] %vm1351, %v1736
        %1769 = vst.msk [vmem:[%s1384 + $0xf0] sm:$0xff] %vm1351, %v1737
        %1770 = vst.msk [vmem:[%s1384 + $0xf8] sm:$0xff] %vm1351, %v1738
        %s1771 = scalar_lea.vmem [#allocation2], 512
        %v1772 = vld [vmem:[%s1771] sm:$0xff]
        %v1773 = vld [vmem:[%s1771 + $0x8] sm:$0xff]
        %v1774 = vld [vmem:[%s1771 + $0x10] sm:$0xff]
        %v1775 = vld [vmem:[%s1771 + $0x18] sm:$0xff]
        %v1776 = vld [vmem:[%s1771 + $0x20] sm:$0xff]
        %v1777 = vld [vmem:[%s1771 + $0x28] sm:$0xff]
        %v1778 = vld [vmem:[%s1771 + $0x30] sm:$0xff]
        %v1779 = vld [vmem:[%s1771 + $0x38] sm:$0xff]
        %v1780 = vld [vmem:[%s1771 + $0x40] sm:$0xff]
        %v1781 = vld [vmem:[%s1771 + $0x48] sm:$0xff]
        %v1782 = vld [vmem:[%s1771 + $0x50] sm:$0xff]
        %v1783 = vld [vmem:[%s1771 + $0x58] sm:$0xff]
        %v1784 = vld [vmem:[%s1771 + $0x60] sm:$0xff]
        %v1785 = vld [vmem:[%s1771 + $0x68] sm:$0xff]
        %v1786 = vld [vmem:[%s1771 + $0x70] sm:$0xff]
        %v1787 = vld [vmem:[%s1771 + $0x78] sm:$0xff]
        %v1788 = vld [vmem:[%s1771 + $0x80] sm:$0xff]
        %v1789 = vld [vmem:[%s1771 + $0x88] sm:$0xff]
        %v1790 = vld [vmem:[%s1771 + $0x90] sm:$0xff]
        %v1791 = vld [vmem:[%s1771 + $0x98] sm:$0xff]
        %v1792 = vld [vmem:[%s1771 + $0xa0] sm:$0xff]
        %v1793 = vld [vmem:[%s1771 + $0xa8] sm:$0xff]
        %v1794 = vld [vmem:[%s1771 + $0xb0] sm:$0xff]
        %v1795 = vld [vmem:[%s1771 + $0xb8] sm:$0xff]
        %v1796 = vld [vmem:[%s1771 + $0xc0] sm:$0xff]
        %v1797 = vld [vmem:[%s1771 + $0xc8] sm:$0xff]
        %v1798 = vld [vmem:[%s1771 + $0xd0] sm:$0xff]
        %v1799 = vld [vmem:[%s1771 + $0xd8] sm:$0xff]
        %v1800 = vld [vmem:[%s1771 + $0xe0] sm:$0xff]
        %v1801 = vld [vmem:[%s1771 + $0xe8] sm:$0xff]
        %v1802 = vld [vmem:[%s1771 + $0xf0] sm:$0xff]
        %v1803 = vld [vmem:[%s1771 + $0xf8] sm:$0xff]
        %s1804 = scalar_lea.vmem %s743, 256 [#allocation3]
        %v1805 = vld [vmem:[%s1804] sm:$0xf]
        %v1806 = vld [vmem:[%s1804 + $0x4] sm:$0xf]
        %v1807 = vld [vmem:[%s1804 + $0x8] sm:$0xf]
        %v1808 = vld [vmem:[%s1804 + $0xc] sm:$0xf]
        %v1809 = vld [vmem:[%s1804 + $0x10] sm:$0xf]
        %v1810 = vld [vmem:[%s1804 + $0x14] sm:$0xf]
        %v1811 = vld [vmem:[%s1804 + $0x18] sm:$0xf]
        %v1812 = vld [vmem:[%s1804 + $0x1c] sm:$0xf]
        %v1813 = vld [vmem:[%s1804 + $0x20] sm:$0xf]
        %v1814 = vld [vmem:[%s1804 + $0x24] sm:$0xf]
        %v1815 = vld [vmem:[%s1804 + $0x28] sm:$0xf]
        %v1816 = vld [vmem:[%s1804 + $0x2c] sm:$0xf]
        %v1817 = vld [vmem:[%s1804 + $0x30] sm:$0xf]
        %v1818 = vld [vmem:[%s1804 + $0x34] sm:$0xf]
        %v1819 = vld [vmem:[%s1804 + $0x38] sm:$0xf]
        %v1820 = vld [vmem:[%s1804 + $0x3c] sm:$0xf]
        %v1821 = vld [vmem:[%s1804 + $0x40] sm:$0xf]
        %v1822 = vld [vmem:[%s1804 + $0x44] sm:$0xf]
        %v1823 = vld [vmem:[%s1804 + $0x48] sm:$0xf]
        %v1824 = vld [vmem:[%s1804 + $0x4c] sm:$0xf]
        %v1825 = vld [vmem:[%s1804 + $0x50] sm:$0xf]
        %v1826 = vld [vmem:[%s1804 + $0x54] sm:$0xf]
        %v1827 = vld [vmem:[%s1804 + $0x58] sm:$0xf]
        %v1828 = vld [vmem:[%s1804 + $0x5c] sm:$0xf]
        %v1829 = vld [vmem:[%s1804 + $0x60] sm:$0xf]
        %v1830 = vld [vmem:[%s1804 + $0x64] sm:$0xf]
        %v1831 = vld [vmem:[%s1804 + $0x68] sm:$0xf]
        %v1832 = vld [vmem:[%s1804 + $0x6c] sm:$0xf]
        %v1833 = vld [vmem:[%s1804 + $0x70] sm:$0xf]
        %v1834 = vld [vmem:[%s1804 + $0x74] sm:$0xf]
        %v1835 = vld [vmem:[%s1804 + $0x78] sm:$0xf]
        %v1836 = vld [vmem:[%s1804 + $0x7c] sm:$0xf]
        %v1869 = vunpack.c.l.b16 %v1805
        %v1870 = vunpack.c.l.b16 %v1806
        %v1871 = vunpack.c.l.b16 %v1807
        %v1872 = vunpack.c.l.b16 %v1808
        %v1873 = vunpack.c.l.b16 %v1809
        %v1874 = vunpack.c.l.b16 %v1810
        %v1875 = vunpack.c.l.b16 %v1811
        %v1876 = vunpack.c.l.b16 %v1812
        %v1877 = vunpack.c.l.b16 %v1813
        %v1878 = vunpack.c.l.b16 %v1814
        %v1879 = vunpack.c.l.b16 %v1815
        %v1880 = vunpack.c.l.b16 %v1816
        %v1881 = vunpack.c.l.b16 %v1817
        %v1882 = vunpack.c.l.b16 %v1818
        %v1883 = vunpack.c.l.b16 %v1819
        %v1884 = vunpack.c.l.b16 %v1820
        %v1885 = vunpack.c.l.b16 %v1821
        %v1886 = vunpack.c.l.b16 %v1822
        %v1887 = vunpack.c.l.b16 %v1823
        %v1888 = vunpack.c.l.b16 %v1824
        %v1889 = vunpack.c.l.b16 %v1825
        %v1890 = vunpack.c.l.b16 %v1826
        %v1891 = vunpack.c.l.b16 %v1827
        %v1892 = vunpack.c.l.b16 %v1828
        %v1893 = vunpack.c.l.b16 %v1829
        %v1894 = vunpack.c.l.b16 %v1830
        %v1895 = vunpack.c.l.b16 %v1831
        %v1896 = vunpack.c.l.b16 %v1832
        %v1897 = vunpack.c.l.b16 %v1833
        %v1898 = vunpack.c.l.b16 %v1834
        %v1899 = vunpack.c.l.b16 %v1835
        %v1900 = vunpack.c.l.b16 %v1836
        %v1901 = vpack.c.b16 %v1870, %v1869
        %v1902 = vpack.c.b16 %v1872, %v1871
        %v1903 = vpack.c.b16 %v1874, %v1873
        %v1904 = vpack.c.b16 %v1876, %v1875
        %v1905 = vpack.c.b16 %v1878, %v1877
        %v1906 = vpack.c.b16 %v1880, %v1879
        %v1907 = vpack.c.b16 %v1882, %v1881
        %v1908 = vpack.c.b16 %v1884, %v1883
        %v1909 = vpack.c.b16 %v1886, %v1885
        %v1910 = vpack.c.b16 %v1888, %v1887
        %v1911 = vpack.c.b16 %v1890, %v1889
        %v1912 = vpack.c.b16 %v1892, %v1891
        %v1913 = vpack.c.b16 %v1894, %v1893
        %v1914 = vpack.c.b16 %v1896, %v1895
        %v1915 = vpack.c.b16 %v1898, %v1897
        %v1916 = vpack.c.b16 %v1900, %v1899
        %1933 = vmatprep.subr.bf16.mxu0 0
        %1934 = vmatpush1.bf16.msra.mxu0 %v1142
        %1935 = vmatprep.subr.bf16.mxu0 0
        %1936 = vmatpush1.bf16.msra.mxu0 %v1143
        %1937 = vmatprep.subr.bf16.mxu0 0
        %1938 = vmatpush1.bf16.msra.mxu0 %v1144
        %1939 = vmatprep.subr.bf16.mxu0 0
        %1940 = vmatpush1.bf16.msra.mxu0 %v1145
        %1941 = vmatprep.subr.bf16.mxu0 0
        %1942 = vmatpush1.bf16.msra.mxu0 %v1146
        %1943 = vmatprep.subr.bf16.mxu0 0
        %1944 = vmatpush1.bf16.msra.mxu0 %v1147
        %1945 = vmatprep.subr.bf16.mxu0 0
        %1946 = vmatpush1.bf16.msra.mxu0 %v1148
        %1947 = vmatprep.subr.bf16.mxu0 0
        %1948 = vmatpush1.bf16.msra.mxu0 %v1149
        %1949 = vmatprep.subr.bf16.mxu0 0
        %1950 = vmatpush1.bf16.msra.mxu0 0
        %1951 = vmatprep.subr.bf16.mxu0 0
        %1952 = vmatpush1.bf16.msra.mxu0 0
        %1953 = vmatprep.subr.bf16.mxu0 0
        %1954 = vmatpush1.bf16.msra.mxu0 0
        %1955 = vmatprep.subr.bf16.mxu0 0
        %1956 = vmatpush1.bf16.msra.mxu0 0
        %1957 = vmatprep.subr.bf16.mxu0 0
        %1958 = vmatpush1.bf16.msra.mxu0 0
        %1959 = vmatprep.subr.bf16.mxu0 0
        %1960 = vmatpush1.bf16.msra.mxu0 0
        %1961 = vmatprep.subr.bf16.mxu0 0
        %1962 = vmatpush1.bf16.msra.mxu0 0
        %1963 = vmatprep.subr.bf16.mxu0 0
        %1964 = vmatpush1.bf16.msra.mxu0 0
        %1965 = vmatprep.mubr.bf16.mxu0 0
        %1966 = vmatmul.mubr.bf16.gmra.mrb[0].mxu0 %v1901
        %v1967 = vpop.f32.mrb[0].mxu0
        %v1968 = vadd.f32 0.0, %v1967
        %v1969 = vpop.f32.mrb[0].mxu0
        %v1970 = vpop.f32.mrb[0].mxu0
        %v1971 = vadd.f32 0.0, %v1970
        %v1972 = vpop.f32.mrb[0].mxu0
        %1973 = vmatprep.mubr.bf16.mxu0 0
        %1974 = vmatmul.mubr.bf16.gmra.mrb[0].mxu0 %v1902
        %v1975 = vpop.f32.mrb[0].mxu0
        %v1976 = vadd.f32 0.0, %v1975
        %v1977 = vpop.f32.mrb[0].mxu0
        %v1978 = vpop.f32.mrb[0].mxu0
        %v1979 = vadd.f32 0.0, %v1978
        %v1980 = vpop.f32.mrb[0].mxu0
        %1981 = vmatprep.mubr.bf16.mxu0 0
        %1982 = vmatmul.mubr.bf16.gmra.mrb[0].mxu0 %v1903
        %v1983 = vpop.f32.mrb[0].mxu0
        %v1984 = vadd.f32 0.0, %v1983
        %v1985 = vpop.f32.mrb[0].mxu0
        %v1986 = vpop.f32.mrb[0].mxu0
        %v1987 = vadd.f32 0.0, %v1986
        %v1988 = vpop.f32.mrb[0].mxu0
        %1989 = vmatprep.mubr.bf16.mxu0 0
        %1990 = vmatmul.mubr.bf16.gmra.mrb[0].mxu0 %v1904
        %v1991 = vpop.f32.mrb[0].mxu0
        %v1992 = vadd.f32 0.0, %v1991
        %v1993 = vpop.f32.mrb[0].mxu0
        %v1994 = vpop.f32.mrb[0].mxu0
        %v1995 = vadd.f32 0.0, %v1994
        %v1996 = vpop.f32.mrb[0].mxu0
        %1997 = vmatprep.mubr.bf16.mxu0 0
        %1998 = vmatmul.mubr.bf16.gmra.mrb[0].mxu0 %v1905
        %v1999 = vpop.f32.mrb[0].mxu0
        %v2000 = vadd.f32 0.0, %v1999
        %v2001 = vpop.f32.mrb[0].mxu0
        %v2002 = vpop.f32.mrb[0].mxu0
        %v2003 = vadd.f32 0.0, %v2002
        %v2004 = vpop.f32.mrb[0].mxu0
        %2005 = vmatprep.mubr.bf16.mxu0 0
        %2006 = vmatmul.mubr.bf16.gmra.mrb[0].mxu0 %v1906
        %v2007 = vpop.f32.mrb[0].mxu0
        %v2008 = vadd.f32 0.0, %v2007
        %v2009 = vpop.f32.mrb[0].mxu0
        %v2010 = vpop.f32.mrb[0].mxu0
        %v2011 = vadd.f32 0.0, %v2010
        %v2012 = vpop.f32.mrb[0].mxu0
        %2013 = vmatprep.mubr.bf16.mxu0 0
        %2014 = vmatmul.mubr.bf16.gmra.mrb[0].mxu0 %v1907
        %v2015 = vpop.f32.mrb[0].mxu0
        %v2016 = vadd.f32 0.0, %v2015
        %v2017 = vpop.f32.mrb[0].mxu0
        %v2018 = vpop.f32.mrb[0].mxu0
        %v2019 = vadd.f32 0.0, %v2018
        %v2020 = vpop.f32.mrb[0].mxu0
        %2021 = vmatprep.mubr.bf16.mxu0 0
        %2022 = vmatmul.mubr.bf16.gmra.mrb[0].mxu0 %v1908
        %v2023 = vpop.f32.mrb[0].mxu0
        %v2024 = vadd.f32 0.0, %v2023
        %v2025 = vpop.f32.mrb[0].mxu0
        %v2026 = vpop.f32.mrb[0].mxu0
        %v2027 = vadd.f32 0.0, %v2026
        %v2028 = vpop.f32.mrb[0].mxu0
        %2029 = vmatprep.mubr.bf16.mxu0 0
        %2030 = vmatmul.mubr.bf16.gmra.mrb[0].mxu0 %v1909
        %v2031 = vpop.f32.mrb[0].mxu0
        %v2032 = vadd.f32 0.0, %v2031
        %v2033 = vpop.f32.mrb[0].mxu0
        %v2034 = vpop.f32.mrb[0].mxu0
        %v2035 = vadd.f32 0.0, %v2034
        %v2036 = vpop.f32.mrb[0].mxu0
        %2037 = vmatprep.mubr.bf16.mxu0 0
        %2038 = vmatmul.mubr.bf16.gmra.mrb[0].mxu0 %v1910
        %v2039 = vpop.f32.mrb[0].mxu0
        %v2040 = vadd.f32 0.0, %v2039
        %v2041 = vpop.f32.mrb[0].mxu0
        %v2042 = vpop.f32.mrb[0].mxu0
        %v2043 = vadd.f32 0.0, %v2042
        %v2044 = vpop.f32.mrb[0].mxu0
        %2045 = vmatprep.mubr.bf16.mxu0 0
        %2046 = vmatmul.mubr.bf16.gmra.mrb[0].mxu0 %v1911
        %v2047 = vpop.f32.mrb[0].mxu0
        %v2048 = vadd.f32 0.0, %v2047
        %v2049 = vpop.f32.mrb[0].mxu0
        %v2050 = vpop.f32.mrb[0].mxu0
        %v2051 = vadd.f32 0.0, %v2050
        %v2052 = vpop.f32.mrb[0].mxu0
        %2053 = vmatprep.mubr.bf16.mxu0 0
        %2054 = vmatmul.mubr.bf16.gmra.mrb[0].mxu0 %v1912
        %v2055 = vpop.f32.mrb[0].mxu0
        %v2056 = vadd.f32 0.0, %v2055
        %v2057 = vpop.f32.mrb[0].mxu0
        %v2058 = vpop.f32.mrb[0].mxu0
        %v2059 = vadd.f32 0.0, %v2058
        %v2060 = vpop.f32.mrb[0].mxu0
        %2061 = vmatprep.mubr.bf16.mxu0 0
        %2062 = vmatmul.mubr.bf16.gmra.mrb[0].mxu0 %v1913
        %v2063 = vpop.f32.mrb[0].mxu0
        %v2064 = vadd.f32 0.0, %v2063
        %v2065 = vpop.f32.mrb[0].mxu0
        %v2066 = vpop.f32.mrb[0].mxu0
        %v2067 = vadd.f32 0.0, %v2066
        %v2068 = vpop.f32.mrb[0].mxu0
        %2069 = vmatprep.mubr.bf16.mxu0 0
        %2070 = vmatmul.mubr.bf16.gmra.mrb[0].mxu0 %v1914
        %v2071 = vpop.f32.mrb[0].mxu0
        %v2072 = vadd.f32 0.0, %v2071
        %v2073 = vpop.f32.mrb[0].mxu0
        %v2074 = vpop.f32.mrb[0].mxu0
        %v2075 = vadd.f32 0.0, %v2074
        %v2076 = vpop.f32.mrb[0].mxu0
        %2077 = vmatprep.mubr.bf16.mxu0 0
        %2078 = vmatmul.mubr.bf16.gmra.mrb[0].mxu0 %v1915
        %v2079 = vpop.f32.mrb[0].mxu0
        %v2080 = vadd.f32 0.0, %v2079
        %v2081 = vpop.f32.mrb[0].mxu0
        %v2082 = vpop.f32.mrb[0].mxu0
        %v2083 = vadd.f32 0.0, %v2082
        %v2084 = vpop.f32.mrb[0].mxu0
        %2085 = vmatprep.mubr.bf16.mxu0 0
        %2086 = vmatmul.mubr.bf16.gmra.mrb[0].mxu0 %v1916
        %v2087 = vpop.f32.mrb[0].mxu0
        %v2088 = vadd.f32 0.0, %v2087
        %v2089 = vpop.f32.mrb[0].mxu0
        %v2090 = vpop.f32.mrb[0].mxu0
        %v2091 = vadd.f32 0.0, %v2090
        %v2092 = vpop.f32.mrb[0].mxu0
        %2093 = vdwg.mxu0
        %v2094 = vadd.f32 %v1772, %v1968
        %v2095 = vadd.f32 %v1773, %v1971
        %v2096 = vadd.f32 %v1774, %v1976
        %v2097 = vadd.f32 %v1775, %v1979
        %v2098 = vadd.f32 %v1776, %v1984
        %v2099 = vadd.f32 %v1777, %v1987
        %v2100 = vadd.f32 %v1778, %v1992
        %v2101 = vadd.f32 %v1779, %v1995
        %v2102 = vadd.f32 %v1780, %v2000
        %v2103 = vadd.f32 %v1781, %v2003
        %v2104 = vadd.f32 %v1782, %v2008
        %v2105 = vadd.f32 %v1783, %v2011
        %v2106 = vadd.f32 %v1784, %v2016
        %v2107 = vadd.f32 %v1785, %v2019
        %v2108 = vadd.f32 %v1786, %v2024
        %v2109 = vadd.f32 %v1787, %v2027
        %v2110 = vadd.f32 %v1788, %v2032
        %v2111 = vadd.f32 %v1789, %v2035
        %v2112 = vadd.f32 %v1790, %v2040
        %v2113 = vadd.f32 %v1791, %v2043
        %v2114 = vadd.f32 %v1792, %v2048
        %v2115 = vadd.f32 %v1793, %v2051
        %v2116 = vadd.f32 %v1794, %v2056
        %v2117 = vadd.f32 %v1795, %v2059
        %v2118 = vadd.f32 %v1796, %v2064
        %v2119 = vadd.f32 %v1797, %v2067
        %v2120 = vadd.f32 %v1798, %v2072
        %v2121 = vadd.f32 %v1799, %v2075
        %v2122 = vadd.f32 %v1800, %v2080
        %v2123 = vadd.f32 %v1801, %v2083
        %v2124 = vadd.f32 %v1802, %v2088
        %v2125 = vadd.f32 %v1803, %v2091
        %2126 = vst.msk [vmem:[%s1771] sm:$0xff] %vm1351, %v2094
        %2127 = vst.msk [vmem:[%s1771 + $0x8] sm:$0xff] %vm1351, %v2095
        %2128 = vst.msk [vmem:[%s1771 + $0x10] sm:$0xff] %vm1351, %v2096
        %2129 = vst.msk [vmem:[%s1771 + $0x18] sm:$0xff] %vm1351, %v2097
        %2130 = vst.msk [vmem:[%s1771 + $0x20] sm:$0xff] %vm1351, %v2098
        %2131 = vst.msk [vmem:[%s1771 + $0x28] sm:$0xff] %vm1351, %v2099
        %2132 = vst.msk [vmem:[%s1771 + $0x30] sm:$0xff] %vm1351, %v2100
        %2133 = vst.msk [vmem:[%s1771 + $0x38] sm:$0xff] %vm1351, %v2101
        %2134 = vst.msk [vmem:[%s1771 + $0x40] sm:$0xff] %vm1351, %v2102
        %2135 = vst.msk [vmem:[%s1771 + $0x48] sm:$0xff] %vm1351, %v2103
        %2136 = vst.msk [vmem:[%s1771 + $0x50] sm:$0xff] %vm1351, %v2104
        %2137 = vst.msk [vmem:[%s1771 + $0x58] sm:$0xff] %vm1351, %v2105
        %2138 = vst.msk [vmem:[%s1771 + $0x60] sm:$0xff] %vm1351, %v2106
        %2139 = vst.msk [vmem:[%s1771 + $0x68] sm:$0xff] %vm1351, %v2107
        %2140 = vst.msk [vmem:[%s1771 + $0x70] sm:$0xff] %vm1351, %v2108
        %2141 = vst.msk [vmem:[%s1771 + $0x78] sm:$0xff] %vm1351, %v2109
        %2142 = vst.msk [vmem:[%s1771 + $0x80] sm:$0xff] %vm1351, %v2110
        %2143 = vst.msk [vmem:[%s1771 + $0x88] sm:$0xff] %vm1351, %v2111
        %2144 = vst.msk [vmem:[%s1771 + $0x90] sm:$0xff] %vm1351, %v2112
        %2145 = vst.msk [vmem:[%s1771 + $0x98] sm:$0xff] %vm1351, %v2113
        %2146 = vst.msk [vmem:[%s1771 + $0xa0] sm:$0xff] %vm1351, %v2114
        %2147 = vst.msk [vmem:[%s1771 + $0xa8] sm:$0xff] %vm1351, %v2115
        %2148 = vst.msk [vmem:[%s1771 + $0xb0] sm:$0xff] %vm1351, %v2116
        %2149 = vst.msk [vmem:[%s1771 + $0xb8] sm:$0xff] %vm1351, %v2117
        %2150 = vst.msk [vmem:[%s1771 + $0xc0] sm:$0xff] %vm1351, %v2118
        %2151 = vst.msk [vmem:[%s1771 + $0xc8] sm:$0xff] %vm1351, %v2119
        %2152 = vst.msk [vmem:[%s1771 + $0xd0] sm:$0xff] %vm1351, %v2120
        %2153 = vst.msk [vmem:[%s1771 + $0xd8] sm:$0xff] %vm1351, %v2121
        %2154 = vst.msk [vmem:[%s1771 + $0xe0] sm:$0xff] %vm1351, %v2122
        %2155 = vst.msk [vmem:[%s1771 + $0xe8] sm:$0xff] %vm1351, %v2123
        %2156 = vst.msk [vmem:[%s1771 + $0xf0] sm:$0xff] %vm1351, %v2124
        %2157 = vst.msk [vmem:[%s1771 + $0xf8] sm:$0xff] %vm1351, %v2125
        %s2158 = scalar_lea.vmem [#allocation2], 768
        %v2159 = vld [vmem:[%s2158] sm:$0xff]
        %v2160 = vld [vmem:[%s2158 + $0x8] sm:$0xff]
        %v2161 = vld [vmem:[%s2158 + $0x10] sm:$0xff]
        %v2162 = vld [vmem:[%s2158 + $0x18] sm:$0xff]
        %v2163 = vld [vmem:[%s2158 + $0x20] sm:$0xff]
        %v2164 = vld [vmem:[%s2158 + $0x28] sm:$0xff]
        %v2165 = vld [vmem:[%s2158 + $0x30] sm:$0xff]
        %v2166 = vld [vmem:[%s2158 + $0x38] sm:$0xff]
        %v2167 = vld [vmem:[%s2158 + $0x40] sm:$0xff]
        %v2168 = vld [vmem:[%s2158 + $0x48] sm:$0xff]
        %v2169 = vld [vmem:[%s2158 + $0x50] sm:$0xff]
        %v2170 = vld [vmem:[%s2158 + $0x58] sm:$0xff]
        %v2171 = vld [vmem:[%s2158 + $0x60] sm:$0xff]
        %v2172 = vld [vmem:[%s2158 + $0x68] sm:$0xff]
        %v2173 = vld [vmem:[%s2158 + $0x70] sm:$0xff]
        %v2174 = vld [vmem:[%s2158 + $0x78] sm:$0xff]
        %v2175 = vld [vmem:[%s2158 + $0x80] sm:$0xff]
        %v2176 = vld [vmem:[%s2158 + $0x88] sm:$0xff]
        %v2177 = vld [vmem:[%s2158 + $0x90] sm:$0xff]
        %v2178 = vld [vmem:[%s2158 + $0x98] sm:$0xff]
        %v2179 = vld [vmem:[%s2158 + $0xa0] sm:$0xff]
        %v2180 = vld [vmem:[%s2158 + $0xa8] sm:$0xff]
        %v2181 = vld [vmem:[%s2158 + $0xb0] sm:$0xff]
        %v2182 = vld [vmem:[%s2158 + $0xb8] sm:$0xff]
        %v2183 = vld [vmem:[%s2158 + $0xc0] sm:$0xff]
        %v2184 = vld [vmem:[%s2158 + $0xc8] sm:$0xff]
        %v2185 = vld [vmem:[%s2158 + $0xd0] sm:$0xff]
        %v2186 = vld [vmem:[%s2158 + $0xd8] sm:$0xff]
        %v2187 = vld [vmem:[%s2158 + $0xe0] sm:$0xff]
        %v2188 = vld [vmem:[%s2158 + $0xe8] sm:$0xff]
        %v2189 = vld [vmem:[%s2158 + $0xf0] sm:$0xff]
        %v2190 = vld [vmem:[%s2158 + $0xf8] sm:$0xff]
        %s2191 = scalar_lea.vmem %s743, 384 [#allocation3]
        %v2192 = vld [vmem:[%s2191] sm:$0xf]
        %v2193 = vld [vmem:[%s2191 + $0x4] sm:$0xf]
        %v2194 = vld [vmem:[%s2191 + $0x8] sm:$0xf]
        %v2195 = vld [vmem:[%s2191 + $0xc] sm:$0xf]
        %v2196 = vld [vmem:[%s2191 + $0x10] sm:$0xf]
        %v2197 = vld [vmem:[%s2191 + $0x14] sm:$0xf]
        %v2198 = vld [vmem:[%s2191 + $0x18] sm:$0xf]
        %v2199 = vld [vmem:[%s2191 + $0x1c] sm:$0xf]
        %v2200 = vld [vmem:[%s2191 + $0x20] sm:$0xf]
        %v2201 = vld [vmem:[%s2191 + $0x24] sm:$0xf]
        %v2202 = vld [vmem:[%s2191 + $0x28] sm:$0xf]
        %v2203 = vld [vmem:[%s2191 + $0x2c] sm:$0xf]
        %v2204 = vld [vmem:[%s2191 + $0x30] sm:$0xf]
        %v2205 = vld [vmem:[%s2191 + $0x34] sm:$0xf]
        %v2206 = vld [vmem:[%s2191 + $0x38] sm:$0xf]
        %v2207 = vld [vmem:[%s2191 + $0x3c] sm:$0xf]
        %v2208 = vld [vmem:[%s2191 + $0x40] sm:$0xf]
        %v2209 = vld [vmem:[%s2191 + $0x44] sm:$0xf]
        %v2210 = vld [vmem:[%s2191 + $0x48] sm:$0xf]
        %v2211 = vld [vmem:[%s2191 + $0x4c] sm:$0xf]
        %v2212 = vld [vmem:[%s2191 + $0x50] sm:$0xf]
        %v2213 = vld [vmem:[%s2191 + $0x54] sm:$0xf]
        %v2214 = vld [vmem:[%s2191 + $0x58] sm:$0xf]
        %v2215 = vld [vmem:[%s2191 + $0x5c] sm:$0xf]
        %v2216 = vld [vmem:[%s2191 + $0x60] sm:$0xf]
        %v2217 = vld [vmem:[%s2191 + $0x64] sm:$0xf]
        %v2218 = vld [vmem:[%s2191 + $0x68] sm:$0xf]
        %v2219 = vld [vmem:[%s2191 + $0x6c] sm:$0xf]
        %v2220 = vld [vmem:[%s2191 + $0x70] sm:$0xf]
        %v2221 = vld [vmem:[%s2191 + $0x74] sm:$0xf]
        %v2222 = vld [vmem:[%s2191 + $0x78] sm:$0xf]
        %v2223 = vld [vmem:[%s2191 + $0x7c] sm:$0xf]
        %v2256 = vunpack.c.l.b16 %v2192
        %v2257 = vunpack.c.l.b16 %v2193
        %v2258 = vunpack.c.l.b16 %v2194
        %v2259 = vunpack.c.l.b16 %v2195
        %v2260 = vunpack.c.l.b16 %v2196
        %v2261 = vunpack.c.l.b16 %v2197
        %v2262 = vunpack.c.l.b16 %v2198
        %v2263 = vunpack.c.l.b16 %v2199
        %v2264 = vunpack.c.l.b16 %v2200
        %v2265 = vunpack.c.l.b16 %v2201
        %v2266 = vunpack.c.l.b16 %v2202
        %v2267 = vunpack.c.l.b16 %v2203
        %v2268 = vunpack.c.l.b16 %v2204
        %v2269 = vunpack.c.l.b16 %v2205
        %v2270 = vunpack.c.l.b16 %v2206
        %v2271 = vunpack.c.l.b16 %v2207
        %v2272 = vunpack.c.l.b16 %v2208
        %v2273 = vunpack.c.l.b16 %v2209
        %v2274 = vunpack.c.l.b16 %v2210
        %v2275 = vunpack.c.l.b16 %v2211
        %v2276 = vunpack.c.l.b16 %v2212
        %v2277 = vunpack.c.l.b16 %v2213
        %v2278 = vunpack.c.l.b16 %v2214
        %v2279 = vunpack.c.l.b16 %v2215
        %v2280 = vunpack.c.l.b16 %v2216
        %v2281 = vunpack.c.l.b16 %v2217
        %v2282 = vunpack.c.l.b16 %v2218
        %v2283 = vunpack.c.l.b16 %v2219
        %v2284 = vunpack.c.l.b16 %v2220
        %v2285 = vunpack.c.l.b16 %v2221
        %v2286 = vunpack.c.l.b16 %v2222
        %v2287 = vunpack.c.l.b16 %v2223
        %v2288 = vpack.c.b16 %v2257, %v2256
        %v2289 = vpack.c.b16 %v2259, %v2258
        %v2290 = vpack.c.b16 %v2261, %v2260
        %v2291 = vpack.c.b16 %v2263, %v2262
        %v2292 = vpack.c.b16 %v2265, %v2264
        %v2293 = vpack.c.b16 %v2267, %v2266
        %v2294 = vpack.c.b16 %v2269, %v2268
        %v2295 = vpack.c.b16 %v2271, %v2270
        %v2296 = vpack.c.b16 %v2273, %v2272
        %v2297 = vpack.c.b16 %v2275, %v2274
        %v2298 = vpack.c.b16 %v2277, %v2276
        %v2299 = vpack.c.b16 %v2279, %v2278
        %v2300 = vpack.c.b16 %v2281, %v2280
        %v2301 = vpack.c.b16 %v2283, %v2282
        %v2302 = vpack.c.b16 %v2285, %v2284
        %v2303 = vpack.c.b16 %v2287, %v2286
        %2320 = vmatprep.subr.bf16.mxu0 0
        %2321 = vmatpush1.bf16.msra.mxu0 %v1142
        %2322 = vmatprep.subr.bf16.mxu0 0
        %2323 = vmatpush1.bf16.msra.mxu0 %v1143
        %2324 = vmatprep.subr.bf16.mxu0 0
        %2325 = vmatpush1.bf16.msra.mxu0 %v1144
        %2326 = vmatprep.subr.bf16.mxu0 0
        %2327 = vmatpush1.bf16.msra.mxu0 %v1145
        %2328 = vmatprep.subr.bf16.mxu0 0
        %2329 = vmatpush1.bf16.msra.mxu0 %v1146
        %2330 = vmatprep.subr.bf16.mxu0 0
        %2331 = vmatpush1.bf16.msra.mxu0 %v1147
        %2332 = vmatprep.subr.bf16.mxu0 0
        %2333 = vmatpush1.bf16.msra.mxu0 %v1148
        %2334 = vmatprep.subr.bf16.mxu0 0
        %2335 = vmatpush1.bf16.msra.mxu0 %v1149
        %2336 = vmatprep.subr.bf16.mxu0 0
        %2337 = vmatpush1.bf16.msra.mxu0 0
        %2338 = vmatprep.subr.bf16.mxu0 0
        %2339 = vmatpush1.bf16.msra.mxu0 0
        %2340 = vmatprep.subr.bf16.mxu0 0
        %2341 = vmatpush1.bf16.msra.mxu0 0
        %2342 = vmatprep.subr.bf16.mxu0 0
        %2343 = vmatpush1.bf16.msra.mxu0 0
        %2344 = vmatprep.subr.bf16.mxu0 0
        %2345 = vmatpush1.bf16.msra.mxu0 0
        %2346 = vmatprep.subr.bf16.mxu0 0
        %2347 = vmatpush1.bf16.msra.mxu0 0
        %2348 = vmatprep.subr.bf16.mxu0 0
        %2349 = vmatpush1.bf16.msra.mxu0 0
        %2350 = vmatprep.subr.bf16.mxu0 0
        %2351 = vmatpush1.bf16.msra.mxu0 0
        %2352 = vmatprep.mubr.bf16.mxu0 0
        %2353 = vmatmul.mubr.bf16.gmra.mrb[0].mxu0 %v2288
        %v2354 = vpop.f32.mrb[0].mxu0
        %v2355 = vadd.f32 0.0, %v2354
        %v2356 = vpop.f32.mrb[0].mxu0
        %v2357 = vpop.f32.mrb[0].mxu0
        %v2358 = vadd.f32 0.0, %v2357
        %v2359 = vpop.f32.mrb[0].mxu0
        %2360 = vmatprep.mubr.bf16.mxu0 0
        %2361 = vmatmul.mubr.bf16.gmra.mrb[0].mxu0 %v2289
        %v2362 = vpop.f32.mrb[0].mxu0
        %v2363 = vadd.f32 0.0, %v2362
        %v2364 = vpop.f32.mrb[0].mxu0
        %v2365 = vpop.f32.mrb[0].mxu0
        %v2366 = vadd.f32 0.0, %v2365
        %v2367 = vpop.f32.mrb[0].mxu0
        %2368 = vmatprep.mubr.bf16.mxu0 0
        %2369 = vmatmul.mubr.bf16.gmra.mrb[0].mxu0 %v2290
        %v2370 = vpop.f32.mrb[0].mxu0
        %v2371 = vadd.f32 0.0, %v2370
        %v2372 = vpop.f32.mrb[0].mxu0
        %v2373 = vpop.f32.mrb[0].mxu0
        %v2374 = vadd.f32 0.0, %v2373
        %v2375 = vpop.f32.mrb[0].mxu0
        %2376 = vmatprep.mubr.bf16.mxu0 0
        %2377 = vmatmul.mubr.bf16.gmra.mrb[0].mxu0 %v2291
        %v2378 = vpop.f32.mrb[0].mxu0
        %v2379 = vadd.f32 0.0, %v2378
        %v2380 = vpop.f32.mrb[0].mxu0
        %v2381 = vpop.f32.mrb[0].mxu0
        %v2382 = vadd.f32 0.0, %v2381
        %v2383 = vpop.f32.mrb[0].mxu0
        %2384 = vmatprep.mubr.bf16.mxu0 0
        %2385 = vmatmul.mubr.bf16.gmra.mrb[0].mxu0 %v2292
        %v2386 = vpop.f32.mrb[0].mxu0
        %v2387 = vadd.f32 0.0, %v2386
        %v2388 = vpop.f32.mrb[0].mxu0
        %v2389 = vpop.f32.mrb[0].mxu0
        %v2390 = vadd.f32 0.0, %v2389
        %v2391 = vpop.f32.mrb[0].mxu0
        %2392 = vmatprep.mubr.bf16.mxu0 0
        %2393 = vmatmul.mubr.bf16.gmra.mrb[0].mxu0 %v2293
        %v2394 = vpop.f32.mrb[0].mxu0
        %v2395 = vadd.f32 0.0, %v2394
        %v2396 = vpop.f32.mrb[0].mxu0
        %v2397 = vpop.f32.mrb[0].mxu0
        %v2398 = vadd.f32 0.0, %v2397
        %v2399 = vpop.f32.mrb[0].mxu0
        %2400 = vmatprep.mubr.bf16.mxu0 0
        %2401 = vmatmul.mubr.bf16.gmra.mrb[0].mxu0 %v2294
        %v2402 = vpop.f32.mrb[0].mxu0
        %v2403 = vadd.f32 0.0, %v2402
        %v2404 = vpop.f32.mrb[0].mxu0
        %v2405 = vpop.f32.mrb[0].mxu0
        %v2406 = vadd.f32 0.0, %v2405
        %v2407 = vpop.f32.mrb[0].mxu0
        %2408 = vmatprep.mubr.bf16.mxu0 0
        %2409 = vmatmul.mubr.bf16.gmra.mrb[0].mxu0 %v2295
        %v2410 = vpop.f32.mrb[0].mxu0
        %v2411 = vadd.f32 0.0, %v2410
        %v2412 = vpop.f32.mrb[0].mxu0
        %v2413 = vpop.f32.mrb[0].mxu0
        %v2414 = vadd.f32 0.0, %v2413
        %v2415 = vpop.f32.mrb[0].mxu0
        %2416 = vmatprep.mubr.bf16.mxu0 0
        %2417 = vmatmul.mubr.bf16.gmra.mrb[0].mxu0 %v2296
        %v2418 = vpop.f32.mrb[0].mxu0
        %v2419 = vadd.f32 0.0, %v2418
        %v2420 = vpop.f32.mrb[0].mxu0
        %v2421 = vpop.f32.mrb[0].mxu0
        %v2422 = vadd.f32 0.0, %v2421
        %v2423 = vpop.f32.mrb[0].mxu0
        %2424 = vmatprep.mubr.bf16.mxu0 0
        %2425 = vmatmul.mubr.bf16.gmra.mrb[0].mxu0 %v2297
        %v2426 = vpop.f32.mrb[0].mxu0
        %v2427 = vadd.f32 0.0, %v2426
        %v2428 = vpop.f32.mrb[0].mxu0
        %v2429 = vpop.f32.mrb[0].mxu0
        %v2430 = vadd.f32 0.0, %v2429
        %v2431 = vpop.f32.mrb[0].mxu0
        %2432 = vmatprep.mubr.bf16.mxu0 0
        %2433 = vmatmul.mubr.bf16.gmra.mrb[0].mxu0 %v2298
        %v2434 = vpop.f32.mrb[0].mxu0
        %v2435 = vadd.f32 0.0, %v2434
        %v2436 = vpop.f32.mrb[0].mxu0
        %v2437 = vpop.f32.mrb[0].mxu0
        %v2438 = vadd.f32 0.0, %v2437
        %v2439 = vpop.f32.mrb[0].mxu0
        %2440 = vmatprep.mubr.bf16.mxu0 0
        %2441 = vmatmul.mubr.bf16.gmra.mrb[0].mxu0 %v2299
        %v2442 = vpop.f32.mrb[0].mxu0
        %v2443 = vadd.f32 0.0, %v2442
        %v2444 = vpop.f32.mrb[0].mxu0
        %v2445 = vpop.f32.mrb[0].mxu0
        %v2446 = vadd.f32 0.0, %v2445
        %v2447 = vpop.f32.mrb[0].mxu0
        %2448 = vmatprep.mubr.bf16.mxu0 0
        %2449 = vmatmul.mubr.bf16.gmra.mrb[0].mxu0 %v2300
        %v2450 = vpop.f32.mrb[0].mxu0
        %v2451 = vadd.f32 0.0, %v2450
        %v2452 = vpop.f32.mrb[0].mxu0
        %v2453 = vpop.f32.mrb[0].mxu0
        %v2454 = vadd.f32 0.0, %v2453
        %v2455 = vpop.f32.mrb[0].mxu0
        %2456 = vmatprep.mubr.bf16.mxu0 0
        %2457 = vmatmul.mubr.bf16.gmra.mrb[0].mxu0 %v2301
        %v2458 = vpop.f32.mrb[0].mxu0
        %v2459 = vadd.f32 0.0, %v2458
        %v2460 = vpop.f32.mrb[0].mxu0
        %v2461 = vpop.f32.mrb[0].mxu0
        %v2462 = vadd.f32 0.0, %v2461
        %v2463 = vpop.f32.mrb[0].mxu0
        %2464 = vmatprep.mubr.bf16.mxu0 0
        %2465 = vmatmul.mubr.bf16.gmra.mrb[0].mxu0 %v2302
        %v2466 = vpop.f32.mrb[0].mxu0
        %v2467 = vadd.f32 0.0, %v2466
        %v2468 = vpop.f32.mrb[0].mxu0
        %v2469 = vpop.f32.mrb[0].mxu0
        %v2470 = vadd.f32 0.0, %v2469
        %v2471 = vpop.f32.mrb[0].mxu0
        %2472 = vmatprep.mubr.bf16.mxu0 0
        %2473 = vmatmul.mubr.bf16.gmra.mrb[0].mxu0 %v2303
        %v2474 = vpop.f32.mrb[0].mxu0
        %v2475 = vadd.f32 0.0, %v2474
        %v2476 = vpop.f32.mrb[0].mxu0
        %v2477 = vpop.f32.mrb[0].mxu0
        %v2478 = vadd.f32 0.0, %v2477
        %v2479 = vpop.f32.mrb[0].mxu0
        %2480 = vdwg.mxu0
        %v2481 = vadd.f32 %v2159, %v2355
        %v2482 = vadd.f32 %v2160, %v2358
        %v2483 = vadd.f32 %v2161, %v2363
        %v2484 = vadd.f32 %v2162, %v2366
        %v2485 = vadd.f32 %v2163, %v2371
        %v2486 = vadd.f32 %v2164, %v2374
        %v2487 = vadd.f32 %v2165, %v2379
        %v2488 = vadd.f32 %v2166, %v2382
        %v2489 = vadd.f32 %v2167, %v2387
        %v2490 = vadd.f32 %v2168, %v2390
        %v2491 = vadd.f32 %v2169, %v2395
        %v2492 = vadd.f32 %v2170, %v2398
        %v2493 = vadd.f32 %v2171, %v2403
        %v2494 = vadd.f32 %v2172, %v2406
        %v2495 = vadd.f32 %v2173, %v2411
        %v2496 = vadd.f32 %v2174, %v2414
        %v2497 = vadd.f32 %v2175, %v2419
        %v2498 = vadd.f32 %v2176, %v2422
        %v2499 = vadd.f32 %v2177, %v2427
        %v2500 = vadd.f32 %v2178, %v2430
        %v2501 = vadd.f32 %v2179, %v2435
        %v2502 = vadd.f32 %v2180, %v2438
        %v2503 = vadd.f32 %v2181, %v2443
        %v2504 = vadd.f32 %v2182, %v2446
        %v2505 = vadd.f32 %v2183, %v2451
        %v2506 = vadd.f32 %v2184, %v2454
        %v2507 = vadd.f32 %v2185, %v2459
        %v2508 = vadd.f32 %v2186, %v2462
        %v2509 = vadd.f32 %v2187, %v2467
        %v2510 = vadd.f32 %v2188, %v2470
        %v2511 = vadd.f32 %v2189, %v2475
        %v2512 = vadd.f32 %v2190, %v2478
        %2513 = vst.msk [vmem:[%s2158] sm:$0xff] %vm1351, %v2481
        %2514 = vst.msk [vmem:[%s2158 + $0x8] sm:$0xff] %vm1351, %v2482
        %2515 = vst.msk [vmem:[%s2158 + $0x10] sm:$0xff] %vm1351, %v2483
        %2516 = vst.msk [vmem:[%s2158 + $0x18] sm:$0xff] %vm1351, %v2484
        %2517 = vst.msk [vmem:[%s2158 + $0x20] sm:$0xff] %vm1351, %v2485
        %2518 = vst.msk [vmem:[%s2158 + $0x28] sm:$0xff] %vm1351, %v2486
        %2519 = vst.msk [vmem:[%s2158 + $0x30] sm:$0xff] %vm1351, %v2487
        %2520 = vst.msk [vmem:[%s2158 + $0x38] sm:$0xff] %vm1351, %v2488
        %2521 = vst.msk [vmem:[%s2158 + $0x40] sm:$0xff] %vm1351, %v2489
        %2522 = vst.msk [vmem:[%s2158 + $0x48] sm:$0xff] %vm1351, %v2490
        %2523 = vst.msk [vmem:[%s2158 + $0x50] sm:$0xff] %vm1351, %v2491
        %2524 = vst.msk [vmem:[%s2158 + $0x58] sm:$0xff] %vm1351, %v2492
        %2525 = vst.msk [vmem:[%s2158 + $0x60] sm:$0xff] %vm1351, %v2493
        %2526 = vst.msk [vmem:[%s2158 + $0x68] sm:$0xff] %vm1351, %v2494
        %2527 = vst.msk [vmem:[%s2158 + $0x70] sm:$0xff] %vm1351, %v2495
        %2528 = vst.msk [vmem:[%s2158 + $0x78] sm:$0xff] %vm1351, %v2496
        %2529 = vst.msk [vmem:[%s2158 + $0x80] sm:$0xff] %vm1351, %v2497
        %2530 = vst.msk [vmem:[%s2158 + $0x88] sm:$0xff] %vm1351, %v2498
        %2531 = vst.msk [vmem:[%s2158 + $0x90] sm:$0xff] %vm1351, %v2499
        %2532 = vst.msk [vmem:[%s2158 + $0x98] sm:$0xff] %vm1351, %v2500
        %2533 = vst.msk [vmem:[%s2158 + $0xa0] sm:$0xff] %vm1351, %v2501
        %2534 = vst.msk [vmem:[%s2158 + $0xa8] sm:$0xff] %vm1351, %v2502
        %2535 = vst.msk [vmem:[%s2158 + $0xb0] sm:$0xff] %vm1351, %v2503
        %2536 = vst.msk [vmem:[%s2158 + $0xb8] sm:$0xff] %vm1351, %v2504
        %2537 = vst.msk [vmem:[%s2158 + $0xc0] sm:$0xff] %vm1351, %v2505
        %2538 = vst.msk [vmem:[%s2158 + $0xc8] sm:$0xff] %vm1351, %v2506
        %2539 = vst.msk [vmem:[%s2158 + $0xd0] sm:$0xff] %vm1351, %v2507
        %2540 = vst.msk [vmem:[%s2158 + $0xd8] sm:$0xff] %vm1351, %v2508
        %2541 = vst.msk [vmem:[%s2158 + $0xe0] sm:$0xff] %vm1351, %v2509
        %2542 = vst.msk [vmem:[%s2158 + $0xe8] sm:$0xff] %vm1351, %v2510
        %2543 = vst.msk [vmem:[%s2158 + $0xf0] sm:$0xff] %vm1351, %v2511
        %2544 = vst.msk [vmem:[%s2158 + $0xf8] sm:$0xff] %vm1351, %v2512
        // Predicated region
        $region78: #{convnetvis_forward.4} parent=68 // pred_check
          %p2545 = pneg %p801
        $region79: #{convnetvis_forward.4} parent=68 // pred_check_branch
          %2547 = sbr.rel (%p2545) target = $region81
        $region80: #{convnetvis_forward.4} parent=68 // pred_region
          %v2548 = vld [vmem:[#allocation2] sm:$0xff]
          %v2549 = vld [vmem:[#allocation2 + $0x8] sm:$0xff]
          %v2550 = vld [vmem:[#allocation2 + $0x10] sm:$0xff]
          %v2551 = vld [vmem:[#allocation2 + $0x18] sm:$0xff]
          %v2552 = vld [vmem:[#allocation2 + $0x20] sm:$0xff]
          %v2553 = vld [vmem:[#allocation2 + $0x28] sm:$0xff]
          %v2554 = vld [vmem:[#allocation2 + $0x30] sm:$0xff]
          %v2555 = vld [vmem:[#allocation2 + $0x38] sm:$0xff]
          %v2556 = vld [vmem:[#allocation2 + $0x40] sm:$0xff]
          %v2557 = vld [vmem:[#allocation2 + $0x48] sm:$0xff]
          %v2558 = vld [vmem:[#allocation2 + $0x50] sm:$0xff]
          %v2559 = vld [vmem:[#allocation2 + $0x58] sm:$0xff]
          %v2560 = vld [vmem:[#allocation2 + $0x60] sm:$0xff]
          %v2561 = vld [vmem:[#allocation2 + $0x68] sm:$0xff]
          %v2562 = vld [vmem:[#allocation2 + $0x70] sm:$0xff]
          %v2563 = vld [vmem:[#allocation2 + $0x78] sm:$0xff]
          %v2564 = vld [vmem:[#allocation2 + $0x80] sm:$0xff]
          %v2565 = vld [vmem:[#allocation2 + $0x88] sm:$0xff]
          %v2566 = vld [vmem:[#allocation2 + $0x90] sm:$0xff]
          %v2567 = vld [vmem:[#allocation2 + $0x98] sm:$0xff]
          %v2568 = vld [vmem:[#allocation2 + $0xa0] sm:$0xff]
          %v2569 = vld [vmem:[#allocation2 + $0xa8] sm:$0xff]
          %v2570 = vld [vmem:[#allocation2 + $0xb0] sm:$0xff]
          %v2571 = vld [vmem:[#allocation2 + $0xb8] sm:$0xff]
          %v2572 = vld [vmem:[#allocation2 + $0xc0] sm:$0xff]
          %v2573 = vld [vmem:[#allocation2 + $0xc8] sm:$0xff]
          %v2574 = vld [vmem:[#allocation2 + $0xd0] sm:$0xff]
          %v2575 = vld [vmem:[#allocation2 + $0xd8] sm:$0xff]
          %v2576 = vld [vmem:[#allocation2 + $0xe0] sm:$0xff]
          %v2577 = vld [vmem:[#allocation2 + $0xe8] sm:$0xff]
          %v2578 = vld [vmem:[#allocation2 + $0xf0] sm:$0xff]
          %v2579 = vld [vmem:[#allocation2 + $0xf8] sm:$0xff]
          %v2580 = vld [vmem:[%s1384] sm:$0xff]
          %v2581 = vld [vmem:[%s1384 + $0x8] sm:$0xff]
          %v2582 = vld [vmem:[%s1384 + $0x10] sm:$0xff]
          %v2583 = vld [vmem:[%s1384 + $0x18] sm:$0xff]
          %v2584 = vld [vmem:[%s1384 + $0x20] sm:$0xff]
          %v2585 = vld [vmem:[%s1384 + $0x28] sm:$0xff]
          %v2586 = vld [vmem:[%s1384 + $0x30] sm:$0xff]
          %v2587 = vld [vmem:[%s1384 + $0x38] sm:$0xff]
          %v2588 = vld [vmem:[%s1384 + $0x40] sm:$0xff]
          %v2589 = vld [vmem:[%s1384 + $0x48] sm:$0xff]
          %v2590 = vld [vmem:[%s1384 + $0x50] sm:$0xff]
          %v2591 = vld [vmem:[%s1384 + $0x58] sm:$0xff]
          %v2592 = vld [vmem:[%s1384 + $0x60] sm:$0xff]
          %v2593 = vld [vmem:[%s1384 + $0x68] sm:$0xff]
          %v2594 = vld [vmem:[%s1384 + $0x70] sm:$0xff]
          %v2595 = vld [vmem:[%s1384 + $0x78] sm:$0xff]
          %v2596 = vld [vmem:[%s1384 + $0x80] sm:$0xff]
          %v2597 = vld [vmem:[%s1384 + $0x88] sm:$0xff]
          %v2598 = vld [vmem:[%s1384 + $0x90] sm:$0xff]
          %v2599 = vld [vmem:[%s1384 + $0x98] sm:$0xff]
          %v2600 = vld [vmem:[%s1384 + $0xa0] sm:$0xff]
          %v2601 = vld [vmem:[%s1384 + $0xa8] sm:$0xff]
          %v2602 = vld [vmem:[%s1384 + $0xb0] sm:$0xff]
          %v2603 = vld [vmem:[%s1384 + $0xb8] sm:$0xff]
          %v2604 = vld [vmem:[%s1384 + $0xc0] sm:$0xff]
          %v2605 = vld [vmem:[%s1384 + $0xc8] sm:$0xff]
          %v2606 = vld [vmem:[%s1384 + $0xd0] sm:$0xff]
          %v2607 = vld [vmem:[%s1384 + $0xd8] sm:$0xff]
          %v2608 = vld [vmem:[%s1384 + $0xe0] sm:$0xff]
          %v2609 = vld [vmem:[%s1384 + $0xe8] sm:$0xff]
          %v2610 = vld [vmem:[%s1384 + $0xf0] sm:$0xff]
          %v2611 = vld [vmem:[%s1384 + $0xf8] sm:$0xff]
          %v2612 = vmax.f32 %v2548, %v2580
          %v2613 = vmax.f32 %v2549, %v2581
          %v2614 = vmax.f32 %v2550, %v2582
          %v2615 = vmax.f32 %v2551, %v2583
          %v2616 = vmax.f32 %v2552, %v2584
          %v2617 = vmax.f32 %v2553, %v2585
          %v2618 = vmax.f32 %v2554, %v2586
          %v2619 = vmax.f32 %v2555, %v2587
          %v2620 = vmax.f32 %v2556, %v2588
          %v2621 = vmax.f32 %v2557, %v2589
          %v2622 = vmax.f32 %v2558, %v2590
          %v2623 = vmax.f32 %v2559, %v2591
          %v2624 = vmax.f32 %v2560, %v2592
          %v2625 = vmax.f32 %v2561, %v2593
          %v2626 = vmax.f32 %v2562, %v2594
          %v2627 = vmax.f32 %v2563, %v2595
          %v2628 = vmax.f32 %v2564, %v2596
          %v2629 = vmax.f32 %v2565, %v2597
          %v2630 = vmax.f32 %v2566, %v2598
          %v2631 = vmax.f32 %v2567, %v2599
          %v2632 = vmax.f32 %v2568, %v2600
          %v2633 = vmax.f32 %v2569, %v2601
          %v2634 = vmax.f32 %v2570, %v2602
          %v2635 = vmax.f32 %v2571, %v2603
          %v2636 = vmax.f32 %v2572, %v2604
          %v2637 = vmax.f32 %v2573, %v2605
          %v2638 = vmax.f32 %v2574, %v2606
          %v2639 = vmax.f32 %v2575, %v2607
          %v2640 = vmax.f32 %v2576, %v2608
          %v2641 = vmax.f32 %v2577, %v2609
          %v2642 = vmax.f32 %v2578, %v2610
          %v2643 = vmax.f32 %v2579, %v2611
          %v2644 = vld [vmem:[%s1771] sm:$0xff]
          %v2645 = vld [vmem:[%s1771 + $0x8] sm:$0xff]
          %v2646 = vld [vmem:[%s1771 + $0x10] sm:$0xff]
          %v2647 = vld [vmem:[%s1771 + $0x18] sm:$0xff]
          %v2648 = vld [vmem:[%s1771 + $0x20] sm:$0xff]
          %v2649 = vld [vmem:[%s1771 + $0x28] sm:$0xff]
          %v2650 = vld [vmem:[%s1771 + $0x30] sm:$0xff]
          %v2651 = vld [vmem:[%s1771 + $0x38] sm:$0xff]
          %v2652 = vld [vmem:[%s1771 + $0x40] sm:$0xff]
          %v2653 = vld [vmem:[%s1771 + $0x48] sm:$0xff]
          %v2654 = vld [vmem:[%s1771 + $0x50] sm:$0xff]
          %v2655 = vld [vmem:[%s1771 + $0x58] sm:$0xff]
          %v2656 = vld [vmem:[%s1771 + $0x60] sm:$0xff]
          %v2657 = vld [vmem:[%s1771 + $0x68] sm:$0xff]
          %v2658 = vld [vmem:[%s1771 + $0x70] sm:$0xff]
          %v2659 = vld [vmem:[%s1771 + $0x78] sm:$0xff]
          %v2660 = vld [vmem:[%s1771 + $0x80] sm:$0xff]
          %v2661 = vld [vmem:[%s1771 + $0x88] sm:$0xff]
          %v2662 = vld [vmem:[%s1771 + $0x90] sm:$0xff]
          %v2663 = vld [vmem:[%s1771 + $0x98] sm:$0xff]
          %v2664 = vld [vmem:[%s1771 + $0xa0] sm:$0xff]
          %v2665 = vld [vmem:[%s1771 + $0xa8] sm:$0xff]
          %v2666 = vld [vmem:[%s1771 + $0xb0] sm:$0xff]
          %v2667 = vld [vmem:[%s1771 + $0xb8] sm:$0xff]
          %v2668 = vld [vmem:[%s1771 + $0xc0] sm:$0xff]
          %v2669 = vld [vmem:[%s1771 + $0xc8] sm:$0xff]
          %v2670 = vld [vmem:[%s1771 + $0xd0] sm:$0xff]
          %v2671 = vld [vmem:[%s1771 + $0xd8] sm:$0xff]
          %v2672 = vld [vmem:[%s1771 + $0xe0] sm:$0xff]
          %v2673 = vld [vmem:[%s1771 + $0xe8] sm:$0xff]
          %v2674 = vld [vmem:[%s1771 + $0xf0] sm:$0xff]
          %v2675 = vld [vmem:[%s1771 + $0xf8] sm:$0xff]
          %v2676 = vld [vmem:[%s2158] sm:$0xff]
          %v2677 = vld [vmem:[%s2158 + $0x8] sm:$0xff]
          %v2678 = vld [vmem:[%s2158 + $0x10] sm:$0xff]
          %v2679 = vld [vmem:[%s2158 + $0x18] sm:$0xff]
          %v2680 = vld [vmem:[%s2158 + $0x20] sm:$0xff]
          %v2681 = vld [vmem:[%s2158 + $0x28] sm:$0xff]
          %v2682 = vld [vmem:[%s2158 + $0x30] sm:$0xff]
          %v2683 = vld [vmem:[%s2158 + $0x38] sm:$0xff]
          %v2684 = vld [vmem:[%s2158 + $0x40] sm:$0xff]
          %v2685 = vld [vmem:[%s2158 + $0x48] sm:$0xff]
          %v2686 = vld [vmem:[%s2158 + $0x50] sm:$0xff]
          %v2687 = vld [vmem:[%s2158 + $0x58] sm:$0xff]
          %v2688 = vld [vmem:[%s2158 + $0x60] sm:$0xff]
          %v2689 = vld [vmem:[%s2158 + $0x68] sm:$0xff]
          %v2690 = vld [vmem:[%s2158 + $0x70] sm:$0xff]
          %v2691 = vld [vmem:[%s2158 + $0x78] sm:$0xff]
          %v2692 = vld [vmem:[%s2158 + $0x80] sm:$0xff]
          %v2693 = vld [vmem:[%s2158 + $0x88] sm:$0xff]
          %v2694 = vld [vmem:[%s2158 + $0x90] sm:$0xff]
          %v2695 = vld [vmem:[%s2158 + $0x98] sm:$0xff]
          %v2696 = vld [vmem:[%s2158 + $0xa0] sm:$0xff]
          %v2697 = vld [vmem:[%s2158 + $0xa8] sm:$0xff]
          %v2698 = vld [vmem:[%s2158 + $0xb0] sm:$0xff]
          %v2699 = vld [vmem:[%s2158 + $0xb8] sm:$0xff]
          %v2700 = vld [vmem:[%s2158 + $0xc0] sm:$0xff]
          %v2701 = vld [vmem:[%s2158 + $0xc8] sm:$0xff]
          %v2702 = vld [vmem:[%s2158 + $0xd0] sm:$0xff]
          %v2703 = vld [vmem:[%s2158 + $0xd8] sm:$0xff]
          %v2704 = vld [vmem:[%s2158 + $0xe0] sm:$0xff]
          %v2705 = vld [vmem:[%s2158 + $0xe8] sm:$0xff]
          %v2706 = vld [vmem:[%s2158 + $0xf0] sm:$0xff]
          %v2707 = vld [vmem:[%s2158 + $0xf8] sm:$0xff]
          %v2708 = vmax.f32 %v2644, %v2676
          %v2709 = vmax.f32 %v2645, %v2677
          %v2710 = vmax.f32 %v2646, %v2678
          %v2711 = vmax.f32 %v2647, %v2679
          %v2712 = vmax.f32 %v2648, %v2680
          %v2713 = vmax.f32 %v2649, %v2681
          %v2714 = vmax.f32 %v2650, %v2682
          %v2715 = vmax.f32 %v2651, %v2683
          %v2716 = vmax.f32 %v2652, %v2684
          %v2717 = vmax.f32 %v2653, %v2685
          %v2718 = vmax.f32 %v2654, %v2686
          %v2719 = vmax.f32 %v2655, %v2687
          %v2720 = vmax.f32 %v2656, %v2688
          %v2721 = vmax.f32 %v2657, %v2689
          %v2722 = vmax.f32 %v2658, %v2690
          %v2723 = vmax.f32 %v2659, %v2691
          %v2724 = vmax.f32 %v2660, %v2692
          %v2725 = vmax.f32 %v2661, %v2693
          %v2726 = vmax.f32 %v2662, %v2694
          %v2727 = vmax.f32 %v2663, %v2695
          %v2728 = vmax.f32 %v2664, %v2696
          %v2729 = vmax.f32 %v2665, %v2697
          %v2730 = vmax.f32 %v2666, %v2698
          %v2731 = vmax.f32 %v2667, %v2699
          %v2732 = vmax.f32 %v2668, %v2700
          %v2733 = vmax.f32 %v2669, %v2701
          %v2734 = vmax.f32 %v2670, %v2702
          %v2735 = vmax.f32 %v2671, %v2703
          %v2736 = vmax.f32 %v2672, %v2704
          %v2737 = vmax.f32 %v2673, %v2705
          %v2738 = vmax.f32 %v2674, %v2706
          %v2739 = vmax.f32 %v2675, %v2707
          %v2740 = vmax.f32 %v2612, %v2708
          %v2741 = vmax.f32 %v2613, %v2709
          %v2742 = vmax.f32 %v2614, %v2710
          %v2743 = vmax.f32 %v2615, %v2711
          %v2744 = vmax.f32 %v2616, %v2712
          %v2745 = vmax.f32 %v2617, %v2713
          %v2746 = vmax.f32 %v2618, %v2714
          %v2747 = vmax.f32 %v2619, %v2715
          %v2748 = vmax.f32 %v2620, %v2716
          %v2749 = vmax.f32 %v2621, %v2717
          %v2750 = vmax.f32 %v2622, %v2718
          %v2751 = vmax.f32 %v2623, %v2719
          %v2752 = vmax.f32 %v2624, %v2720
          %v2753 = vmax.f32 %v2625, %v2721
          %v2754 = vmax.f32 %v2626, %v2722
          %v2755 = vmax.f32 %v2627, %v2723
          %v2756 = vmax.f32 %v2628, %v2724
          %v2757 = vmax.f32 %v2629, %v2725
          %v2758 = vmax.f32 %v2630, %v2726
          %v2759 = vmax.f32 %v2631, %v2727
          %v2760 = vmax.f32 %v2632, %v2728
          %v2761 = vmax.f32 %v2633, %v2729
          %v2762 = vmax.f32 %v2634, %v2730
          %v2763 = vmax.f32 %v2635, %v2731
          %v2764 = vmax.f32 %v2636, %v2732
          %v2765 = vmax.f32 %v2637, %v2733
          %v2766 = vmax.f32 %v2638, %v2734
          %v2767 = vmax.f32 %v2639, %v2735
          %v2768 = vmax.f32 %v2640, %v2736
          %v2769 = vmax.f32 %v2641, %v2737
          %v2770 = vmax.f32 %v2642, %v2738
          %v2771 = vmax.f32 %v2643, %v2739
          %v2772 = vld [vmem:[%s790] sm:$0x1]
          %v2774 = vlaneseq
          %v2775 = vshrl.u32 %v2774, 7
          %v2776 = vsub.s32 0, %v2775
          %v2777 = vrot.slane %v2772, %v2776
          %v2779 = vadd.f32 %v2740, %v2777
          %v2780 = vadd.f32 %v2741, %v2777
          %v2781 = vadd.f32 %v2742, %v2777
          %v2782 = vadd.f32 %v2743, %v2777
          %v2783 = vadd.f32 %v2744, %v2777
          %v2784 = vadd.f32 %v2745, %v2777
          %v2785 = vadd.f32 %v2746, %v2777
          %v2786 = vadd.f32 %v2747, %v2777
          %v2787 = vadd.f32 %v2748, %v2777
          %v2788 = vadd.f32 %v2749, %v2777
          %v2789 = vadd.f32 %v2750, %v2777
          %v2790 = vadd.f32 %v2751, %v2777
          %v2791 = vadd.f32 %v2752, %v2777
          %v2792 = vadd.f32 %v2753, %v2777
          %v2793 = vadd.f32 %v2754, %v2777
          %v2794 = vadd.f32 %v2755, %v2777
          %v2795 = vadd.f32 %v2756, %v2777
          %v2796 = vadd.f32 %v2757, %v2777
          %v2797 = vadd.f32 %v2758, %v2777
          %v2798 = vadd.f32 %v2759, %v2777
          %v2799 = vadd.f32 %v2760, %v2777
          %v2800 = vadd.f32 %v2761, %v2777
          %v2801 = vadd.f32 %v2762, %v2777
          %v2802 = vadd.f32 %v2763, %v2777
          %v2803 = vadd.f32 %v2764, %v2777
          %v2804 = vadd.f32 %v2765, %v2777
          %v2805 = vadd.f32 %v2766, %v2777
          %v2806 = vadd.f32 %v2767, %v2777
          %v2807 = vadd.f32 %v2768, %v2777
          %v2808 = vadd.f32 %v2769, %v2777
          %v2809 = vadd.f32 %v2770, %v2777
          %v2810 = vadd.f32 %v2771, %v2777
          %v2811 = vmax.f32 %v2779, 0.0
          %v2812 = vmax.f32 %v2780, 0.0
          %v2813 = vmax.f32 %v2781, 0.0
          %v2814 = vmax.f32 %v2782, 0.0
          %v2815 = vmax.f32 %v2783, 0.0
          %v2816 = vmax.f32 %v2784, 0.0
          %v2817 = vmax.f32 %v2785, 0.0
          %v2818 = vmax.f32 %v2786, 0.0
          %v2819 = vmax.f32 %v2787, 0.0
          %v2820 = vmax.f32 %v2788, 0.0
          %v2821 = vmax.f32 %v2789, 0.0
          %v2822 = vmax.f32 %v2790, 0.0
          %v2823 = vmax.f32 %v2791, 0.0
          %v2824 = vmax.f32 %v2792, 0.0
          %v2825 = vmax.f32 %v2793, 0.0
          %v2826 = vmax.f32 %v2794, 0.0
          %v2827 = vmax.f32 %v2795, 0.0
          %v2828 = vmax.f32 %v2796, 0.0
          %v2829 = vmax.f32 %v2797, 0.0
          %v2830 = vmax.f32 %v2798, 0.0
          %v2831 = vmax.f32 %v2799, 0.0
          %v2832 = vmax.f32 %v2800, 0.0
          %v2833 = vmax.f32 %v2801, 0.0
          %v2834 = vmax.f32 %v2802, 0.0
          %v2835 = vmax.f32 %v2803, 0.0
          %v2836 = vmax.f32 %v2804, 0.0
          %v2837 = vmax.f32 %v2805, 0.0
          %v2838 = vmax.f32 %v2806, 0.0
          %v2839 = vmax.f32 %v2807, 0.0
          %v2840 = vmax.f32 %v2808, 0.0
          %v2841 = vmax.f32 %v2809, 0.0
          %v2842 = vmax.f32 %v2810, 0.0
          %v2843 = vpack.c.bf16 %v2812, %v2811
          %v2844 = vpack.c.bf16 %v2814, %v2813
          %v2845 = vpack.c.bf16 %v2816, %v2815
          %v2846 = vpack.c.bf16 %v2818, %v2817
          %v2847 = vpack.c.bf16 %v2820, %v2819
          %v2848 = vpack.c.bf16 %v2822, %v2821
          %v2849 = vpack.c.bf16 %v2824, %v2823
          %v2850 = vpack.c.bf16 %v2826, %v2825
          %v2851 = vpack.c.bf16 %v2828, %v2827
          %v2852 = vpack.c.bf16 %v2830, %v2829
          %v2853 = vpack.c.bf16 %v2832, %v2831
          %v2854 = vpack.c.bf16 %v2834, %v2833
          %v2855 = vpack.c.bf16 %v2836, %v2835
          %v2856 = vpack.c.bf16 %v2838, %v2837
          %v2857 = vpack.c.bf16 %v2840, %v2839
          %v2858 = vpack.c.bf16 %v2842, %v2841
          %v2875 = vunpack.c.l.b16 %v2843
          %v2876 = vunpack.c.h.b16 %v2843
          %v2877 = vunpack.c.l.b16 %v2844
          %v2878 = vunpack.c.h.b16 %v2844
          %v2879 = vunpack.c.l.b16 %v2845
          %v2880 = vunpack.c.h.b16 %v2845
          %v2881 = vunpack.c.l.b16 %v2846
          %v2882 = vunpack.c.h.b16 %v2846
          %v2883 = vunpack.c.l.b16 %v2847
          %v2884 = vunpack.c.h.b16 %v2847
          %v2885 = vunpack.c.l.b16 %v2848
          %v2886 = vunpack.c.h.b16 %v2848
          %v2887 = vunpack.c.l.b16 %v2849
          %v2888 = vunpack.c.h.b16 %v2849
          %v2889 = vunpack.c.l.b16 %v2850
          %v2890 = vunpack.c.h.b16 %v2850
          %v2891 = vunpack.c.l.b16 %v2851
          %v2892 = vunpack.c.h.b16 %v2851
          %v2893 = vunpack.c.l.b16 %v2852
          %v2894 = vunpack.c.h.b16 %v2852
          %v2895 = vunpack.c.l.b16 %v2853
          %v2896 = vunpack.c.h.b16 %v2853
          %v2897 = vunpack.c.l.b16 %v2854
          %v2898 = vunpack.c.h.b16 %v2854
          %v2899 = vunpack.c.l.b16 %v2855
          %v2900 = vunpack.c.h.b16 %v2855
          %v2901 = vunpack.c.l.b16 %v2856
          %v2902 = vunpack.c.h.b16 %v2856
          %v2903 = vunpack.c.l.b16 %v2857
          %v2904 = vunpack.c.h.b16 %v2857
          %v2905 = vunpack.c.l.b16 %v2858
          %v2906 = vunpack.c.h.b16 %v2858
          %v2907 = vpack.c.b16 %v2875, %v2875
          %v2908 = vpack.c.b16 %v2876, %v2876
          %v2909 = vpack.c.b16 %v2877, %v2877
          %v2910 = vpack.c.b16 %v2878, %v2878
          %v2911 = vpack.c.b16 %v2879, %v2879
          %v2912 = vpack.c.b16 %v2880, %v2880
          %v2913 = vpack.c.b16 %v2881, %v2881
          %v2914 = vpack.c.b16 %v2882, %v2882
          %v2915 = vpack.c.b16 %v2883, %v2883
          %v2916 = vpack.c.b16 %v2884, %v2884
          %v2917 = vpack.c.b16 %v2885, %v2885
          %v2918 = vpack.c.b16 %v2886, %v2886
          %v2919 = vpack.c.b16 %v2887, %v2887
          %v2920 = vpack.c.b16 %v2888, %v2888
          %v2921 = vpack.c.b16 %v2889, %v2889
          %v2922 = vpack.c.b16 %v2890, %v2890
          %v2923 = vpack.c.b16 %v2891, %v2891
          %v2924 = vpack.c.b16 %v2892, %v2892
          %v2925 = vpack.c.b16 %v2893, %v2893
          %v2926 = vpack.c.b16 %v2894, %v2894
          %v2927 = vpack.c.b16 %v2895, %v2895
          %v2928 = vpack.c.b16 %v2896, %v2896
          %v2929 = vpack.c.b16 %v2897, %v2897
          %v2930 = vpack.c.b16 %v2898, %v2898
          %v2931 = vpack.c.b16 %v2899, %v2899
          %v2932 = vpack.c.b16 %v2900, %v2900
          %v2933 = vpack.c.b16 %v2901, %v2901
          %v2934 = vpack.c.b16 %v2902, %v2902
          %v2935 = vpack.c.b16 %v2903, %v2903
          %v2936 = vpack.c.b16 %v2904, %v2904
          %v2937 = vpack.c.b16 %v2905, %v2905
          %v2938 = vpack.c.b16 %v2906, %v2906
          %vm2971 = vcmask 519168
          %2972 = vst.msk [vmem:[%s798] sm:$0xf] %vm2971, %v2907
          %2973 = vst.msk [vmem:[%s798 + $0x4] sm:$0xf] %vm2971, %v2908
          %2974 = vst.msk [vmem:[%s798 + $0x8] sm:$0xf] %vm2971, %v2909
          %2975 = vst.msk [vmem:[%s798 + $0xc] sm:$0xf] %vm2971, %v2910
          %2976 = vst.msk [vmem:[%s798 + $0x10] sm:$0xf] %vm2971, %v2911
          %2977 = vst.msk [vmem:[%s798 + $0x14] sm:$0xf] %vm2971, %v2912
          %2978 = vst.msk [vmem:[%s798 + $0x18] sm:$0xf] %vm2971, %v2913
          %2979 = vst.msk [vmem:[%s798 + $0x1c] sm:$0xf] %vm2971, %v2914
          %2980 = vst.msk [vmem:[%s798 + $0x20] sm:$0xf] %vm2971, %v2915
          %2981 = vst.msk [vmem:[%s798 + $0x24] sm:$0xf] %vm2971, %v2916
          %2982 = vst.msk [vmem:[%s798 + $0x28] sm:$0xf] %vm2971, %v2917
          %2983 = vst.msk [vmem:[%s798 + $0x2c] sm:$0xf] %vm2971, %v2918
          %2984 = vst.msk [vmem:[%s798 + $0x30] sm:$0xf] %vm2971, %v2919
          %2985 = vst.msk [vmem:[%s798 + $0x34] sm:$0xf] %vm2971, %v2920
          %2986 = vst.msk [vmem:[%s798 + $0x38] sm:$0xf] %vm2971, %v2921
          %2987 = vst.msk [vmem:[%s798 + $0x3c] sm:$0xf] %vm2971, %v2922
          %2988 = vst.msk [vmem:[%s798 + $0x40] sm:$0xf] %vm2971, %v2923
          %2989 = vst.msk [vmem:[%s798 + $0x44] sm:$0xf] %vm2971, %v2924
          %2990 = vst.msk [vmem:[%s798 + $0x48] sm:$0xf] %vm2971, %v2925
          %2991 = vst.msk [vmem:[%s798 + $0x4c] sm:$0xf] %vm2971, %v2926
          %2992 = vst.msk [vmem:[%s798 + $0x50] sm:$0xf] %vm2971, %v2927
          %2993 = vst.msk [vmem:[%s798 + $0x54] sm:$0xf] %vm2971, %v2928
          %2994 = vst.msk [vmem:[%s798 + $0x58] sm:$0xf] %vm2971, %v2929
          %2995 = vst.msk [vmem:[%s798 + $0x5c] sm:$0xf] %vm2971, %v2930
          %2996 = vst.msk [vmem:[%s798 + $0x60] sm:$0xf] %vm2971, %v2931
          %2997 = vst.msk [vmem:[%s798 + $0x64] sm:$0xf] %vm2971, %v2932
          %2998 = vst.msk [vmem:[%s798 + $0x68] sm:$0xf] %vm2971, %v2933
          %2999 = vst.msk [vmem:[%s798 + $0x6c] sm:$0xf] %vm2971, %v2934
          %3000 = vst.msk [vmem:[%s798 + $0x70] sm:$0xf] %vm2971, %v2935
          %3001 = vst.msk [vmem:[%s798 + $0x74] sm:$0xf] %vm2971, %v2936
          %3002 = vst.msk [vmem:[%s798 + $0x78] sm:$0xf] %vm2971, %v2937
          %3003 = vst.msk [vmem:[%s798 + $0x7c] sm:$0xf] %vm2971, %v2938
        $region81: #{convnetvis_forward.4} parent=68 // pred_fallthru
          _
        %s3004 = smul.u32 32, %s19
        %p3005 = scmp.lt.s32.totalorder %s3004, 63
        %s3006 = scalar_select %p3005, %s3004, 63
        %p3007 = scmp.lt.s32.totalorder %s20, 0
        %s3008 = scalar_select %p3007, %s20, 0
        %s3009 = sadd.s32 %s3008, %s3006
        %s3010 = smul.addr %s3009, 4
        %s3011 = scalar_lea.vmem %s3, %s3010
        // Predicated region
        $region82: #{convnetvis_forward.4} parent=68 // pred_check
          %p3012 = pneg %p135
        $region83: #{convnetvis_forward.4} parent=68 // pred_check_branch
          %3014 = sbr.rel (%p3012) target = $region85
        $region84: #{convnetvis_forward.4} parent=68 // pred_region
          %s3015 = smul.u32 32, %s19
        $region85: #{convnetvis_forward.4} parent=68 // pred_fallthru
          _
      $region69: #{convnetvis_forward.4} parent=5 // pred_fallthru
        _
      %p3016 = scmp.le.s32.totalorder 2, %s9
      // Predicated region
      $region86: #{convnetvis_forward.4} parent=5 // pred_check
        %p3017 = pneg %p3016
      $region87: #{convnetvis_forward.4} parent=5 // pred_check_branch
        %3019 = sbr.rel (%p3017) target = $region89
      $region88: #{convnetvis_forward.4} parent=5 // pred_region
        %s3020 = ssub.s32 %s9, 2
        // Predicated region
        $region90: #{convnetvis_forward.4} parent=88 // pred_check
          %p3021 = pneg %p141
        $region91: #{convnetvis_forward.4} parent=88 // pred_check_branch
          %3023 = sbr.rel (%p3021) target = $region93
        $region92: #{convnetvis_forward.4} parent=88 // pred_region
          %s3024 = smul.u32 32, %s22
          %p3025 = scmp.lt.s32.totalorder %s3024, 63
          %s3026 = scalar_select %p3025, %s3024, 63
          %p3027 = scmp.lt.s32.totalorder %s23, 0
          %s3028 = scalar_select %p3027, %s23, 0
          %s3029 = sadd.s32 %s3028, %s3026
          %s3030 = smul.addr %s3029, 4
          %s3031 = scalar_lea.vmem %s3, %s3030
        $region93: #{convnetvis_forward.4} parent=88 // pred_fallthru
          _
      $region89: #{convnetvis_forward.4} parent=5 // pred_fallthru
        _
    $region6: #{convnetvis_forward.4} parent=1 // loop_footer
      %s13 = sadd.s32 1, %s9
    $region7: #{convnetvis_forward.4} parent=1 // loop_footer_branch
      %8 = sbr.rel target = $region3
    $region8: #{convnetvis_forward.4} parent=1 // loop_exit
      _

// kernel: convnetvis_forward.6
$region0: #{convnetvis_forward.6}
  #allocation0 [shape = 'u32[]', space=smem, size = 0x4, offset = 0x4, fixed_abs, tag = 'smem constant byte address 0x4 - core index']
  #allocation1 [shape = 'u32[144,128]{1,0:T(1,128)}', space=vmem, size = 0x12000, scoped, tag = 'internal scratch']
  #allocation2 [shape = 'f32[8,512]{1,0:T(8,128)}', space=vmem, size = 0x4000, scoped, tag = 'scratch operand']
  %s0 = inlined_call_operand.vmem [shape: bf16[8,3200], index: 0, kind: input, shape index: {}]
  %s1 = inlined_call_operand.vmem [shape: bf16[3200,1024], index: 1, kind: input, shape index: {}]
  %s2 = inlined_call_operand.vmem [shape: f32[1,1024], index: 2, kind: input, shape index: {}]
  %s3 = inlined_call_operand.vmem [shape: f32[8,1024], index: 3, kind: output, shape index: {}]
  %s4 = sld [smem:[#allocation0]]
  $region76: #{convnetvis_forward.6} parent=0
    _
  %s6 = ssub.s32 1, %s4
  %s7 = scalar_select 0, %s6, %s4
  $region1: #{convnetvis_forward.6} parent=0
    #allocation3 [shape = 'u8[1310720]{0}', space=vmem, size = 0x140000, scoped, tag = 'input window, operand 1']
    loop: start=0, step=1, limit=12
    $region2: #{convnetvis_forward.6} parent=1 // loop_pre_header
      _
    $region3: #{convnetvis_forward.6} parent=1 // loop_header
      %s9 = sphi 0, %s13
      %p10 = scmp.ge.s32.totalorder %s9, 12
      %s16 = sphi 0, %s35
      %s17 = sphi 0, %s31
      %s18 = sphi 0, %s27
      %s19 = sphi 0, %s16
      %s20 = sphi 0, %s17
      %s21 = sphi 0, %s18
      %s22 = sphi 0, %s19
      %s23 = sphi 0, %s20
      %s24 = sphi 0, %s21
      %s40 = sphi 0, %s42
      %s43 = sphi 0, %s40
      %s44 = sphi 0, %s43
      %s60 = sphi 0, %s44
      %s68 = sphi 0, %s70
      %s71 = sphi 0, %s68
      %s72 = sphi 0, %s71
      %s88 = sphi 0, %s72
      %s94 = sphi 0, %s96
      %s97 = sphi 0, %s94
      %s98 = sphi 0, %s97
      %s114 = sphi 0, %s98
      %s122 = sphi 0, %s124
      %s125 = sphi 0, %s122
      %s126 = sphi 0, %s125
      %s142 = sphi 0, %s126
    $region4: #{convnetvis_forward.6} parent=1 // loop_header_branch
      %12 = sbr.rel (%p10) target = $region8
    $region5: #{convnetvis_forward.6} parent=1 // loop_body
      %s14 = ssub.s32 %s9, 1
      %s15 = ssub.s32 %s9, 2
      %s25 = sadd.s32 1, %s18
      %p26 = scmp.ge.s32.totalorder %s25, 5
      %s27 = scalar_select %p26, 0, %s25
      %s28 = sadd.s32 1, %s17
      %s29 = scalar_select %p26, %s28, %s17
      %p30 = scmp.ge.s32.totalorder %s29, 2
      %s31 = scalar_select %p30, 0, %s29
      %s32 = sadd.s32 1, %s16
      %s33 = scalar_select %p30, %s32, %s16
      %p34 = scmp.ge.s32.totalorder %s33, 1
      %s35 = scalar_select %p34, 0, %s33
      %s36 = ssub.s32 %s16, %s35
      %s37 = ssub.s32 %s18, %s27
      %s38 = sor.u32 %s36, %s37
      %p39 = scmp.eq.s32.totalorder %s38, 0
      %s41 = sadd.s32 %s40, 1
      %s42 = scalar_select %p39, %s40, %s41
      %p45 = pneg %p39
      %p46 = scmp.eq.s32.totalorder %s9, 9
      %p47 = por %p45, %p46
      %p48 = scmp.ne.s32.totalorder %s40, %s43
      %p49 = scmp.eq.s32.totalorder %s9, 0
      %p50 = por %p48, %p49
      %p51 = scmp.ne.s32.totalorder %s40, %s43
      %p52 = scmp.eq.s32.totalorder %s14, 9
      %p53 = por %p51, %p52
      %p54 = scmp.ne.s32.totalorder %s43, %s44
      %p55 = scmp.eq.s32.totalorder %s14, 0
      %p56 = por %p54, %p55
      %p57 = scmp.ne.s32.totalorder %s43, %s44
      %p58 = scmp.eq.s32.totalorder %s15, 9
      %p59 = por %p57, %p58
      %p61 = scmp.ne.s32.totalorder %s44, %s60
      %p62 = scmp.eq.s32.totalorder %s15, 0
      %p63 = por %p61, %p62
      %s64 = ssub.s32 %s18, %s27
      %s65 = ssub.s32 %s17, %s31
      %s66 = sor.u32 %s64, %s65
      %p67 = scmp.eq.s32.totalorder %s66, 0
      %s69 = sadd.s32 %s68, 1
      %s70 = scalar_select %p67, %s68, %s69
      %p73 = pneg %p67
      %p74 = scmp.eq.s32.totalorder %s9, 9
      %p75 = por %p73, %p74
      %p76 = scmp.ne.s32.totalorder %s68, %s71
      %p77 = scmp.eq.s32.totalorder %s9, 0
      %p78 = por %p76, %p77
      %p79 = scmp.ne.s32.totalorder %s68, %s71
      %p80 = scmp.eq.s32.totalorder %s14, 9
      %p81 = por %p79, %p80
      %p82 = scmp.ne.s32.totalorder %s71, %s72
      %p83 = scmp.eq.s32.totalorder %s14, 0
      %p84 = por %p82, %p83
      %p85 = scmp.ne.s32.totalorder %s71, %s72
      %p86 = scmp.eq.s32.totalorder %s15, 9
      %p87 = por %p85, %p86
      %p89 = scmp.ne.s32.totalorder %s72, %s88
      %p90 = scmp.eq.s32.totalorder %s15, 0
      %p91 = por %p89, %p90
      %s92 = ssub.s32 %s17, %s31
      %p93 = scmp.eq.s32.totalorder %s92, 0
      %s95 = sadd.s32 %s94, 1
      %s96 = scalar_select %p93, %s94, %s95
      %p99 = pneg %p93
      %p100 = scmp.eq.s32.totalorder %s9, 9
      %p101 = por %p99, %p100
      %p102 = scmp.ne.s32.totalorder %s94, %s97
      %p103 = scmp.eq.s32.totalorder %s9, 0
      %p104 = por %p102, %p103
      %p105 = scmp.ne.s32.totalorder %s94, %s97
      %p106 = scmp.eq.s32.totalorder %s14, 9
      %p107 = por %p105, %p106
      %p108 = scmp.ne.s32.totalorder %s97, %s98
      %p109 = scmp.eq.s32.totalorder %s14, 0
      %p110 = por %p108, %p109
      %p111 = scmp.ne.s32.totalorder %s97, %s98
      %p112 = scmp.eq.s32.totalorder %s15, 9
      %p113 = por %p111, %p112
      %p115 = scmp.ne.s32.totalorder %s98, %s114
      %p116 = scmp.eq.s32.totalorder %s15, 0
      %p117 = por %p115, %p116
      %s118 = ssub.s32 %s16, %s35
      %s119 = ssub.s32 %s17, %s31
      %s120 = sor.u32 %s118, %s119
      %p121 = scmp.eq.s32.totalorder %s120, 0
      %s123 = sadd.s32 %s122, 1
      %s124 = scalar_select %p121, %s122, %s123
      %p127 = pneg %p121
      %p128 = scmp.eq.s32.totalorder %s9, 9
      %p129 = por %p127, %p128
      %p130 = scmp.ne.s32.totalorder %s122, %s125
      %p131 = scmp.eq.s32.totalorder %s9, 0
      %p132 = por %p130, %p131
      %p133 = scmp.ne.s32.totalorder %s122, %s125
      %p134 = scmp.eq.s32.totalorder %s14, 9
      %p135 = por %p133, %p134
      %p136 = scmp.ne.s32.totalorder %s125, %s126
      %p137 = scmp.eq.s32.totalorder %s14, 0
      %p138 = por %p136, %p137
      %p139 = scmp.ne.s32.totalorder %s125, %s126
      %p140 = scmp.eq.s32.totalorder %s15, 9
      %p141 = por %p139, %p140
      %p143 = scmp.ne.s32.totalorder %s126, %s142
      %p144 = scmp.eq.s32.totalorder %s15, 0
      %p145 = por %p143, %p144
      %p146 = scmp.le.s32.totalorder 1, %s9
      %p147 = scmp.lt.s32.totalorder %s9, 11
      %p148 = pnand %p146, %p147
      %p149 = pneg %p148
      // Predicated region
      $region9: #{convnetvis_forward.6} parent=5 // pred_check
        _
      $region10: #{convnetvis_forward.6} parent=5 // pred_check_branch
        %151 = sbr.rel (%p148) target = $region12
      $region11: #{convnetvis_forward.6} parent=5 // pred_region
        %s152 = ssub.s32 %s9, 1
      $region12: #{convnetvis_forward.6} parent=5 // pred_fallthru
        _
      %p153 = scmp.lt.s32.totalorder %s9, 10
      // Predicated region
      $region13: #{convnetvis_forward.6} parent=5 // pred_check
        %p154 = pneg %p153
      $region14: #{convnetvis_forward.6} parent=5 // pred_check_branch
        %156 = sbr.rel (%p154) target = $region16
      $region15: #{convnetvis_forward.6} parent=5 // pred_region
        // Predicated region
        $region17: #{convnetvis_forward.6} parent=15 // pred_check
          %p157 = pneg %p50
        $region18: #{convnetvis_forward.6} parent=15 // pred_check_branch
          %159 = sbr.rel (%p157) target = $region20
        $region19: #{convnetvis_forward.6} parent=15 // pred_region
          %s160 = smul.u32 5, %s18
          %p161 = scmp.lt.s32.totalorder %s16, 0
          %s162 = scalar_select %p161, %s16, 0
          %p163 = scmp.lt.s32.totalorder %s160, 24
          %s164 = scalar_select %p163, %s160, 24
          %s165 = smul.addr %s162, 25
          %s166 = sadd.s32 %s164, %s165
          %s167 = smul.addr %s166, 4
          %s168 = scalar_lea.vmem %s0, %s167
          %s169 = smul.u32 5, %s18
        $region20: #{convnetvis_forward.6} parent=15 // pred_fallthru
          _
        // Predicated region
        $region21: #{convnetvis_forward.6} parent=15 // pred_check
          %p170 = pneg %p78
        $region22: #{convnetvis_forward.6} parent=15 // pred_check_branch
          %172 = sbr.rel (%p170) target = $region24
        $region23: #{convnetvis_forward.6} parent=15 // pred_region
          %s173 = sand.u32 %s68, 1
          %s174 = sand.u32 %s68, 1
          %s175 = smul.addr %s174, 1280
          %s176 = scalar_lea.vmem [#allocation3], %s175
          %s177 = smul.u32 80, %s18
          %s178 = smul.u32 4, %s17
          %s179 = smul.addr %s177, 8
          %s180 = sadd.s32 %s178, %s179
          %s181 = smul.addr %s180, 4
          %s182 = scalar_lea.vmem %s1, %s181
          // Predicated region
          $region25: #{convnetvis_forward.6} parent=23 // pred_check
            _
          $region26: #{convnetvis_forward.6} parent=23 // pred_check_branch
            %184 = sbr.rel (0) target = $region28
          $region27: #{convnetvis_forward.6} parent=23 // pred_region
            // Predicated region
            $region29: #{convnetvis_forward.6} parent=27 // pred_check
              _
            $region30: #{convnetvis_forward.6} parent=27 // pred_check_branch
              %186 = sbr.rel (0) target = $region32
            $region31: #{convnetvis_forward.6} parent=27 // pred_region
              loop: start=0, step=1, limit=1
              $region33: #{convnetvis_forward.6} parent=31 // loop_pre_header
                _
              $region34: #{convnetvis_forward.6} parent=31 // loop_header
                %s188 = sphi 0, %s192
                %p189 = scmp.ge.s32.totalorder %s188, 1
                %s193 = sphi %s182, %s182
                %s194 = sphi %s176, %s176
              $region35: #{convnetvis_forward.6} parent=31 // loop_header_branch
                %191 = sbr.rel (%p189) target = $region39
              $region36: #{convnetvis_forward.6} parent=31 // loop_body
                %v195 = vld [vmem:[%s193] sm:$0xff]
                %196 = vst [vmem:[%s194] sm:$0xff] %v195
                %v197 = vld [vmem:[%s193 + $0x8] sm:$0xff]
                %198 = vst [vmem:[%s194 + $0x8] sm:$0xff] %v197
                %v199 = vld [vmem:[%s193 + $0x20] sm:$0xff]
                %200 = vst [vmem:[%s194 + $0x10] sm:$0xff] %v199
                %v201 = vld [vmem:[%s193 + $0x28] sm:$0xff]
                %202 = vst [vmem:[%s194 + $0x18] sm:$0xff] %v201
                %v203 = vld [vmem:[%s193 + $0x40] sm:$0xff]
                %204 = vst [vmem:[%s194 + $0x20] sm:$0xff] %v203
                %v205 = vld [vmem:[%s193 + $0x48] sm:$0xff]
                %206 = vst [vmem:[%s194 + $0x28] sm:$0xff] %v205
                %v207 = vld [vmem:[%s193 + $0x60] sm:$0xff]
                %208 = vst [vmem:[%s194 + $0x30] sm:$0xff] %v207
                %v209 = vld [vmem:[%s193 + $0x68] sm:$0xff]
                %210 = vst [vmem:[%s194 + $0x38] sm:$0xff] %v209
                %v211 = vld [vmem:[%s193 + $0x80] sm:$0xff]
                %212 = vst [vmem:[%s194 + $0x40] sm:$0xff] %v211
                %v213 = vld [vmem:[%s193 + $0x88] sm:$0xff]
                %214 = vst [vmem:[%s194 + $0x48] sm:$0xff] %v213
                %v215 = vld [vmem:[%s193 + $0xa0] sm:$0xff]
                %216 = vst [vmem:[%s194 + $0x50] sm:$0xff] %v215
                %v217 = vld [vmem:[%s193 + $0xa8] sm:$0xff]
                %218 = vst [vmem:[%s194 + $0x58] sm:$0xff] %v217
                %v219 = vld [vmem:[%s193 + $0xc0] sm:$0xff]
                %220 = vst [vmem:[%s194 + $0x60] sm:$0xff] %v219
                %v221 = vld [vmem:[%s193 + $0xc8] sm:$0xff]
                %222 = vst [vmem:[%s194 + $0x68] sm:$0xff] %v221
                %v223 = vld [vmem:[%s193 + $0xe0] sm:$0xff]
                %224 = vst [vmem:[%s194 + $0x70] sm:$0xff] %v223
                %v225 = vld [vmem:[%s193 + $0xe8] sm:$0xff]
                %226 = vst [vmem:[%s194 + $0x78] sm:$0xff] %v225
                %v227 = vld [vmem:[%s193 + $0x100] sm:$0xff]
                %228 = vst [vmem:[%s194 + $0x80] sm:$0xff] %v227
                %v229 = vld [vmem:[%s193 + $0x108] sm:$0xff]
                %230 = vst [vmem:[%s194 + $0x88] sm:$0xff] %v229
                %v231 = vld [vmem:[%s193 + $0x120] sm:$0xff]
                %232 = vst [vmem:[%s194 + $0x90] sm:$0xff] %v231
                %v233 = vld [vmem:[%s193 + $0x128] sm:$0xff]
                %234 = vst [vmem:[%s194 + $0x98] sm:$0xff] %v233
                %v235 = vld [vmem:[%s193 + $0x140] sm:$0xff]
                %236 = vst [vmem:[%s194 + $0xa0] sm:$0xff] %v235
                %v237 = vld [vmem:[%s193 + $0x148] sm:$0xff]
                %238 = vst [vmem:[%s194 + $0xa8] sm:$0xff] %v237
                %v239 = vld [vmem:[%s193 + $0x160] sm:$0xff]
                %240 = vst [vmem:[%s194 + $0xb0] sm:$0xff] %v239
                %v241 = vld [vmem:[%s193 + $0x168] sm:$0xff]
                %242 = vst [vmem:[%s194 + $0xb8] sm:$0xff] %v241
                %v243 = vld [vmem:[%s193 + $0x180] sm:$0xff]
                %244 = vst [vmem:[%s194 + $0xc0] sm:$0xff] %v243
                %v245 = vld [vmem:[%s193 + $0x188] sm:$0xff]
                %246 = vst [vmem:[%s194 + $0xc8] sm:$0xff] %v245
                %v247 = vld [vmem:[%s193 + $0x1a0] sm:$0xff]
                %248 = vst [vmem:[%s194 + $0xd0] sm:$0xff] %v247
                %v249 = vld [vmem:[%s193 + $0x1a8] sm:$0xff]
                %250 = vst [vmem:[%s194 + $0xd8] sm:$0xff] %v249
                %v251 = vld [vmem:[%s193 + $0x1c0] sm:$0xff]
                %252 = vst [vmem:[%s194 + $0xe0] sm:$0xff] %v251
                %v253 = vld [vmem:[%s193 + $0x1c8] sm:$0xff]
                %254 = vst [vmem:[%s194 + $0xe8] sm:$0xff] %v253
                %v255 = vld [vmem:[%s193 + $0x1e0] sm:$0xff]
                %256 = vst [vmem:[%s194 + $0xf0] sm:$0xff] %v255
                %v257 = vld [vmem:[%s193 + $0x1e8] sm:$0xff]
                %258 = vst [vmem:[%s194 + $0xf8] sm:$0xff] %v257
                %v259 = vld [vmem:[%s193 + $0x200] sm:$0xff]
                %260 = vst [vmem:[%s194 + $0x100] sm:$0xff] %v259
                %v261 = vld [vmem:[%s193 + $0x208] sm:$0xff]
                %262 = vst [vmem:[%s194 + $0x108] sm:$0xff] %v261
                %v263 = vld [vmem:[%s193 + $0x220] sm:$0xff]
                %264 = vst [vmem:[%s194 + $0x110] sm:$0xff] %v263
                %v265 = vld [vmem:[%s193 + $0x228] sm:$0xff]
                %266 = vst [vmem:[%s194 + $0x118] sm:$0xff] %v265
                %v267 = vld [vmem:[%s193 + $0x240] sm:$0xff]
                %268 = vst [vmem:[%s194 + $0x120] sm:$0xff] %v267
                %v269 = vld [vmem:[%s193 + $0x248] sm:$0xff]
                %270 = vst [vmem:[%s194 + $0x128] sm:$0xff] %v269
                %v271 = vld [vmem:[%s193 + $0x260] sm:$0xff]
                %272 = vst [vmem:[%s194 + $0x130] sm:$0xff] %v271
                %v273 = vld [vmem:[%s193 + $0x268] sm:$0xff]
                %274 = vst [vmem:[%s194 + $0x138] sm:$0xff] %v273
                %v275 = vld [vmem:[%s193 + $0x280] sm:$0xff]
                %276 = vst [vmem:[%s194 + $0x140] sm:$0xff] %v275
                %v277 = vld [vmem:[%s193 + $0x288] sm:$0xff]
                %278 = vst [vmem:[%s194 + $0x148] sm:$0xff] %v277
                %v279 = vld [vmem:[%s193 + $0x2a0] sm:$0xff]
                %280 = vst [vmem:[%s194 + $0x150] sm:$0xff] %v279
                %v281 = vld [vmem:[%s193 + $0x2a8] sm:$0xff]
                %282 = vst [vmem:[%s194 + $0x158] sm:$0xff] %v281
                %v283 = vld [vmem:[%s193 + $0x2c0] sm:$0xff]
                %284 = vst [vmem:[%s194 + $0x160] sm:$0xff] %v283
                %v285 = vld [vmem:[%s193 + $0x2c8] sm:$0xff]
                %286 = vst [vmem:[%s194 + $0x168] sm:$0xff] %v285
                %v287 = vld [vmem:[%s193 + $0x2e0] sm:$0xff]
                %288 = vst [vmem:[%s194 + $0x170] sm:$0xff] %v287
                %v289 = vld [vmem:[%s193 + $0x2e8] sm:$0xff]
                %290 = vst [vmem:[%s194 + $0x178] sm:$0xff] %v289
                %v291 = vld [vmem:[%s193 + $0x300] sm:$0xff]
                %292 = vst [vmem:[%s194 + $0x180] sm:$0xff] %v291
                %v293 = vld [vmem:[%s193 + $0x308] sm:$0xff]
                %294 = vst [vmem:[%s194 + $0x188] sm:$0xff] %v293
                %v295 = vld [vmem:[%s193 + $0x320] sm:$0xff]
                %296 = vst [vmem:[%s194 + $0x190] sm:$0xff] %v295
                %v297 = vld [vmem:[%s193 + $0x328] sm:$0xff]
                %298 = vst [vmem:[%s194 + $0x198] sm:$0xff] %v297
                %v299 = vld [vmem:[%s193 + $0x340] sm:$0xff]
                %300 = vst [vmem:[%s194 + $0x1a0] sm:$0xff] %v299
                %v301 = vld [vmem:[%s193 + $0x348] sm:$0xff]
                %302 = vst [vmem:[%s194 + $0x1a8] sm:$0xff] %v301
                %v303 = vld [vmem:[%s193 + $0x360] sm:$0xff]
                %304 = vst [vmem:[%s194 + $0x1b0] sm:$0xff] %v303
                %v305 = vld [vmem:[%s193 + $0x368] sm:$0xff]
                %306 = vst [vmem:[%s194 + $0x1b8] sm:$0xff] %v305
                %v307 = vld [vmem:[%s193 + $0x380] sm:$0xff]
                %308 = vst [vmem:[%s194 + $0x1c0] sm:$0xff] %v307
                %v309 = vld [vmem:[%s193 + $0x388] sm:$0xff]
                %310 = vst [vmem:[%s194 + $0x1c8] sm:$0xff] %v309
                %v311 = vld [vmem:[%s193 + $0x3a0] sm:$0xff]
                %312 = vst [vmem:[%s194 + $0x1d0] sm:$0xff] %v311
                %v313 = vld [vmem:[%s193 + $0x3a8] sm:$0xff]
                %314 = vst [vmem:[%s194 + $0x1d8] sm:$0xff] %v313
                %v315 = vld [vmem:[%s193 + $0x3c0] sm:$0xff]
                %316 = vst [vmem:[%s194 + $0x1e0] sm:$0xff] %v315
                %v317 = vld [vmem:[%s193 + $0x3c8] sm:$0xff]
                %318 = vst [vmem:[%s194 + $0x1e8] sm:$0xff] %v317
                %v319 = vld [vmem:[%s193 + $0x3e0] sm:$0xff]
                %320 = vst [vmem:[%s194 + $0x1f0] sm:$0xff] %v319
                %v321 = vld [vmem:[%s193 + $0x3e8] sm:$0xff]
                %322 = vst [vmem:[%s194 + $0x1f8] sm:$0xff] %v321
                %v323 = vld [vmem:[%s193 + $0x400] sm:$0xff]
                %324 = vst [vmem:[%s194 + $0x200] sm:$0xff] %v323
                %v325 = vld [vmem:[%s193 + $0x408] sm:$0xff]
                %326 = vst [vmem:[%s194 + $0x208] sm:$0xff] %v325
                %v327 = vld [vmem:[%s193 + $0x420] sm:$0xff]
                %328 = vst [vmem:[%s194 + $0x210] sm:$0xff] %v327
                %v329 = vld [vmem:[%s193 + $0x428] sm:$0xff]
                %330 = vst [vmem:[%s194 + $0x218] sm:$0xff] %v329
                %v331 = vld [vmem:[%s193 + $0x440] sm:$0xff]
                %332 = vst [vmem:[%s194 + $0x220] sm:$0xff] %v331
                %v333 = vld [vmem:[%s193 + $0x448] sm:$0xff]
                %334 = vst [vmem:[%s194 + $0x228] sm:$0xff] %v333
                %v335 = vld [vmem:[%s193 + $0x460] sm:$0xff]
                %336 = vst [vmem:[%s194 + $0x230] sm:$0xff] %v335
                %v337 = vld [vmem:[%s193 + $0x468] sm:$0xff]
                %338 = vst [vmem:[%s194 + $0x238] sm:$0xff] %v337
                %v339 = vld [vmem:[%s193 + $0x480] sm:$0xff]
                %340 = vst [vmem:[%s194 + $0x240] sm:$0xff] %v339
                %v341 = vld [vmem:[%s193 + $0x488] sm:$0xff]
                %342 = vst [vmem:[%s194 + $0x248] sm:$0xff] %v341
                %v343 = vld [vmem:[%s193 + $0x4a0] sm:$0xff]
                %344 = vst [vmem:[%s194 + $0x250] sm:$0xff] %v343
                %v345 = vld [vmem:[%s193 + $0x4a8] sm:$0xff]
                %346 = vst [vmem:[%s194 + $0x258] sm:$0xff] %v345
                %v347 = vld [vmem:[%s193 + $0x4c0] sm:$0xff]
                %348 = vst [vmem:[%s194 + $0x260] sm:$0xff] %v347
                %v349 = vld [vmem:[%s193 + $0x4c8] sm:$0xff]
                %350 = vst [vmem:[%s194 + $0x268] sm:$0xff] %v349
                %v351 = vld [vmem:[%s193 + $0x4e0] sm:$0xff]
                %352 = vst [vmem:[%s194 + $0x270] sm:$0xff] %v351
                %v353 = vld [vmem:[%s193 + $0x4e8] sm:$0xff]
                %354 = vst [vmem:[%s194 + $0x278] sm:$0xff] %v353
                %v355 = vld [vmem:[%s193 + $0x500] sm:$0xff]
                %356 = vst [vmem:[%s194 + $0x280] sm:$0xff] %v355
                %v357 = vld [vmem:[%s193 + $0x508] sm:$0xff]
                %358 = vst [vmem:[%s194 + $0x288] sm:$0xff] %v357
                %v359 = vld [vmem:[%s193 + $0x520] sm:$0xff]
                %360 = vst [vmem:[%s194 + $0x290] sm:$0xff] %v359
                %v361 = vld [vmem:[%s193 + $0x528] sm:$0xff]
                %362 = vst [vmem:[%s194 + $0x298] sm:$0xff] %v361
                %v363 = vld [vmem:[%s193 + $0x540] sm:$0xff]
                %364 = vst [vmem:[%s194 + $0x2a0] sm:$0xff] %v363
                %v365 = vld [vmem:[%s193 + $0x548] sm:$0xff]
                %366 = vst [vmem:[%s194 + $0x2a8] sm:$0xff] %v365
                %v367 = vld [vmem:[%s193 + $0x560] sm:$0xff]
                %368 = vst [vmem:[%s194 + $0x2b0] sm:$0xff] %v367
                %v369 = vld [vmem:[%s193 + $0x568] sm:$0xff]
                %370 = vst [vmem:[%s194 + $0x2b8] sm:$0xff] %v369
                %v371 = vld [vmem:[%s193 + $0x580] sm:$0xff]
                %372 = vst [vmem:[%s194 + $0x2c0] sm:$0xff] %v371
                %v373 = vld [vmem:[%s193 + $0x588] sm:$0xff]
                %374 = vst [vmem:[%s194 + $0x2c8] sm:$0xff] %v373
                %v375 = vld [vmem:[%s193 + $0x5a0] sm:$0xff]
                %376 = vst [vmem:[%s194 + $0x2d0] sm:$0xff] %v375
                %v377 = vld [vmem:[%s193 + $0x5a8] sm:$0xff]
                %378 = vst [vmem:[%s194 + $0x2d8] sm:$0xff] %v377
                %v379 = vld [vmem:[%s193 + $0x5c0] sm:$0xff]
                %380 = vst [vmem:[%s194 + $0x2e0] sm:$0xff] %v379
                %v381 = vld [vmem:[%s193 + $0x5c8] sm:$0xff]
                %382 = vst [vmem:[%s194 + $0x2e8] sm:$0xff] %v381
                %v383 = vld [vmem:[%s193 + $0x5e0] sm:$0xff]
                %384 = vst [vmem:[%s194 + $0x2f0] sm:$0xff] %v383
                %v385 = vld [vmem:[%s193 + $0x5e8] sm:$0xff]
                %386 = vst [vmem:[%s194 + $0x2f8] sm:$0xff] %v385
                %v387 = vld [vmem:[%s193 + $0x600] sm:$0xff]
                %388 = vst [vmem:[%s194 + $0x300] sm:$0xff] %v387
                %v389 = vld [vmem:[%s193 + $0x608] sm:$0xff]
                %390 = vst [vmem:[%s194 + $0x308] sm:$0xff] %v389
                %v391 = vld [vmem:[%s193 + $0x620] sm:$0xff]
                %392 = vst [vmem:[%s194 + $0x310] sm:$0xff] %v391
                %v393 = vld [vmem:[%s193 + $0x628] sm:$0xff]
                %394 = vst [vmem:[%s194 + $0x318] sm:$0xff] %v393
                %v395 = vld [vmem:[%s193 + $0x640] sm:$0xff]
                %396 = vst [vmem:[%s194 + $0x320] sm:$0xff] %v395
                %v397 = vld [vmem:[%s193 + $0x648] sm:$0xff]
                %398 = vst [vmem:[%s194 + $0x328] sm:$0xff] %v397
                %v399 = vld [vmem:[%s193 + $0x660] sm:$0xff]
                %400 = vst [vmem:[%s194 + $0x330] sm:$0xff] %v399
                %v401 = vld [vmem:[%s193 + $0x668] sm:$0xff]
                %402 = vst [vmem:[%s194 + $0x338] sm:$0xff] %v401
                %v403 = vld [vmem:[%s193 + $0x680] sm:$0xff]
                %404 = vst [vmem:[%s194 + $0x340] sm:$0xff] %v403
                %v405 = vld [vmem:[%s193 + $0x688] sm:$0xff]
                %406 = vst [vmem:[%s194 + $0x348] sm:$0xff] %v405
                %v407 = vld [vmem:[%s193 + $0x6a0] sm:$0xff]
                %408 = vst [vmem:[%s194 + $0x350] sm:$0xff] %v407
                %v409 = vld [vmem:[%s193 + $0x6a8] sm:$0xff]
                %410 = vst [vmem:[%s194 + $0x358] sm:$0xff] %v409
                %v411 = vld [vmem:[%s193 + $0x6c0] sm:$0xff]
                %412 = vst [vmem:[%s194 + $0x360] sm:$0xff] %v411
                %v413 = vld [vmem:[%s193 + $0x6c8] sm:$0xff]
                %414 = vst [vmem:[%s194 + $0x368] sm:$0xff] %v413
                %v415 = vld [vmem:[%s193 + $0x6e0] sm:$0xff]
                %416 = vst [vmem:[%s194 + $0x370] sm:$0xff] %v415
                %v417 = vld [vmem:[%s193 + $0x6e8] sm:$0xff]
                %418 = vst [vmem:[%s194 + $0x378] sm:$0xff] %v417
                %v419 = vld [vmem:[%s193 + $0x700] sm:$0xff]
                %420 = vst [vmem:[%s194 + $0x380] sm:$0xff] %v419
                %v421 = vld [vmem:[%s193 + $0x708] sm:$0xff]
                %422 = vst [vmem:[%s194 + $0x388] sm:$0xff] %v421
                %v423 = vld [vmem:[%s193 + $0x720] sm:$0xff]
                %424 = vst [vmem:[%s194 + $0x390] sm:$0xff] %v423
                %v425 = vld [vmem:[%s193 + $0x728] sm:$0xff]
                %426 = vst [vmem:[%s194 + $0x398] sm:$0xff] %v425
                %v427 = vld [vmem:[%s193 + $0x740] sm:$0xff]
                %428 = vst [vmem:[%s194 + $0x3a0] sm:$0xff] %v427
                %v429 = vld [vmem:[%s193 + $0x748] sm:$0xff]
                %430 = vst [vmem:[%s194 + $0x3a8] sm:$0xff] %v429
                %v431 = vld [vmem:[%s193 + $0x760] sm:$0xff]
                %432 = vst [vmem:[%s194 + $0x3b0] sm:$0xff] %v431
                %v433 = vld [vmem:[%s193 + $0x768] sm:$0xff]
                %434 = vst [vmem:[%s194 + $0x3b8] sm:$0xff] %v433
                %v435 = vld [vmem:[%s193 + $0x780] sm:$0xff]
                %436 = vst [vmem:[%s194 + $0x3c0] sm:$0xff] %v435
                %v437 = vld [vmem:[%s193 + $0x788] sm:$0xff]
                %438 = vst [vmem:[%s194 + $0x3c8] sm:$0xff] %v437
                %v439 = vld [vmem:[%s193 + $0x7a0] sm:$0xff]
                %440 = vst [vmem:[%s194 + $0x3d0] sm:$0xff] %v439
                %v441 = vld [vmem:[%s193 + $0x7a8] sm:$0xff]
                %442 = vst [vmem:[%s194 + $0x3d8] sm:$0xff] %v441
                %v443 = vld [vmem:[%s193 + $0x7c0] sm:$0xff]
                %444 = vst [vmem:[%s194 + $0x3e0] sm:$0xff] %v443
                %v445 = vld [vmem:[%s193 + $0x7c8] sm:$0xff]
                %446 = vst [vmem:[%s194 + $0x3e8] sm:$0xff] %v445
                %v447 = vld [vmem:[%s193 + $0x7e0] sm:$0xff]
                %448 = vst [vmem:[%s194 + $0x3f0] sm:$0xff] %v447
                %v449 = vld [vmem:[%s193 + $0x7e8] sm:$0xff]
                %450 = vst [vmem:[%s194 + $0x3f8] sm:$0xff] %v449
                %v451 = vld [vmem:[%s193 + $0x800] sm:$0xff]
                %452 = vst [vmem:[%s194 + $0x400] sm:$0xff] %v451
                %v453 = vld [vmem:[%s193 + $0x808] sm:$0xff]
                %454 = vst [vmem:[%s194 + $0x408] sm:$0xff] %v453
                %v455 = vld [vmem:[%s193 + $0x820] sm:$0xff]
                %456 = vst [vmem:[%s194 + $0x410] sm:$0xff] %v455
                %v457 = vld [vmem:[%s193 + $0x828] sm:$0xff]
                %458 = vst [vmem:[%s194 + $0x418] sm:$0xff] %v457
                %v459 = vld [vmem:[%s193 + $0x840] sm:$0xff]
                %460 = vst [vmem:[%s194 + $0x420] sm:$0xff] %v459
                %v461 = vld [vmem:[%s193 + $0x848] sm:$0xff]
                %462 = vst [vmem:[%s194 + $0x428] sm:$0xff] %v461
                %v463 = vld [vmem:[%s193 + $0x860] sm:$0xff]
                %464 = vst [vmem:[%s194 + $0x430] sm:$0xff] %v463
                %v465 = vld [vmem:[%s193 + $0x868] sm:$0xff]
                %466 = vst [vmem:[%s194 + $0x438] sm:$0xff] %v465
                %v467 = vld [vmem:[%s193 + $0x880] sm:$0xff]
                %468 = vst [vmem:[%s194 + $0x440] sm:$0xff] %v467
                %v469 = vld [vmem:[%s193 + $0x888] sm:$0xff]
                %470 = vst [vmem:[%s194 + $0x448] sm:$0xff] %v469
                %v471 = vld [vmem:[%s193 + $0x8a0] sm:$0xff]
                %472 = vst [vmem:[%s194 + $0x450] sm:$0xff] %v471
                %v473 = vld [vmem:[%s193 + $0x8a8] sm:$0xff]
                %474 = vst [vmem:[%s194 + $0x458] sm:$0xff] %v473
                %v475 = vld [vmem:[%s193 + $0x8c0] sm:$0xff]
                %476 = vst [vmem:[%s194 + $0x460] sm:$0xff] %v475
                %v477 = vld [vmem:[%s193 + $0x8c8] sm:$0xff]
                %478 = vst [vmem:[%s194 + $0x468] sm:$0xff] %v477
                %v479 = vld [vmem:[%s193 + $0x8e0] sm:$0xff]
                %480 = vst [vmem:[%s194 + $0x470] sm:$0xff] %v479
                %v481 = vld [vmem:[%s193 + $0x8e8] sm:$0xff]
                %482 = vst [vmem:[%s194 + $0x478] sm:$0xff] %v481
                %v483 = vld [vmem:[%s193 + $0x900] sm:$0xff]
                %484 = vst [vmem:[%s194 + $0x480] sm:$0xff] %v483
                %v485 = vld [vmem:[%s193 + $0x908] sm:$0xff]
                %486 = vst [vmem:[%s194 + $0x488] sm:$0xff] %v485
                %v487 = vld [vmem:[%s193 + $0x920] sm:$0xff]
                %488 = vst [vmem:[%s194 + $0x490] sm:$0xff] %v487
                %v489 = vld [vmem:[%s193 + $0x928] sm:$0xff]
                %490 = vst [vmem:[%s194 + $0x498] sm:$0xff] %v489
                %v491 = vld [vmem:[%s193 + $0x940] sm:$0xff]
                %492 = vst [vmem:[%s194 + $0x4a0] sm:$0xff] %v491
                %v493 = vld [vmem:[%s193 + $0x948] sm:$0xff]
                %494 = vst [vmem:[%s194 + $0x4a8] sm:$0xff] %v493
                %v495 = vld [vmem:[%s193 + $0x960] sm:$0xff]
                %496 = vst [vmem:[%s194 + $0x4b0] sm:$0xff] %v495
                %v497 = vld [vmem:[%s193 + $0x968] sm:$0xff]
                %498 = vst [vmem:[%s194 + $0x4b8] sm:$0xff] %v497
                %v499 = vld [vmem:[%s193 + $0x980] sm:$0xff]
                %500 = vst [vmem:[%s194 + $0x4c0] sm:$0xff] %v499
                %v501 = vld [vmem:[%s193 + $0x988] sm:$0xff]
                %502 = vst [vmem:[%s194 + $0x4c8] sm:$0xff] %v501
                %v503 = vld [vmem:[%s193 + $0x9a0] sm:$0xff]
                %504 = vst [vmem:[%s194 + $0x4d0] sm:$0xff] %v503
                %v505 = vld [vmem:[%s193 + $0x9a8] sm:$0xff]
                %506 = vst [vmem:[%s194 + $0x4d8] sm:$0xff] %v505
                %v507 = vld [vmem:[%s193 + $0x9c0] sm:$0xff]
                %508 = vst [vmem:[%s194 + $0x4e0] sm:$0xff] %v507
                %v509 = vld [vmem:[%s193 + $0x9c8] sm:$0xff]
                %510 = vst [vmem:[%s194 + $0x4e8] sm:$0xff] %v509
                %v511 = vld [vmem:[%s193 + $0x9e0] sm:$0xff]
                %512 = vst [vmem:[%s194 + $0x4f0] sm:$0xff] %v511
                %v513 = vld [vmem:[%s193 + $0x9e8] sm:$0xff]
                %514 = vst [vmem:[%s194 + $0x4f8] sm:$0xff] %v513
              $region37: #{convnetvis_forward.6} parent=31 // loop_footer
                %s192 = sadd.s32 1, %s188
              $region38: #{convnetvis_forward.6} parent=31 // loop_footer_branch
                %187 = sbr.rel target = $region34
              $region39: #{convnetvis_forward.6} parent=31 // loop_exit
                _
            $region32: #{convnetvis_forward.6} parent=27 // pred_fallthru
              _
            // Predicated region
            $region40: #{convnetvis_forward.6} parent=27 // pred_check
              _
            $region41: #{convnetvis_forward.6} parent=27 // pred_check_branch
              %516 = sbr.rel target = $region43
            $region42: #{convnetvis_forward.6} parent=27 // pred_region
              _
            $region43: #{convnetvis_forward.6} parent=27 // pred_fallthru
              _
          $region28: #{convnetvis_forward.6} parent=23 // pred_fallthru
            _
          %517 = vnop
        $region24: #{convnetvis_forward.6} parent=15 // pred_fallthru
          _
        // Predicated region
        $region44: #{convnetvis_forward.6} parent=15 // pred_check
          %p518 = pneg %p104
        $region45: #{convnetvis_forward.6} parent=15 // pred_check_branch
          %520 = sbr.rel (%p518) target = $region47
        $region46: #{convnetvis_forward.6} parent=15 // pred_region
          %s521 = smul.u32 4, %s17
          %p522 = scmp.lt.s32.totalorder %s521, 7
          %s523 = scalar_select %p522, %s521, 7
          %s524 = scalar_lea.vmem %s2, %s523
          %s525 = smul.u32 4, %s17
        $region47: #{convnetvis_forward.6} parent=15 // pred_fallthru
          _
      $region16: #{convnetvis_forward.6} parent=5 // pred_fallthru
        _
      %p526 = scmp.le.s32.totalorder 1, %s9
      %p527 = scmp.lt.s32.totalorder %s9, 11
      %p528 = pnand %p526, %p527
      %p529 = pneg %p528
      // Predicated region
      $region48: #{convnetvis_forward.6} parent=5 // pred_check
        _
      $region49: #{convnetvis_forward.6} parent=5 // pred_check_branch
        %531 = sbr.rel (%p528) target = $region51
      $region50: #{convnetvis_forward.6} parent=5 // pred_region
        %s532 = ssub.s32 %s9, 1
        %s533 = sand.u32 %s71, 1
        %s534 = sand.u32 %s71, 1
        %s535 = smul.addr %s534, 1280
        %s536 = scalar_lea.vmem [#allocation3], %s535
        // Predicated region
        $region52: #{convnetvis_forward.6} parent=50 // pred_check
          %p537 = pneg %p84
        $region53: #{convnetvis_forward.6} parent=50 // pred_check_branch
          %539 = sbr.rel (%p537) target = $region55
        $region54: #{convnetvis_forward.6} parent=50 // pred_region
          _
        $region55: #{convnetvis_forward.6} parent=50 // pred_fallthru
          _
        %s540 = smul.u32 5, %s21
        %p541 = scmp.lt.s32.totalorder %s19, 0
        %s542 = scalar_select %p541, %s19, 0
        %p543 = scmp.lt.s32.totalorder %s540, 24
        %s544 = scalar_select %p543, %s540, 24
        %s545 = smul.addr %s542, 25
        %s546 = sadd.s32 %s544, %s545
        %s547 = smul.addr %s546, 4
        %s548 = scalar_lea.vmem %s0, %s547
        %p549 = pneg %p56
        %p550 = pneg %p53
        %s551 = sand.u32 %s71, 1
        %s552 = sand.u32 %s71, 1
        %s553 = smul.addr %s552, 1280
        %s554 = scalar_lea.vmem [#allocation3], %s553
        %p555 = pneg %p84
        %p556 = pneg %p81
        %s557 = smul.u32 4, %s20
        %p558 = scmp.lt.s32.totalorder %s557, 7
        %s559 = scalar_select %p558, %s557, 7
        %s560 = scalar_lea.vmem %s2, %s559
        %p561 = pneg %p110
        %p562 = pneg %p107
        %p563 = pneg %p138
        %p564 = pneg %p135
        %s565 = smul.u32 4, %s20
        %p566 = scmp.lt.s32.totalorder %s19, 0
        %s567 = scalar_select %p566, %s19, 0
        %p568 = scmp.lt.s32.totalorder %s565, 7
        %s569 = scalar_select %p568, %s565, 7
        %s570 = smul.addr %s567, 8
        %s571 = sadd.s32 %s569, %s570
        %s572 = smul.addr %s571, 8
        %s573 = scalar_lea.vmem %s3, %s572
        %s574 = smul.u32 5, %s21
        %p575 = scmp.lt.s32.totalorder %s19, 0
        %s576 = scalar_select %p575, %s19, 0
        %p577 = scmp.lt.s32.totalorder %s574, 24
        %s578 = scalar_select %p577, %s574, 24
        %s579 = smul.addr %s576, 25
        %s580 = sadd.s32 %s578, %s579
        %s581 = smul.addr %s580, 4
        %s582 = scalar_lea.vmem %s0, %s581
        %s583 = smul.u32 5, %s21
        %s584 = smul.u32 80, %s21
        %s585 = smul.u32 4, %s20
        %s586 = smul.u32 4, %s20
        %p587 = scmp.lt.s32.totalorder %s586, 7
        %s588 = scalar_select %p587, %s586, 7
        %s589 = scalar_lea.vmem %s2, %s588
        %s590 = smul.u32 4, %s20
        %s591 = smul.u32 4, %s20
        %p592 = scmp.lt.s32.totalorder %s19, 0
        %s593 = scalar_select %p592, %s19, 0
        %p594 = scmp.lt.s32.totalorder %s591, 7
        %s595 = scalar_select %p594, %s591, 7
        %s596 = smul.addr %s593, 8
        %s597 = sadd.s32 %s595, %s596
        %s598 = smul.addr %s597, 8
        %s599 = scalar_lea.vmem %s3, %s598
        %s600 = smul.u32 4, %s20
        %p602 = scmp.eq.s32.totalorder %s21, 0
        // Predicated region
        $region56: #{convnetvis_forward.6} parent=50 // pred_check
          %p603 = pneg %p602
        $region57: #{convnetvis_forward.6} parent=50 // pred_check_branch
          %605 = sbr.rel (%p603) target = $region59
        $region58: #{convnetvis_forward.6} parent=50 // pred_region
          %606 = vst [vmem:[#allocation2] sm:$0xff] 0.0
          %607 = vst [vmem:[#allocation2 + $0x8] sm:$0xff] 0.0
          %608 = vst [vmem:[#allocation2 + $0x10] sm:$0xff] 0.0
          %609 = vst [vmem:[#allocation2 + $0x18] sm:$0xff] 0.0
        $region59: #{convnetvis_forward.6} parent=50 // pred_fallthru
          _
        %v610 = vld [vmem:[#allocation2] sm:$0xff]
        %v611 = vld [vmem:[#allocation2 + $0x8] sm:$0xff]
        %v612 = vld [vmem:[#allocation2 + $0x10] sm:$0xff]
        %v613 = vld [vmem:[#allocation2 + $0x18] sm:$0xff]
        %v614 = vld [vmem:[%s582] sm:$0xff]
        %v615 = vld [vmem:[%s582 + $0x8] sm:$0xff]
        %v616 = vld [vmem:[%s582 + $0x10] sm:$0xf]
        %v617 = vld [vmem:[%s536] sm:$0xff]
        %v618 = vld [vmem:[%s536 + $0x8] sm:$0xff]
        %v619 = vld [vmem:[%s536 + $0x10] sm:$0xff]
        %v620 = vld [vmem:[%s536 + $0x18] sm:$0xff]
        %v621 = vld [vmem:[%s536 + $0x20] sm:$0xff]
        %v622 = vld [vmem:[%s536 + $0x28] sm:$0xff]
        %v623 = vld [vmem:[%s536 + $0x30] sm:$0xff]
        %v624 = vld [vmem:[%s536 + $0x38] sm:$0xff]
        %v625 = vld [vmem:[%s536 + $0x40] sm:$0xff]
        %v626 = vld [vmem:[%s536 + $0x48] sm:$0xff]
        %v627 = vld [vmem:[%s536 + $0x50] sm:$0xff]
        %v628 = vld [vmem:[%s536 + $0x58] sm:$0xff]
        %v629 = vld [vmem:[%s536 + $0x60] sm:$0xff]
        %v630 = vld [vmem:[%s536 + $0x68] sm:$0xff]
        %v631 = vld [vmem:[%s536 + $0x70] sm:$0xff]
        %v632 = vld [vmem:[%s536 + $0x78] sm:$0xff]
        %v633 = vld [vmem:[%s536 + $0x80] sm:$0xff]
        %v634 = vld [vmem:[%s536 + $0x88] sm:$0xff]
        %v635 = vld [vmem:[%s536 + $0x90] sm:$0xff]
        %v636 = vld [vmem:[%s536 + $0x98] sm:$0xff]
        %v637 = vld [vmem:[%s536 + $0xa0] sm:$0xff]
        %v638 = vld [vmem:[%s536 + $0xa8] sm:$0xff]
        %v639 = vld [vmem:[%s536 + $0xb0] sm:$0xff]
        %v640 = vld [vmem:[%s536 + $0xb8] sm:$0xff]
        %v641 = vld [vmem:[%s536 + $0xc0] sm:$0xff]
        %v642 = vld [vmem:[%s536 + $0xc8] sm:$0xff]
        %v643 = vld [vmem:[%s536 + $0xd0] sm:$0xff]
        %v644 = vld [vmem:[%s536 + $0xd8] sm:$0xff]
        %v645 = vld [vmem:[%s536 + $0xe0] sm:$0xff]
        %v646 = vld [vmem:[%s536 + $0xe8] sm:$0xff]
        %v647 = vld [vmem:[%s536 + $0xf0] sm:$0xff]
        %v648 = vld [vmem:[%s536 + $0xf8] sm:$0xff]
        %v649 = vld [vmem:[%s536 + $0x100] sm:$0xff]
        %v650 = vld [vmem:[%s536 + $0x108] sm:$0xff]
        %v651 = vld [vmem:[%s536 + $0x110] sm:$0xff]
        %v652 = vld [vmem:[%s536 + $0x118] sm:$0xff]
        %v653 = vld [vmem:[%s536 + $0x120] sm:$0xff]
        %v654 = vld [vmem:[%s536 + $0x128] sm:$0xff]
        %v655 = vld [vmem:[%s536 + $0x130] sm:$0xff]
        %v656 = vld [vmem:[%s536 + $0x138] sm:$0xff]
        %v657 = vld [vmem:[%s536 + $0x140] sm:$0xff]
        %v658 = vld [vmem:[%s536 + $0x148] sm:$0xff]
        %v659 = vld [vmem:[%s536 + $0x150] sm:$0xff]
        %v660 = vld [vmem:[%s536 + $0x158] sm:$0xff]
        %v661 = vld [vmem:[%s536 + $0x160] sm:$0xff]
        %v662 = vld [vmem:[%s536 + $0x168] sm:$0xff]
        %v663 = vld [vmem:[%s536 + $0x170] sm:$0xff]
        %v664 = vld [vmem:[%s536 + $0x178] sm:$0xff]
        %v665 = vld [vmem:[%s536 + $0x180] sm:$0xff]
        %v666 = vld [vmem:[%s536 + $0x188] sm:$0xff]
        %v667 = vld [vmem:[%s536 + $0x190] sm:$0xff]
        %v668 = vld [vmem:[%s536 + $0x198] sm:$0xff]
        %v669 = vld [vmem:[%s536 + $0x1a0] sm:$0xff]
        %v670 = vld [vmem:[%s536 + $0x1a8] sm:$0xff]
        %v671 = vld [vmem:[%s536 + $0x1b0] sm:$0xff]
        %v672 = vld [vmem:[%s536 + $0x1b8] sm:$0xff]
        %v673 = vld [vmem:[%s536 + $0x1c0] sm:$0xff]
        %v674 = vld [vmem:[%s536 + $0x1c8] sm:$0xff]
        %v675 = vld [vmem:[%s536 + $0x1d0] sm:$0xff]
        %v676 = vld [vmem:[%s536 + $0x1d8] sm:$0xff]
        %v677 = vld [vmem:[%s536 + $0x1e0] sm:$0xff]
        %v678 = vld [vmem:[%s536 + $0x1e8] sm:$0xff]
        %v679 = vld [vmem:[%s536 + $0x1f0] sm:$0xff]
        %v680 = vld [vmem:[%s536 + $0x1f8] sm:$0xff]
        %v681 = vld [vmem:[%s536 + $0x200] sm:$0xff]
        %v682 = vld [vmem:[%s536 + $0x208] sm:$0xff]
        %v683 = vld [vmem:[%s536 + $0x210] sm:$0xff]
        %v684 = vld [vmem:[%s536 + $0x218] sm:$0xff]
        %v685 = vld [vmem:[%s536 + $0x220] sm:$0xff]
        %v686 = vld [vmem:[%s536 + $0x228] sm:$0xff]
        %v687 = vld [vmem:[%s536 + $0x230] sm:$0xff]
        %v688 = vld [vmem:[%s536 + $0x238] sm:$0xff]
        %v689 = vld [vmem:[%s536 + $0x240] sm:$0xff]
        %v690 = vld [vmem:[%s536 + $0x248] sm:$0xff]
        %v691 = vld [vmem:[%s536 + $0x250] sm:$0xff]
        %v692 = vld [vmem:[%s536 + $0x258] sm:$0xff]
        %v693 = vld [vmem:[%s536 + $0x260] sm:$0xff]
        %v694 = vld [vmem:[%s536 + $0x268] sm:$0xff]
        %v695 = vld [vmem:[%s536 + $0x270] sm:$0xff]
        %v696 = vld [vmem:[%s536 + $0x278] sm:$0xff]
        %v697 = vld [vmem:[%s536 + $0x280] sm:$0xff]
        %v698 = vld [vmem:[%s536 + $0x288] sm:$0xff]
        %v699 = vld [vmem:[%s536 + $0x290] sm:$0xff]
        %v700 = vld [vmem:[%s536 + $0x298] sm:$0xff]
        %v701 = vld [vmem:[%s536 + $0x2a0] sm:$0xff]
        %v702 = vld [vmem:[%s536 + $0x2a8] sm:$0xff]
        %v703 = vld [vmem:[%s536 + $0x2b0] sm:$0xff]
        %v704 = vld [vmem:[%s536 + $0x2b8] sm:$0xff]
        %v705 = vld [vmem:[%s536 + $0x2c0] sm:$0xff]
        %v706 = vld [vmem:[%s536 + $0x2c8] sm:$0xff]
        %v707 = vld [vmem:[%s536 + $0x2d0] sm:$0xff]
        %v708 = vld [vmem:[%s536 + $0x2d8] sm:$0xff]
        %v709 = vld [vmem:[%s536 + $0x2e0] sm:$0xff]
        %v710 = vld [vmem:[%s536 + $0x2e8] sm:$0xff]
        %v711 = vld [vmem:[%s536 + $0x2f0] sm:$0xff]
        %v712 = vld [vmem:[%s536 + $0x2f8] sm:$0xff]
        %v713 = vld [vmem:[%s536 + $0x300] sm:$0xff]
        %v714 = vld [vmem:[%s536 + $0x308] sm:$0xff]
        %v715 = vld [vmem:[%s536 + $0x310] sm:$0xff]
        %v716 = vld [vmem:[%s536 + $0x318] sm:$0xff]
        %v717 = vld [vmem:[%s536 + $0x320] sm:$0xff]
        %v718 = vld [vmem:[%s536 + $0x328] sm:$0xff]
        %v719 = vld [vmem:[%s536 + $0x330] sm:$0xff]
        %v720 = vld [vmem:[%s536 + $0x338] sm:$0xff]
        %v721 = vld [vmem:[%s536 + $0x340] sm:$0xff]
        %v722 = vld [vmem:[%s536 + $0x348] sm:$0xff]
        %v723 = vld [vmem:[%s536 + $0x350] sm:$0xff]
        %v724 = vld [vmem:[%s536 + $0x358] sm:$0xff]
        %v725 = vld [vmem:[%s536 + $0x360] sm:$0xff]
        %v726 = vld [vmem:[%s536 + $0x368] sm:$0xff]
        %v727 = vld [vmem:[%s536 + $0x370] sm:$0xff]
        %v728 = vld [vmem:[%s536 + $0x378] sm:$0xff]
        %v729 = vld [vmem:[%s536 + $0x380] sm:$0xff]
        %v730 = vld [vmem:[%s536 + $0x388] sm:$0xff]
        %v731 = vld [vmem:[%s536 + $0x390] sm:$0xff]
        %v732 = vld [vmem:[%s536 + $0x398] sm:$0xff]
        %v733 = vld [vmem:[%s536 + $0x3a0] sm:$0xff]
        %v734 = vld [vmem:[%s536 + $0x3a8] sm:$0xff]
        %v735 = vld [vmem:[%s536 + $0x3b0] sm:$0xff]
        %v736 = vld [vmem:[%s536 + $0x3b8] sm:$0xff]
        %v737 = vld [vmem:[%s536 + $0x3c0] sm:$0xff]
        %v738 = vld [vmem:[%s536 + $0x3c8] sm:$0xff]
        %v739 = vld [vmem:[%s536 + $0x3d0] sm:$0xff]
        %v740 = vld [vmem:[%s536 + $0x3d8] sm:$0xff]
        %v741 = vld [vmem:[%s536 + $0x3e0] sm:$0xff]
        %v742 = vld [vmem:[%s536 + $0x3e8] sm:$0xff]
        %v743 = vld [vmem:[%s536 + $0x3f0] sm:$0xff]
        %v744 = vld [vmem:[%s536 + $0x3f8] sm:$0xff]
        %v745 = vld [vmem:[%s536 + $0x400] sm:$0xff]
        %v746 = vld [vmem:[%s536 + $0x408] sm:$0xff]
        %v747 = vld [vmem:[%s536 + $0x410] sm:$0xff]
        %v748 = vld [vmem:[%s536 + $0x418] sm:$0xff]
        %v749 = vld [vmem:[%s536 + $0x420] sm:$0xff]
        %v750 = vld [vmem:[%s536 + $0x428] sm:$0xff]
        %v751 = vld [vmem:[%s536 + $0x430] sm:$0xff]
        %v752 = vld [vmem:[%s536 + $0x438] sm:$0xff]
        %v753 = vld [vmem:[%s536 + $0x440] sm:$0xff]
        %v754 = vld [vmem:[%s536 + $0x448] sm:$0xff]
        %v755 = vld [vmem:[%s536 + $0x450] sm:$0xff]
        %v756 = vld [vmem:[%s536 + $0x458] sm:$0xff]
        %v757 = vld [vmem:[%s536 + $0x460] sm:$0xff]
        %v758 = vld [vmem:[%s536 + $0x468] sm:$0xff]
        %v759 = vld [vmem:[%s536 + $0x470] sm:$0xff]
        %v760 = vld [vmem:[%s536 + $0x478] sm:$0xff]
        %v761 = vld [vmem:[%s536 + $0x480] sm:$0xff]
        %v762 = vld [vmem:[%s536 + $0x488] sm:$0xff]
        %v763 = vld [vmem:[%s536 + $0x490] sm:$0xff]
        %v764 = vld [vmem:[%s536 + $0x498] sm:$0xff]
        %v765 = vld [vmem:[%s536 + $0x4a0] sm:$0xff]
        %v766 = vld [vmem:[%s536 + $0x4a8] sm:$0xff]
        %v767 = vld [vmem:[%s536 + $0x4b0] sm:$0xff]
        %v768 = vld [vmem:[%s536 + $0x4b8] sm:$0xff]
        %v769 = vld [vmem:[%s536 + $0x4c0] sm:$0xff]
        %v770 = vld [vmem:[%s536 + $0x4c8] sm:$0xff]
        %v771 = vld [vmem:[%s536 + $0x4d0] sm:$0xff]
        %v772 = vld [vmem:[%s536 + $0x4d8] sm:$0xff]
        %v773 = vld [vmem:[%s536 + $0x4e0] sm:$0xff]
        %v774 = vld [vmem:[%s536 + $0x4e8] sm:$0xff]
        %v775 = vld [vmem:[%s536 + $0x4f0] sm:$0xff]
        %v776 = vld [vmem:[%s536 + $0x4f8] sm:$0xff]
        %v780 = vunpack.c.l.b16 %v614
        %v781 = vunpack.c.h.b16 %v614
        %v782 = vunpack.c.l.b16 %v615
        %v783 = vunpack.c.h.b16 %v615
        %v784 = vunpack.c.l.b16 %v616
        %v785 = vpack.c.b16 %v780, %v780
        %v786 = vpack.c.b16 %v781, %v781
        %v787 = vpack.c.b16 %v782, %v782
        %v788 = vpack.c.b16 %v783, %v783
        %v789 = vpack.c.b16 %v784, %v784
        %v955 = vunpack.c.l.b16 %v617
        %v956 = vunpack.c.h.b16 %v617
        %v957 = vunpack.c.l.b16 %v618
        %v958 = vunpack.c.h.b16 %v618
        %v959 = vunpack.c.l.b16 %v619
        %v960 = vunpack.c.h.b16 %v619
        %v961 = vunpack.c.l.b16 %v620
        %v962 = vunpack.c.h.b16 %v620
        %v963 = vunpack.c.l.b16 %v621
        %v964 = vunpack.c.h.b16 %v621
        %v965 = vunpack.c.l.b16 %v622
        %v966 = vunpack.c.h.b16 %v622
        %v967 = vunpack.c.l.b16 %v623
        %v968 = vunpack.c.h.b16 %v623
        %v969 = vunpack.c.l.b16 %v624
        %v970 = vunpack.c.h.b16 %v624
        %v971 = vunpack.c.l.b16 %v625
        %v972 = vunpack.c.h.b16 %v625
        %v973 = vunpack.c.l.b16 %v626
        %v974 = vunpack.c.h.b16 %v626
        %v975 = vunpack.c.l.b16 %v627
        %v976 = vunpack.c.h.b16 %v627
        %v977 = vunpack.c.l.b16 %v628
        %v978 = vunpack.c.h.b16 %v628
        %v979 = vunpack.c.l.b16 %v629
        %v980 = vunpack.c.h.b16 %v629
        %v981 = vunpack.c.l.b16 %v630
        %v982 = vunpack.c.h.b16 %v630
        %v983 = vunpack.c.l.b16 %v631
        %v984 = vunpack.c.h.b16 %v631
        %v985 = vunpack.c.l.b16 %v632
        %v986 = vunpack.c.h.b16 %v632
        %v987 = vunpack.c.l.b16 %v633
        %v988 = vunpack.c.h.b16 %v633
        %v989 = vunpack.c.l.b16 %v634
        %v990 = vunpack.c.h.b16 %v634
        %v991 = vunpack.c.l.b16 %v635
        %v992 = vunpack.c.h.b16 %v635
        %v993 = vunpack.c.l.b16 %v636
        %v994 = vunpack.c.h.b16 %v636
        %v995 = vunpack.c.l.b16 %v637
        %v996 = vunpack.c.h.b16 %v637
        %v997 = vunpack.c.l.b16 %v638
        %v998 = vunpack.c.h.b16 %v638
        %v999 = vunpack.c.l.b16 %v639
        %v1000 = vunpack.c.h.b16 %v639
        %v1001 = vunpack.c.l.b16 %v640
        %v1002 = vunpack.c.h.b16 %v640
        %v1003 = vunpack.c.l.b16 %v641
        %v1004 = vunpack.c.h.b16 %v641
        %v1005 = vunpack.c.l.b16 %v642
        %v1006 = vunpack.c.h.b16 %v642
        %v1007 = vunpack.c.l.b16 %v643
        %v1008 = vunpack.c.h.b16 %v643
        %v1009 = vunpack.c.l.b16 %v644
        %v1010 = vunpack.c.h.b16 %v644
        %v1011 = vunpack.c.l.b16 %v645
        %v1012 = vunpack.c.h.b16 %v645
        %v1013 = vunpack.c.l.b16 %v646
        %v1014 = vunpack.c.h.b16 %v646
        %v1015 = vunpack.c.l.b16 %v647
        %v1016 = vunpack.c.h.b16 %v647
        %v1017 = vunpack.c.l.b16 %v648
        %v1018 = vunpack.c.h.b16 %v648
        %v1019 = vunpack.c.l.b16 %v649
        %v1020 = vunpack.c.h.b16 %v649
        %v1021 = vunpack.c.l.b16 %v650
        %v1022 = vunpack.c.h.b16 %v650
        %v1023 = vunpack.c.l.b16 %v651
        %v1024 = vunpack.c.h.b16 %v651
        %v1025 = vunpack.c.l.b16 %v652
        %v1026 = vunpack.c.h.b16 %v652
        %v1027 = vunpack.c.l.b16 %v653
        %v1028 = vunpack.c.h.b16 %v653
        %v1029 = vunpack.c.l.b16 %v654
        %v1030 = vunpack.c.h.b16 %v654
        %v1031 = vunpack.c.l.b16 %v655
        %v1032 = vunpack.c.h.b16 %v655
        %v1033 = vunpack.c.l.b16 %v656
        %v1034 = vunpack.c.h.b16 %v656
        %v1035 = vunpack.c.l.b16 %v657
        %v1036 = vunpack.c.h.b16 %v657
        %v1037 = vunpack.c.l.b16 %v658
        %v1038 = vunpack.c.h.b16 %v658
        %v1039 = vunpack.c.l.b16 %v659
        %v1040 = vunpack.c.h.b16 %v659
        %v1041 = vunpack.c.l.b16 %v660
        %v1042 = vunpack.c.h.b16 %v660
        %v1043 = vunpack.c.l.b16 %v661
        %v1044 = vunpack.c.h.b16 %v661
        %v1045 = vunpack.c.l.b16 %v662
        %v1046 = vunpack.c.h.b16 %v662
        %v1047 = vunpack.c.l.b16 %v663
        %v1048 = vunpack.c.h.b16 %v663
        %v1049 = vunpack.c.l.b16 %v664
        %v1050 = vunpack.c.h.b16 %v664
        %v1051 = vunpack.c.l.b16 %v665
        %v1052 = vunpack.c.h.b16 %v665
        %v1053 = vunpack.c.l.b16 %v666
        %v1054 = vunpack.c.h.b16 %v666
        %v1055 = vunpack.c.l.b16 %v667
        %v1056 = vunpack.c.h.b16 %v667
        %v1057 = vunpack.c.l.b16 %v668
        %v1058 = vunpack.c.h.b16 %v668
        %v1059 = vunpack.c.l.b16 %v669
        %v1060 = vunpack.c.h.b16 %v669
        %v1061 = vunpack.c.l.b16 %v670
        %v1062 = vunpack.c.h.b16 %v670
        %v1063 = vunpack.c.l.b16 %v671
        %v1064 = vunpack.c.h.b16 %v671
        %v1065 = vunpack.c.l.b16 %v672
        %v1066 = vunpack.c.h.b16 %v672
        %v1067 = vunpack.c.l.b16 %v673
        %v1068 = vunpack.c.h.b16 %v673
        %v1069 = vunpack.c.l.b16 %v674
        %v1070 = vunpack.c.h.b16 %v674
        %v1071 = vunpack.c.l.b16 %v675
        %v1072 = vunpack.c.h.b16 %v675
        %v1073 = vunpack.c.l.b16 %v676
        %v1074 = vunpack.c.h.b16 %v676
        %v1075 = vunpack.c.l.b16 %v677
        %v1076 = vunpack.c.h.b16 %v677
        %v1077 = vunpack.c.l.b16 %v678
        %v1078 = vunpack.c.h.b16 %v678
        %v1079 = vunpack.c.l.b16 %v679
        %v1080 = vunpack.c.h.b16 %v679
        %v1081 = vunpack.c.l.b16 %v680
        %v1082 = vunpack.c.h.b16 %v680
        %v1083 = vunpack.c.l.b16 %v681
        %v1084 = vunpack.c.h.b16 %v681
        %v1085 = vunpack.c.l.b16 %v682
        %v1086 = vunpack.c.h.b16 %v682
        %v1087 = vunpack.c.l.b16 %v683
        %v1088 = vunpack.c.h.b16 %v683
        %v1089 = vunpack.c.l.b16 %v684
        %v1090 = vunpack.c.h.b16 %v684
        %v1091 = vunpack.c.l.b16 %v685
        %v1092 = vunpack.c.h.b16 %v685
        %v1093 = vunpack.c.l.b16 %v686
        %v1094 = vunpack.c.h.b16 %v686
        %v1095 = vunpack.c.l.b16 %v687
        %v1096 = vunpack.c.h.b16 %v687
        %v1097 = vunpack.c.l.b16 %v688
        %v1098 = vunpack.c.h.b16 %v688
        %v1099 = vunpack.c.l.b16 %v689
        %v1100 = vunpack.c.h.b16 %v689
        %v1101 = vunpack.c.l.b16 %v690
        %v1102 = vunpack.c.h.b16 %v690
        %v1103 = vunpack.c.l.b16 %v691
        %v1104 = vunpack.c.h.b16 %v691
        %v1105 = vunpack.c.l.b16 %v692
        %v1106 = vunpack.c.h.b16 %v692
        %v1107 = vunpack.c.l.b16 %v693
        %v1108 = vunpack.c.h.b16 %v693
        %v1109 = vunpack.c.l.b16 %v694
        %v1110 = vunpack.c.h.b16 %v694
        %v1111 = vunpack.c.l.b16 %v695
        %v1112 = vunpack.c.h.b16 %v695
        %v1113 = vunpack.c.l.b16 %v696
        %v1114 = vunpack.c.h.b16 %v696
        %v1115 = vunpack.c.l.b16 %v697
        %v1116 = vunpack.c.h.b16 %v697
        %v1117 = vunpack.c.l.b16 %v698
        %v1118 = vunpack.c.h.b16 %v698
        %v1119 = vunpack.c.l.b16 %v699
        %v1120 = vunpack.c.h.b16 %v699
        %v1121 = vunpack.c.l.b16 %v700
        %v1122 = vunpack.c.h.b16 %v700
        %v1123 = vunpack.c.l.b16 %v701
        %v1124 = vunpack.c.h.b16 %v701
        %v1125 = vunpack.c.l.b16 %v702
        %v1126 = vunpack.c.h.b16 %v702
        %v1127 = vunpack.c.l.b16 %v703
        %v1128 = vunpack.c.h.b16 %v703
        %v1129 = vunpack.c.l.b16 %v704
        %v1130 = vunpack.c.h.b16 %v704
        %v1131 = vunpack.c.l.b16 %v705
        %v1132 = vunpack.c.h.b16 %v705
        %v1133 = vunpack.c.l.b16 %v706
        %v1134 = vunpack.c.h.b16 %v706
        %v1135 = vunpack.c.l.b16 %v707
        %v1136 = vunpack.c.h.b16 %v707
        %v1137 = vunpack.c.l.b16 %v708
        %v1138 = vunpack.c.h.b16 %v708
        %v1139 = vunpack.c.l.b16 %v709
        %v1140 = vunpack.c.h.b16 %v709
        %v1141 = vunpack.c.l.b16 %v710
        %v1142 = vunpack.c.h.b16 %v710
        %v1143 = vunpack.c.l.b16 %v711
        %v1144 = vunpack.c.h.b16 %v711
        %v1145 = vunpack.c.l.b16 %v712
        %v1146 = vunpack.c.h.b16 %v712
        %v1147 = vunpack.c.l.b16 %v713
        %v1148 = vunpack.c.h.b16 %v713
        %v1149 = vunpack.c.l.b16 %v714
        %v1150 = vunpack.c.h.b16 %v714
        %v1151 = vunpack.c.l.b16 %v715
        %v1152 = vunpack.c.h.b16 %v715
        %v1153 = vunpack.c.l.b16 %v716
        %v1154 = vunpack.c.h.b16 %v716
        %v1155 = vunpack.c.l.b16 %v717
        %v1156 = vunpack.c.h.b16 %v717
        %v1157 = vunpack.c.l.b16 %v718
        %v1158 = vunpack.c.h.b16 %v718
        %v1159 = vunpack.c.l.b16 %v719
        %v1160 = vunpack.c.h.b16 %v719
        %v1161 = vunpack.c.l.b16 %v720
        %v1162 = vunpack.c.h.b16 %v720
        %v1163 = vunpack.c.l.b16 %v721
        %v1164 = vunpack.c.h.b16 %v721
        %v1165 = vunpack.c.l.b16 %v722
        %v1166 = vunpack.c.h.b16 %v722
        %v1167 = vunpack.c.l.b16 %v723
        %v1168 = vunpack.c.h.b16 %v723
        %v1169 = vunpack.c.l.b16 %v724
        %v1170 = vunpack.c.h.b16 %v724
        %v1171 = vunpack.c.l.b16 %v725
        %v1172 = vunpack.c.h.b16 %v725
        %v1173 = vunpack.c.l.b16 %v726
        %v1174 = vunpack.c.h.b16 %v726
        %v1175 = vunpack.c.l.b16 %v727
        %v1176 = vunpack.c.h.b16 %v727
        %v1177 = vunpack.c.l.b16 %v728
        %v1178 = vunpack.c.h.b16 %v728
        %v1179 = vunpack.c.l.b16 %v729
        %v1180 = vunpack.c.h.b16 %v729
        %v1181 = vunpack.c.l.b16 %v730
        %v1182 = vunpack.c.h.b16 %v730
        %v1183 = vunpack.c.l.b16 %v731
        %v1184 = vunpack.c.h.b16 %v731
        %v1185 = vunpack.c.l.b16 %v732
        %v1186 = vunpack.c.h.b16 %v732
        %v1187 = vunpack.c.l.b16 %v733
        %v1188 = vunpack.c.h.b16 %v733
        %v1189 = vunpack.c.l.b16 %v734
        %v1190 = vunpack.c.h.b16 %v734
        %v1191 = vunpack.c.l.b16 %v735
        %v1192 = vunpack.c.h.b16 %v735
        %v1193 = vunpack.c.l.b16 %v736
        %v1194 = vunpack.c.h.b16 %v736
        %v1195 = vunpack.c.l.b16 %v737
        %v1196 = vunpack.c.h.b16 %v737
        %v1197 = vunpack.c.l.b16 %v738
        %v1198 = vunpack.c.h.b16 %v738
        %v1199 = vunpack.c.l.b16 %v739
        %v1200 = vunpack.c.h.b16 %v739
        %v1201 = vunpack.c.l.b16 %v740
        %v1202 = vunpack.c.h.b16 %v740
        %v1203 = vunpack.c.l.b16 %v741
        %v1204 = vunpack.c.h.b16 %v741
        %v1205 = vunpack.c.l.b16 %v742
        %v1206 = vunpack.c.h.b16 %v742
        %v1207 = vunpack.c.l.b16 %v743
        %v1208 = vunpack.c.h.b16 %v743
        %v1209 = vunpack.c.l.b16 %v744
        %v1210 = vunpack.c.h.b16 %v744
        %v1211 = vunpack.c.l.b16 %v745
        %v1212 = vunpack.c.h.b16 %v745
        %v1213 = vunpack.c.l.b16 %v746
        %v1214 = vunpack.c.h.b16 %v746
        %v1215 = vunpack.c.l.b16 %v747
        %v1216 = vunpack.c.h.b16 %v747
        %v1217 = vunpack.c.l.b16 %v748
        %v1218 = vunpack.c.h.b16 %v748
        %v1219 = vunpack.c.l.b16 %v749
        %v1220 = vunpack.c.h.b16 %v749
        %v1221 = vunpack.c.l.b16 %v750
        %v1222 = vunpack.c.h.b16 %v750
        %v1223 = vunpack.c.l.b16 %v751
        %v1224 = vunpack.c.h.b16 %v751
        %v1225 = vunpack.c.l.b16 %v752
        %v1226 = vunpack.c.h.b16 %v752
        %v1227 = vunpack.c.l.b16 %v753
        %v1228 = vunpack.c.h.b16 %v753
        %v1229 = vunpack.c.l.b16 %v754
        %v1230 = vunpack.c.h.b16 %v754
        %v1231 = vunpack.c.l.b16 %v755
        %v1232 = vunpack.c.h.b16 %v755
        %v1233 = vunpack.c.l.b16 %v756
        %v1234 = vunpack.c.h.b16 %v756
        %v1235 = vunpack.c.l.b16 %v757
        %v1236 = vunpack.c.h.b16 %v757
        %v1237 = vunpack.c.l.b16 %v758
        %v1238 = vunpack.c.h.b16 %v758
        %v1239 = vunpack.c.l.b16 %v759
        %v1240 = vunpack.c.h.b16 %v759
        %v1241 = vunpack.c.l.b16 %v760
        %v1242 = vunpack.c.h.b16 %v760
        %v1243 = vunpack.c.l.b16 %v761
        %v1244 = vunpack.c.h.b16 %v761
        %v1245 = vunpack.c.l.b16 %v762
        %v1246 = vunpack.c.h.b16 %v762
        %v1247 = vunpack.c.l.b16 %v763
        %v1248 = vunpack.c.h.b16 %v763
        %v1249 = vunpack.c.l.b16 %v764
        %v1250 = vunpack.c.h.b16 %v764
        %v1251 = vunpack.c.l.b16 %v765
        %v1252 = vunpack.c.h.b16 %v765
        %v1253 = vunpack.c.l.b16 %v766
        %v1254 = vunpack.c.h.b16 %v766
        %v1255 = vunpack.c.l.b16 %v767
        %v1256 = vunpack.c.h.b16 %v767
        %v1257 = vunpack.c.l.b16 %v768
        %v1258 = vunpack.c.h.b16 %v768
        %v1259 = vunpack.c.l.b16 %v769
        %v1260 = vunpack.c.h.b16 %v769
        %v1261 = vunpack.c.l.b16 %v770
        %v1262 = vunpack.c.h.b16 %v770
        %v1263 = vunpack.c.l.b16 %v771
        %v1264 = vunpack.c.h.b16 %v771
        %v1265 = vunpack.c.l.b16 %v772
        %v1266 = vunpack.c.h.b16 %v772
        %v1267 = vunpack.c.l.b16 %v773
        %v1268 = vunpack.c.h.b16 %v773
        %v1269 = vunpack.c.l.b16 %v774
        %v1270 = vunpack.c.h.b16 %v774
        %v1271 = vunpack.c.l.b16 %v775
        %v1272 = vunpack.c.h.b16 %v775
        %v1273 = vunpack.c.l.b16 %v776
        %v1274 = vunpack.c.h.b16 %v776
        %v1275 = vpack.c.b16 %v959, %v955
        %v1276 = vpack.c.b16 %v960, %v956
        %v1277 = vpack.c.b16 %v961, %v957
        %v1278 = vpack.c.b16 %v962, %v958
        %v1279 = vpack.c.b16 %v967, %v963
        %v1280 = vpack.c.b16 %v968, %v964
        %v1281 = vpack.c.b16 %v969, %v965
        %v1282 = vpack.c.b16 %v970, %v966
        %v1283 = vpack.c.b16 %v975, %v971
        %v1284 = vpack.c.b16 %v976, %v972
        %v1285 = vpack.c.b16 %v977, %v973
        %v1286 = vpack.c.b16 %v978, %v974
        %v1287 = vpack.c.b16 %v983, %v979
        %v1288 = vpack.c.b16 %v984, %v980
        %v1289 = vpack.c.b16 %v985, %v981
        %v1290 = vpack.c.b16 %v986, %v982
        %v1291 = vpack.c.b16 %v991, %v987
        %v1292 = vpack.c.b16 %v992, %v988
        %v1293 = vpack.c.b16 %v993, %v989
        %v1294 = vpack.c.b16 %v994, %v990
        %v1295 = vpack.c.b16 %v999, %v995
        %v1296 = vpack.c.b16 %v1000, %v996
        %v1297 = vpack.c.b16 %v1001, %v997
        %v1298 = vpack.c.b16 %v1002, %v998
        %v1299 = vpack.c.b16 %v1007, %v1003
        %v1300 = vpack.c.b16 %v1008, %v1004
        %v1301 = vpack.c.b16 %v1009, %v1005
        %v1302 = vpack.c.b16 %v1010, %v1006
        %v1303 = vpack.c.b16 %v1015, %v1011
        %v1304 = vpack.c.b16 %v1016, %v1012
        %v1305 = vpack.c.b16 %v1017, %v1013
        %v1306 = vpack.c.b16 %v1018, %v1014
        %v1307 = vpack.c.b16 %v1023, %v1019
        %v1308 = vpack.c.b16 %v1024, %v1020
        %v1309 = vpack.c.b16 %v1025, %v1021
        %v1310 = vpack.c.b16 %v1026, %v1022
        %v1311 = vpack.c.b16 %v1031, %v1027
        %v1312 = vpack.c.b16 %v1032, %v1028
        %v1313 = vpack.c.b16 %v1033, %v1029
        %v1314 = vpack.c.b16 %v1034, %v1030
        %v1315 = vpack.c.b16 %v1039, %v1035
        %v1316 = vpack.c.b16 %v1040, %v1036
        %v1317 = vpack.c.b16 %v1041, %v1037
        %v1318 = vpack.c.b16 %v1042, %v1038
        %v1319 = vpack.c.b16 %v1047, %v1043
        %v1320 = vpack.c.b16 %v1048, %v1044
        %v1321 = vpack.c.b16 %v1049, %v1045
        %v1322 = vpack.c.b16 %v1050, %v1046
        %v1323 = vpack.c.b16 %v1055, %v1051
        %v1324 = vpack.c.b16 %v1056, %v1052
        %v1325 = vpack.c.b16 %v1057, %v1053
        %v1326 = vpack.c.b16 %v1058, %v1054
        %v1327 = vpack.c.b16 %v1063, %v1059
        %v1328 = vpack.c.b16 %v1064, %v1060
        %v1329 = vpack.c.b16 %v1065, %v1061
        %v1330 = vpack.c.b16 %v1066, %v1062
        %v1331 = vpack.c.b16 %v1071, %v1067
        %v1332 = vpack.c.b16 %v1072, %v1068
        %v1333 = vpack.c.b16 %v1073, %v1069
        %v1334 = vpack.c.b16 %v1074, %v1070
        %v1335 = vpack.c.b16 %v1079, %v1075
        %v1336 = vpack.c.b16 %v1080, %v1076
        %v1337 = vpack.c.b16 %v1081, %v1077
        %v1338 = vpack.c.b16 %v1082, %v1078
        %v1339 = vpack.c.b16 %v1087, %v1083
        %v1340 = vpack.c.b16 %v1088, %v1084
        %v1341 = vpack.c.b16 %v1089, %v1085
        %v1342 = vpack.c.b16 %v1090, %v1086
        %v1343 = vpack.c.b16 %v1095, %v1091
        %v1344 = vpack.c.b16 %v1096, %v1092
        %v1345 = vpack.c.b16 %v1097, %v1093
        %v1346 = vpack.c.b16 %v1098, %v1094
        %v1347 = vpack.c.b16 %v1103, %v1099
        %v1348 = vpack.c.b16 %v1104, %v1100
        %v1349 = vpack.c.b16 %v1105, %v1101
        %v1350 = vpack.c.b16 %v1106, %v1102
        %v1351 = vpack.c.b16 %v1111, %v1107
        %v1352 = vpack.c.b16 %v1112, %v1108
        %v1353 = vpack.c.b16 %v1113, %v1109
        %v1354 = vpack.c.b16 %v1114, %v1110
        %v1355 = vpack.c.b16 %v1119, %v1115
        %v1356 = vpack.c.b16 %v1120, %v1116
        %v1357 = vpack.c.b16 %v1121, %v1117
        %v1358 = vpack.c.b16 %v1122, %v1118
        %v1359 = vpack.c.b16 %v1127, %v1123
        %v1360 = vpack.c.b16 %v1128, %v1124
        %v1361 = vpack.c.b16 %v1129, %v1125
        %v1362 = vpack.c.b16 %v1130, %v1126
        %v1363 = vpack.c.b16 %v1135, %v1131
        %v1364 = vpack.c.b16 %v1136, %v1132
        %v1365 = vpack.c.b16 %v1137, %v1133
        %v1366 = vpack.c.b16 %v1138, %v1134
        %v1367 = vpack.c.b16 %v1143, %v1139
        %v1368 = vpack.c.b16 %v1144, %v1140
        %v1369 = vpack.c.b16 %v1145, %v1141
        %v1370 = vpack.c.b16 %v1146, %v1142
        %v1371 = vpack.c.b16 %v1151, %v1147
        %v1372 = vpack.c.b16 %v1152, %v1148
        %v1373 = vpack.c.b16 %v1153, %v1149
        %v1374 = vpack.c.b16 %v1154, %v1150
        %v1375 = vpack.c.b16 %v1159, %v1155
        %v1376 = vpack.c.b16 %v1160, %v1156
        %v1377 = vpack.c.b16 %v1161, %v1157
        %v1378 = vpack.c.b16 %v1162, %v1158
        %v1379 = vpack.c.b16 %v1167, %v1163
        %v1380 = vpack.c.b16 %v1168, %v1164
        %v1381 = vpack.c.b16 %v1169, %v1165
        %v1382 = vpack.c.b16 %v1170, %v1166
        %v1383 = vpack.c.b16 %v1175, %v1171
        %v1384 = vpack.c.b16 %v1176, %v1172
        %v1385 = vpack.c.b16 %v1177, %v1173
        %v1386 = vpack.c.b16 %v1178, %v1174
        %v1387 = vpack.c.b16 %v1183, %v1179
        %v1388 = vpack.c.b16 %v1184, %v1180
        %v1389 = vpack.c.b16 %v1185, %v1181
        %v1390 = vpack.c.b16 %v1186, %v1182
        %v1391 = vpack.c.b16 %v1191, %v1187
        %v1392 = vpack.c.b16 %v1192, %v1188
        %v1393 = vpack.c.b16 %v1193, %v1189
        %v1394 = vpack.c.b16 %v1194, %v1190
        %v1395 = vpack.c.b16 %v1199, %v1195
        %v1396 = vpack.c.b16 %v1200, %v1196
        %v1397 = vpack.c.b16 %v1201, %v1197
        %v1398 = vpack.c.b16 %v1202, %v1198
        %v1399 = vpack.c.b16 %v1207, %v1203
        %v1400 = vpack.c.b16 %v1208, %v1204
        %v1401 = vpack.c.b16 %v1209, %v1205
        %v1402 = vpack.c.b16 %v1210, %v1206
        %v1403 = vpack.c.b16 %v1215, %v1211
        %v1404 = vpack.c.b16 %v1216, %v1212
        %v1405 = vpack.c.b16 %v1217, %v1213
        %v1406 = vpack.c.b16 %v1218, %v1214
        %v1407 = vpack.c.b16 %v1223, %v1219
        %v1408 = vpack.c.b16 %v1224, %v1220
        %v1409 = vpack.c.b16 %v1225, %v1221
        %v1410 = vpack.c.b16 %v1226, %v1222
        %v1411 = vpack.c.b16 %v1231, %v1227
        %v1412 = vpack.c.b16 %v1232, %v1228
        %v1413 = vpack.c.b16 %v1233, %v1229
        %v1414 = vpack.c.b16 %v1234, %v1230
        %v1415 = vpack.c.b16 %v1239, %v1235
        %v1416 = vpack.c.b16 %v1240, %v1236
        %v1417 = vpack.c.b16 %v1241, %v1237
        %v1418 = vpack.c.b16 %v1242, %v1238
        %v1419 = vpack.c.b16 %v1247, %v1243
        %v1420 = vpack.c.b16 %v1248, %v1244
        %v1421 = vpack.c.b16 %v1249, %v1245
        %v1422 = vpack.c.b16 %v1250, %v1246
        %v1423 = vpack.c.b16 %v1255, %v1251
        %v1424 = vpack.c.b16 %v1256, %v1252
        %v1425 = vpack.c.b16 %v1257, %v1253
        %v1426 = vpack.c.b16 %v1258, %v1254
        %v1427 = vpack.c.b16 %v1263, %v1259
        %v1428 = vpack.c.b16 %v1264, %v1260
        %v1429 = vpack.c.b16 %v1265, %v1261
        %v1430 = vpack.c.b16 %v1266, %v1262
        %v1431 = vpack.c.b16 %v1271, %v1267
        %v1432 = vpack.c.b16 %v1272, %v1268
        %v1433 = vpack.c.b16 %v1273, %v1269
        %v1434 = vpack.c.b16 %v1274, %v1270
        %1595 = vmatprep.subr.bf16.mxu0 %v1276
        %1596 = vmatpush1.bf16.msra.mxu0 %v1275
        %1597 = vmatprep.subr.bf16.mxu0 %v1280
        %1598 = vmatpush1.bf16.msra.mxu0 %v1279
        %1599 = vmatprep.subr.bf16.mxu0 %v1284
        %1600 = vmatpush1.bf16.msra.mxu0 %v1283
        %1601 = vmatprep.subr.bf16.mxu0 %v1288
        %1602 = vmatpush1.bf16.msra.mxu0 %v1287
        %1603 = vmatprep.subr.bf16.mxu0 %v1292
        %1604 = vmatpush1.bf16.msra.mxu0 %v1291
        %1605 = vmatprep.subr.bf16.mxu0 %v1296
        %1606 = vmatpush1.bf16.msra.mxu0 %v1295
        %1607 = vmatprep.subr.bf16.mxu0 %v1300
        %1608 = vmatpush1.bf16.msra.mxu0 %v1299
        %1609 = vmatprep.subr.bf16.mxu0 %v1304
        %1610 = vmatpush1.bf16.msra.mxu0 %v1303
        %1611 = vmatprep.subr.bf16.mxu0 %v1308
        %1612 = vmatpush1.bf16.msra.mxu0 %v1307
        %1613 = vmatprep.subr.bf16.mxu0 %v1312
        %1614 = vmatpush1.bf16.msra.mxu0 %v1311
        %1615 = vmatprep.subr.bf16.mxu0 %v1316
        %1616 = vmatpush1.bf16.msra.mxu0 %v1315
        %1617 = vmatprep.subr.bf16.mxu0 %v1320
        %1618 = vmatpush1.bf16.msra.mxu0 %v1319
        %1619 = vmatprep.subr.bf16.mxu0 %v1324
        %1620 = vmatpush1.bf16.msra.mxu0 %v1323
        %1621 = vmatprep.subr.bf16.mxu0 %v1328
        %1622 = vmatpush1.bf16.msra.mxu0 %v1327
        %1623 = vmatprep.subr.bf16.mxu0 %v1332
        %1624 = vmatpush1.bf16.msra.mxu0 %v1331
        %1625 = vmatprep.subr.bf16.mxu0 %v1336
        %1626 = vmatpush1.bf16.msra.mxu0 %v1335
        %1627 = vmatprep.mubr.bf16.mxu0 %v786
        %1628 = vmatmul.mubr.bf16.gmra.mrb[0].mxu0 %v785
        %v1629 = vpop.f32.mrb[0].mxu0
        %v1630 = vadd.f32 0.0, %v1629
        %v1631 = vpop.f32.mrb[0].mxu0
        %v1632 = vadd.f32 0.0, %v1631
        %v1633 = vpop.f32.mrb[0].mxu0
        %v1634 = vpop.f32.mrb[0].mxu0
        %1635 = vdwg.mxu0
        %1636 = vmatprep.subr.bf16.mxu0 %v1340
        %1637 = vmatpush1.bf16.msra.mxu0 %v1339
        %1638 = vmatprep.subr.bf16.mxu0 %v1344
        %1639 = vmatpush1.bf16.msra.mxu0 %v1343
        %1640 = vmatprep.subr.bf16.mxu0 %v1348
        %1641 = vmatpush1.bf16.msra.mxu0 %v1347
        %1642 = vmatprep.subr.bf16.mxu0 %v1352
        %1643 = vmatpush1.bf16.msra.mxu0 %v1351
        %1644 = vmatprep.subr.bf16.mxu0 %v1356
        %1645 = vmatpush1.bf16.msra.mxu0 %v1355
        %1646 = vmatprep.subr.bf16.mxu0 %v1360
        %1647 = vmatpush1.bf16.msra.mxu0 %v1359
        %1648 = vmatprep.subr.bf16.mxu0 %v1364
        %1649 = vmatpush1.bf16.msra.mxu0 %v1363
        %1650 = vmatprep.subr.bf16.mxu0 %v1368
        %1651 = vmatpush1.bf16.msra.mxu0 %v1367
        %1652 = vmatprep.subr.bf16.mxu0 %v1372
        %1653 = vmatpush1.bf16.msra.mxu0 %v1371
        %1654 = vmatprep.subr.bf16.mxu0 %v1376
        %1655 = vmatpush1.bf16.msra.mxu0 %v1375
        %1656 = vmatprep.subr.bf16.mxu0 %v1380
        %1657 = vmatpush1.bf16.msra.mxu0 %v1379
        %1658 = vmatprep.subr.bf16.mxu0 %v1384
        %1659 = vmatpush1.bf16.msra.mxu0 %v1383
        %1660 = vmatprep.subr.bf16.mxu0 %v1388
        %1661 = vmatpush1.bf16.msra.mxu0 %v1387
        %1662 = vmatprep.subr.bf16.mxu0 %v1392
        %1663 = vmatpush1.bf16.msra.mxu0 %v1391
        %1664 = vmatprep.subr.bf16.mxu0 %v1396
        %1665 = vmatpush1.bf16.msra.mxu0 %v1395
        %1666 = vmatprep.subr.bf16.mxu0 %v1400
        %1667 = vmatpush1.bf16.msra.mxu0 %v1399
        %1668 = vmatprep.mubr.bf16.mxu0 %v788
        %1669 = vmatmul.mubr.bf16.gmra.mrb[0].mxu0 %v787
        %v1670 = vpop.f32.mrb[0].mxu0
        %v1671 = vadd.f32 %v1630, %v1670
        %v1672 = vpop.f32.mrb[0].mxu0
        %v1673 = vadd.f32 %v1632, %v1672
        %v1674 = vpop.f32.mrb[0].mxu0
        %v1675 = vpop.f32.mrb[0].mxu0
        %1676 = vdwg.mxu0
        %1677 = vmatprep.subr.bf16.mxu0 %v1404
        %1678 = vmatpush1.bf16.msra.mxu0 %v1403
        %1679 = vmatprep.subr.bf16.mxu0 %v1408
        %1680 = vmatpush1.bf16.msra.mxu0 %v1407
        %1681 = vmatprep.subr.bf16.mxu0 %v1412
        %1682 = vmatpush1.bf16.msra.mxu0 %v1411
        %1683 = vmatprep.subr.bf16.mxu0 %v1416
        %1684 = vmatpush1.bf16.msra.mxu0 %v1415
        %1685 = vmatprep.subr.bf16.mxu0 %v1420
        %1686 = vmatpush1.bf16.msra.mxu0 %v1419
        %1687 = vmatprep.subr.bf16.mxu0 %v1424
        %1688 = vmatpush1.bf16.msra.mxu0 %v1423
        %1689 = vmatprep.subr.bf16.mxu0 %v1428
        %1690 = vmatpush1.bf16.msra.mxu0 %v1427
        %1691 = vmatprep.subr.bf16.mxu0 %v1432
        %1692 = vmatpush1.bf16.msra.mxu0 %v1431
        %1693 = vmatprep.subr.bf16.mxu0 0
        %1694 = vmatpush1.bf16.msra.mxu0 0
        %1695 = vmatprep.subr.bf16.mxu0 0
        %1696 = vmatpush1.bf16.msra.mxu0 0
        %1697 = vmatprep.subr.bf16.mxu0 0
        %1698 = vmatpush1.bf16.msra.mxu0 0
        %1699 = vmatprep.subr.bf16.mxu0 0
        %1700 = vmatpush1.bf16.msra.mxu0 0
        %1701 = vmatprep.subr.bf16.mxu0 0
        %1702 = vmatpush1.bf16.msra.mxu0 0
        %1703 = vmatprep.subr.bf16.mxu0 0
        %1704 = vmatpush1.bf16.msra.mxu0 0
        %1705 = vmatprep.subr.bf16.mxu0 0
        %1706 = vmatpush1.bf16.msra.mxu0 0
        %1707 = vmatprep.subr.bf16.mxu0 0
        %1708 = vmatpush1.bf16.msra.mxu0 0
        %1709 = vmatprep.mubr.bf16.mxu0 0
        %1710 = vmatmul.mubr.bf16.gmra.mrb[0].mxu0 %v789
        %v1711 = vpop.f32.mrb[0].mxu0
        %v1712 = vadd.f32 %v1671, %v1711
        %v1713 = vpop.f32.mrb[0].mxu0
        %v1714 = vadd.f32 %v1673, %v1713
        %v1715 = vpop.f32.mrb[0].mxu0
        %v1716 = vpop.f32.mrb[0].mxu0
        %1717 = vdwg.mxu0
        %1718 = vmatprep.subr.bf16.mxu0 %v1278
        %1719 = vmatpush1.bf16.msra.mxu0 %v1277
        %1720 = vmatprep.subr.bf16.mxu0 %v1282
        %1721 = vmatpush1.bf16.msra.mxu0 %v1281
        %1722 = vmatprep.subr.bf16.mxu0 %v1286
        %1723 = vmatpush1.bf16.msra.mxu0 %v1285
        %1724 = vmatprep.subr.bf16.mxu0 %v1290
        %1725 = vmatpush1.bf16.msra.mxu0 %v1289
        %1726 = vmatprep.subr.bf16.mxu0 %v1294
        %1727 = vmatpush1.bf16.msra.mxu0 %v1293
        %1728 = vmatprep.subr.bf16.mxu0 %v1298
        %1729 = vmatpush1.bf16.msra.mxu0 %v1297
        %1730 = vmatprep.subr.bf16.mxu0 %v1302
        %1731 = vmatpush1.bf16.msra.mxu0 %v1301
        %1732 = vmatprep.subr.bf16.mxu0 %v1306
        %1733 = vmatpush1.bf16.msra.mxu0 %v1305
        %1734 = vmatprep.subr.bf16.mxu0 %v1310
        %1735 = vmatpush1.bf16.msra.mxu0 %v1309
        %1736 = vmatprep.subr.bf16.mxu0 %v1314
        %1737 = vmatpush1.bf16.msra.mxu0 %v1313
        %1738 = vmatprep.subr.bf16.mxu0 %v1318
        %1739 = vmatpush1.bf16.msra.mxu0 %v1317
        %1740 = vmatprep.subr.bf16.mxu0 %v1322
        %1741 = vmatpush1.bf16.msra.mxu0 %v1321
        %1742 = vmatprep.subr.bf16.mxu0 %v1326
        %1743 = vmatpush1.bf16.msra.mxu0 %v1325
        %1744 = vmatprep.subr.bf16.mxu0 %v1330
        %1745 = vmatpush1.bf16.msra.mxu0 %v1329
        %1746 = vmatprep.subr.bf16.mxu0 %v1334
        %1747 = vmatpush1.bf16.msra.mxu0 %v1333
        %1748 = vmatprep.subr.bf16.mxu0 %v1338
        %1749 = vmatpush1.bf16.msra.mxu0 %v1337
        %1750 = vmatprep.mubr.bf16.mxu0 %v786
        %1751 = vmatmul.mubr.bf16.gmra.mrb[0].mxu0 %v785
        %v1752 = vpop.f32.mrb[0].mxu0
        %v1753 = vadd.f32 0.0, %v1752
        %v1754 = vpop.f32.mrb[0].mxu0
        %v1755 = vadd.f32 0.0, %v1754
        %v1756 = vpop.f32.mrb[0].mxu0
        %v1757 = vpop.f32.mrb[0].mxu0
        %1758 = vdwg.mxu0
        %1759 = vmatprep.subr.bf16.mxu0 %v1342
        %1760 = vmatpush1.bf16.msra.mxu0 %v1341
        %1761 = vmatprep.subr.bf16.mxu0 %v1346
        %1762 = vmatpush1.bf16.msra.mxu0 %v1345
        %1763 = vmatprep.subr.bf16.mxu0 %v1350
        %1764 = vmatpush1.bf16.msra.mxu0 %v1349
        %1765 = vmatprep.subr.bf16.mxu0 %v1354
        %1766 = vmatpush1.bf16.msra.mxu0 %v1353
        %1767 = vmatprep.subr.bf16.mxu0 %v1358
        %1768 = vmatpush1.bf16.msra.mxu0 %v1357
        %1769 = vmatprep.subr.bf16.mxu0 %v1362
        %1770 = vmatpush1.bf16.msra.mxu0 %v1361
        %1771 = vmatprep.subr.bf16.mxu0 %v1366
        %1772 = vmatpush1.bf16.msra.mxu0 %v1365
        %1773 = vmatprep.subr.bf16.mxu0 %v1370
        %1774 = vmatpush1.bf16.msra.mxu0 %v1369
        %1775 = vmatprep.subr.bf16.mxu0 %v1374
        %1776 = vmatpush1.bf16.msra.mxu0 %v1373
        %1777 = vmatprep.subr.bf16.mxu0 %v1378
        %1778 = vmatpush1.bf16.msra.mxu0 %v1377
        %1779 = vmatprep.subr.bf16.mxu0 %v1382
        %1780 = vmatpush1.bf16.msra.mxu0 %v1381
        %1781 = vmatprep.subr.bf16.mxu0 %v1386
        %1782 = vmatpush1.bf16.msra.mxu0 %v1385
        %1783 = vmatprep.subr.bf16.mxu0 %v1390
        %1784 = vmatpush1.bf16.msra.mxu0 %v1389
        %1785 = vmatprep.subr.bf16.mxu0 %v1394
        %1786 = vmatpush1.bf16.msra.mxu0 %v1393
        %1787 = vmatprep.subr.bf16.mxu0 %v1398
        %1788 = vmatpush1.bf16.msra.mxu0 %v1397
        %1789 = vmatprep.subr.bf16.mxu0 %v1402
        %1790 = vmatpush1.bf16.msra.mxu0 %v1401
        %1791 = vmatprep.mubr.bf16.mxu0 %v788
        %1792 = vmatmul.mubr.bf16.gmra.mrb[0].mxu0 %v787
        %v1793 = vpop.f32.mrb[0].mxu0
        %v1794 = vadd.f32 %v1753, %v1793
        %v1795 = vpop.f32.mrb[0].mxu0
        %v1796 = vadd.f32 %v1755, %v1795
        %v1797 = vpop.f32.mrb[0].mxu0
        %v1798 = vpop.f32.mrb[0].mxu0
        %1799 = vdwg.mxu0
        %1800 = vmatprep.subr.bf16.mxu0 %v1406
        %1801 = vmatpush1.bf16.msra.mxu0 %v1405
        %1802 = vmatprep.subr.bf16.mxu0 %v1410
        %1803 = vmatpush1.bf16.msra.mxu0 %v1409
        %1804 = vmatprep.subr.bf16.mxu0 %v1414
        %1805 = vmatpush1.bf16.msra.mxu0 %v1413
        %1806 = vmatprep.subr.bf16.mxu0 %v1418
        %1807 = vmatpush1.bf16.msra.mxu0 %v1417
        %1808 = vmatprep.subr.bf16.mxu0 %v1422
        %1809 = vmatpush1.bf16.msra.mxu0 %v1421
        %1810 = vmatprep.subr.bf16.mxu0 %v1426
        %1811 = vmatpush1.bf16.msra.mxu0 %v1425
        %1812 = vmatprep.subr.bf16.mxu0 %v1430
        %1813 = vmatpush1.bf16.msra.mxu0 %v1429
        %1814 = vmatprep.subr.bf16.mxu0 %v1434
        %1815 = vmatpush1.bf16.msra.mxu0 %v1433
        %1816 = vmatprep.subr.bf16.mxu0 0
        %1817 = vmatpush1.bf16.msra.mxu0 0
        %1818 = vmatprep.subr.bf16.mxu0 0
        %1819 = vmatpush1.bf16.msra.mxu0 0
        %1820 = vmatprep.subr.bf16.mxu0 0
        %1821 = vmatpush1.bf16.msra.mxu0 0
        %1822 = vmatprep.subr.bf16.mxu0 0
        %1823 = vmatpush1.bf16.msra.mxu0 0
        %1824 = vmatprep.subr.bf16.mxu0 0
        %1825 = vmatpush1.bf16.msra.mxu0 0
        %1826 = vmatprep.subr.bf16.mxu0 0
        %1827 = vmatpush1.bf16.msra.mxu0 0
        %1828 = vmatprep.subr.bf16.mxu0 0
        %1829 = vmatpush1.bf16.msra.mxu0 0
        %1830 = vmatprep.subr.bf16.mxu0 0
        %1831 = vmatpush1.bf16.msra.mxu0 0
        %1832 = vmatprep.mubr.bf16.mxu0 0
        %1833 = vmatmul.mubr.bf16.gmra.mrb[0].mxu0 %v789
        %v1834 = vpop.f32.mrb[0].mxu0
        %v1835 = vadd.f32 %v1794, %v1834
        %v1836 = vpop.f32.mrb[0].mxu0
        %v1837 = vadd.f32 %v1796, %v1836
        %v1838 = vpop.f32.mrb[0].mxu0
        %v1839 = vpop.f32.mrb[0].mxu0
        %1840 = vdwg.mxu0
        %v1841 = vadd.f32 %v610, %v1712
        %v1842 = vadd.f32 %v611, %v1714
        %v1843 = vadd.f32 %v612, %v1835
        %v1844 = vadd.f32 %v613, %v1837
        %1845 = vst [vmem:[#allocation2] sm:$0xff] %v1841
        %1846 = vst [vmem:[#allocation2 + $0x8] sm:$0xff] %v1842
        %1847 = vst [vmem:[#allocation2 + $0x10] sm:$0xff] %v1843
        %1848 = vst [vmem:[#allocation2 + $0x18] sm:$0xff] %v1844
        %p1849 = scmp.eq.s32.totalorder %s21, 4
        // Predicated region
        $region60: #{convnetvis_forward.6} parent=50 // pred_check
          %p1850 = pneg %p1849
        $region61: #{convnetvis_forward.6} parent=50 // pred_check_branch
          %1852 = sbr.rel (%p1850) target = $region63
        $region62: #{convnetvis_forward.6} parent=50 // pred_region
          %v1853 = vld [vmem:[#allocation2] sm:$0xff]
          %v1854 = vld [vmem:[#allocation2 + $0x8] sm:$0xff]
          %v1855 = vld [vmem:[#allocation2 + $0x10] sm:$0xff]
          %v1856 = vld [vmem:[#allocation2 + $0x18] sm:$0xff]
          %v1857 = vld [vmem:[%s589] sm:$0xf]
          %v1859 = vlaneseq
          %v1860 = vshrl.u32 %v1859, 7
          %v1861 = vsub.s32 0, %v1860
          %v1862 = vrot.slane %v1857, %v1861
          %v1863 = vlaneseq
          %v1864 = vshrl.u32 %v1863, 7
          %v1865 = vsub.s32 1, %v1864
          %v1866 = vrot.slane %v1857, %v1865
          %v1867 = vlaneseq
          %v1868 = vshrl.u32 %v1867, 7
          %v1869 = vsub.s32 2, %v1868
          %v1870 = vrot.slane %v1857, %v1869
          %v1871 = vlaneseq
          %v1872 = vshrl.u32 %v1871, 7
          %v1873 = vsub.s32 3, %v1872
          %v1874 = vrot.slane %v1857, %v1873
          %v1879 = vadd.f32 %v1853, %v1862
          %v1880 = vadd.f32 %v1854, %v1866
          %v1881 = vadd.f32 %v1855, %v1870
          %v1882 = vadd.f32 %v1856, %v1874
          %v1883 = vmax.f32 %v1879, 0.0
          %v1884 = vmax.f32 %v1880, 0.0
          %v1885 = vmax.f32 %v1881, 0.0
          %v1886 = vmax.f32 %v1882, 0.0
          %1887 = vst [vmem:[%s599] sm:$0xff] %v1883
          %1888 = vst [vmem:[%s599 + $0x8] sm:$0xff] %v1884
          %1889 = vst [vmem:[%s599 + $0x10] sm:$0xff] %v1885
          %1890 = vst [vmem:[%s599 + $0x18] sm:$0xff] %v1886
        $region63: #{convnetvis_forward.6} parent=50 // pred_fallthru
          _
        %s1891 = smul.u32 4, %s20
        %p1892 = scmp.lt.s32.totalorder %s19, 0
        %s1893 = scalar_select %p1892, %s19, 0
        %p1894 = scmp.lt.s32.totalorder %s1891, 7
        %s1895 = scalar_select %p1894, %s1891, 7
        %s1896 = smul.addr %s1893, 8
        %s1897 = sadd.s32 %s1895, %s1896
        %s1898 = smul.addr %s1897, 8
        %s1899 = scalar_lea.vmem %s3, %s1898
        // Predicated region
        $region64: #{convnetvis_forward.6} parent=50 // pred_check
          %p1900 = pneg %p135
        $region65: #{convnetvis_forward.6} parent=50 // pred_check_branch
          %1902 = sbr.rel (%p1900) target = $region67
        $region66: #{convnetvis_forward.6} parent=50 // pred_region
          %s1903 = smul.u32 4, %s20
        $region67: #{convnetvis_forward.6} parent=50 // pred_fallthru
          _
      $region51: #{convnetvis_forward.6} parent=5 // pred_fallthru
        _
      %p1904 = scmp.le.s32.totalorder 2, %s9
      // Predicated region
      $region68: #{convnetvis_forward.6} parent=5 // pred_check
        %p1905 = pneg %p1904
      $region69: #{convnetvis_forward.6} parent=5 // pred_check_branch
        %1907 = sbr.rel (%p1905) target = $region71
      $region70: #{convnetvis_forward.6} parent=5 // pred_region
        %s1908 = ssub.s32 %s9, 2
        // Predicated region
        $region72: #{convnetvis_forward.6} parent=70 // pred_check
          %p1909 = pneg %p141
        $region73: #{convnetvis_forward.6} parent=70 // pred_check_branch
          %1911 = sbr.rel (%p1909) target = $region75
        $region74: #{convnetvis_forward.6} parent=70 // pred_region
          %s1912 = smul.u32 4, %s23
          %p1913 = scmp.lt.s32.totalorder %s22, 0
          %s1914 = scalar_select %p1913, %s22, 0
          %p1915 = scmp.lt.s32.totalorder %s1912, 7
          %s1916 = scalar_select %p1915, %s1912, 7
          %s1917 = smul.addr %s1914, 8
          %s1918 = sadd.s32 %s1916, %s1917
          %s1919 = smul.addr %s1918, 8
          %s1920 = scalar_lea.vmem %s3, %s1919
        $region75: #{convnetvis_forward.6} parent=70 // pred_fallthru
          _
      $region71: #{convnetvis_forward.6} parent=5 // pred_fallthru
        _
    $region6: #{convnetvis_forward.6} parent=1 // loop_footer
      %s13 = sadd.s32 1, %s9
    $region7: #{convnetvis_forward.6} parent=1 // loop_footer_branch
      %8 = sbr.rel target = $region3
    $region8: #{convnetvis_forward.6} parent=1 // loop_exit
      _

// kernel: convnetvis_forward.5
$region0: #{convnetvis_forward.5}
  #allocation0 [shape = 'u32[]', space=smem, size = 0x4, offset = 0x4, fixed_abs, tag = 'smem constant byte address 0x4 - core index']
  #allocation1 [shape = 'u32[144,128]{1,0:T(1,128)}', space=vmem, size = 0x12000, scoped, tag = 'internal scratch']
  #allocation2 [shape = 'f32[4,56,128]{2,1,0:T(8,128)}', space=vmem, size = 0x1c000, scoped, tag = 'scratch operand']
  %s0 = inlined_call_operand.vmem [shape: bf16[4,56,2048], index: 0, kind: input, shape index: {}]
  %s1 = inlined_call_operand.vmem [shape: bf16[2048,128], index: 1, kind: input, shape index: {}]
  %s2 = inlined_call_operand.vmem [shape: f32[1,128], index: 2, kind: input, shape index: {}]
  %s3 = inlined_call_operand.vmem [shape: bf16[56,128], index: 3, kind: output, shape index: {}]
  %s4 = sld [smem:[#allocation0]]
  $region76: #{convnetvis_forward.5} parent=0
    _
  %s6 = ssub.s32 1, %s4
  %s7 = scalar_select 0, %s6, %s4
  $region1: #{convnetvis_forward.5} parent=0
    #allocation3 [shape = 'u8[917504]{0}', space=vmem, size = 0xe0000, scoped, tag = 'input window, operand 0']
    loop: start=0, step=1, limit=4
    $region2: #{convnetvis_forward.5} parent=1 // loop_pre_header
      _
    $region3: #{convnetvis_forward.5} parent=1 // loop_header
      %s9 = sphi 0, %s13
      %p10 = scmp.ge.s32.totalorder %s9, 4
      %s16 = sphi 0, %s35
      %s17 = sphi 0, %s31
      %s18 = sphi 0, %s27
      %s19 = sphi 0, %s16
      %s20 = sphi 0, %s17
      %s21 = sphi 0, %s18
      %s22 = sphi 0, %s19
      %s23 = sphi 0, %s20
      %s24 = sphi 0, %s21
      %s40 = sphi 0, %s42
      %s43 = sphi 0, %s40
      %s44 = sphi 0, %s43
      %s60 = sphi 0, %s44
      %s68 = sphi 0, %s70
      %s71 = sphi 0, %s68
      %s72 = sphi 0, %s71
      %s88 = sphi 0, %s72
      %s94 = sphi 0, %s96
      %s97 = sphi 0, %s94
      %s98 = sphi 0, %s97
      %s114 = sphi 0, %s98
      %s122 = sphi 0, %s124
      %s125 = sphi 0, %s122
      %s126 = sphi 0, %s125
      %s142 = sphi 0, %s126
    $region4: #{convnetvis_forward.5} parent=1 // loop_header_branch
      %12 = sbr.rel (%p10) target = $region8
    $region5: #{convnetvis_forward.5} parent=1 // loop_body
      %s14 = ssub.s32 %s9, 1
      %s15 = ssub.s32 %s9, 2
      %s25 = sadd.s32 1, %s18
      %p26 = scmp.ge.s32.totalorder %s25, 2
      %s27 = scalar_select %p26, 0, %s25
      %s28 = sadd.s32 1, %s17
      %s29 = scalar_select %p26, %s28, %s17
      %p30 = scmp.ge.s32.totalorder %s29, 1
      %s31 = scalar_select %p30, 0, %s29
      %s32 = sadd.s32 1, %s16
      %s33 = scalar_select %p30, %s32, %s16
      %p34 = scmp.ge.s32.totalorder %s33, 1
      %s35 = scalar_select %p34, 0, %s33
      %s36 = ssub.s32 %s16, %s35
      %s37 = ssub.s32 %s18, %s27
      %s38 = sor.u32 %s36, %s37
      %p39 = scmp.eq.s32.totalorder %s38, 0
      %s41 = sadd.s32 %s40, 1
      %s42 = scalar_select %p39, %s40, %s41
      %p45 = pneg %p39
      %p46 = scmp.eq.s32.totalorder %s9, 1
      %p47 = por %p45, %p46
      %p48 = scmp.ne.s32.totalorder %s40, %s43
      %p49 = scmp.eq.s32.totalorder %s9, 0
      %p50 = por %p48, %p49
      %p51 = scmp.ne.s32.totalorder %s40, %s43
      %p52 = scmp.eq.s32.totalorder %s14, 1
      %p53 = por %p51, %p52
      %p54 = scmp.ne.s32.totalorder %s43, %s44
      %p55 = scmp.eq.s32.totalorder %s14, 0
      %p56 = por %p54, %p55
      %p57 = scmp.ne.s32.totalorder %s43, %s44
      %p58 = scmp.eq.s32.totalorder %s15, 1
      %p59 = por %p57, %p58
      %p61 = scmp.ne.s32.totalorder %s44, %s60
      %p62 = scmp.eq.s32.totalorder %s15, 0
      %p63 = por %p61, %p62
      %s64 = ssub.s32 %s18, %s27
      %s65 = ssub.s32 %s17, %s31
      %s66 = sor.u32 %s64, %s65
      %p67 = scmp.eq.s32.totalorder %s66, 0
      %s69 = sadd.s32 %s68, 1
      %s70 = scalar_select %p67, %s68, %s69
      %p73 = pneg %p67
      %p74 = scmp.eq.s32.totalorder %s9, 1
      %p75 = por %p73, %p74
      %p76 = scmp.ne.s32.totalorder %s68, %s71
      %p77 = scmp.eq.s32.totalorder %s9, 0
      %p78 = por %p76, %p77
      %p79 = scmp.ne.s32.totalorder %s68, %s71
      %p80 = scmp.eq.s32.totalorder %s14, 1
      %p81 = por %p79, %p80
      %p82 = scmp.ne.s32.totalorder %s71, %s72
      %p83 = scmp.eq.s32.totalorder %s14, 0
      %p84 = por %p82, %p83
      %p85 = scmp.ne.s32.totalorder %s71, %s72
      %p86 = scmp.eq.s32.totalorder %s15, 1
      %p87 = por %p85, %p86
      %p89 = scmp.ne.s32.totalorder %s72, %s88
      %p90 = scmp.eq.s32.totalorder %s15, 0
      %p91 = por %p89, %p90
      %s92 = ssub.s32 %s17, %s31
      %p93 = scmp.eq.s32.totalorder %s92, 0
      %s95 = sadd.s32 %s94, 1
      %s96 = scalar_select %p93, %s94, %s95
      %p99 = pneg %p93
      %p100 = scmp.eq.s32.totalorder %s9, 1
      %p101 = por %p99, %p100
      %p102 = scmp.ne.s32.totalorder %s94, %s97
      %p103 = scmp.eq.s32.totalorder %s9, 0
      %p104 = por %p102, %p103
      %p105 = scmp.ne.s32.totalorder %s94, %s97
      %p106 = scmp.eq.s32.totalorder %s14, 1
      %p107 = por %p105, %p106
      %p108 = scmp.ne.s32.totalorder %s97, %s98
      %p109 = scmp.eq.s32.totalorder %s14, 0
      %p110 = por %p108, %p109
      %p111 = scmp.ne.s32.totalorder %s97, %s98
      %p112 = scmp.eq.s32.totalorder %s15, 1
      %p113 = por %p111, %p112
      %p115 = scmp.ne.s32.totalorder %s98, %s114
      %p116 = scmp.eq.s32.totalorder %s15, 0
      %p117 = por %p115, %p116
      %s118 = ssub.s32 %s16, %s35
      %s119 = ssub.s32 %s17, %s31
      %s120 = sor.u32 %s118, %s119
      %p121 = scmp.eq.s32.totalorder %s120, 0
      %s123 = sadd.s32 %s122, 1
      %s124 = scalar_select %p121, %s122, %s123
      %p127 = pneg %p121
      %p128 = scmp.eq.s32.totalorder %s9, 1
      %p129 = por %p127, %p128
      %p130 = scmp.ne.s32.totalorder %s122, %s125
      %p131 = scmp.eq.s32.totalorder %s9, 0
      %p132 = por %p130, %p131
      %p133 = scmp.ne.s32.totalorder %s122, %s125
      %p134 = scmp.eq.s32.totalorder %s14, 1
      %p135 = por %p133, %p134
      %p136 = scmp.ne.s32.totalorder %s125, %s126
      %p137 = scmp.eq.s32.totalorder %s14, 0
      %p138 = por %p136, %p137
      %p139 = scmp.ne.s32.totalorder %s125, %s126
      %p140 = scmp.eq.s32.totalorder %s15, 1
      %p141 = por %p139, %p140
      %p143 = scmp.ne.s32.totalorder %s126, %s142
      %p144 = scmp.eq.s32.totalorder %s15, 0
      %p145 = por %p143, %p144
      %p146 = scmp.le.s32.totalorder 1, %s9
      %p147 = scmp.lt.s32.totalorder %s9, 3
      %p148 = pnand %p146, %p147
      %p149 = pneg %p148
      // Predicated region
      $region9: #{convnetvis_forward.5} parent=5 // pred_check
        _
      $region10: #{convnetvis_forward.5} parent=5 // pred_check_branch
        %151 = sbr.rel (%p148) target = $region12
      $region11: #{convnetvis_forward.5} parent=5 // pred_region
        %s152 = ssub.s32 %s9, 1
        // Predicated region
        $region13: #{convnetvis_forward.5} parent=11 // pred_check
          %p153 = pneg %p110
        $region14: #{convnetvis_forward.5} parent=11 // pred_check_branch
          %155 = sbr.rel (%p153) target = $region16
        $region15: #{convnetvis_forward.5} parent=11 // pred_region
          %p156 = scmp.lt.s32.totalorder %s20, 0
          %s157 = scalar_select %p156, %s20, 0
          %s158 = scalar_lea.vmem %s2, %s157
        $region16: #{convnetvis_forward.5} parent=11 // pred_fallthru
          _
      $region12: #{convnetvis_forward.5} parent=5 // pred_fallthru
        _
      %p159 = scmp.lt.s32.totalorder %s9, 2
      // Predicated region
      $region17: #{convnetvis_forward.5} parent=5 // pred_check
        %p160 = pneg %p159
      $region18: #{convnetvis_forward.5} parent=5 // pred_check_branch
        %162 = sbr.rel (%p160) target = $region20
      $region19: #{convnetvis_forward.5} parent=5 // pred_region
        // Predicated region
        $region21: #{convnetvis_forward.5} parent=19 // pred_check
          %p163 = pneg %p50
        $region22: #{convnetvis_forward.5} parent=19 // pred_check_branch
          %165 = sbr.rel (%p163) target = $region24
        $region23: #{convnetvis_forward.5} parent=19 // pred_region
          %s166 = sand.u32 %s40, 1
          %s167 = sand.u32 %s40, 1
          %s168 = smul.addr %s167, 896
          %s169 = scalar_lea.vmem [#allocation3], %s168
          %s170 = smul.u32 7, %s16
          %s171 = smul.u32 8, %s18
          %s172 = smul.addr %s170, 16
          %s173 = sadd.s32 %s171, %s172
          %s174 = smul.addr %s173, 4
          %s175 = scalar_lea.vmem %s0, %s174
          // Predicated region
          $region25: #{convnetvis_forward.5} parent=23 // pred_check
            _
          $region26: #{convnetvis_forward.5} parent=23 // pred_check_branch
            %177 = sbr.rel (0) target = $region28
          $region27: #{convnetvis_forward.5} parent=23 // pred_region
            // Predicated region
            $region29: #{convnetvis_forward.5} parent=27 // pred_check
              _
            $region30: #{convnetvis_forward.5} parent=27 // pred_check_branch
              %179 = sbr.rel (0) target = $region32
            $region31: #{convnetvis_forward.5} parent=27 // pred_region
              loop: start=0, step=1, limit=1
              $region33: #{convnetvis_forward.5} parent=31 // loop_pre_header
                _
              $region34: #{convnetvis_forward.5} parent=31 // loop_header
                %s181 = sphi 0, %s185
                %p182 = scmp.ge.s32.totalorder %s181, 1
                %s186 = sphi %s175, %s175
                %s187 = sphi %s169, %s169
              $region35: #{convnetvis_forward.5} parent=31 // loop_header_branch
                %184 = sbr.rel (%p182) target = $region39
              $region36: #{convnetvis_forward.5} parent=31 // loop_body
                %v188 = vld [vmem:[%s186] sm:$0xff]
                %189 = vst [vmem:[%s187] sm:$0xff] %v188
                %v190 = vld [vmem:[%s186 + $0x8] sm:$0xff]
                %191 = vst [vmem:[%s187 + $0x8] sm:$0xff] %v190
                %v192 = vld [vmem:[%s186 + $0x10] sm:$0xff]
                %193 = vst [vmem:[%s187 + $0x10] sm:$0xff] %v192
                %v194 = vld [vmem:[%s186 + $0x18] sm:$0xff]
                %195 = vst [vmem:[%s187 + $0x18] sm:$0xff] %v194
                %v196 = vld [vmem:[%s186 + $0x40] sm:$0xff]
                %197 = vst [vmem:[%s187 + $0x20] sm:$0xff] %v196
                %v198 = vld [vmem:[%s186 + $0x48] sm:$0xff]
                %199 = vst [vmem:[%s187 + $0x28] sm:$0xff] %v198
                %v200 = vld [vmem:[%s186 + $0x50] sm:$0xff]
                %201 = vst [vmem:[%s187 + $0x30] sm:$0xff] %v200
                %v202 = vld [vmem:[%s186 + $0x58] sm:$0xff]
                %203 = vst [vmem:[%s187 + $0x38] sm:$0xff] %v202
                %v204 = vld [vmem:[%s186 + $0x80] sm:$0xff]
                %205 = vst [vmem:[%s187 + $0x40] sm:$0xff] %v204
                %v206 = vld [vmem:[%s186 + $0x88] sm:$0xff]
                %207 = vst [vmem:[%s187 + $0x48] sm:$0xff] %v206
                %v208 = vld [vmem:[%s186 + $0x90] sm:$0xff]
                %209 = vst [vmem:[%s187 + $0x50] sm:$0xff] %v208
                %v210 = vld [vmem:[%s186 + $0x98] sm:$0xff]
                %211 = vst [vmem:[%s187 + $0x58] sm:$0xff] %v210
                %v212 = vld [vmem:[%s186 + $0xc0] sm:$0xff]
                %213 = vst [vmem:[%s187 + $0x60] sm:$0xff] %v212
                %v214 = vld [vmem:[%s186 + $0xc8] sm:$0xff]
                %215 = vst [vmem:[%s187 + $0x68] sm:$0xff] %v214
                %v216 = vld [vmem:[%s186 + $0xd0] sm:$0xff]
                %217 = vst [vmem:[%s187 + $0x70] sm:$0xff] %v216
                %v218 = vld [vmem:[%s186 + $0xd8] sm:$0xff]
                %219 = vst [vmem:[%s187 + $0x78] sm:$0xff] %v218
                %v220 = vld [vmem:[%s186 + $0x100] sm:$0xff]
                %221 = vst [vmem:[%s187 + $0x80] sm:$0xff] %v220
                %v222 = vld [vmem:[%s186 + $0x108] sm:$0xff]
                %223 = vst [vmem:[%s187 + $0x88] sm:$0xff] %v222
                %v224 = vld [vmem:[%s186 + $0x110] sm:$0xff]
                %225 = vst [vmem:[%s187 + $0x90] sm:$0xff] %v224
                %v226 = vld [vmem:[%s186 + $0x118] sm:$0xff]
                %227 = vst [vmem:[%s187 + $0x98] sm:$0xff] %v226
                %v228 = vld [vmem:[%s186 + $0x140] sm:$0xff]
                %229 = vst [vmem:[%s187 + $0xa0] sm:$0xff] %v228
                %v230 = vld [vmem:[%s186 + $0x148] sm:$0xff]
                %231 = vst [vmem:[%s187 + $0xa8] sm:$0xff] %v230
                %v232 = vld [vmem:[%s186 + $0x150] sm:$0xff]
                %233 = vst [vmem:[%s187 + $0xb0] sm:$0xff] %v232
                %v234 = vld [vmem:[%s186 + $0x158] sm:$0xff]
                %235 = vst [vmem:[%s187 + $0xb8] sm:$0xff] %v234
                %v236 = vld [vmem:[%s186 + $0x180] sm:$0xff]
                %237 = vst [vmem:[%s187 + $0xc0] sm:$0xff] %v236
                %v238 = vld [vmem:[%s186 + $0x188] sm:$0xff]
                %239 = vst [vmem:[%s187 + $0xc8] sm:$0xff] %v238
                %v240 = vld [vmem:[%s186 + $0x190] sm:$0xff]
                %241 = vst [vmem:[%s187 + $0xd0] sm:$0xff] %v240
                %v242 = vld [vmem:[%s186 + $0x198] sm:$0xff]
                %243 = vst [vmem:[%s187 + $0xd8] sm:$0xff] %v242
                %v244 = vld [vmem:[%s186 + $0x1c0] sm:$0xff]
                %245 = vst [vmem:[%s187 + $0xe0] sm:$0xff] %v244
                %v246 = vld [vmem:[%s186 + $0x1c8] sm:$0xff]
                %247 = vst [vmem:[%s187 + $0xe8] sm:$0xff] %v246
                %v248 = vld [vmem:[%s186 + $0x1d0] sm:$0xff]
                %249 = vst [vmem:[%s187 + $0xf0] sm:$0xff] %v248
                %v250 = vld [vmem:[%s186 + $0x1d8] sm:$0xff]
                %251 = vst [vmem:[%s187 + $0xf8] sm:$0xff] %v250
                %v252 = vld [vmem:[%s186 + $0x200] sm:$0xff]
                %253 = vst [vmem:[%s187 + $0x100] sm:$0xff] %v252
                %v254 = vld [vmem:[%s186 + $0x208] sm:$0xff]
                %255 = vst [vmem:[%s187 + $0x108] sm:$0xff] %v254
                %v256 = vld [vmem:[%s186 + $0x210] sm:$0xff]
                %257 = vst [vmem:[%s187 + $0x110] sm:$0xff] %v256
                %v258 = vld [vmem:[%s186 + $0x218] sm:$0xff]
                %259 = vst [vmem:[%s187 + $0x118] sm:$0xff] %v258
                %v260 = vld [vmem:[%s186 + $0x240] sm:$0xff]
                %261 = vst [vmem:[%s187 + $0x120] sm:$0xff] %v260
                %v262 = vld [vmem:[%s186 + $0x248] sm:$0xff]
                %263 = vst [vmem:[%s187 + $0x128] sm:$0xff] %v262
                %v264 = vld [vmem:[%s186 + $0x250] sm:$0xff]
                %265 = vst [vmem:[%s187 + $0x130] sm:$0xff] %v264
                %v266 = vld [vmem:[%s186 + $0x258] sm:$0xff]
                %267 = vst [vmem:[%s187 + $0x138] sm:$0xff] %v266
                %v268 = vld [vmem:[%s186 + $0x280] sm:$0xff]
                %269 = vst [vmem:[%s187 + $0x140] sm:$0xff] %v268
                %v270 = vld [vmem:[%s186 + $0x288] sm:$0xff]
                %271 = vst [vmem:[%s187 + $0x148] sm:$0xff] %v270
                %v272 = vld [vmem:[%s186 + $0x290] sm:$0xff]
                %273 = vst [vmem:[%s187 + $0x150] sm:$0xff] %v272
                %v274 = vld [vmem:[%s186 + $0x298] sm:$0xff]
                %275 = vst [vmem:[%s187 + $0x158] sm:$0xff] %v274
                %v276 = vld [vmem:[%s186 + $0x2c0] sm:$0xff]
                %277 = vst [vmem:[%s187 + $0x160] sm:$0xff] %v276
                %v278 = vld [vmem:[%s186 + $0x2c8] sm:$0xff]
                %279 = vst [vmem:[%s187 + $0x168] sm:$0xff] %v278
                %v280 = vld [vmem:[%s186 + $0x2d0] sm:$0xff]
                %281 = vst [vmem:[%s187 + $0x170] sm:$0xff] %v280
                %v282 = vld [vmem:[%s186 + $0x2d8] sm:$0xff]
                %283 = vst [vmem:[%s187 + $0x178] sm:$0xff] %v282
                %v284 = vld [vmem:[%s186 + $0x300] sm:$0xff]
                %285 = vst [vmem:[%s187 + $0x180] sm:$0xff] %v284
                %v286 = vld [vmem:[%s186 + $0x308] sm:$0xff]
                %287 = vst [vmem:[%s187 + $0x188] sm:$0xff] %v286
                %v288 = vld [vmem:[%s186 + $0x310] sm:$0xff]
                %289 = vst [vmem:[%s187 + $0x190] sm:$0xff] %v288
                %v290 = vld [vmem:[%s186 + $0x318] sm:$0xff]
                %291 = vst [vmem:[%s187 + $0x198] sm:$0xff] %v290
                %v292 = vld [vmem:[%s186 + $0x340] sm:$0xff]
                %293 = vst [vmem:[%s187 + $0x1a0] sm:$0xff] %v292
                %v294 = vld [vmem:[%s186 + $0x348] sm:$0xff]
                %295 = vst [vmem:[%s187 + $0x1a8] sm:$0xff] %v294
                %v296 = vld [vmem:[%s186 + $0x350] sm:$0xff]
                %297 = vst [vmem:[%s187 + $0x1b0] sm:$0xff] %v296
                %v298 = vld [vmem:[%s186 + $0x358] sm:$0xff]
                %299 = vst [vmem:[%s187 + $0x1b8] sm:$0xff] %v298
                %v300 = vld [vmem:[%s186 + $0x380] sm:$0xff]
                %301 = vst [vmem:[%s187 + $0x1c0] sm:$0xff] %v300
                %v302 = vld [vmem:[%s186 + $0x388] sm:$0xff]
                %303 = vst [vmem:[%s187 + $0x1c8] sm:$0xff] %v302
                %v304 = vld [vmem:[%s186 + $0x390] sm:$0xff]
                %305 = vst [vmem:[%s187 + $0x1d0] sm:$0xff] %v304
                %v306 = vld [vmem:[%s186 + $0x398] sm:$0xff]
                %307 = vst [vmem:[%s187 + $0x1d8] sm:$0xff] %v306
                %v308 = vld [vmem:[%s186 + $0x3c0] sm:$0xff]
                %309 = vst [vmem:[%s187 + $0x1e0] sm:$0xff] %v308
                %v310 = vld [vmem:[%s186 + $0x3c8] sm:$0xff]
                %311 = vst [vmem:[%s187 + $0x1e8] sm:$0xff] %v310
                %v312 = vld [vmem:[%s186 + $0x3d0] sm:$0xff]
                %313 = vst [vmem:[%s187 + $0x1f0] sm:$0xff] %v312
                %v314 = vld [vmem:[%s186 + $0x3d8] sm:$0xff]
                %315 = vst [vmem:[%s187 + $0x1f8] sm:$0xff] %v314
                %v316 = vld [vmem:[%s186 + $0x400] sm:$0xff]
                %317 = vst [vmem:[%s187 + $0x200] sm:$0xff] %v316
                %v318 = vld [vmem:[%s186 + $0x408] sm:$0xff]
                %319 = vst [vmem:[%s187 + $0x208] sm:$0xff] %v318
                %v320 = vld [vmem:[%s186 + $0x410] sm:$0xff]
                %321 = vst [vmem:[%s187 + $0x210] sm:$0xff] %v320
                %v322 = vld [vmem:[%s186 + $0x418] sm:$0xff]
                %323 = vst [vmem:[%s187 + $0x218] sm:$0xff] %v322
                %v324 = vld [vmem:[%s186 + $0x440] sm:$0xff]
                %325 = vst [vmem:[%s187 + $0x220] sm:$0xff] %v324
                %v326 = vld [vmem:[%s186 + $0x448] sm:$0xff]
                %327 = vst [vmem:[%s187 + $0x228] sm:$0xff] %v326
                %v328 = vld [vmem:[%s186 + $0x450] sm:$0xff]
                %329 = vst [vmem:[%s187 + $0x230] sm:$0xff] %v328
                %v330 = vld [vmem:[%s186 + $0x458] sm:$0xff]
                %331 = vst [vmem:[%s187 + $0x238] sm:$0xff] %v330
                %v332 = vld [vmem:[%s186 + $0x480] sm:$0xff]
                %333 = vst [vmem:[%s187 + $0x240] sm:$0xff] %v332
                %v334 = vld [vmem:[%s186 + $0x488] sm:$0xff]
                %335 = vst [vmem:[%s187 + $0x248] sm:$0xff] %v334
                %v336 = vld [vmem:[%s186 + $0x490] sm:$0xff]
                %337 = vst [vmem:[%s187 + $0x250] sm:$0xff] %v336
                %v338 = vld [vmem:[%s186 + $0x498] sm:$0xff]
                %339 = vst [vmem:[%s187 + $0x258] sm:$0xff] %v338
                %v340 = vld [vmem:[%s186 + $0x4c0] sm:$0xff]
                %341 = vst [vmem:[%s187 + $0x260] sm:$0xff] %v340
                %v342 = vld [vmem:[%s186 + $0x4c8] sm:$0xff]
                %343 = vst [vmem:[%s187 + $0x268] sm:$0xff] %v342
                %v344 = vld [vmem:[%s186 + $0x4d0] sm:$0xff]
                %345 = vst [vmem:[%s187 + $0x270] sm:$0xff] %v344
                %v346 = vld [vmem:[%s186 + $0x4d8] sm:$0xff]
                %347 = vst [vmem:[%s187 + $0x278] sm:$0xff] %v346
                %v348 = vld [vmem:[%s186 + $0x500] sm:$0xff]
                %349 = vst [vmem:[%s187 + $0x280] sm:$0xff] %v348
                %v350 = vld [vmem:[%s186 + $0x508] sm:$0xff]
                %351 = vst [vmem:[%s187 + $0x288] sm:$0xff] %v350
                %v352 = vld [vmem:[%s186 + $0x510] sm:$0xff]
                %353 = vst [vmem:[%s187 + $0x290] sm:$0xff] %v352
                %v354 = vld [vmem:[%s186 + $0x518] sm:$0xff]
                %355 = vst [vmem:[%s187 + $0x298] sm:$0xff] %v354
                %v356 = vld [vmem:[%s186 + $0x540] sm:$0xff]
                %357 = vst [vmem:[%s187 + $0x2a0] sm:$0xff] %v356
                %v358 = vld [vmem:[%s186 + $0x548] sm:$0xff]
                %359 = vst [vmem:[%s187 + $0x2a8] sm:$0xff] %v358
                %v360 = vld [vmem:[%s186 + $0x550] sm:$0xff]
                %361 = vst [vmem:[%s187 + $0x2b0] sm:$0xff] %v360
                %v362 = vld [vmem:[%s186 + $0x558] sm:$0xff]
                %363 = vst [vmem:[%s187 + $0x2b8] sm:$0xff] %v362
                %v364 = vld [vmem:[%s186 + $0x580] sm:$0xff]
                %365 = vst [vmem:[%s187 + $0x2c0] sm:$0xff] %v364
                %v366 = vld [vmem:[%s186 + $0x588] sm:$0xff]
                %367 = vst [vmem:[%s187 + $0x2c8] sm:$0xff] %v366
                %v368 = vld [vmem:[%s186 + $0x590] sm:$0xff]
                %369 = vst [vmem:[%s187 + $0x2d0] sm:$0xff] %v368
                %v370 = vld [vmem:[%s186 + $0x598] sm:$0xff]
                %371 = vst [vmem:[%s187 + $0x2d8] sm:$0xff] %v370
                %v372 = vld [vmem:[%s186 + $0x5c0] sm:$0xff]
                %373 = vst [vmem:[%s187 + $0x2e0] sm:$0xff] %v372
                %v374 = vld [vmem:[%s186 + $0x5c8] sm:$0xff]
                %375 = vst [vmem:[%s187 + $0x2e8] sm:$0xff] %v374
                %v376 = vld [vmem:[%s186 + $0x5d0] sm:$0xff]
                %377 = vst [vmem:[%s187 + $0x2f0] sm:$0xff] %v376
                %v378 = vld [vmem:[%s186 + $0x5d8] sm:$0xff]
                %379 = vst [vmem:[%s187 + $0x2f8] sm:$0xff] %v378
                %v380 = vld [vmem:[%s186 + $0x600] sm:$0xff]
                %381 = vst [vmem:[%s187 + $0x300] sm:$0xff] %v380
                %v382 = vld [vmem:[%s186 + $0x608] sm:$0xff]
                %383 = vst [vmem:[%s187 + $0x308] sm:$0xff] %v382
                %v384 = vld [vmem:[%s186 + $0x610] sm:$0xff]
                %385 = vst [vmem:[%s187 + $0x310] sm:$0xff] %v384
                %v386 = vld [vmem:[%s186 + $0x618] sm:$0xff]
                %387 = vst [vmem:[%s187 + $0x318] sm:$0xff] %v386
                %v388 = vld [vmem:[%s186 + $0x640] sm:$0xff]
                %389 = vst [vmem:[%s187 + $0x320] sm:$0xff] %v388
                %v390 = vld [vmem:[%s186 + $0x648] sm:$0xff]
                %391 = vst [vmem:[%s187 + $0x328] sm:$0xff] %v390
                %v392 = vld [vmem:[%s186 + $0x650] sm:$0xff]
                %393 = vst [vmem:[%s187 + $0x330] sm:$0xff] %v392
                %v394 = vld [vmem:[%s186 + $0x658] sm:$0xff]
                %395 = vst [vmem:[%s187 + $0x338] sm:$0xff] %v394
                %v396 = vld [vmem:[%s186 + $0x680] sm:$0xff]
                %397 = vst [vmem:[%s187 + $0x340] sm:$0xff] %v396
                %v398 = vld [vmem:[%s186 + $0x688] sm:$0xff]
                %399 = vst [vmem:[%s187 + $0x348] sm:$0xff] %v398
                %v400 = vld [vmem:[%s186 + $0x690] sm:$0xff]
                %401 = vst [vmem:[%s187 + $0x350] sm:$0xff] %v400
                %v402 = vld [vmem:[%s186 + $0x698] sm:$0xff]
                %403 = vst [vmem:[%s187 + $0x358] sm:$0xff] %v402
                %v404 = vld [vmem:[%s186 + $0x6c0] sm:$0xff]
                %405 = vst [vmem:[%s187 + $0x360] sm:$0xff] %v404
                %v406 = vld [vmem:[%s186 + $0x6c8] sm:$0xff]
                %407 = vst [vmem:[%s187 + $0x368] sm:$0xff] %v406
                %v408 = vld [vmem:[%s186 + $0x6d0] sm:$0xff]
                %409 = vst [vmem:[%s187 + $0x370] sm:$0xff] %v408
                %v410 = vld [vmem:[%s186 + $0x6d8] sm:$0xff]
                %411 = vst [vmem:[%s187 + $0x378] sm:$0xff] %v410
              $region37: #{convnetvis_forward.5} parent=31 // loop_footer
                %s185 = sadd.s32 1, %s181
              $region38: #{convnetvis_forward.5} parent=31 // loop_footer_branch
                %180 = sbr.rel target = $region34
              $region39: #{convnetvis_forward.5} parent=31 // loop_exit
                _
            $region32: #{convnetvis_forward.5} parent=27 // pred_fallthru
              _
            // Predicated region
            $region40: #{convnetvis_forward.5} parent=27 // pred_check
              _
            $region41: #{convnetvis_forward.5} parent=27 // pred_check_branch
              %413 = sbr.rel target = $region43
            $region42: #{convnetvis_forward.5} parent=27 // pred_region
              _
            $region43: #{convnetvis_forward.5} parent=27 // pred_fallthru
              _
          $region28: #{convnetvis_forward.5} parent=23 // pred_fallthru
            _
          %414 = vnop
        $region24: #{convnetvis_forward.5} parent=19 // pred_fallthru
          _
        // Predicated region
        $region44: #{convnetvis_forward.5} parent=19 // pred_check
          %p415 = pneg %p78
        $region45: #{convnetvis_forward.5} parent=19 // pred_check_branch
          %417 = sbr.rel (%p415) target = $region47
        $region46: #{convnetvis_forward.5} parent=19 // pred_region
          %s418 = smul.u32 128, %s18
          %p419 = scmp.lt.s32.totalorder %s418, 255
          %s420 = scalar_select %p419, %s418, 255
          %p421 = scmp.lt.s32.totalorder %s17, 0
          %s422 = scalar_select %p421, %s17, 0
          %s423 = sadd.s32 %s422, %s420
          %s424 = smul.addr %s423, 4
          %s425 = scalar_lea.vmem %s1, %s424
          %s426 = smul.u32 128, %s18
        $region47: #{convnetvis_forward.5} parent=19 // pred_fallthru
          _
      $region20: #{convnetvis_forward.5} parent=5 // pred_fallthru
        _
      %p427 = scmp.le.s32.totalorder 1, %s9
      %p428 = scmp.lt.s32.totalorder %s9, 3
      %p429 = pnand %p427, %p428
      %p430 = pneg %p429
      // Predicated region
      $region48: #{convnetvis_forward.5} parent=5 // pred_check
        _
      $region49: #{convnetvis_forward.5} parent=5 // pred_check_branch
        %432 = sbr.rel (%p429) target = $region51
      $region50: #{convnetvis_forward.5} parent=5 // pred_region
        %s433 = ssub.s32 %s9, 1
        %s434 = sand.u32 %s43, 1
        %s435 = sand.u32 %s43, 1
        %s436 = smul.addr %s435, 896
        %s437 = scalar_lea.vmem [#allocation3], %s436
        // Predicated region
        $region52: #{convnetvis_forward.5} parent=50 // pred_check
          %p438 = pneg %p56
        $region53: #{convnetvis_forward.5} parent=50 // pred_check_branch
          %440 = sbr.rel (%p438) target = $region55
        $region54: #{convnetvis_forward.5} parent=50 // pred_region
          _
        $region55: #{convnetvis_forward.5} parent=50 // pred_fallthru
          _
        %s441 = sand.u32 %s43, 1
        %s442 = sand.u32 %s43, 1
        %s443 = smul.addr %s442, 896
        %s444 = scalar_lea.vmem [#allocation3], %s443
        %p445 = pneg %p56
        %p446 = pneg %p53
        %s447 = smul.u32 128, %s21
        %p448 = scmp.lt.s32.totalorder %s447, 255
        %s449 = scalar_select %p448, %s447, 255
        %p450 = scmp.lt.s32.totalorder %s20, 0
        %s451 = scalar_select %p450, %s20, 0
        %s452 = sadd.s32 %s451, %s449
        %s453 = smul.addr %s452, 4
        %s454 = scalar_lea.vmem %s1, %s453
        %p455 = pneg %p84
        %p456 = pneg %p81
        %p457 = scmp.lt.s32.totalorder %s20, 0
        %s458 = scalar_select %p457, %s20, 0
        %s459 = scalar_lea.vmem %s2, %s458
        %p460 = pneg %p110
        %p461 = pneg %p107
        %p462 = pneg %p138
        %p463 = pneg %p135
        %s464 = smul.u32 7, %s19
        %p465 = scmp.lt.s32.totalorder %s464, 6
        %s466 = scalar_select %p465, %s464, 6
        %p467 = scmp.lt.s32.totalorder %s20, 0
        %s468 = scalar_select %p467, %s20, 0
        %s469 = sadd.s32 %s468, %s466
        %s470 = smul.addr %s469, 4
        %s471 = scalar_lea.vmem %s3, %s470
        %s472 = smul.u32 7, %s19
        %s473 = smul.u32 8, %s21
        %s474 = smul.u32 128, %s21
        %p475 = scmp.lt.s32.totalorder %s474, 255
        %s476 = scalar_select %p475, %s474, 255
        %p477 = scmp.lt.s32.totalorder %s20, 0
        %s478 = scalar_select %p477, %s20, 0
        %s479 = sadd.s32 %s478, %s476
        %s480 = smul.addr %s479, 4
        %s481 = scalar_lea.vmem %s1, %s480
        %s482 = smul.u32 128, %s21
        %p483 = scmp.lt.s32.totalorder %s20, 0
        %s484 = scalar_select %p483, %s20, 0
        %s485 = scalar_lea.vmem %s2, %s484
        %s486 = smul.u32 7, %s19
        %p487 = scmp.lt.s32.totalorder %s486, 6
        %s488 = scalar_select %p487, %s486, 6
        %p489 = scmp.lt.s32.totalorder %s20, 0
        %s490 = scalar_select %p489, %s20, 0
        %s491 = sadd.s32 %s490, %s488
        %s492 = smul.addr %s491, 4
        %s493 = scalar_lea.vmem %s3, %s492
        %s494 = smul.u32 7, %s19
        %p496 = scmp.eq.s32.totalorder %s21, 0
        // Predicated region
        $region56: #{convnetvis_forward.5} parent=50 // pred_check
          %p497 = pneg %p496
        $region57: #{convnetvis_forward.5} parent=50 // pred_check_branch
          %499 = sbr.rel (%p497) target = $region59
        $region58: #{convnetvis_forward.5} parent=50 // pred_region
          %500 = vst [vmem:[#allocation2] sm:$0xff] 0.0
          %501 = vst [vmem:[#allocation2 + $0x8] sm:$0xff] 0.0
          %502 = vst [vmem:[#allocation2 + $0x10] sm:$0xff] 0.0
          %503 = vst [vmem:[#allocation2 + $0x18] sm:$0xff] 0.0
          %504 = vst [vmem:[#allocation2 + $0x20] sm:$0xff] 0.0
          %505 = vst [vmem:[#allocation2 + $0x28] sm:$0xff] 0.0
          %506 = vst [vmem:[#allocation2 + $0x30] sm:$0xff] 0.0
          %507 = vst [vmem:[#allocation2 + $0x38] sm:$0xff] 0.0
          %508 = vst [vmem:[#allocation2 + $0x40] sm:$0xff] 0.0
          %509 = vst [vmem:[#allocation2 + $0x48] sm:$0xff] 0.0
          %510 = vst [vmem:[#allocation2 + $0x50] sm:$0xff] 0.0
          %511 = vst [vmem:[#allocation2 + $0x58] sm:$0xff] 0.0
          %512 = vst [vmem:[#allocation2 + $0x60] sm:$0xff] 0.0
          %513 = vst [vmem:[#allocation2 + $0x68] sm:$0xff] 0.0
          %514 = vst [vmem:[#allocation2 + $0x70] sm:$0xff] 0.0
          %515 = vst [vmem:[#allocation2 + $0x78] sm:$0xff] 0.0
          %516 = vst [vmem:[#allocation2 + $0x80] sm:$0xff] 0.0
          %517 = vst [vmem:[#allocation2 + $0x88] sm:$0xff] 0.0
          %518 = vst [vmem:[#allocation2 + $0x90] sm:$0xff] 0.0
          %519 = vst [vmem:[#allocation2 + $0x98] sm:$0xff] 0.0
          %520 = vst [vmem:[#allocation2 + $0xa0] sm:$0xff] 0.0
          %521 = vst [vmem:[#allocation2 + $0xa8] sm:$0xff] 0.0
          %522 = vst [vmem:[#allocation2 + $0xb0] sm:$0xff] 0.0
          %523 = vst [vmem:[#allocation2 + $0xb8] sm:$0xff] 0.0
          %524 = vst [vmem:[#allocation2 + $0xc0] sm:$0xff] 0.0
          %525 = vst [vmem:[#allocation2 + $0xc8] sm:$0xff] 0.0
          %526 = vst [vmem:[#allocation2 + $0xd0] sm:$0xff] 0.0
          %527 = vst [vmem:[#allocation2 + $0xd8] sm:$0xff] 0.0
        $region59: #{convnetvis_forward.5} parent=50 // pred_fallthru
          _
        %v528 = vld [vmem:[%s481] sm:$0xf]
        %v529 = vld [vmem:[%s481 + $0x4] sm:$0xf]
        %v530 = vld [vmem:[%s481 + $0x8] sm:$0xf]
        %v531 = vld [vmem:[%s481 + $0xc] sm:$0xf]
        %v532 = vld [vmem:[%s481 + $0x10] sm:$0xf]
        %v533 = vld [vmem:[%s481 + $0x14] sm:$0xf]
        %v534 = vld [vmem:[%s481 + $0x18] sm:$0xf]
        %v535 = vld [vmem:[%s481 + $0x1c] sm:$0xf]
        %v536 = vld [vmem:[%s481 + $0x20] sm:$0xf]
        %v537 = vld [vmem:[%s481 + $0x24] sm:$0xf]
        %v538 = vld [vmem:[%s481 + $0x28] sm:$0xf]
        %v539 = vld [vmem:[%s481 + $0x2c] sm:$0xf]
        %v540 = vld [vmem:[%s481 + $0x30] sm:$0xf]
        %v541 = vld [vmem:[%s481 + $0x34] sm:$0xf]
        %v542 = vld [vmem:[%s481 + $0x38] sm:$0xf]
        %v543 = vld [vmem:[%s481 + $0x3c] sm:$0xf]
        %v544 = vld [vmem:[%s481 + $0x40] sm:$0xf]
        %v545 = vld [vmem:[%s481 + $0x44] sm:$0xf]
        %v546 = vld [vmem:[%s481 + $0x48] sm:$0xf]
        %v547 = vld [vmem:[%s481 + $0x4c] sm:$0xf]
        %v548 = vld [vmem:[%s481 + $0x50] sm:$0xf]
        %v549 = vld [vmem:[%s481 + $0x54] sm:$0xf]
        %v550 = vld [vmem:[%s481 + $0x58] sm:$0xf]
        %v551 = vld [vmem:[%s481 + $0x5c] sm:$0xf]
        %v552 = vld [vmem:[%s481 + $0x60] sm:$0xf]
        %v553 = vld [vmem:[%s481 + $0x64] sm:$0xf]
        %v554 = vld [vmem:[%s481 + $0x68] sm:$0xf]
        %v555 = vld [vmem:[%s481 + $0x6c] sm:$0xf]
        %v556 = vld [vmem:[%s481 + $0x70] sm:$0xf]
        %v557 = vld [vmem:[%s481 + $0x74] sm:$0xf]
        %v558 = vld [vmem:[%s481 + $0x78] sm:$0xf]
        %v559 = vld [vmem:[%s481 + $0x7c] sm:$0xf]
        %v560 = vld [vmem:[%s481 + $0x80] sm:$0xf]
        %v561 = vld [vmem:[%s481 + $0x84] sm:$0xf]
        %v562 = vld [vmem:[%s481 + $0x88] sm:$0xf]
        %v563 = vld [vmem:[%s481 + $0x8c] sm:$0xf]
        %v564 = vld [vmem:[%s481 + $0x90] sm:$0xf]
        %v565 = vld [vmem:[%s481 + $0x94] sm:$0xf]
        %v566 = vld [vmem:[%s481 + $0x98] sm:$0xf]
        %v567 = vld [vmem:[%s481 + $0x9c] sm:$0xf]
        %v568 = vld [vmem:[%s481 + $0xa0] sm:$0xf]
        %v569 = vld [vmem:[%s481 + $0xa4] sm:$0xf]
        %v570 = vld [vmem:[%s481 + $0xa8] sm:$0xf]
        %v571 = vld [vmem:[%s481 + $0xac] sm:$0xf]
        %v572 = vld [vmem:[%s481 + $0xb0] sm:$0xf]
        %v573 = vld [vmem:[%s481 + $0xb4] sm:$0xf]
        %v574 = vld [vmem:[%s481 + $0xb8] sm:$0xf]
        %v575 = vld [vmem:[%s481 + $0xbc] sm:$0xf]
        %v576 = vld [vmem:[%s481 + $0xc0] sm:$0xf]
        %v577 = vld [vmem:[%s481 + $0xc4] sm:$0xf]
        %v578 = vld [vmem:[%s481 + $0xc8] sm:$0xf]
        %v579 = vld [vmem:[%s481 + $0xcc] sm:$0xf]
        %v580 = vld [vmem:[%s481 + $0xd0] sm:$0xf]
        %v581 = vld [vmem:[%s481 + $0xd4] sm:$0xf]
        %v582 = vld [vmem:[%s481 + $0xd8] sm:$0xf]
        %v583 = vld [vmem:[%s481 + $0xdc] sm:$0xf]
        %v584 = vld [vmem:[%s481 + $0xe0] sm:$0xf]
        %v585 = vld [vmem:[%s481 + $0xe4] sm:$0xf]
        %v586 = vld [vmem:[%s481 + $0xe8] sm:$0xf]
        %v587 = vld [vmem:[%s481 + $0xec] sm:$0xf]
        %v588 = vld [vmem:[%s481 + $0xf0] sm:$0xf]
        %v589 = vld [vmem:[%s481 + $0xf4] sm:$0xf]
        %v590 = vld [vmem:[%s481 + $0xf8] sm:$0xf]
        %v591 = vld [vmem:[%s481 + $0xfc] sm:$0xf]
        %v592 = vld [vmem:[%s481 + $0x100] sm:$0xf]
        %v593 = vld [vmem:[%s481 + $0x104] sm:$0xf]
        %v594 = vld [vmem:[%s481 + $0x108] sm:$0xf]
        %v595 = vld [vmem:[%s481 + $0x10c] sm:$0xf]
        %v596 = vld [vmem:[%s481 + $0x110] sm:$0xf]
        %v597 = vld [vmem:[%s481 + $0x114] sm:$0xf]
        %v598 = vld [vmem:[%s481 + $0x118] sm:$0xf]
        %v599 = vld [vmem:[%s481 + $0x11c] sm:$0xf]
        %v600 = vld [vmem:[%s481 + $0x120] sm:$0xf]
        %v601 = vld [vmem:[%s481 + $0x124] sm:$0xf]
        %v602 = vld [vmem:[%s481 + $0x128] sm:$0xf]
        %v603 = vld [vmem:[%s481 + $0x12c] sm:$0xf]
        %v604 = vld [vmem:[%s481 + $0x130] sm:$0xf]
        %v605 = vld [vmem:[%s481 + $0x134] sm:$0xf]
        %v606 = vld [vmem:[%s481 + $0x138] sm:$0xf]
        %v607 = vld [vmem:[%s481 + $0x13c] sm:$0xf]
        %v608 = vld [vmem:[%s481 + $0x140] sm:$0xf]
        %v609 = vld [vmem:[%s481 + $0x144] sm:$0xf]
        %v610 = vld [vmem:[%s481 + $0x148] sm:$0xf]
        %v611 = vld [vmem:[%s481 + $0x14c] sm:$0xf]
        %v612 = vld [vmem:[%s481 + $0x150] sm:$0xf]
        %v613 = vld [vmem:[%s481 + $0x154] sm:$0xf]
        %v614 = vld [vmem:[%s481 + $0x158] sm:$0xf]
        %v615 = vld [vmem:[%s481 + $0x15c] sm:$0xf]
        %v616 = vld [vmem:[%s481 + $0x160] sm:$0xf]
        %v617 = vld [vmem:[%s481 + $0x164] sm:$0xf]
        %v618 = vld [vmem:[%s481 + $0x168] sm:$0xf]
        %v619 = vld [vmem:[%s481 + $0x16c] sm:$0xf]
        %v620 = vld [vmem:[%s481 + $0x170] sm:$0xf]
        %v621 = vld [vmem:[%s481 + $0x174] sm:$0xf]
        %v622 = vld [vmem:[%s481 + $0x178] sm:$0xf]
        %v623 = vld [vmem:[%s481 + $0x17c] sm:$0xf]
        %v624 = vld [vmem:[%s481 + $0x180] sm:$0xf]
        %v625 = vld [vmem:[%s481 + $0x184] sm:$0xf]
        %v626 = vld [vmem:[%s481 + $0x188] sm:$0xf]
        %v627 = vld [vmem:[%s481 + $0x18c] sm:$0xf]
        %v628 = vld [vmem:[%s481 + $0x190] sm:$0xf]
        %v629 = vld [vmem:[%s481 + $0x194] sm:$0xf]
        %v630 = vld [vmem:[%s481 + $0x198] sm:$0xf]
        %v631 = vld [vmem:[%s481 + $0x19c] sm:$0xf]
        %v632 = vld [vmem:[%s481 + $0x1a0] sm:$0xf]
        %v633 = vld [vmem:[%s481 + $0x1a4] sm:$0xf]
        %v634 = vld [vmem:[%s481 + $0x1a8] sm:$0xf]
        %v635 = vld [vmem:[%s481 + $0x1ac] sm:$0xf]
        %v636 = vld [vmem:[%s481 + $0x1b0] sm:$0xf]
        %v637 = vld [vmem:[%s481 + $0x1b4] sm:$0xf]
        %v638 = vld [vmem:[%s481 + $0x1b8] sm:$0xf]
        %v639 = vld [vmem:[%s481 + $0x1bc] sm:$0xf]
        %v640 = vld [vmem:[%s481 + $0x1c0] sm:$0xf]
        %v641 = vld [vmem:[%s481 + $0x1c4] sm:$0xf]
        %v642 = vld [vmem:[%s481 + $0x1c8] sm:$0xf]
        %v643 = vld [vmem:[%s481 + $0x1cc] sm:$0xf]
        %v644 = vld [vmem:[%s481 + $0x1d0] sm:$0xf]
        %v645 = vld [vmem:[%s481 + $0x1d4] sm:$0xf]
        %v646 = vld [vmem:[%s481 + $0x1d8] sm:$0xf]
        %v647 = vld [vmem:[%s481 + $0x1dc] sm:$0xf]
        %v648 = vld [vmem:[%s481 + $0x1e0] sm:$0xf]
        %v649 = vld [vmem:[%s481 + $0x1e4] sm:$0xf]
        %v650 = vld [vmem:[%s481 + $0x1e8] sm:$0xf]
        %v651 = vld [vmem:[%s481 + $0x1ec] sm:$0xf]
        %v652 = vld [vmem:[%s481 + $0x1f0] sm:$0xf]
        %v653 = vld [vmem:[%s481 + $0x1f4] sm:$0xf]
        %v654 = vld [vmem:[%s481 + $0x1f8] sm:$0xf]
        %v655 = vld [vmem:[%s481 + $0x1fc] sm:$0xf]
        %v656 = vld [vmem:[#allocation2] sm:$0xff]
        %v657 = vld [vmem:[#allocation2 + $0x8] sm:$0xff]
        %v658 = vld [vmem:[#allocation2 + $0x10] sm:$0xff]
        %v659 = vld [vmem:[#allocation2 + $0x18] sm:$0xff]
        %v660 = vld [vmem:[#allocation2 + $0x20] sm:$0xff]
        %v661 = vld [vmem:[#allocation2 + $0x28] sm:$0xff]
        %v662 = vld [vmem:[#allocation2 + $0x30] sm:$0xff]
        %v663 = vld [vmem:[%s437] sm:$0xff]
        %v664 = vld [vmem:[%s437 + $0x8] sm:$0xff]
        %v665 = vld [vmem:[%s437 + $0x10] sm:$0xff]
        %v666 = vld [vmem:[%s437 + $0x18] sm:$0xff]
        %v667 = vld [vmem:[%s437 + $0x20] sm:$0xff]
        %v668 = vld [vmem:[%s437 + $0x28] sm:$0xff]
        %v669 = vld [vmem:[%s437 + $0x30] sm:$0xff]
        %v670 = vld [vmem:[%s437 + $0x38] sm:$0xff]
        %v671 = vld [vmem:[%s437 + $0x40] sm:$0xff]
        %v672 = vld [vmem:[%s437 + $0x48] sm:$0xff]
        %v673 = vld [vmem:[%s437 + $0x50] sm:$0xff]
        %v674 = vld [vmem:[%s437 + $0x58] sm:$0xff]
        %v675 = vld [vmem:[%s437 + $0x60] sm:$0xff]
        %v676 = vld [vmem:[%s437 + $0x68] sm:$0xff]
        %v677 = vld [vmem:[%s437 + $0x70] sm:$0xff]
        %v678 = vld [vmem:[%s437 + $0x78] sm:$0xff]
        %v679 = vld [vmem:[%s437 + $0x80] sm:$0xff]
        %v680 = vld [vmem:[%s437 + $0x88] sm:$0xff]
        %v681 = vld [vmem:[%s437 + $0x90] sm:$0xff]
        %v682 = vld [vmem:[%s437 + $0x98] sm:$0xff]
        %v683 = vld [vmem:[%s437 + $0xa0] sm:$0xff]
        %v684 = vld [vmem:[%s437 + $0xa8] sm:$0xff]
        %v685 = vld [vmem:[%s437 + $0xb0] sm:$0xff]
        %v686 = vld [vmem:[%s437 + $0xb8] sm:$0xff]
        %v687 = vld [vmem:[%s437 + $0xc0] sm:$0xff]
        %v688 = vld [vmem:[%s437 + $0xc8] sm:$0xff]
        %v689 = vld [vmem:[%s437 + $0xd0] sm:$0xff]
        %v690 = vld [vmem:[%s437 + $0xd8] sm:$0xff]
        %v719 = vunpack.c.l.b16 %v663
        %v720 = vunpack.c.h.b16 %v663
        %v721 = vunpack.c.l.b16 %v664
        %v722 = vunpack.c.h.b16 %v664
        %v723 = vunpack.c.l.b16 %v665
        %v724 = vunpack.c.h.b16 %v665
        %v725 = vunpack.c.l.b16 %v666
        %v726 = vunpack.c.h.b16 %v666
        %v727 = vunpack.c.l.b16 %v667
        %v728 = vunpack.c.h.b16 %v667
        %v729 = vunpack.c.l.b16 %v668
        %v730 = vunpack.c.h.b16 %v668
        %v731 = vunpack.c.l.b16 %v669
        %v732 = vunpack.c.h.b16 %v669
        %v733 = vunpack.c.l.b16 %v670
        %v734 = vunpack.c.h.b16 %v670
        %v735 = vunpack.c.l.b16 %v671
        %v736 = vunpack.c.h.b16 %v671
        %v737 = vunpack.c.l.b16 %v672
        %v738 = vunpack.c.h.b16 %v672
        %v739 = vunpack.c.l.b16 %v673
        %v740 = vunpack.c.h.b16 %v673
        %v741 = vunpack.c.l.b16 %v674
        %v742 = vunpack.c.h.b16 %v674
        %v743 = vunpack.c.l.b16 %v675
        %v744 = vunpack.c.h.b16 %v675
        %v745 = vunpack.c.l.b16 %v676
        %v746 = vunpack.c.h.b16 %v676
        %v747 = vunpack.c.l.b16 %v677
        %v748 = vunpack.c.h.b16 %v677
        %v749 = vunpack.c.l.b16 %v678
        %v750 = vunpack.c.h.b16 %v678
        %v751 = vunpack.c.l.b16 %v679
        %v752 = vunpack.c.h.b16 %v679
        %v753 = vunpack.c.l.b16 %v680
        %v754 = vunpack.c.h.b16 %v680
        %v755 = vunpack.c.l.b16 %v681
        %v756 = vunpack.c.h.b16 %v681
        %v757 = vunpack.c.l.b16 %v682
        %v758 = vunpack.c.h.b16 %v682
        %v759 = vunpack.c.l.b16 %v683
        %v760 = vunpack.c.h.b16 %v683
        %v761 = vunpack.c.l.b16 %v684
        %v762 = vunpack.c.h.b16 %v684
        %v763 = vunpack.c.l.b16 %v685
        %v764 = vunpack.c.h.b16 %v685
        %v765 = vunpack.c.l.b16 %v686
        %v766 = vunpack.c.h.b16 %v686
        %v767 = vunpack.c.l.b16 %v687
        %v768 = vunpack.c.h.b16 %v687
        %v769 = vunpack.c.l.b16 %v688
        %v770 = vunpack.c.h.b16 %v688
        %v771 = vunpack.c.l.b16 %v689
        %v772 = vunpack.c.h.b16 %v689
        %v773 = vunpack.c.l.b16 %v690
        %v774 = vunpack.c.h.b16 %v690
        %v775 = vpack.c.b16 %v727, %v719
        %v776 = vpack.c.b16 %v728, %v720
        %v777 = vpack.c.b16 %v729, %v721
        %v778 = vpack.c.b16 %v730, %v722
        %v779 = vpack.c.b16 %v731, %v723
        %v780 = vpack.c.b16 %v732, %v724
        %v781 = vpack.c.b16 %v733, %v725
        %v782 = vpack.c.b16 %v734, %v726
        %v783 = vpack.c.b16 %v743, %v735
        %v784 = vpack.c.b16 %v744, %v736
        %v785 = vpack.c.b16 %v745, %v737
        %v786 = vpack.c.b16 %v746, %v738
        %v787 = vpack.c.b16 %v747, %v739
        %v788 = vpack.c.b16 %v748, %v740
        %v789 = vpack.c.b16 %v749, %v741
        %v790 = vpack.c.b16 %v750, %v742
        %v791 = vpack.c.b16 %v759, %v751
        %v792 = vpack.c.b16 %v760, %v752
        %v793 = vpack.c.b16 %v761, %v753
        %v794 = vpack.c.b16 %v762, %v754
        %v795 = vpack.c.b16 %v763, %v755
        %v796 = vpack.c.b16 %v764, %v756
        %v797 = vpack.c.b16 %v765, %v757
        %v798 = vpack.c.b16 %v766, %v758
        %v799 = vpack.c.b16 %v767, %v767
        %v800 = vpack.c.b16 %v768, %v768
        %v801 = vpack.c.b16 %v769, %v769
        %v802 = vpack.c.b16 %v770, %v770
        %v803 = vpack.c.b16 %v771, %v771
        %v804 = vpack.c.b16 %v772, %v772
        %v805 = vpack.c.b16 %v773, %v773
        %v806 = vpack.c.b16 %v774, %v774
        %v967 = vunpack.c.l.b16 %v528
        %v968 = vunpack.c.l.b16 %v529
        %v969 = vunpack.c.l.b16 %v530
        %v970 = vunpack.c.l.b16 %v531
        %v971 = vunpack.c.l.b16 %v532
        %v972 = vunpack.c.l.b16 %v533
        %v973 = vunpack.c.l.b16 %v534
        %v974 = vunpack.c.l.b16 %v535
        %v975 = vunpack.c.l.b16 %v536
        %v976 = vunpack.c.l.b16 %v537
        %v977 = vunpack.c.l.b16 %v538
        %v978 = vunpack.c.l.b16 %v539
        %v979 = vunpack.c.l.b16 %v540
        %v980 = vunpack.c.l.b16 %v541
        %v981 = vunpack.c.l.b16 %v542
        %v982 = vunpack.c.l.b16 %v543
        %v983 = vunpack.c.l.b16 %v544
        %v984 = vunpack.c.l.b16 %v545
        %v985 = vunpack.c.l.b16 %v546
        %v986 = vunpack.c.l.b16 %v547
        %v987 = vunpack.c.l.b16 %v548
        %v988 = vunpack.c.l.b16 %v549
        %v989 = vunpack.c.l.b16 %v550
        %v990 = vunpack.c.l.b16 %v551
        %v991 = vunpack.c.l.b16 %v552
        %v992 = vunpack.c.l.b16 %v553
        %v993 = vunpack.c.l.b16 %v554
        %v994 = vunpack.c.l.b16 %v555
        %v995 = vunpack.c.l.b16 %v556
        %v996 = vunpack.c.l.b16 %v557
        %v997 = vunpack.c.l.b16 %v558
        %v998 = vunpack.c.l.b16 %v559
        %v999 = vunpack.c.l.b16 %v560
        %v1000 = vunpack.c.l.b16 %v561
        %v1001 = vunpack.c.l.b16 %v562
        %v1002 = vunpack.c.l.b16 %v563
        %v1003 = vunpack.c.l.b16 %v564
        %v1004 = vunpack.c.l.b16 %v565
        %v1005 = vunpack.c.l.b16 %v566
        %v1006 = vunpack.c.l.b16 %v567
        %v1007 = vunpack.c.l.b16 %v568
        %v1008 = vunpack.c.l.b16 %v569
        %v1009 = vunpack.c.l.b16 %v570
        %v1010 = vunpack.c.l.b16 %v571
        %v1011 = vunpack.c.l.b16 %v572
        %v1012 = vunpack.c.l.b16 %v573
        %v1013 = vunpack.c.l.b16 %v574
        %v1014 = vunpack.c.l.b16 %v575
        %v1015 = vunpack.c.l.b16 %v576
        %v1016 = vunpack.c.l.b16 %v577
        %v1017 = vunpack.c.l.b16 %v578
        %v1018 = vunpack.c.l.b16 %v579
        %v1019 = vunpack.c.l.b16 %v580
        %v1020 = vunpack.c.l.b16 %v581
        %v1021 = vunpack.c.l.b16 %v582
        %v1022 = vunpack.c.l.b16 %v583
        %v1023 = vunpack.c.l.b16 %v584
        %v1024 = vunpack.c.l.b16 %v585
        %v1025 = vunpack.c.l.b16 %v586
        %v1026 = vunpack.c.l.b16 %v587
        %v1027 = vunpack.c.l.b16 %v588
        %v1028 = vunpack.c.l.b16 %v589
        %v1029 = vunpack.c.l.b16 %v590
        %v1030 = vunpack.c.l.b16 %v591
        %v1031 = vunpack.c.l.b16 %v592
        %v1032 = vunpack.c.l.b16 %v593
        %v1033 = vunpack.c.l.b16 %v594
        %v1034 = vunpack.c.l.b16 %v595
        %v1035 = vunpack.c.l.b16 %v596
        %v1036 = vunpack.c.l.b16 %v597
        %v1037 = vunpack.c.l.b16 %v598
        %v1038 = vunpack.c.l.b16 %v599
        %v1039 = vunpack.c.l.b16 %v600
        %v1040 = vunpack.c.l.b16 %v601
        %v1041 = vunpack.c.l.b16 %v602
        %v1042 = vunpack.c.l.b16 %v603
        %v1043 = vunpack.c.l.b16 %v604
        %v1044 = vunpack.c.l.b16 %v605
        %v1045 = vunpack.c.l.b16 %v606
        %v1046 = vunpack.c.l.b16 %v607
        %v1047 = vunpack.c.l.b16 %v608
        %v1048 = vunpack.c.l.b16 %v609
        %v1049 = vunpack.c.l.b16 %v610
        %v1050 = vunpack.c.l.b16 %v611
        %v1051 = vunpack.c.l.b16 %v612
        %v1052 = vunpack.c.l.b16 %v613
        %v1053 = vunpack.c.l.b16 %v614
        %v1054 = vunpack.c.l.b16 %v615
        %v1055 = vunpack.c.l.b16 %v616
        %v1056 = vunpack.c.l.b16 %v617
        %v1057 = vunpack.c.l.b16 %v618
        %v1058 = vunpack.c.l.b16 %v619
        %v1059 = vunpack.c.l.b16 %v620
        %v1060 = vunpack.c.l.b16 %v621
        %v1061 = vunpack.c.l.b16 %v622
        %v1062 = vunpack.c.l.b16 %v623
        %v1063 = vunpack.c.l.b16 %v624
        %v1064 = vunpack.c.l.b16 %v625
        %v1065 = vunpack.c.l.b16 %v626
        %v1066 = vunpack.c.l.b16 %v627
        %v1067 = vunpack.c.l.b16 %v628
        %v1068 = vunpack.c.l.b16 %v629
        %v1069 = vunpack.c.l.b16 %v630
        %v1070 = vunpack.c.l.b16 %v631
        %v1071 = vunpack.c.l.b16 %v632
        %v1072 = vunpack.c.l.b16 %v633
        %v1073 = vunpack.c.l.b16 %v634
        %v1074 = vunpack.c.l.b16 %v635
        %v1075 = vunpack.c.l.b16 %v636
        %v1076 = vunpack.c.l.b16 %v637
        %v1077 = vunpack.c.l.b16 %v638
        %v1078 = vunpack.c.l.b16 %v639
        %v1079 = vunpack.c.l.b16 %v640
        %v1080 = vunpack.c.l.b16 %v641
        %v1081 = vunpack.c.l.b16 %v642
        %v1082 = vunpack.c.l.b16 %v643
        %v1083 = vunpack.c.l.b16 %v644
        %v1084 = vunpack.c.l.b16 %v645
        %v1085 = vunpack.c.l.b16 %v646
        %v1086 = vunpack.c.l.b16 %v647
        %v1087 = vunpack.c.l.b16 %v648
        %v1088 = vunpack.c.l.b16 %v649
        %v1089 = vunpack.c.l.b16 %v650
        %v1090 = vunpack.c.l.b16 %v651
        %v1091 = vunpack.c.l.b16 %v652
        %v1092 = vunpack.c.l.b16 %v653
        %v1093 = vunpack.c.l.b16 %v654
        %v1094 = vunpack.c.l.b16 %v655
        %v1095 = vpack.c.b16 %v968, %v967
        %v1096 = vpack.c.b16 %v970, %v969
        %v1097 = vpack.c.b16 %v972, %v971
        %v1098 = vpack.c.b16 %v974, %v973
        %v1099 = vpack.c.b16 %v976, %v975
        %v1100 = vpack.c.b16 %v978, %v977
        %v1101 = vpack.c.b16 %v980, %v979
        %v1102 = vpack.c.b16 %v982, %v981
        %v1103 = vpack.c.b16 %v984, %v983
        %v1104 = vpack.c.b16 %v986, %v985
        %v1105 = vpack.c.b16 %v988, %v987
        %v1106 = vpack.c.b16 %v990, %v989
        %v1107 = vpack.c.b16 %v992, %v991
        %v1108 = vpack.c.b16 %v994, %v993
        %v1109 = vpack.c.b16 %v996, %v995
        %v1110 = vpack.c.b16 %v998, %v997
        %v1111 = vpack.c.b16 %v1000, %v999
        %v1112 = vpack.c.b16 %v1002, %v1001
        %v1113 = vpack.c.b16 %v1004, %v1003
        %v1114 = vpack.c.b16 %v1006, %v1005
        %v1115 = vpack.c.b16 %v1008, %v1007
        %v1116 = vpack.c.b16 %v1010, %v1009
        %v1117 = vpack.c.b16 %v1012, %v1011
        %v1118 = vpack.c.b16 %v1014, %v1013
        %v1119 = vpack.c.b16 %v1016, %v1015
        %v1120 = vpack.c.b16 %v1018, %v1017
        %v1121 = vpack.c.b16 %v1020, %v1019
        %v1122 = vpack.c.b16 %v1022, %v1021
        %v1123 = vpack.c.b16 %v1024, %v1023
        %v1124 = vpack.c.b16 %v1026, %v1025
        %v1125 = vpack.c.b16 %v1028, %v1027
        %v1126 = vpack.c.b16 %v1030, %v1029
        %v1127 = vpack.c.b16 %v1032, %v1031
        %v1128 = vpack.c.b16 %v1034, %v1033
        %v1129 = vpack.c.b16 %v1036, %v1035
        %v1130 = vpack.c.b16 %v1038, %v1037
        %v1131 = vpack.c.b16 %v1040, %v1039
        %v1132 = vpack.c.b16 %v1042, %v1041
        %v1133 = vpack.c.b16 %v1044, %v1043
        %v1134 = vpack.c.b16 %v1046, %v1045
        %v1135 = vpack.c.b16 %v1048, %v1047
        %v1136 = vpack.c.b16 %v1050, %v1049
        %v1137 = vpack.c.b16 %v1052, %v1051
        %v1138 = vpack.c.b16 %v1054, %v1053
        %v1139 = vpack.c.b16 %v1056, %v1055
        %v1140 = vpack.c.b16 %v1058, %v1057
        %v1141 = vpack.c.b16 %v1060, %v1059
        %v1142 = vpack.c.b16 %v1062, %v1061
        %v1143 = vpack.c.b16 %v1064, %v1063
        %v1144 = vpack.c.b16 %v1066, %v1065
        %v1145 = vpack.c.b16 %v1068, %v1067
        %v1146 = vpack.c.b16 %v1070, %v1069
        %v1147 = vpack.c.b16 %v1072, %v1071
        %v1148 = vpack.c.b16 %v1074, %v1073
        %v1149 = vpack.c.b16 %v1076, %v1075
        %v1150 = vpack.c.b16 %v1078, %v1077
        %v1151 = vpack.c.b16 %v1080, %v1079
        %v1152 = vpack.c.b16 %v1082, %v1081
        %v1153 = vpack.c.b16 %v1084, %v1083
        %v1154 = vpack.c.b16 %v1086, %v1085
        %v1155 = vpack.c.b16 %v1088, %v1087
        %v1156 = vpack.c.b16 %v1090, %v1089
        %v1157 = vpack.c.b16 %v1092, %v1091
        %v1158 = vpack.c.b16 %v1094, %v1093
        %1223 = vmatprep.subr.bf16.mxu0 0
        %1224 = vmatpush1.bf16.msra.mxu0 %v1095
        %1225 = vmatprep.subr.bf16.mxu0 0
        %1226 = vmatpush1.bf16.msra.mxu0 %v1096
        %1227 = vmatprep.subr.bf16.mxu0 0
        %1228 = vmatpush1.bf16.msra.mxu0 %v1097
        %1229 = vmatprep.subr.bf16.mxu0 0
        %1230 = vmatpush1.bf16.msra.mxu0 %v1098
        %1231 = vmatprep.subr.bf16.mxu0 0
        %1232 = vmatpush1.bf16.msra.mxu0 %v1099
        %1233 = vmatprep.subr.bf16.mxu0 0
        %1234 = vmatpush1.bf16.msra.mxu0 %v1100
        %1235 = vmatprep.subr.bf16.mxu0 0
        %1236 = vmatpush1.bf16.msra.mxu0 %v1101
        %1237 = vmatprep.subr.bf16.mxu0 0
        %1238 = vmatpush1.bf16.msra.mxu0 %v1102
        %1239 = vmatprep.subr.bf16.mxu0 0
        %1240 = vmatpush1.bf16.msra.mxu0 %v1103
        %1241 = vmatprep.subr.bf16.mxu0 0
        %1242 = vmatpush1.bf16.msra.mxu0 %v1104
        %1243 = vmatprep.subr.bf16.mxu0 0
        %1244 = vmatpush1.bf16.msra.mxu0 %v1105
        %1245 = vmatprep.subr.bf16.mxu0 0
        %1246 = vmatpush1.bf16.msra.mxu0 %v1106
        %1247 = vmatprep.subr.bf16.mxu0 0
        %1248 = vmatpush1.bf16.msra.mxu0 %v1107
        %1249 = vmatprep.subr.bf16.mxu0 0
        %1250 = vmatpush1.bf16.msra.mxu0 %v1108
        %1251 = vmatprep.subr.bf16.mxu0 0
        %1252 = vmatpush1.bf16.msra.mxu0 %v1109
        %1253 = vmatprep.subr.bf16.mxu0 0
        %1254 = vmatpush1.bf16.msra.mxu0 %v1110
        %1255 = vmatprep.mubr.bf16.mxu0 %v776
        %1256 = vmatmul.mubr.bf16.gmra.mrb[0].mxu0 %v775
        %v1257 = vpop.f32.mrb[0].mxu0
        %v1258 = vadd.f32 0.0, %v1257
        %v1259 = vpop.f32.mrb[0].mxu0
        %v1260 = vpop.f32.mrb[0].mxu0
        %v1261 = vadd.f32 0.0, %v1260
        %v1262 = vpop.f32.mrb[0].mxu0
        %1263 = vmatprep.mubr.bf16.mxu0 %v784
        %1264 = vmatmul.mubr.bf16.gmra.mrb[0].mxu0 %v783
        %v1265 = vpop.f32.mrb[0].mxu0
        %v1266 = vadd.f32 0.0, %v1265
        %v1267 = vpop.f32.mrb[0].mxu0
        %v1268 = vpop.f32.mrb[0].mxu0
        %v1269 = vadd.f32 0.0, %v1268
        %v1270 = vpop.f32.mrb[0].mxu0
        %1271 = vmatprep.mubr.bf16.mxu0 %v792
        %1272 = vmatmul.mubr.bf16.gmra.mrb[0].mxu0 %v791
        %v1273 = vpop.f32.mrb[0].mxu0
        %v1274 = vadd.f32 0.0, %v1273
        %v1275 = vpop.f32.mrb[0].mxu0
        %v1276 = vpop.f32.mrb[0].mxu0
        %v1277 = vadd.f32 0.0, %v1276
        %v1278 = vpop.f32.mrb[0].mxu0
        %1279 = vmatprep.mubr.bf16.mxu0 %v800
        %1280 = vmatmul.mubr.bf16.gmra.mrb[0].mxu0 %v799
        %v1281 = vpop.f32.mrb[0].mxu0
        %v1282 = vadd.f32 0.0, %v1281
        %v1283 = vpop.f32.mrb[0].mxu0
        %v1284 = vpop.f32.mrb[0].mxu0
        %v1285 = vpop.f32.mrb[0].mxu0
        %1286 = vdwg.mxu0
        %1287 = vmatprep.subr.bf16.mxu0 0
        %1288 = vmatpush1.bf16.msra.mxu0 %v1111
        %1289 = vmatprep.subr.bf16.mxu0 0
        %1290 = vmatpush1.bf16.msra.mxu0 %v1112
        %1291 = vmatprep.subr.bf16.mxu0 0
        %1292 = vmatpush1.bf16.msra.mxu0 %v1113
        %1293 = vmatprep.subr.bf16.mxu0 0
        %1294 = vmatpush1.bf16.msra.mxu0 %v1114
        %1295 = vmatprep.subr.bf16.mxu0 0
        %1296 = vmatpush1.bf16.msra.mxu0 %v1115
        %1297 = vmatprep.subr.bf16.mxu0 0
        %1298 = vmatpush1.bf16.msra.mxu0 %v1116
        %1299 = vmatprep.subr.bf16.mxu0 0
        %1300 = vmatpush1.bf16.msra.mxu0 %v1117
        %1301 = vmatprep.subr.bf16.mxu0 0
        %1302 = vmatpush1.bf16.msra.mxu0 %v1118
        %1303 = vmatprep.subr.bf16.mxu0 0
        %1304 = vmatpush1.bf16.msra.mxu0 %v1119
        %1305 = vmatprep.subr.bf16.mxu0 0
        %1306 = vmatpush1.bf16.msra.mxu0 %v1120
        %1307 = vmatprep.subr.bf16.mxu0 0
        %1308 = vmatpush1.bf16.msra.mxu0 %v1121
        %1309 = vmatprep.subr.bf16.mxu0 0
        %1310 = vmatpush1.bf16.msra.mxu0 %v1122
        %1311 = vmatprep.subr.bf16.mxu0 0
        %1312 = vmatpush1.bf16.msra.mxu0 %v1123
        %1313 = vmatprep.subr.bf16.mxu0 0
        %1314 = vmatpush1.bf16.msra.mxu0 %v1124
        %1315 = vmatprep.subr.bf16.mxu0 0
        %1316 = vmatpush1.bf16.msra.mxu0 %v1125
        %1317 = vmatprep.subr.bf16.mxu0 0
        %1318 = vmatpush1.bf16.msra.mxu0 %v1126
        %1319 = vmatprep.mubr.bf16.mxu0 %v778
        %1320 = vmatmul.mubr.bf16.gmra.mrb[0].mxu0 %v777
        %v1321 = vpop.f32.mrb[0].mxu0
        %v1322 = vadd.f32 %v1258, %v1321
        %v1323 = vpop.f32.mrb[0].mxu0
        %v1324 = vpop.f32.mrb[0].mxu0
        %v1325 = vadd.f32 %v1261, %v1324
        %v1326 = vpop.f32.mrb[0].mxu0
        %1327 = vmatprep.mubr.bf16.mxu0 %v786
        %1328 = vmatmul.mubr.bf16.gmra.mrb[0].mxu0 %v785
        %v1329 = vpop.f32.mrb[0].mxu0
        %v1330 = vadd.f32 %v1266, %v1329
        %v1331 = vpop.f32.mrb[0].mxu0
        %v1332 = vpop.f32.mrb[0].mxu0
        %v1333 = vadd.f32 %v1269, %v1332
        %v1334 = vpop.f32.mrb[0].mxu0
        %1335 = vmatprep.mubr.bf16.mxu0 %v794
        %1336 = vmatmul.mubr.bf16.gmra.mrb[0].mxu0 %v793
        %v1337 = vpop.f32.mrb[0].mxu0
        %v1338 = vadd.f32 %v1274, %v1337
        %v1339 = vpop.f32.mrb[0].mxu0
        %v1340 = vpop.f32.mrb[0].mxu0
        %v1341 = vadd.f32 %v1277, %v1340
        %v1342 = vpop.f32.mrb[0].mxu0
        %1343 = vmatprep.mubr.bf16.mxu0 %v802
        %1344 = vmatmul.mubr.bf16.gmra.mrb[0].mxu0 %v801
        %v1345 = vpop.f32.mrb[0].mxu0
        %v1346 = vadd.f32 %v1282, %v1345
        %v1347 = vpop.f32.mrb[0].mxu0
        %v1348 = vpop.f32.mrb[0].mxu0
        %v1349 = vpop.f32.mrb[0].mxu0
        %1350 = vdwg.mxu0
        %1351 = vmatprep.subr.bf16.mxu0 0
        %1352 = vmatpush1.bf16.msra.mxu0 %v1127
        %1353 = vmatprep.subr.bf16.mxu0 0
        %1354 = vmatpush1.bf16.msra.mxu0 %v1128
        %1355 = vmatprep.subr.bf16.mxu0 0
        %1356 = vmatpush1.bf16.msra.mxu0 %v1129
        %1357 = vmatprep.subr.bf16.mxu0 0
        %1358 = vmatpush1.bf16.msra.mxu0 %v1130
        %1359 = vmatprep.subr.bf16.mxu0 0
        %1360 = vmatpush1.bf16.msra.mxu0 %v1131
        %1361 = vmatprep.subr.bf16.mxu0 0
        %1362 = vmatpush1.bf16.msra.mxu0 %v1132
        %1363 = vmatprep.subr.bf16.mxu0 0
        %1364 = vmatpush1.bf16.msra.mxu0 %v1133
        %1365 = vmatprep.subr.bf16.mxu0 0
        %1366 = vmatpush1.bf16.msra.mxu0 %v1134
        %1367 = vmatprep.subr.bf16.mxu0 0
        %1368 = vmatpush1.bf16.msra.mxu0 %v1135
        %1369 = vmatprep.subr.bf16.mxu0 0
        %1370 = vmatpush1.bf16.msra.mxu0 %v1136
        %1371 = vmatprep.subr.bf16.mxu0 0
        %1372 = vmatpush1.bf16.msra.mxu0 %v1137
        %1373 = vmatprep.subr.bf16.mxu0 0
        %1374 = vmatpush1.bf16.msra.mxu0 %v1138
        %1375 = vmatprep.subr.bf16.mxu0 0
        %1376 = vmatpush1.bf16.msra.mxu0 %v1139
        %1377 = vmatprep.subr.bf16.mxu0 0
        %1378 = vmatpush1.bf16.msra.mxu0 %v1140
        %1379 = vmatprep.subr.bf16.mxu0 0
        %1380 = vmatpush1.bf16.msra.mxu0 %v1141
        %1381 = vmatprep.subr.bf16.mxu0 0
        %1382 = vmatpush1.bf16.msra.mxu0 %v1142
        %1383 = vmatprep.mubr.bf16.mxu0 %v780
        %1384 = vmatmul.mubr.bf16.gmra.mrb[0].mxu0 %v779
        %v1385 = vpop.f32.mrb[0].mxu0
        %v1386 = vadd.f32 %v1322, %v1385
        %v1387 = vpop.f32.mrb[0].mxu0
        %v1388 = vpop.f32.mrb[0].mxu0
        %v1389 = vadd.f32 %v1325, %v1388
        %v1390 = vpop.f32.mrb[0].mxu0
        %1391 = vmatprep.mubr.bf16.mxu0 %v788
        %1392 = vmatmul.mubr.bf16.gmra.mrb[0].mxu0 %v787
        %v1393 = vpop.f32.mrb[0].mxu0
        %v1394 = vadd.f32 %v1330, %v1393
        %v1395 = vpop.f32.mrb[0].mxu0
        %v1396 = vpop.f32.mrb[0].mxu0
        %v1397 = vadd.f32 %v1333, %v1396
        %v1398 = vpop.f32.mrb[0].mxu0
        %1399 = vmatprep.mubr.bf16.mxu0 %v796
        %1400 = vmatmul.mubr.bf16.gmra.mrb[0].mxu0 %v795
        %v1401 = vpop.f32.mrb[0].mxu0
        %v1402 = vadd.f32 %v1338, %v1401
        %v1403 = vpop.f32.mrb[0].mxu0
        %v1404 = vpop.f32.mrb[0].mxu0
        %v1405 = vadd.f32 %v1341, %v1404
        %v1406 = vpop.f32.mrb[0].mxu0
        %1407 = vmatprep.mubr.bf16.mxu0 %v804
        %1408 = vmatmul.mubr.bf16.gmra.mrb[0].mxu0 %v803
        %v1409 = vpop.f32.mrb[0].mxu0
        %v1410 = vadd.f32 %v1346, %v1409
        %v1411 = vpop.f32.mrb[0].mxu0
        %v1412 = vpop.f32.mrb[0].mxu0
        %v1413 = vpop.f32.mrb[0].mxu0
        %1414 = vdwg.mxu0
        %1415 = vmatprep.subr.bf16.mxu0 0
        %1416 = vmatpush1.bf16.msra.mxu0 %v1143
        %1417 = vmatprep.subr.bf16.mxu0 0
        %1418 = vmatpush1.bf16.msra.mxu0 %v1144
        %1419 = vmatprep.subr.bf16.mxu0 0
        %1420 = vmatpush1.bf16.msra.mxu0 %v1145
        %1421 = vmatprep.subr.bf16.mxu0 0
        %1422 = vmatpush1.bf16.msra.mxu0 %v1146
        %1423 = vmatprep.subr.bf16.mxu0 0
        %1424 = vmatpush1.bf16.msra.mxu0 %v1147
        %1425 = vmatprep.subr.bf16.mxu0 0
        %1426 = vmatpush1.bf16.msra.mxu0 %v1148
        %1427 = vmatprep.subr.bf16.mxu0 0
        %1428 = vmatpush1.bf16.msra.mxu0 %v1149
        %1429 = vmatprep.subr.bf16.mxu0 0
        %1430 = vmatpush1.bf16.msra.mxu0 %v1150
        %1431 = vmatprep.subr.bf16.mxu0 0
        %1432 = vmatpush1.bf16.msra.mxu0 %v1151
        %1433 = vmatprep.subr.bf16.mxu0 0
        %1434 = vmatpush1.bf16.msra.mxu0 %v1152
        %1435 = vmatprep.subr.bf16.mxu0 0
        %1436 = vmatpush1.bf16.msra.mxu0 %v1153
        %1437 = vmatprep.subr.bf16.mxu0 0
        %1438 = vmatpush1.bf16.msra.mxu0 %v1154
        %1439 = vmatprep.subr.bf16.mxu0 0
        %1440 = vmatpush1.bf16.msra.mxu0 %v1155
        %1441 = vmatprep.subr.bf16.mxu0 0
        %1442 = vmatpush1.bf16.msra.mxu0 %v1156
        %1443 = vmatprep.subr.bf16.mxu0 0
        %1444 = vmatpush1.bf16.msra.mxu0 %v1157
        %1445 = vmatprep.subr.bf16.mxu0 0
        %1446 = vmatpush1.bf16.msra.mxu0 %v1158
        %1447 = vmatprep.mubr.bf16.mxu0 %v782
        %1448 = vmatmul.mubr.bf16.gmra.mrb[0].mxu0 %v781
        %v1449 = vpop.f32.mrb[0].mxu0
        %v1450 = vadd.f32 %v1386, %v1449
        %v1451 = vpop.f32.mrb[0].mxu0
        %v1452 = vpop.f32.mrb[0].mxu0
        %v1453 = vadd.f32 %v1389, %v1452
        %v1454 = vpop.f32.mrb[0].mxu0
        %1455 = vmatprep.mubr.bf16.mxu0 %v790
        %1456 = vmatmul.mubr.bf16.gmra.mrb[0].mxu0 %v789
        %v1457 = vpop.f32.mrb[0].mxu0
        %v1458 = vadd.f32 %v1394, %v1457
        %v1459 = vpop.f32.mrb[0].mxu0
        %v1460 = vpop.f32.mrb[0].mxu0
        %v1461 = vadd.f32 %v1397, %v1460
        %v1462 = vpop.f32.mrb[0].mxu0
        %1463 = vmatprep.mubr.bf16.mxu0 %v798
        %1464 = vmatmul.mubr.bf16.gmra.mrb[0].mxu0 %v797
        %v1465 = vpop.f32.mrb[0].mxu0
        %v1466 = vadd.f32 %v1402, %v1465
        %v1467 = vpop.f32.mrb[0].mxu0
        %v1468 = vpop.f32.mrb[0].mxu0
        %v1469 = vadd.f32 %v1405, %v1468
        %v1470 = vpop.f32.mrb[0].mxu0
        %1471 = vmatprep.mubr.bf16.mxu0 %v806
        %1472 = vmatmul.mubr.bf16.gmra.mrb[0].mxu0 %v805
        %v1473 = vpop.f32.mrb[0].mxu0
        %v1474 = vadd.f32 %v1410, %v1473
        %v1475 = vpop.f32.mrb[0].mxu0
        %v1476 = vpop.f32.mrb[0].mxu0
        %v1477 = vpop.f32.mrb[0].mxu0
        %1478 = vdwg.mxu0
        %v1479 = vadd.f32 %v656, %v1450
        %v1480 = vadd.f32 %v657, %v1453
        %v1481 = vadd.f32 %v658, %v1458
        %v1482 = vadd.f32 %v659, %v1461
        %v1483 = vadd.f32 %v660, %v1466
        %v1484 = vadd.f32 %v661, %v1469
        %v1485 = vadd.f32 %v662, %v1474
        %1486 = vst [vmem:[#allocation2] sm:$0xff] %v1479
        %1487 = vst [vmem:[#allocation2 + $0x8] sm:$0xff] %v1480
        %1488 = vst [vmem:[#allocation2 + $0x10] sm:$0xff] %v1481
        %1489 = vst [vmem:[#allocation2 + $0x18] sm:$0xff] %v1482
        %1490 = vst [vmem:[#allocation2 + $0x20] sm:$0xff] %v1483
        %1491 = vst [vmem:[#allocation2 + $0x28] sm:$0xff] %v1484
        %1492 = vst [vmem:[#allocation2 + $0x30] sm:$0xff] %v1485
        %s1493 = scalar_lea.vmem [#allocation2], 56
        %v1494 = vld [vmem:[%s1493] sm:$0xff]
        %v1495 = vld [vmem:[%s1493 + $0x8] sm:$0xff]
        %v1496 = vld [vmem:[%s1493 + $0x10] sm:$0xff]
        %v1497 = vld [vmem:[%s1493 + $0x18] sm:$0xff]
        %v1498 = vld [vmem:[%s1493 + $0x20] sm:$0xff]
        %v1499 = vld [vmem:[%s1493 + $0x28] sm:$0xff]
        %v1500 = vld [vmem:[%s1493 + $0x30] sm:$0xff]
        %s1501 = scalar_lea.vmem %s437, 224 [#allocation3]
        %v1502 = vld [vmem:[%s1501] sm:$0xff]
        %v1503 = vld [vmem:[%s1501 + $0x8] sm:$0xff]
        %v1504 = vld [vmem:[%s1501 + $0x10] sm:$0xff]
        %v1505 = vld [vmem:[%s1501 + $0x18] sm:$0xff]
        %v1506 = vld [vmem:[%s1501 + $0x20] sm:$0xff]
        %v1507 = vld [vmem:[%s1501 + $0x28] sm:$0xff]
        %v1508 = vld [vmem:[%s1501 + $0x30] sm:$0xff]
        %v1509 = vld [vmem:[%s1501 + $0x38] sm:$0xff]
        %v1510 = vld [vmem:[%s1501 + $0x40] sm:$0xff]
        %v1511 = vld [vmem:[%s1501 + $0x48] sm:$0xff]
        %v1512 = vld [vmem:[%s1501 + $0x50] sm:$0xff]
        %v1513 = vld [vmem:[%s1501 + $0x58] sm:$0xff]
        %v1514 = vld [vmem:[%s1501 + $0x60] sm:$0xff]
        %v1515 = vld [vmem:[%s1501 + $0x68] sm:$0xff]
        %v1516 = vld [vmem:[%s1501 + $0x70] sm:$0xff]
        %v1517 = vld [vmem:[%s1501 + $0x78] sm:$0xff]
        %v1518 = vld [vmem:[%s1501 + $0x80] sm:$0xff]
        %v1519 = vld [vmem:[%s1501 + $0x88] sm:$0xff]
        %v1520 = vld [vmem:[%s1501 + $0x90] sm:$0xff]
        %v1521 = vld [vmem:[%s1501 + $0x98] sm:$0xff]
        %v1522 = vld [vmem:[%s1501 + $0xa0] sm:$0xff]
        %v1523 = vld [vmem:[%s1501 + $0xa8] sm:$0xff]
        %v1524 = vld [vmem:[%s1501 + $0xb0] sm:$0xff]
        %v1525 = vld [vmem:[%s1501 + $0xb8] sm:$0xff]
        %v1526 = vld [vmem:[%s1501 + $0xc0] sm:$0xff]
        %v1527 = vld [vmem:[%s1501 + $0xc8] sm:$0xff]
        %v1528 = vld [vmem:[%s1501 + $0xd0] sm:$0xff]
        %v1529 = vld [vmem:[%s1501 + $0xd8] sm:$0xff]
        %v1558 = vunpack.c.l.b16 %v1502
        %v1559 = vunpack.c.h.b16 %v1502
        %v1560 = vunpack.c.l.b16 %v1503
        %v1561 = vunpack.c.h.b16 %v1503
        %v1562 = vunpack.c.l.b16 %v1504
        %v1563 = vunpack.c.h.b16 %v1504
        %v1564 = vunpack.c.l.b16 %v1505
        %v1565 = vunpack.c.h.b16 %v1505
        %v1566 = vunpack.c.l.b16 %v1506
        %v1567 = vunpack.c.h.b16 %v1506
        %v1568 = vunpack.c.l.b16 %v1507
        %v1569 = vunpack.c.h.b16 %v1507
        %v1570 = vunpack.c.l.b16 %v1508
        %v1571 = vunpack.c.h.b16 %v1508
        %v1572 = vunpack.c.l.b16 %v1509
        %v1573 = vunpack.c.h.b16 %v1509
        %v1574 = vunpack.c.l.b16 %v1510
        %v1575 = vunpack.c.h.b16 %v1510
        %v1576 = vunpack.c.l.b16 %v1511
        %v1577 = vunpack.c.h.b16 %v1511
        %v1578 = vunpack.c.l.b16 %v1512
        %v1579 = vunpack.c.h.b16 %v1512
        %v1580 = vunpack.c.l.b16 %v1513
        %v1581 = vunpack.c.h.b16 %v1513
        %v1582 = vunpack.c.l.b16 %v1514
        %v1583 = vunpack.c.h.b16 %v1514
        %v1584 = vunpack.c.l.b16 %v1515
        %v1585 = vunpack.c.h.b16 %v1515
        %v1586 = vunpack.c.l.b16 %v1516
        %v1587 = vunpack.c.h.b16 %v1516
        %v1588 = vunpack.c.l.b16 %v1517
        %v1589 = vunpack.c.h.b16 %v1517
        %v1590 = vunpack.c.l.b16 %v1518
        %v1591 = vunpack.c.h.b16 %v1518
        %v1592 = vunpack.c.l.b16 %v1519
        %v1593 = vunpack.c.h.b16 %v1519
        %v1594 = vunpack.c.l.b16 %v1520
        %v1595 = vunpack.c.h.b16 %v1520
        %v1596 = vunpack.c.l.b16 %v1521
        %v1597 = vunpack.c.h.b16 %v1521
        %v1598 = vunpack.c.l.b16 %v1522
        %v1599 = vunpack.c.h.b16 %v1522
        %v1600 = vunpack.c.l.b16 %v1523
        %v1601 = vunpack.c.h.b16 %v1523
        %v1602 = vunpack.c.l.b16 %v1524
        %v1603 = vunpack.c.h.b16 %v1524
        %v1604 = vunpack.c.l.b16 %v1525
        %v1605 = vunpack.c.h.b16 %v1525
        %v1606 = vunpack.c.l.b16 %v1526
        %v1607 = vunpack.c.h.b16 %v1526
        %v1608 = vunpack.c.l.b16 %v1527
        %v1609 = vunpack.c.h.b16 %v1527
        %v1610 = vunpack.c.l.b16 %v1528
        %v1611 = vunpack.c.h.b16 %v1528
        %v1612 = vunpack.c.l.b16 %v1529
        %v1613 = vunpack.c.h.b16 %v1529
        %v1614 = vpack.c.b16 %v1566, %v1558
        %v1615 = vpack.c.b16 %v1567, %v1559
        %v1616 = vpack.c.b16 %v1568, %v1560
        %v1617 = vpack.c.b16 %v1569, %v1561
        %v1618 = vpack.c.b16 %v1570, %v1562
        %v1619 = vpack.c.b16 %v1571, %v1563
        %v1620 = vpack.c.b16 %v1572, %v1564
        %v1621 = vpack.c.b16 %v1573, %v1565
        %v1622 = vpack.c.b16 %v1582, %v1574
        %v1623 = vpack.c.b16 %v1583, %v1575
        %v1624 = vpack.c.b16 %v1584, %v1576
        %v1625 = vpack.c.b16 %v1585, %v1577
        %v1626 = vpack.c.b16 %v1586, %v1578
        %v1627 = vpack.c.b16 %v1587, %v1579
        %v1628 = vpack.c.b16 %v1588, %v1580
        %v1629 = vpack.c.b16 %v1589, %v1581
        %v1630 = vpack.c.b16 %v1598, %v1590
        %v1631 = vpack.c.b16 %v1599, %v1591
        %v1632 = vpack.c.b16 %v1600, %v1592
        %v1633 = vpack.c.b16 %v1601, %v1593
        %v1634 = vpack.c.b16 %v1602, %v1594
        %v1635 = vpack.c.b16 %v1603, %v1595
        %v1636 = vpack.c.b16 %v1604, %v1596
        %v1637 = vpack.c.b16 %v1605, %v1597
        %v1638 = vpack.c.b16 %v1606, %v1606
        %v1639 = vpack.c.b16 %v1607, %v1607
        %v1640 = vpack.c.b16 %v1608, %v1608
        %v1641 = vpack.c.b16 %v1609, %v1609
        %v1642 = vpack.c.b16 %v1610, %v1610
        %v1643 = vpack.c.b16 %v1611, %v1611
        %v1644 = vpack.c.b16 %v1612, %v1612
        %v1645 = vpack.c.b16 %v1613, %v1613
        %1678 = vmatprep.subr.bf16.mxu0 0
        %1679 = vmatpush1.bf16.msra.mxu0 %v1095
        %1680 = vmatprep.subr.bf16.mxu0 0
        %1681 = vmatpush1.bf16.msra.mxu0 %v1096
        %1682 = vmatprep.subr.bf16.mxu0 0
        %1683 = vmatpush1.bf16.msra.mxu0 %v1097
        %1684 = vmatprep.subr.bf16.mxu0 0
        %1685 = vmatpush1.bf16.msra.mxu0 %v1098
        %1686 = vmatprep.subr.bf16.mxu0 0
        %1687 = vmatpush1.bf16.msra.mxu0 %v1099
        %1688 = vmatprep.subr.bf16.mxu0 0
        %1689 = vmatpush1.bf16.msra.mxu0 %v1100
        %1690 = vmatprep.subr.bf16.mxu0 0
        %1691 = vmatpush1.bf16.msra.mxu0 %v1101
        %1692 = vmatprep.subr.bf16.mxu0 0
        %1693 = vmatpush1.bf16.msra.mxu0 %v1102
        %1694 = vmatprep.subr.bf16.mxu0 0
        %1695 = vmatpush1.bf16.msra.mxu0 %v1103
        %1696 = vmatprep.subr.bf16.mxu0 0
        %1697 = vmatpush1.bf16.msra.mxu0 %v1104
        %1698 = vmatprep.subr.bf16.mxu0 0
        %1699 = vmatpush1.bf16.msra.mxu0 %v1105
        %1700 = vmatprep.subr.bf16.mxu0 0
        %1701 = vmatpush1.bf16.msra.mxu0 %v1106
        %1702 = vmatprep.subr.bf16.mxu0 0
        %1703 = vmatpush1.bf16.msra.mxu0 %v1107
        %1704 = vmatprep.subr.bf16.mxu0 0
        %1705 = vmatpush1.bf16.msra.mxu0 %v1108
        %1706 = vmatprep.subr.bf16.mxu0 0
        %1707 = vmatpush1.bf16.msra.mxu0 %v1109
        %1708 = vmatprep.subr.bf16.mxu0 0
        %1709 = vmatpush1.bf16.msra.mxu0 %v1110
        %1710 = vmatprep.mubr.bf16.mxu0 %v1615
        %1711 = vmatmul.mubr.bf16.gmra.mrb[0].mxu0 %v1614
        %v1712 = vpop.f32.mrb[0].mxu0
        %v1713 = vadd.f32 0.0, %v1712
        %v1714 = vpop.f32.mrb[0].mxu0
        %v1715 = vpop.f32.mrb[0].mxu0
        %v1716 = vadd.f32 0.0, %v1715
        %v1717 = vpop.f32.mrb[0].mxu0
        %1718 = vmatprep.mubr.bf16.mxu0 %v1623
        %1719 = vmatmul.mubr.bf16.gmra.mrb[0].mxu0 %v1622
        %v1720 = vpop.f32.mrb[0].mxu0
        %v1721 = vadd.f32 0.0, %v1720
        %v1722 = vpop.f32.mrb[0].mxu0
        %v1723 = vpop.f32.mrb[0].mxu0
        %v1724 = vadd.f32 0.0, %v1723
        %v1725 = vpop.f32.mrb[0].mxu0
        %1726 = vmatprep.mubr.bf16.mxu0 %v1631
        %1727 = vmatmul.mubr.bf16.gmra.mrb[0].mxu0 %v1630
        %v1728 = vpop.f32.mrb[0].mxu0
        %v1729 = vadd.f32 0.0, %v1728
        %v1730 = vpop.f32.mrb[0].mxu0
        %v1731 = vpop.f32.mrb[0].mxu0
        %v1732 = vadd.f32 0.0, %v1731
        %v1733 = vpop.f32.mrb[0].mxu0
        %1734 = vmatprep.mubr.bf16.mxu0 %v1639
        %1735 = vmatmul.mubr.bf16.gmra.mrb[0].mxu0 %v1638
        %v1736 = vpop.f32.mrb[0].mxu0
        %v1737 = vadd.f32 0.0, %v1736
        %v1738 = vpop.f32.mrb[0].mxu0
        %v1739 = vpop.f32.mrb[0].mxu0
        %v1740 = vpop.f32.mrb[0].mxu0
        %1741 = vdwg.mxu0
        %1742 = vmatprep.subr.bf16.mxu0 0
        %1743 = vmatpush1.bf16.msra.mxu0 %v1111
        %1744 = vmatprep.subr.bf16.mxu0 0
        %1745 = vmatpush1.bf16.msra.mxu0 %v1112
        %1746 = vmatprep.subr.bf16.mxu0 0
        %1747 = vmatpush1.bf16.msra.mxu0 %v1113
        %1748 = vmatprep.subr.bf16.mxu0 0
        %1749 = vmatpush1.bf16.msra.mxu0 %v1114
        %1750 = vmatprep.subr.bf16.mxu0 0
        %1751 = vmatpush1.bf16.msra.mxu0 %v1115
        %1752 = vmatprep.subr.bf16.mxu0 0
        %1753 = vmatpush1.bf16.msra.mxu0 %v1116
        %1754 = vmatprep.subr.bf16.mxu0 0
        %1755 = vmatpush1.bf16.msra.mxu0 %v1117
        %1756 = vmatprep.subr.bf16.mxu0 0
        %1757 = vmatpush1.bf16.msra.mxu0 %v1118
        %1758 = vmatprep.subr.bf16.mxu0 0
        %1759 = vmatpush1.bf16.msra.mxu0 %v1119
        %1760 = vmatprep.subr.bf16.mxu0 0
        %1761 = vmatpush1.bf16.msra.mxu0 %v1120
        %1762 = vmatprep.subr.bf16.mxu0 0
        %1763 = vmatpush1.bf16.msra.mxu0 %v1121
        %1764 = vmatprep.subr.bf16.mxu0 0
        %1765 = vmatpush1.bf16.msra.mxu0 %v1122
        %1766 = vmatprep.subr.bf16.mxu0 0
        %1767 = vmatpush1.bf16.msra.mxu0 %v1123
        %1768 = vmatprep.subr.bf16.mxu0 0
        %1769 = vmatpush1.bf16.msra.mxu0 %v1124
        %1770 = vmatprep.subr.bf16.mxu0 0
        %1771 = vmatpush1.bf16.msra.mxu0 %v1125
        %1772 = vmatprep.subr.bf16.mxu0 0
        %1773 = vmatpush1.bf16.msra.mxu0 %v1126
        %1774 = vmatprep.mubr.bf16.mxu0 %v1617
        %1775 = vmatmul.mubr.bf16.gmra.mrb[0].mxu0 %v1616
        %v1776 = vpop.f32.mrb[0].mxu0
        %v1777 = vadd.f32 %v1713, %v1776
        %v1778 = vpop.f32.mrb[0].mxu0
        %v1779 = vpop.f32.mrb[0].mxu0
        %v1780 = vadd.f32 %v1716, %v1779
        %v1781 = vpop.f32.mrb[0].mxu0
        %1782 = vmatprep.mubr.bf16.mxu0 %v1625
        %1783 = vmatmul.mubr.bf16.gmra.mrb[0].mxu0 %v1624
        %v1784 = vpop.f32.mrb[0].mxu0
        %v1785 = vadd.f32 %v1721, %v1784
        %v1786 = vpop.f32.mrb[0].mxu0
        %v1787 = vpop.f32.mrb[0].mxu0
        %v1788 = vadd.f32 %v1724, %v1787
        %v1789 = vpop.f32.mrb[0].mxu0
        %1790 = vmatprep.mubr.bf16.mxu0 %v1633
        %1791 = vmatmul.mubr.bf16.gmra.mrb[0].mxu0 %v1632
        %v1792 = vpop.f32.mrb[0].mxu0
        %v1793 = vadd.f32 %v1729, %v1792
        %v1794 = vpop.f32.mrb[0].mxu0
        %v1795 = vpop.f32.mrb[0].mxu0
        %v1796 = vadd.f32 %v1732, %v1795
        %v1797 = vpop.f32.mrb[0].mxu0
        %1798 = vmatprep.mubr.bf16.mxu0 %v1641
        %1799 = vmatmul.mubr.bf16.gmra.mrb[0].mxu0 %v1640
        %v1800 = vpop.f32.mrb[0].mxu0
        %v1801 = vadd.f32 %v1737, %v1800
        %v1802 = vpop.f32.mrb[0].mxu0
        %v1803 = vpop.f32.mrb[0].mxu0
        %v1804 = vpop.f32.mrb[0].mxu0
        %1805 = vdwg.mxu0
        %1806 = vmatprep.subr.bf16.mxu0 0
        %1807 = vmatpush1.bf16.msra.mxu0 %v1127
        %1808 = vmatprep.subr.bf16.mxu0 0
        %1809 = vmatpush1.bf16.msra.mxu0 %v1128
        %1810 = vmatprep.subr.bf16.mxu0 0
        %1811 = vmatpush1.bf16.msra.mxu0 %v1129
        %1812 = vmatprep.subr.bf16.mxu0 0
        %1813 = vmatpush1.bf16.msra.mxu0 %v1130
        %1814 = vmatprep.subr.bf16.mxu0 0
        %1815 = vmatpush1.bf16.msra.mxu0 %v1131
        %1816 = vmatprep.subr.bf16.mxu0 0
        %1817 = vmatpush1.bf16.msra.mxu0 %v1132
        %1818 = vmatprep.subr.bf16.mxu0 0
        %1819 = vmatpush1.bf16.msra.mxu0 %v1133
        %1820 = vmatprep.subr.bf16.mxu0 0
        %1821 = vmatpush1.bf16.msra.mxu0 %v1134
        %1822 = vmatprep.subr.bf16.mxu0 0
        %1823 = vmatpush1.bf16.msra.mxu0 %v1135
        %1824 = vmatprep.subr.bf16.mxu0 0
        %1825 = vmatpush1.bf16.msra.mxu0 %v1136
        %1826 = vmatprep.subr.bf16.mxu0 0
        %1827 = vmatpush1.bf16.msra.mxu0 %v1137
        %1828 = vmatprep.subr.bf16.mxu0 0
        %1829 = vmatpush1.bf16.msra.mxu0 %v1138
        %1830 = vmatprep.subr.bf16.mxu0 0
        %1831 = vmatpush1.bf16.msra.mxu0 %v1139
        %1832 = vmatprep.subr.bf16.mxu0 0
        %1833 = vmatpush1.bf16.msra.mxu0 %v1140
        %1834 = vmatprep.subr.bf16.mxu0 0
        %1835 = vmatpush1.bf16.msra.mxu0 %v1141
        %1836 = vmatprep.subr.bf16.mxu0 0
        %1837 = vmatpush1.bf16.msra.mxu0 %v1142
        %1838 = vmatprep.mubr.bf16.mxu0 %v1619
        %1839 = vmatmul.mubr.bf16.gmra.mrb[0].mxu0 %v1618
        %v1840 = vpop.f32.mrb[0].mxu0
        %v1841 = vadd.f32 %v1777, %v1840
        %v1842 = vpop.f32.mrb[0].mxu0
        %v1843 = vpop.f32.mrb[0].mxu0
        %v1844 = vadd.f32 %v1780, %v1843
        %v1845 = vpop.f32.mrb[0].mxu0
        %1846 = vmatprep.mubr.bf16.mxu0 %v1627
        %1847 = vmatmul.mubr.bf16.gmra.mrb[0].mxu0 %v1626
        %v1848 = vpop.f32.mrb[0].mxu0
        %v1849 = vadd.f32 %v1785, %v1848
        %v1850 = vpop.f32.mrb[0].mxu0
        %v1851 = vpop.f32.mrb[0].mxu0
        %v1852 = vadd.f32 %v1788, %v1851
        %v1853 = vpop.f32.mrb[0].mxu0
        %1854 = vmatprep.mubr.bf16.mxu0 %v1635
        %1855 = vmatmul.mubr.bf16.gmra.mrb[0].mxu0 %v1634
        %v1856 = vpop.f32.mrb[0].mxu0
        %v1857 = vadd.f32 %v1793, %v1856
        %v1858 = vpop.f32.mrb[0].mxu0
        %v1859 = vpop.f32.mrb[0].mxu0
        %v1860 = vadd.f32 %v1796, %v1859
        %v1861 = vpop.f32.mrb[0].mxu0
        %1862 = vmatprep.mubr.bf16.mxu0 %v1643
        %1863 = vmatmul.mubr.bf16.gmra.mrb[0].mxu0 %v1642
        %v1864 = vpop.f32.mrb[0].mxu0
        %v1865 = vadd.f32 %v1801, %v1864
        %v1866 = vpop.f32.mrb[0].mxu0
        %v1867 = vpop.f32.mrb[0].mxu0
        %v1868 = vpop.f32.mrb[0].mxu0
        %1869 = vdwg.mxu0
        %1870 = vmatprep.subr.bf16.mxu0 0
        %1871 = vmatpush1.bf16.msra.mxu0 %v1143
        %1872 = vmatprep.subr.bf16.mxu0 0
        %1873 = vmatpush1.bf16.msra.mxu0 %v1144
        %1874 = vmatprep.subr.bf16.mxu0 0
        %1875 = vmatpush1.bf16.msra.mxu0 %v1145
        %1876 = vmatprep.subr.bf16.mxu0 0
        %1877 = vmatpush1.bf16.msra.mxu0 %v1146
        %1878 = vmatprep.subr.bf16.mxu0 0
        %1879 = vmatpush1.bf16.msra.mxu0 %v1147
        %1880 = vmatprep.subr.bf16.mxu0 0
        %1881 = vmatpush1.bf16.msra.mxu0 %v1148
        %1882 = vmatprep.subr.bf16.mxu0 0
        %1883 = vmatpush1.bf16.msra.mxu0 %v1149
        %1884 = vmatprep.subr.bf16.mxu0 0
        %1885 = vmatpush1.bf16.msra.mxu0 %v1150
        %1886 = vmatprep.subr.bf16.mxu0 0
        %1887 = vmatpush1.bf16.msra.mxu0 %v1151
        %1888 = vmatprep.subr.bf16.mxu0 0
        %1889 = vmatpush1.bf16.msra.mxu0 %v1152
        %1890 = vmatprep.subr.bf16.mxu0 0
        %1891 = vmatpush1.bf16.msra.mxu0 %v1153
        %1892 = vmatprep.subr.bf16.mxu0 0
        %1893 = vmatpush1.bf16.msra.mxu0 %v1154
        %1894 = vmatprep.subr.bf16.mxu0 0
        %1895 = vmatpush1.bf16.msra.mxu0 %v1155
        %1896 = vmatprep.subr.bf16.mxu0 0
        %1897 = vmatpush1.bf16.msra.mxu0 %v1156
        %1898 = vmatprep.subr.bf16.mxu0 0
        %1899 = vmatpush1.bf16.msra.mxu0 %v1157
        %1900 = vmatprep.subr.bf16.mxu0 0
        %1901 = vmatpush1.bf16.msra.mxu0 %v1158
        %1902 = vmatprep.mubr.bf16.mxu0 %v1621
        %1903 = vmatmul.mubr.bf16.gmra.mrb[0].mxu0 %v1620
        %v1904 = vpop.f32.mrb[0].mxu0
        %v1905 = vadd.f32 %v1841, %v1904
        %v1906 = vpop.f32.mrb[0].mxu0
        %v1907 = vpop.f32.mrb[0].mxu0
        %v1908 = vadd.f32 %v1844, %v1907
        %v1909 = vpop.f32.mrb[0].mxu0
        %1910 = vmatprep.mubr.bf16.mxu0 %v1629
        %1911 = vmatmul.mubr.bf16.gmra.mrb[0].mxu0 %v1628
        %v1912 = vpop.f32.mrb[0].mxu0
        %v1913 = vadd.f32 %v1849, %v1912
        %v1914 = vpop.f32.mrb[0].mxu0
        %v1915 = vpop.f32.mrb[0].mxu0
        %v1916 = vadd.f32 %v1852, %v1915
        %v1917 = vpop.f32.mrb[0].mxu0
        %1918 = vmatprep.mubr.bf16.mxu0 %v1637
        %1919 = vmatmul.mubr.bf16.gmra.mrb[0].mxu0 %v1636
        %v1920 = vpop.f32.mrb[0].mxu0
        %v1921 = vadd.f32 %v1857, %v1920
        %v1922 = vpop.f32.mrb[0].mxu0
        %v1923 = vpop.f32.mrb[0].mxu0
        %v1924 = vadd.f32 %v1860, %v1923
        %v1925 = vpop.f32.mrb[0].mxu0
        %1926 = vmatprep.mubr.bf16.mxu0 %v1645
        %1927 = vmatmul.mubr.bf16.gmra.mrb[0].mxu0 %v1644
        %v1928 = vpop.f32.mrb[0].mxu0
        %v1929 = vadd.f32 %v1865, %v1928
        %v1930 = vpop.f32.mrb[0].mxu0
        %v1931 = vpop.f32.mrb[0].mxu0
        %v1932 = vpop.f32.mrb[0].mxu0
        %1933 = vdwg.mxu0
        %v1934 = vadd.f32 %v1494, %v1905
        %v1935 = vadd.f32 %v1495, %v1908
        %v1936 = vadd.f32 %v1496, %v1913
        %v1937 = vadd.f32 %v1497, %v1916
        %v1938 = vadd.f32 %v1498, %v1921
        %v1939 = vadd.f32 %v1499, %v1924
        %v1940 = vadd.f32 %v1500, %v1929
        %1941 = vst [vmem:[%s1493] sm:$0xff] %v1934
        %1942 = vst [vmem:[%s1493 + $0x8] sm:$0xff] %v1935
        %1943 = vst [vmem:[%s1493 + $0x10] sm:$0xff] %v1936
        %1944 = vst [vmem:[%s1493 + $0x18] sm:$0xff] %v1937
        %1945 = vst [vmem:[%s1493 + $0x20] sm:$0xff] %v1938
        %1946 = vst [vmem:[%s1493 + $0x28] sm:$0xff] %v1939
        %1947 = vst [vmem:[%s1493 + $0x30] sm:$0xff] %v1940
        %s1948 = scalar_lea.vmem [#allocation2], 112
        %v1949 = vld [vmem:[%s1948] sm:$0xff]
        %v1950 = vld [vmem:[%s1948 + $0x8] sm:$0xff]
        %v1951 = vld [vmem:[%s1948 + $0x10] sm:$0xff]
        %v1952 = vld [vmem:[%s1948 + $0x18] sm:$0xff]
        %v1953 = vld [vmem:[%s1948 + $0x20] sm:$0xff]
        %v1954 = vld [vmem:[%s1948 + $0x28] sm:$0xff]
        %v1955 = vld [vmem:[%s1948 + $0x30] sm:$0xff]
        %s1956 = scalar_lea.vmem %s437, 448 [#allocation3]
        %v1957 = vld [vmem:[%s1956] sm:$0xff]
        %v1958 = vld [vmem:[%s1956 + $0x8] sm:$0xff]
        %v1959 = vld [vmem:[%s1956 + $0x10] sm:$0xff]
        %v1960 = vld [vmem:[%s1956 + $0x18] sm:$0xff]
        %v1961 = vld [vmem:[%s1956 + $0x20] sm:$0xff]
        %v1962 = vld [vmem:[%s1956 + $0x28] sm:$0xff]
        %v1963 = vld [vmem:[%s1956 + $0x30] sm:$0xff]
        %v1964 = vld [vmem:[%s1956 + $0x38] sm:$0xff]
        %v1965 = vld [vmem:[%s1956 + $0x40] sm:$0xff]
        %v1966 = vld [vmem:[%s1956 + $0x48] sm:$0xff]
        %v1967 = vld [vmem:[%s1956 + $0x50] sm:$0xff]
        %v1968 = vld [vmem:[%s1956 + $0x58] sm:$0xff]
        %v1969 = vld [vmem:[%s1956 + $0x60] sm:$0xff]
        %v1970 = vld [vmem:[%s1956 + $0x68] sm:$0xff]
        %v1971 = vld [vmem:[%s1956 + $0x70] sm:$0xff]
        %v1972 = vld [vmem:[%s1956 + $0x78] sm:$0xff]
        %v1973 = vld [vmem:[%s1956 + $0x80] sm:$0xff]
        %v1974 = vld [vmem:[%s1956 + $0x88] sm:$0xff]
        %v1975 = vld [vmem:[%s1956 + $0x90] sm:$0xff]
        %v1976 = vld [vmem:[%s1956 + $0x98] sm:$0xff]
        %v1977 = vld [vmem:[%s1956 + $0xa0] sm:$0xff]
        %v1978 = vld [vmem:[%s1956 + $0xa8] sm:$0xff]
        %v1979 = vld [vmem:[%s1956 + $0xb0] sm:$0xff]
        %v1980 = vld [vmem:[%s1956 + $0xb8] sm:$0xff]
        %v1981 = vld [vmem:[%s1956 + $0xc0] sm:$0xff]
        %v1982 = vld [vmem:[%s1956 + $0xc8] sm:$0xff]
        %v1983 = vld [vmem:[%s1956 + $0xd0] sm:$0xff]
        %v1984 = vld [vmem:[%s1956 + $0xd8] sm:$0xff]
        %v2013 = vunpack.c.l.b16 %v1957
        %v2014 = vunpack.c.h.b16 %v1957
        %v2015 = vunpack.c.l.b16 %v1958
        %v2016 = vunpack.c.h.b16 %v1958
        %v2017 = vunpack.c.l.b16 %v1959
        %v2018 = vunpack.c.h.b16 %v1959
        %v2019 = vunpack.c.l.b16 %v1960
        %v2020 = vunpack.c.h.b16 %v1960
        %v2021 = vunpack.c.l.b16 %v1961
        %v2022 = vunpack.c.h.b16 %v1961
        %v2023 = vunpack.c.l.b16 %v1962
        %v2024 = vunpack.c.h.b16 %v1962
        %v2025 = vunpack.c.l.b16 %v1963
        %v2026 = vunpack.c.h.b16 %v1963
        %v2027 = vunpack.c.l.b16 %v1964
        %v2028 = vunpack.c.h.b16 %v1964
        %v2029 = vunpack.c.l.b16 %v1965
        %v2030 = vunpack.c.h.b16 %v1965
        %v2031 = vunpack.c.l.b16 %v1966
        %v2032 = vunpack.c.h.b16 %v1966
        %v2033 = vunpack.c.l.b16 %v1967
        %v2034 = vunpack.c.h.b16 %v1967
        %v2035 = vunpack.c.l.b16 %v1968
        %v2036 = vunpack.c.h.b16 %v1968
        %v2037 = vunpack.c.l.b16 %v1969
        %v2038 = vunpack.c.h.b16 %v1969
        %v2039 = vunpack.c.l.b16 %v1970
        %v2040 = vunpack.c.h.b16 %v1970
        %v2041 = vunpack.c.l.b16 %v1971
        %v2042 = vunpack.c.h.b16 %v1971
        %v2043 = vunpack.c.l.b16 %v1972
        %v2044 = vunpack.c.h.b16 %v1972
        %v2045 = vunpack.c.l.b16 %v1973
        %v2046 = vunpack.c.h.b16 %v1973
        %v2047 = vunpack.c.l.b16 %v1974
        %v2048 = vunpack.c.h.b16 %v1974
        %v2049 = vunpack.c.l.b16 %v1975
        %v2050 = vunpack.c.h.b16 %v1975
        %v2051 = vunpack.c.l.b16 %v1976
        %v2052 = vunpack.c.h.b16 %v1976
        %v2053 = vunpack.c.l.b16 %v1977
        %v2054 = vunpack.c.h.b16 %v1977
        %v2055 = vunpack.c.l.b16 %v1978
        %v2056 = vunpack.c.h.b16 %v1978
        %v2057 = vunpack.c.l.b16 %v1979
        %v2058 = vunpack.c.h.b16 %v1979
        %v2059 = vunpack.c.l.b16 %v1980
        %v2060 = vunpack.c.h.b16 %v1980
        %v2061 = vunpack.c.l.b16 %v1981
        %v2062 = vunpack.c.h.b16 %v1981
        %v2063 = vunpack.c.l.b16 %v1982
        %v2064 = vunpack.c.h.b16 %v1982
        %v2065 = vunpack.c.l.b16 %v1983
        %v2066 = vunpack.c.h.b16 %v1983
        %v2067 = vunpack.c.l.b16 %v1984
        %v2068 = vunpack.c.h.b16 %v1984
        %v2069 = vpack.c.b16 %v2021, %v2013
        %v2070 = vpack.c.b16 %v2022, %v2014
        %v2071 = vpack.c.b16 %v2023, %v2015
        %v2072 = vpack.c.b16 %v2024, %v2016
        %v2073 = vpack.c.b16 %v2025, %v2017
        %v2074 = vpack.c.b16 %v2026, %v2018
        %v2075 = vpack.c.b16 %v2027, %v2019
        %v2076 = vpack.c.b16 %v2028, %v2020
        %v2077 = vpack.c.b16 %v2037, %v2029
        %v2078 = vpack.c.b16 %v2038, %v2030
        %v2079 = vpack.c.b16 %v2039, %v2031
        %v2080 = vpack.c.b16 %v2040, %v2032
        %v2081 = vpack.c.b16 %v2041, %v2033
        %v2082 = vpack.c.b16 %v2042, %v2034
        %v2083 = vpack.c.b16 %v2043, %v2035
        %v2084 = vpack.c.b16 %v2044, %v2036
        %v2085 = vpack.c.b16 %v2053, %v2045
        %v2086 = vpack.c.b16 %v2054, %v2046
        %v2087 = vpack.c.b16 %v2055, %v2047
        %v2088 = vpack.c.b16 %v2056, %v2048
        %v2089 = vpack.c.b16 %v2057, %v2049
        %v2090 = vpack.c.b16 %v2058, %v2050
        %v2091 = vpack.c.b16 %v2059, %v2051
        %v2092 = vpack.c.b16 %v2060, %v2052
        %v2093 = vpack.c.b16 %v2061, %v2061
        %v2094 = vpack.c.b16 %v2062, %v2062
        %v2095 = vpack.c.b16 %v2063, %v2063
        %v2096 = vpack.c.b16 %v2064, %v2064
        %v2097 = vpack.c.b16 %v2065, %v2065
        %v2098 = vpack.c.b16 %v2066, %v2066
        %v2099 = vpack.c.b16 %v2067, %v2067
        %v2100 = vpack.c.b16 %v2068, %v2068
        %2133 = vmatprep.subr.bf16.mxu0 0
        %2134 = vmatpush1.bf16.msra.mxu0 %v1095
        %2135 = vmatprep.subr.bf16.mxu0 0
        %2136 = vmatpush1.bf16.msra.mxu0 %v1096
        %2137 = vmatprep.subr.bf16.mxu0 0
        %2138 = vmatpush1.bf16.msra.mxu0 %v1097
        %2139 = vmatprep.subr.bf16.mxu0 0
        %2140 = vmatpush1.bf16.msra.mxu0 %v1098
        %2141 = vmatprep.subr.bf16.mxu0 0
        %2142 = vmatpush1.bf16.msra.mxu0 %v1099
        %2143 = vmatprep.subr.bf16.mxu0 0
        %2144 = vmatpush1.bf16.msra.mxu0 %v1100
        %2145 = vmatprep.subr.bf16.mxu0 0
        %2146 = vmatpush1.bf16.msra.mxu0 %v1101
        %2147 = vmatprep.subr.bf16.mxu0 0
        %2148 = vmatpush1.bf16.msra.mxu0 %v1102
        %2149 = vmatprep.subr.bf16.mxu0 0
        %2150 = vmatpush1.bf16.msra.mxu0 %v1103
        %2151 = vmatprep.subr.bf16.mxu0 0
        %2152 = vmatpush1.bf16.msra.mxu0 %v1104
        %2153 = vmatprep.subr.bf16.mxu0 0
        %2154 = vmatpush1.bf16.msra.mxu0 %v1105
        %2155 = vmatprep.subr.bf16.mxu0 0
        %2156 = vmatpush1.bf16.msra.mxu0 %v1106
        %2157 = vmatprep.subr.bf16.mxu0 0
        %2158 = vmatpush1.bf16.msra.mxu0 %v1107
        %2159 = vmatprep.subr.bf16.mxu0 0
        %2160 = vmatpush1.bf16.msra.mxu0 %v1108
        %2161 = vmatprep.subr.bf16.mxu0 0
        %2162 = vmatpush1.bf16.msra.mxu0 %v1109
        %2163 = vmatprep.subr.bf16.mxu0 0
        %2164 = vmatpush1.bf16.msra.mxu0 %v1110
        %2165 = vmatprep.mubr.bf16.mxu0 %v2070
        %2166 = vmatmul.mubr.bf16.gmra.mrb[0].mxu0 %v2069
        %v2167 = vpop.f32.mrb[0].mxu0
        %v2168 = vadd.f32 0.0, %v2167
        %v2169 = vpop.f32.mrb[0].mxu0
        %v2170 = vpop.f32.mrb[0].mxu0
        %v2171 = vadd.f32 0.0, %v2170
        %v2172 = vpop.f32.mrb[0].mxu0
        %2173 = vmatprep.mubr.bf16.mxu0 %v2078
        %2174 = vmatmul.mubr.bf16.gmra.mrb[0].mxu0 %v2077
        %v2175 = vpop.f32.mrb[0].mxu0
        %v2176 = vadd.f32 0.0, %v2175
        %v2177 = vpop.f32.mrb[0].mxu0
        %v2178 = vpop.f32.mrb[0].mxu0
        %v2179 = vadd.f32 0.0, %v2178
        %v2180 = vpop.f32.mrb[0].mxu0
        %2181 = vmatprep.mubr.bf16.mxu0 %v2086
        %2182 = vmatmul.mubr.bf16.gmra.mrb[0].mxu0 %v2085
        %v2183 = vpop.f32.mrb[0].mxu0
        %v2184 = vadd.f32 0.0, %v2183
        %v2185 = vpop.f32.mrb[0].mxu0
        %v2186 = vpop.f32.mrb[0].mxu0
        %v2187 = vadd.f32 0.0, %v2186
        %v2188 = vpop.f32.mrb[0].mxu0
        %2189 = vmatprep.mubr.bf16.mxu0 %v2094
        %2190 = vmatmul.mubr.bf16.gmra.mrb[0].mxu0 %v2093
        %v2191 = vpop.f32.mrb[0].mxu0
        %v2192 = vadd.f32 0.0, %v2191
        %v2193 = vpop.f32.mrb[0].mxu0
        %v2194 = vpop.f32.mrb[0].mxu0
        %v2195 = vpop.f32.mrb[0].mxu0
        %2196 = vdwg.mxu0
        %2197 = vmatprep.subr.bf16.mxu0 0
        %2198 = vmatpush1.bf16.msra.mxu0 %v1111
        %2199 = vmatprep.subr.bf16.mxu0 0
        %2200 = vmatpush1.bf16.msra.mxu0 %v1112
        %2201 = vmatprep.subr.bf16.mxu0 0
        %2202 = vmatpush1.bf16.msra.mxu0 %v1113
        %2203 = vmatprep.subr.bf16.mxu0 0
        %2204 = vmatpush1.bf16.msra.mxu0 %v1114
        %2205 = vmatprep.subr.bf16.mxu0 0
        %2206 = vmatpush1.bf16.msra.mxu0 %v1115
        %2207 = vmatprep.subr.bf16.mxu0 0
        %2208 = vmatpush1.bf16.msra.mxu0 %v1116
        %2209 = vmatprep.subr.bf16.mxu0 0
        %2210 = vmatpush1.bf16.msra.mxu0 %v1117
        %2211 = vmatprep.subr.bf16.mxu0 0
        %2212 = vmatpush1.bf16.msra.mxu0 %v1118
        %2213 = vmatprep.subr.bf16.mxu0 0
        %2214 = vmatpush1.bf16.msra.mxu0 %v1119
        %2215 = vmatprep.subr.bf16.mxu0 0
        %2216 = vmatpush1.bf16.msra.mxu0 %v1120
        %2217 = vmatprep.subr.bf16.mxu0 0
        %2218 = vmatpush1.bf16.msra.mxu0 %v1121
        %2219 = vmatprep.subr.bf16.mxu0 0
        %2220 = vmatpush1.bf16.msra.mxu0 %v1122
        %2221 = vmatprep.subr.bf16.mxu0 0
        %2222 = vmatpush1.bf16.msra.mxu0 %v1123
        %2223 = vmatprep.subr.bf16.mxu0 0
        %2224 = vmatpush1.bf16.msra.mxu0 %v1124
        %2225 = vmatprep.subr.bf16.mxu0 0
        %2226 = vmatpush1.bf16.msra.mxu0 %v1125
        %2227 = vmatprep.subr.bf16.mxu0 0
        %2228 = vmatpush1.bf16.msra.mxu0 %v1126
        %2229 = vmatprep.mubr.bf16.mxu0 %v2072
        %2230 = vmatmul.mubr.bf16.gmra.mrb[0].mxu0 %v2071
        %v2231 = vpop.f32.mrb[0].mxu0
        %v2232 = vadd.f32 %v2168, %v2231
        %v2233 = vpop.f32.mrb[0].mxu0
        %v2234 = vpop.f32.mrb[0].mxu0
        %v2235 = vadd.f32 %v2171, %v2234
        %v2236 = vpop.f32.mrb[0].mxu0
        %2237 = vmatprep.mubr.bf16.mxu0 %v2080
        %2238 = vmatmul.mubr.bf16.gmra.mrb[0].mxu0 %v2079
        %v2239 = vpop.f32.mrb[0].mxu0
        %v2240 = vadd.f32 %v2176, %v2239
        %v2241 = vpop.f32.mrb[0].mxu0
        %v2242 = vpop.f32.mrb[0].mxu0
        %v2243 = vadd.f32 %v2179, %v2242
        %v2244 = vpop.f32.mrb[0].mxu0
        %2245 = vmatprep.mubr.bf16.mxu0 %v2088
        %2246 = vmatmul.mubr.bf16.gmra.mrb[0].mxu0 %v2087
        %v2247 = vpop.f32.mrb[0].mxu0
        %v2248 = vadd.f32 %v2184, %v2247
        %v2249 = vpop.f32.mrb[0].mxu0
        %v2250 = vpop.f32.mrb[0].mxu0
        %v2251 = vadd.f32 %v2187, %v2250
        %v2252 = vpop.f32.mrb[0].mxu0
        %2253 = vmatprep.mubr.bf16.mxu0 %v2096
        %2254 = vmatmul.mubr.bf16.gmra.mrb[0].mxu0 %v2095
        %v2255 = vpop.f32.mrb[0].mxu0
        %v2256 = vadd.f32 %v2192, %v2255
        %v2257 = vpop.f32.mrb[0].mxu0
        %v2258 = vpop.f32.mrb[0].mxu0
        %v2259 = vpop.f32.mrb[0].mxu0
        %2260 = vdwg.mxu0
        %2261 = vmatprep.subr.bf16.mxu0 0
        %2262 = vmatpush1.bf16.msra.mxu0 %v1127
        %2263 = vmatprep.subr.bf16.mxu0 0
        %2264 = vmatpush1.bf16.msra.mxu0 %v1128
        %2265 = vmatprep.subr.bf16.mxu0 0
        %2266 = vmatpush1.bf16.msra.mxu0 %v1129
        %2267 = vmatprep.subr.bf16.mxu0 0
        %2268 = vmatpush1.bf16.msra.mxu0 %v1130
        %2269 = vmatprep.subr.bf16.mxu0 0
        %2270 = vmatpush1.bf16.msra.mxu0 %v1131
        %2271 = vmatprep.subr.bf16.mxu0 0
        %2272 = vmatpush1.bf16.msra.mxu0 %v1132
        %2273 = vmatprep.subr.bf16.mxu0 0
        %2274 = vmatpush1.bf16.msra.mxu0 %v1133
        %2275 = vmatprep.subr.bf16.mxu0 0
        %2276 = vmatpush1.bf16.msra.mxu0 %v1134
        %2277 = vmatprep.subr.bf16.mxu0 0
        %2278 = vmatpush1.bf16.msra.mxu0 %v1135
        %2279 = vmatprep.subr.bf16.mxu0 0
        %2280 = vmatpush1.bf16.msra.mxu0 %v1136
        %2281 = vmatprep.subr.bf16.mxu0 0
        %2282 = vmatpush1.bf16.msra.mxu0 %v1137
        %2283 = vmatprep.subr.bf16.mxu0 0
        %2284 = vmatpush1.bf16.msra.mxu0 %v1138
        %2285 = vmatprep.subr.bf16.mxu0 0
        %2286 = vmatpush1.bf16.msra.mxu0 %v1139
        %2287 = vmatprep.subr.bf16.mxu0 0
        %2288 = vmatpush1.bf16.msra.mxu0 %v1140
        %2289 = vmatprep.subr.bf16.mxu0 0
        %2290 = vmatpush1.bf16.msra.mxu0 %v1141
        %2291 = vmatprep.subr.bf16.mxu0 0
        %2292 = vmatpush1.bf16.msra.mxu0 %v1142
        %2293 = vmatprep.mubr.bf16.mxu0 %v2074
        %2294 = vmatmul.mubr.bf16.gmra.mrb[0].mxu0 %v2073
        %v2295 = vpop.f32.mrb[0].mxu0
        %v2296 = vadd.f32 %v2232, %v2295
        %v2297 = vpop.f32.mrb[0].mxu0
        %v2298 = vpop.f32.mrb[0].mxu0
        %v2299 = vadd.f32 %v2235, %v2298
        %v2300 = vpop.f32.mrb[0].mxu0
        %2301 = vmatprep.mubr.bf16.mxu0 %v2082
        %2302 = vmatmul.mubr.bf16.gmra.mrb[0].mxu0 %v2081
        %v2303 = vpop.f32.mrb[0].mxu0
        %v2304 = vadd.f32 %v2240, %v2303
        %v2305 = vpop.f32.mrb[0].mxu0
        %v2306 = vpop.f32.mrb[0].mxu0
        %v2307 = vadd.f32 %v2243, %v2306
        %v2308 = vpop.f32.mrb[0].mxu0
        %2309 = vmatprep.mubr.bf16.mxu0 %v2090
        %2310 = vmatmul.mubr.bf16.gmra.mrb[0].mxu0 %v2089
        %v2311 = vpop.f32.mrb[0].mxu0
        %v2312 = vadd.f32 %v2248, %v2311
        %v2313 = vpop.f32.mrb[0].mxu0
        %v2314 = vpop.f32.mrb[0].mxu0
        %v2315 = vadd.f32 %v2251, %v2314
        %v2316 = vpop.f32.mrb[0].mxu0
        %2317 = vmatprep.mubr.bf16.mxu0 %v2098
        %2318 = vmatmul.mubr.bf16.gmra.mrb[0].mxu0 %v2097
        %v2319 = vpop.f32.mrb[0].mxu0
        %v2320 = vadd.f32 %v2256, %v2319
        %v2321 = vpop.f32.mrb[0].mxu0
        %v2322 = vpop.f32.mrb[0].mxu0
        %v2323 = vpop.f32.mrb[0].mxu0
        %2324 = vdwg.mxu0
        %2325 = vmatprep.subr.bf16.mxu0 0
        %2326 = vmatpush1.bf16.msra.mxu0 %v1143
        %2327 = vmatprep.subr.bf16.mxu0 0
        %2328 = vmatpush1.bf16.msra.mxu0 %v1144
        %2329 = vmatprep.subr.bf16.mxu0 0
        %2330 = vmatpush1.bf16.msra.mxu0 %v1145
        %2331 = vmatprep.subr.bf16.mxu0 0
        %2332 = vmatpush1.bf16.msra.mxu0 %v1146
        %2333 = vmatprep.subr.bf16.mxu0 0
        %2334 = vmatpush1.bf16.msra.mxu0 %v1147
        %2335 = vmatprep.subr.bf16.mxu0 0
        %2336 = vmatpush1.bf16.msra.mxu0 %v1148
        %2337 = vmatprep.subr.bf16.mxu0 0
        %2338 = vmatpush1.bf16.msra.mxu0 %v1149
        %2339 = vmatprep.subr.bf16.mxu0 0
        %2340 = vmatpush1.bf16.msra.mxu0 %v1150
        %2341 = vmatprep.subr.bf16.mxu0 0
        %2342 = vmatpush1.bf16.msra.mxu0 %v1151
        %2343 = vmatprep.subr.bf16.mxu0 0
        %2344 = vmatpush1.bf16.msra.mxu0 %v1152
        %2345 = vmatprep.subr.bf16.mxu0 0
        %2346 = vmatpush1.bf16.msra.mxu0 %v1153
        %2347 = vmatprep.subr.bf16.mxu0 0
        %2348 = vmatpush1.bf16.msra.mxu0 %v1154
        %2349 = vmatprep.subr.bf16.mxu0 0
        %2350 = vmatpush1.bf16.msra.mxu0 %v1155
        %2351 = vmatprep.subr.bf16.mxu0 0
        %2352 = vmatpush1.bf16.msra.mxu0 %v1156
        %2353 = vmatprep.subr.bf16.mxu0 0
        %2354 = vmatpush1.bf16.msra.mxu0 %v1157
        %2355 = vmatprep.subr.bf16.mxu0 0
        %2356 = vmatpush1.bf16.msra.mxu0 %v1158
        %2357 = vmatprep.mubr.bf16.mxu0 %v2076
        %2358 = vmatmul.mubr.bf16.gmra.mrb[0].mxu0 %v2075
        %v2359 = vpop.f32.mrb[0].mxu0
        %v2360 = vadd.f32 %v2296, %v2359
        %v2361 = vpop.f32.mrb[0].mxu0
        %v2362 = vpop.f32.mrb[0].mxu0
        %v2363 = vadd.f32 %v2299, %v2362
        %v2364 = vpop.f32.mrb[0].mxu0
        %2365 = vmatprep.mubr.bf16.mxu0 %v2084
        %2366 = vmatmul.mubr.bf16.gmra.mrb[0].mxu0 %v2083
        %v2367 = vpop.f32.mrb[0].mxu0
        %v2368 = vadd.f32 %v2304, %v2367
        %v2369 = vpop.f32.mrb[0].mxu0
        %v2370 = vpop.f32.mrb[0].mxu0
        %v2371 = vadd.f32 %v2307, %v2370
        %v2372 = vpop.f32.mrb[0].mxu0
        %2373 = vmatprep.mubr.bf16.mxu0 %v2092
        %2374 = vmatmul.mubr.bf16.gmra.mrb[0].mxu0 %v2091
        %v2375 = vpop.f32.mrb[0].mxu0
        %v2376 = vadd.f32 %v2312, %v2375
        %v2377 = vpop.f32.mrb[0].mxu0
        %v2378 = vpop.f32.mrb[0].mxu0
        %v2379 = vadd.f32 %v2315, %v2378
        %v2380 = vpop.f32.mrb[0].mxu0
        %2381 = vmatprep.mubr.bf16.mxu0 %v2100
        %2382 = vmatmul.mubr.bf16.gmra.mrb[0].mxu0 %v2099
        %v2383 = vpop.f32.mrb[0].mxu0
        %v2384 = vadd.f32 %v2320, %v2383
        %v2385 = vpop.f32.mrb[0].mxu0
        %v2386 = vpop.f32.mrb[0].mxu0
        %v2387 = vpop.f32.mrb[0].mxu0
        %2388 = vdwg.mxu0
        %v2389 = vadd.f32 %v1949, %v2360
        %v2390 = vadd.f32 %v1950, %v2363
        %v2391 = vadd.f32 %v1951, %v2368
        %v2392 = vadd.f32 %v1952, %v2371
        %v2393 = vadd.f32 %v1953, %v2376
        %v2394 = vadd.f32 %v1954, %v2379
        %v2395 = vadd.f32 %v1955, %v2384
        %2396 = vst [vmem:[%s1948] sm:$0xff] %v2389
        %2397 = vst [vmem:[%s1948 + $0x8] sm:$0xff] %v2390
        %2398 = vst [vmem:[%s1948 + $0x10] sm:$0xff] %v2391
        %2399 = vst [vmem:[%s1948 + $0x18] sm:$0xff] %v2392
        %2400 = vst [vmem:[%s1948 + $0x20] sm:$0xff] %v2393
        %2401 = vst [vmem:[%s1948 + $0x28] sm:$0xff] %v2394
        %2402 = vst [vmem:[%s1948 + $0x30] sm:$0xff] %v2395
        %s2403 = scalar_lea.vmem [#allocation2], 168
        %v2404 = vld [vmem:[%s2403] sm:$0xff]
        %v2405 = vld [vmem:[%s2403 + $0x8] sm:$0xff]
        %v2406 = vld [vmem:[%s2403 + $0x10] sm:$0xff]
        %v2407 = vld [vmem:[%s2403 + $0x18] sm:$0xff]
        %v2408 = vld [vmem:[%s2403 + $0x20] sm:$0xff]
        %v2409 = vld [vmem:[%s2403 + $0x28] sm:$0xff]
        %v2410 = vld [vmem:[%s2403 + $0x30] sm:$0xff]
        %s2411 = scalar_lea.vmem %s437, 672 [#allocation3]
        %v2412 = vld [vmem:[%s2411] sm:$0xff]
        %v2413 = vld [vmem:[%s2411 + $0x8] sm:$0xff]
        %v2414 = vld [vmem:[%s2411 + $0x10] sm:$0xff]
        %v2415 = vld [vmem:[%s2411 + $0x18] sm:$0xff]
        %v2416 = vld [vmem:[%s2411 + $0x20] sm:$0xff]
        %v2417 = vld [vmem:[%s2411 + $0x28] sm:$0xff]
        %v2418 = vld [vmem:[%s2411 + $0x30] sm:$0xff]
        %v2419 = vld [vmem:[%s2411 + $0x38] sm:$0xff]
        %v2420 = vld [vmem:[%s2411 + $0x40] sm:$0xff]
        %v2421 = vld [vmem:[%s2411 + $0x48] sm:$0xff]
        %v2422 = vld [vmem:[%s2411 + $0x50] sm:$0xff]
        %v2423 = vld [vmem:[%s2411 + $0x58] sm:$0xff]
        %v2424 = vld [vmem:[%s2411 + $0x60] sm:$0xff]
        %v2425 = vld [vmem:[%s2411 + $0x68] sm:$0xff]
        %v2426 = vld [vmem:[%s2411 + $0x70] sm:$0xff]
        %v2427 = vld [vmem:[%s2411 + $0x78] sm:$0xff]
        %v2428 = vld [vmem:[%s2411 + $0x80] sm:$0xff]
        %v2429 = vld [vmem:[%s2411 + $0x88] sm:$0xff]
        %v2430 = vld [vmem:[%s2411 + $0x90] sm:$0xff]
        %v2431 = vld [vmem:[%s2411 + $0x98] sm:$0xff]
        %v2432 = vld [vmem:[%s2411 + $0xa0] sm:$0xff]
        %v2433 = vld [vmem:[%s2411 + $0xa8] sm:$0xff]
        %v2434 = vld [vmem:[%s2411 + $0xb0] sm:$0xff]
        %v2435 = vld [vmem:[%s2411 + $0xb8] sm:$0xff]
        %v2436 = vld [vmem:[%s2411 + $0xc0] sm:$0xff]
        %v2437 = vld [vmem:[%s2411 + $0xc8] sm:$0xff]
        %v2438 = vld [vmem:[%s2411 + $0xd0] sm:$0xff]
        %v2439 = vld [vmem:[%s2411 + $0xd8] sm:$0xff]
        %v2468 = vunpack.c.l.b16 %v2412
        %v2469 = vunpack.c.h.b16 %v2412
        %v2470 = vunpack.c.l.b16 %v2413
        %v2471 = vunpack.c.h.b16 %v2413
        %v2472 = vunpack.c.l.b16 %v2414
        %v2473 = vunpack.c.h.b16 %v2414
        %v2474 = vunpack.c.l.b16 %v2415
        %v2475 = vunpack.c.h.b16 %v2415
        %v2476 = vunpack.c.l.b16 %v2416
        %v2477 = vunpack.c.h.b16 %v2416
        %v2478 = vunpack.c.l.b16 %v2417
        %v2479 = vunpack.c.h.b16 %v2417
        %v2480 = vunpack.c.l.b16 %v2418
        %v2481 = vunpack.c.h.b16 %v2418
        %v2482 = vunpack.c.l.b16 %v2419
        %v2483 = vunpack.c.h.b16 %v2419
        %v2484 = vunpack.c.l.b16 %v2420
        %v2485 = vunpack.c.h.b16 %v2420
        %v2486 = vunpack.c.l.b16 %v2421
        %v2487 = vunpack.c.h.b16 %v2421
        %v2488 = vunpack.c.l.b16 %v2422
        %v2489 = vunpack.c.h.b16 %v2422
        %v2490 = vunpack.c.l.b16 %v2423
        %v2491 = vunpack.c.h.b16 %v2423
        %v2492 = vunpack.c.l.b16 %v2424
        %v2493 = vunpack.c.h.b16 %v2424
        %v2494 = vunpack.c.l.b16 %v2425
        %v2495 = vunpack.c.h.b16 %v2425
        %v2496 = vunpack.c.l.b16 %v2426
        %v2497 = vunpack.c.h.b16 %v2426
        %v2498 = vunpack.c.l.b16 %v2427
        %v2499 = vunpack.c.h.b16 %v2427
        %v2500 = vunpack.c.l.b16 %v2428
        %v2501 = vunpack.c.h.b16 %v2428
        %v2502 = vunpack.c.l.b16 %v2429
        %v2503 = vunpack.c.h.b16 %v2429
        %v2504 = vunpack.c.l.b16 %v2430
        %v2505 = vunpack.c.h.b16 %v2430
        %v2506 = vunpack.c.l.b16 %v2431
        %v2507 = vunpack.c.h.b16 %v2431
        %v2508 = vunpack.c.l.b16 %v2432
        %v2509 = vunpack.c.h.b16 %v2432
        %v2510 = vunpack.c.l.b16 %v2433
        %v2511 = vunpack.c.h.b16 %v2433
        %v2512 = vunpack.c.l.b16 %v2434
        %v2513 = vunpack.c.h.b16 %v2434
        %v2514 = vunpack.c.l.b16 %v2435
        %v2515 = vunpack.c.h.b16 %v2435
        %v2516 = vunpack.c.l.b16 %v2436
        %v2517 = vunpack.c.h.b16 %v2436
        %v2518 = vunpack.c.l.b16 %v2437
        %v2519 = vunpack.c.h.b16 %v2437
        %v2520 = vunpack.c.l.b16 %v2438
        %v2521 = vunpack.c.h.b16 %v2438
        %v2522 = vunpack.c.l.b16 %v2439
        %v2523 = vunpack.c.h.b16 %v2439
        %v2524 = vpack.c.b16 %v2476, %v2468
        %v2525 = vpack.c.b16 %v2477, %v2469
        %v2526 = vpack.c.b16 %v2478, %v2470
        %v2527 = vpack.c.b16 %v2479, %v2471
        %v2528 = vpack.c.b16 %v2480, %v2472
        %v2529 = vpack.c.b16 %v2481, %v2473
        %v2530 = vpack.c.b16 %v2482, %v2474
        %v2531 = vpack.c.b16 %v2483, %v2475
        %v2532 = vpack.c.b16 %v2492, %v2484
        %v2533 = vpack.c.b16 %v2493, %v2485
        %v2534 = vpack.c.b16 %v2494, %v2486
        %v2535 = vpack.c.b16 %v2495, %v2487
        %v2536 = vpack.c.b16 %v2496, %v2488
        %v2537 = vpack.c.b16 %v2497, %v2489
        %v2538 = vpack.c.b16 %v2498, %v2490
        %v2539 = vpack.c.b16 %v2499, %v2491
        %v2540 = vpack.c.b16 %v2508, %v2500
        %v2541 = vpack.c.b16 %v2509, %v2501
        %v2542 = vpack.c.b16 %v2510, %v2502
        %v2543 = vpack.c.b16 %v2511, %v2503
        %v2544 = vpack.c.b16 %v2512, %v2504
        %v2545 = vpack.c.b16 %v2513, %v2505
        %v2546 = vpack.c.b16 %v2514, %v2506
        %v2547 = vpack.c.b16 %v2515, %v2507
        %v2548 = vpack.c.b16 %v2516, %v2516
        %v2549 = vpack.c.b16 %v2517, %v2517
        %v2550 = vpack.c.b16 %v2518, %v2518
        %v2551 = vpack.c.b16 %v2519, %v2519
        %v2552 = vpack.c.b16 %v2520, %v2520
        %v2553 = vpack.c.b16 %v2521, %v2521
        %v2554 = vpack.c.b16 %v2522, %v2522
        %v2555 = vpack.c.b16 %v2523, %v2523
        %2588 = vmatprep.subr.bf16.mxu0 0
        %2589 = vmatpush1.bf16.msra.mxu0 %v1095
        %2590 = vmatprep.subr.bf16.mxu0 0
        %2591 = vmatpush1.bf16.msra.mxu0 %v1096
        %2592 = vmatprep.subr.bf16.mxu0 0
        %2593 = vmatpush1.bf16.msra.mxu0 %v1097
        %2594 = vmatprep.subr.bf16.mxu0 0
        %2595 = vmatpush1.bf16.msra.mxu0 %v1098
        %2596 = vmatprep.subr.bf16.mxu0 0
        %2597 = vmatpush1.bf16.msra.mxu0 %v1099
        %2598 = vmatprep.subr.bf16.mxu0 0
        %2599 = vmatpush1.bf16.msra.mxu0 %v1100
        %2600 = vmatprep.subr.bf16.mxu0 0
        %2601 = vmatpush1.bf16.msra.mxu0 %v1101
        %2602 = vmatprep.subr.bf16.mxu0 0
        %2603 = vmatpush1.bf16.msra.mxu0 %v1102
        %2604 = vmatprep.subr.bf16.mxu0 0
        %2605 = vmatpush1.bf16.msra.mxu0 %v1103
        %2606 = vmatprep.subr.bf16.mxu0 0
        %2607 = vmatpush1.bf16.msra.mxu0 %v1104
        %2608 = vmatprep.subr.bf16.mxu0 0
        %2609 = vmatpush1.bf16.msra.mxu0 %v1105
        %2610 = vmatprep.subr.bf16.mxu0 0
        %2611 = vmatpush1.bf16.msra.mxu0 %v1106
        %2612 = vmatprep.subr.bf16.mxu0 0
        %2613 = vmatpush1.bf16.msra.mxu0 %v1107
        %2614 = vmatprep.subr.bf16.mxu0 0
        %2615 = vmatpush1.bf16.msra.mxu0 %v1108
        %2616 = vmatprep.subr.bf16.mxu0 0
        %2617 = vmatpush1.bf16.msra.mxu0 %v1109
        %2618 = vmatprep.subr.bf16.mxu0 0
        %2619 = vmatpush1.bf16.msra.mxu0 %v1110
        %2620 = vmatprep.mubr.bf16.mxu0 %v2525
        %2621 = vmatmul.mubr.bf16.gmra.mrb[0].mxu0 %v2524
        %v2622 = vpop.f32.mrb[0].mxu0
        %v2623 = vadd.f32 0.0, %v2622
        %v2624 = vpop.f32.mrb[0].mxu0
        %v2625 = vpop.f32.mrb[0].mxu0
        %v2626 = vadd.f32 0.0, %v2625
        %v2627 = vpop.f32.mrb[0].mxu0
        %2628 = vmatprep.mubr.bf16.mxu0 %v2533
        %2629 = vmatmul.mubr.bf16.gmra.mrb[0].mxu0 %v2532
        %v2630 = vpop.f32.mrb[0].mxu0
        %v2631 = vadd.f32 0.0, %v2630
        %v2632 = vpop.f32.mrb[0].mxu0
        %v2633 = vpop.f32.mrb[0].mxu0
        %v2634 = vadd.f32 0.0, %v2633
        %v2635 = vpop.f32.mrb[0].mxu0
        %2636 = vmatprep.mubr.bf16.mxu0 %v2541
        %2637 = vmatmul.mubr.bf16.gmra.mrb[0].mxu0 %v2540
        %v2638 = vpop.f32.mrb[0].mxu0
        %v2639 = vadd.f32 0.0, %v2638
        %v2640 = vpop.f32.mrb[0].mxu0
        %v2641 = vpop.f32.mrb[0].mxu0
        %v2642 = vadd.f32 0.0, %v2641
        %v2643 = vpop.f32.mrb[0].mxu0
        %2644 = vmatprep.mubr.bf16.mxu0 %v2549
        %2645 = vmatmul.mubr.bf16.gmra.mrb[0].mxu0 %v2548
        %v2646 = vpop.f32.mrb[0].mxu0
        %v2647 = vadd.f32 0.0, %v2646
        %v2648 = vpop.f32.mrb[0].mxu0
        %v2649 = vpop.f32.mrb[0].mxu0
        %v2650 = vpop.f32.mrb[0].mxu0
        %2651 = vdwg.mxu0
        %2652 = vmatprep.subr.bf16.mxu0 0
        %2653 = vmatpush1.bf16.msra.mxu0 %v1111
        %2654 = vmatprep.subr.bf16.mxu0 0
        %2655 = vmatpush1.bf16.msra.mxu0 %v1112
        %2656 = vmatprep.subr.bf16.mxu0 0
        %2657 = vmatpush1.bf16.msra.mxu0 %v1113
        %2658 = vmatprep.subr.bf16.mxu0 0
        %2659 = vmatpush1.bf16.msra.mxu0 %v1114
        %2660 = vmatprep.subr.bf16.mxu0 0
        %2661 = vmatpush1.bf16.msra.mxu0 %v1115
        %2662 = vmatprep.subr.bf16.mxu0 0
        %2663 = vmatpush1.bf16.msra.mxu0 %v1116
        %2664 = vmatprep.subr.bf16.mxu0 0
        %2665 = vmatpush1.bf16.msra.mxu0 %v1117
        %2666 = vmatprep.subr.bf16.mxu0 0
        %2667 = vmatpush1.bf16.msra.mxu0 %v1118
        %2668 = vmatprep.subr.bf16.mxu0 0
        %2669 = vmatpush1.bf16.msra.mxu0 %v1119
        %2670 = vmatprep.subr.bf16.mxu0 0
        %2671 = vmatpush1.bf16.msra.mxu0 %v1120
        %2672 = vmatprep.subr.bf16.mxu0 0
        %2673 = vmatpush1.bf16.msra.mxu0 %v1121
        %2674 = vmatprep.subr.bf16.mxu0 0
        %2675 = vmatpush1.bf16.msra.mxu0 %v1122
        %2676 = vmatprep.subr.bf16.mxu0 0
        %2677 = vmatpush1.bf16.msra.mxu0 %v1123
        %2678 = vmatprep.subr.bf16.mxu0 0
        %2679 = vmatpush1.bf16.msra.mxu0 %v1124
        %2680 = vmatprep.subr.bf16.mxu0 0
        %2681 = vmatpush1.bf16.msra.mxu0 %v1125
        %2682 = vmatprep.subr.bf16.mxu0 0
        %2683 = vmatpush1.bf16.msra.mxu0 %v1126
        %2684 = vmatprep.mubr.bf16.mxu0 %v2527
        %2685 = vmatmul.mubr.bf16.gmra.mrb[0].mxu0 %v2526
        %v2686 = vpop.f32.mrb[0].mxu0
        %v2687 = vadd.f32 %v2623, %v2686
        %v2688 = vpop.f32.mrb[0].mxu0
        %v2689 = vpop.f32.mrb[0].mxu0
        %v2690 = vadd.f32 %v2626, %v2689
        %v2691 = vpop.f32.mrb[0].mxu0
        %2692 = vmatprep.mubr.bf16.mxu0 %v2535
        %2693 = vmatmul.mubr.bf16.gmra.mrb[0].mxu0 %v2534
        %v2694 = vpop.f32.mrb[0].mxu0
        %v2695 = vadd.f32 %v2631, %v2694
        %v2696 = vpop.f32.mrb[0].mxu0
        %v2697 = vpop.f32.mrb[0].mxu0
        %v2698 = vadd.f32 %v2634, %v2697
        %v2699 = vpop.f32.mrb[0].mxu0
        %2700 = vmatprep.mubr.bf16.mxu0 %v2543
        %2701 = vmatmul.mubr.bf16.gmra.mrb[0].mxu0 %v2542
        %v2702 = vpop.f32.mrb[0].mxu0
        %v2703 = vadd.f32 %v2639, %v2702
        %v2704 = vpop.f32.mrb[0].mxu0
        %v2705 = vpop.f32.mrb[0].mxu0
        %v2706 = vadd.f32 %v2642, %v2705
        %v2707 = vpop.f32.mrb[0].mxu0
        %2708 = vmatprep.mubr.bf16.mxu0 %v2551
        %2709 = vmatmul.mubr.bf16.gmra.mrb[0].mxu0 %v2550
        %v2710 = vpop.f32.mrb[0].mxu0
        %v2711 = vadd.f32 %v2647, %v2710
        %v2712 = vpop.f32.mrb[0].mxu0
        %v2713 = vpop.f32.mrb[0].mxu0
        %v2714 = vpop.f32.mrb[0].mxu0
        %2715 = vdwg.mxu0
        %2716 = vmatprep.subr.bf16.mxu0 0
        %2717 = vmatpush1.bf16.msra.mxu0 %v1127
        %2718 = vmatprep.subr.bf16.mxu0 0
        %2719 = vmatpush1.bf16.msra.mxu0 %v1128
        %2720 = vmatprep.subr.bf16.mxu0 0
        %2721 = vmatpush1.bf16.msra.mxu0 %v1129
        %2722 = vmatprep.subr.bf16.mxu0 0
        %2723 = vmatpush1.bf16.msra.mxu0 %v1130
        %2724 = vmatprep.subr.bf16.mxu0 0
        %2725 = vmatpush1.bf16.msra.mxu0 %v1131
        %2726 = vmatprep.subr.bf16.mxu0 0
        %2727 = vmatpush1.bf16.msra.mxu0 %v1132
        %2728 = vmatprep.subr.bf16.mxu0 0
        %2729 = vmatpush1.bf16.msra.mxu0 %v1133
        %2730 = vmatprep.subr.bf16.mxu0 0
        %2731 = vmatpush1.bf16.msra.mxu0 %v1134
        %2732 = vmatprep.subr.bf16.mxu0 0
        %2733 = vmatpush1.bf16.msra.mxu0 %v1135
        %2734 = vmatprep.subr.bf16.mxu0 0
        %2735 = vmatpush1.bf16.msra.mxu0 %v1136
        %2736 = vmatprep.subr.bf16.mxu0 0
        %2737 = vmatpush1.bf16.msra.mxu0 %v1137
        %2738 = vmatprep.subr.bf16.mxu0 0
        %2739 = vmatpush1.bf16.msra.mxu0 %v1138
        %2740 = vmatprep.subr.bf16.mxu0 0
        %2741 = vmatpush1.bf16.msra.mxu0 %v1139
        %2742 = vmatprep.subr.bf16.mxu0 0
        %2743 = vmatpush1.bf16.msra.mxu0 %v1140
        %2744 = vmatprep.subr.bf16.mxu0 0
        %2745 = vmatpush1.bf16.msra.mxu0 %v1141
        %2746 = vmatprep.subr.bf16.mxu0 0
        %2747 = vmatpush1.bf16.msra.mxu0 %v1142
        %2748 = vmatprep.mubr.bf16.mxu0 %v2529
        %2749 = vmatmul.mubr.bf16.gmra.mrb[0].mxu0 %v2528
        %v2750 = vpop.f32.mrb[0].mxu0
        %v2751 = vadd.f32 %v2687, %v2750
        %v2752 = vpop.f32.mrb[0].mxu0
        %v2753 = vpop.f32.mrb[0].mxu0
        %v2754 = vadd.f32 %v2690, %v2753
        %v2755 = vpop.f32.mrb[0].mxu0
        %2756 = vmatprep.mubr.bf16.mxu0 %v2537
        %2757 = vmatmul.mubr.bf16.gmra.mrb[0].mxu0 %v2536
        %v2758 = vpop.f32.mrb[0].mxu0
        %v2759 = vadd.f32 %v2695, %v2758
        %v2760 = vpop.f32.mrb[0].mxu0
        %v2761 = vpop.f32.mrb[0].mxu0
        %v2762 = vadd.f32 %v2698, %v2761
        %v2763 = vpop.f32.mrb[0].mxu0
        %2764 = vmatprep.mubr.bf16.mxu0 %v2545
        %2765 = vmatmul.mubr.bf16.gmra.mrb[0].mxu0 %v2544
        %v2766 = vpop.f32.mrb[0].mxu0
        %v2767 = vadd.f32 %v2703, %v2766
        %v2768 = vpop.f32.mrb[0].mxu0
        %v2769 = vpop.f32.mrb[0].mxu0
        %v2770 = vadd.f32 %v2706, %v2769
        %v2771 = vpop.f32.mrb[0].mxu0
        %2772 = vmatprep.mubr.bf16.mxu0 %v2553
        %2773 = vmatmul.mubr.bf16.gmra.mrb[0].mxu0 %v2552
        %v2774 = vpop.f32.mrb[0].mxu0
        %v2775 = vadd.f32 %v2711, %v2774
        %v2776 = vpop.f32.mrb[0].mxu0
        %v2777 = vpop.f32.mrb[0].mxu0
        %v2778 = vpop.f32.mrb[0].mxu0
        %2779 = vdwg.mxu0
        %2780 = vmatprep.subr.bf16.mxu0 0
        %2781 = vmatpush1.bf16.msra.mxu0 %v1143
        %2782 = vmatprep.subr.bf16.mxu0 0
        %2783 = vmatpush1.bf16.msra.mxu0 %v1144
        %2784 = vmatprep.subr.bf16.mxu0 0
        %2785 = vmatpush1.bf16.msra.mxu0 %v1145
        %2786 = vmatprep.subr.bf16.mxu0 0
        %2787 = vmatpush1.bf16.msra.mxu0 %v1146
        %2788 = vmatprep.subr.bf16.mxu0 0
        %2789 = vmatpush1.bf16.msra.mxu0 %v1147
        %2790 = vmatprep.subr.bf16.mxu0 0
        %2791 = vmatpush1.bf16.msra.mxu0 %v1148
        %2792 = vmatprep.subr.bf16.mxu0 0
        %2793 = vmatpush1.bf16.msra.mxu0 %v1149
        %2794 = vmatprep.subr.bf16.mxu0 0
        %2795 = vmatpush1.bf16.msra.mxu0 %v1150
        %2796 = vmatprep.subr.bf16.mxu0 0
        %2797 = vmatpush1.bf16.msra.mxu0 %v1151
        %2798 = vmatprep.subr.bf16.mxu0 0
        %2799 = vmatpush1.bf16.msra.mxu0 %v1152
        %2800 = vmatprep.subr.bf16.mxu0 0
        %2801 = vmatpush1.bf16.msra.mxu0 %v1153
        %2802 = vmatprep.subr.bf16.mxu0 0
        %2803 = vmatpush1.bf16.msra.mxu0 %v1154
        %2804 = vmatprep.subr.bf16.mxu0 0
        %2805 = vmatpush1.bf16.msra.mxu0 %v1155
        %2806 = vmatprep.subr.bf16.mxu0 0
        %2807 = vmatpush1.bf16.msra.mxu0 %v1156
        %2808 = vmatprep.subr.bf16.mxu0 0
        %2809 = vmatpush1.bf16.msra.mxu0 %v1157
        %2810 = vmatprep.subr.bf16.mxu0 0
        %2811 = vmatpush1.bf16.msra.mxu0 %v1158
        %2812 = vmatprep.mubr.bf16.mxu0 %v2531
        %2813 = vmatmul.mubr.bf16.gmra.mrb[0].mxu0 %v2530
        %v2814 = vpop.f32.mrb[0].mxu0
        %v2815 = vadd.f32 %v2751, %v2814
        %v2816 = vpop.f32.mrb[0].mxu0
        %v2817 = vpop.f32.mrb[0].mxu0
        %v2818 = vadd.f32 %v2754, %v2817
        %v2819 = vpop.f32.mrb[0].mxu0
        %2820 = vmatprep.mubr.bf16.mxu0 %v2539
        %2821 = vmatmul.mubr.bf16.gmra.mrb[0].mxu0 %v2538
        %v2822 = vpop.f32.mrb[0].mxu0
        %v2823 = vadd.f32 %v2759, %v2822
        %v2824 = vpop.f32.mrb[0].mxu0
        %v2825 = vpop.f32.mrb[0].mxu0
        %v2826 = vadd.f32 %v2762, %v2825
        %v2827 = vpop.f32.mrb[0].mxu0
        %2828 = vmatprep.mubr.bf16.mxu0 %v2547
        %2829 = vmatmul.mubr.bf16.gmra.mrb[0].mxu0 %v2546
        %v2830 = vpop.f32.mrb[0].mxu0
        %v2831 = vadd.f32 %v2767, %v2830
        %v2832 = vpop.f32.mrb[0].mxu0
        %v2833 = vpop.f32.mrb[0].mxu0
        %v2834 = vadd.f32 %v2770, %v2833
        %v2835 = vpop.f32.mrb[0].mxu0
        %2836 = vmatprep.mubr.bf16.mxu0 %v2555
        %2837 = vmatmul.mubr.bf16.gmra.mrb[0].mxu0 %v2554
        %v2838 = vpop.f32.mrb[0].mxu0
        %v2839 = vadd.f32 %v2775, %v2838
        %v2840 = vpop.f32.mrb[0].mxu0
        %v2841 = vpop.f32.mrb[0].mxu0
        %v2842 = vpop.f32.mrb[0].mxu0
        %2843 = vdwg.mxu0
        %v2844 = vadd.f32 %v2404, %v2815
        %v2845 = vadd.f32 %v2405, %v2818
        %v2846 = vadd.f32 %v2406, %v2823
        %v2847 = vadd.f32 %v2407, %v2826
        %v2848 = vadd.f32 %v2408, %v2831
        %v2849 = vadd.f32 %v2409, %v2834
        %v2850 = vadd.f32 %v2410, %v2839
        %2851 = vst [vmem:[%s2403] sm:$0xff] %v2844
        %2852 = vst [vmem:[%s2403 + $0x8] sm:$0xff] %v2845
        %2853 = vst [vmem:[%s2403 + $0x10] sm:$0xff] %v2846
        %2854 = vst [vmem:[%s2403 + $0x18] sm:$0xff] %v2847
        %2855 = vst [vmem:[%s2403 + $0x20] sm:$0xff] %v2848
        %2856 = vst [vmem:[%s2403 + $0x28] sm:$0xff] %v2849
        %2857 = vst [vmem:[%s2403 + $0x30] sm:$0xff] %v2850
        %p2858 = scmp.eq.s32.totalorder %s21, 1
        // Predicated region
        $region60: #{convnetvis_forward.5} parent=50 // pred_check
          %p2859 = pneg %p2858
        $region61: #{convnetvis_forward.5} parent=50 // pred_check_branch
          %2861 = sbr.rel (%p2859) target = $region63
        $region62: #{convnetvis_forward.5} parent=50 // pred_region
          %v2862 = vld [vmem:[#allocation2] sm:$0xff]
          %v2863 = vld [vmem:[#allocation2 + $0x8] sm:$0xff]
          %v2864 = vld [vmem:[#allocation2 + $0x10] sm:$0xff]
          %v2865 = vld [vmem:[#allocation2 + $0x18] sm:$0xff]
          %v2866 = vld [vmem:[#allocation2 + $0x20] sm:$0xff]
          %v2867 = vld [vmem:[#allocation2 + $0x28] sm:$0xff]
          %v2868 = vld [vmem:[#allocation2 + $0x30] sm:$0xff]
          %v2869 = vld [vmem:[%s1493] sm:$0xff]
          %v2870 = vld [vmem:[%s1493 + $0x8] sm:$0xff]
          %v2871 = vld [vmem:[%s1493 + $0x10] sm:$0xff]
          %v2872 = vld [vmem:[%s1493 + $0x18] sm:$0xff]
          %v2873 = vld [vmem:[%s1493 + $0x20] sm:$0xff]
          %v2874 = vld [vmem:[%s1493 + $0x28] sm:$0xff]
          %v2875 = vld [vmem:[%s1493 + $0x30] sm:$0xff]
          %v2876 = vmax.f32 %v2862, %v2869
          %v2877 = vmax.f32 %v2863, %v2870
          %v2878 = vmax.f32 %v2864, %v2871
          %v2879 = vmax.f32 %v2865, %v2872
          %v2880 = vmax.f32 %v2866, %v2873
          %v2881 = vmax.f32 %v2867, %v2874
          %v2882 = vmax.f32 %v2868, %v2875
          %v2883 = vld [vmem:[%s1948] sm:$0xff]
          %v2884 = vld [vmem:[%s1948 + $0x8] sm:$0xff]
          %v2885 = vld [vmem:[%s1948 + $0x10] sm:$0xff]
          %v2886 = vld [vmem:[%s1948 + $0x18] sm:$0xff]
          %v2887 = vld [vmem:[%s1948 + $0x20] sm:$0xff]
          %v2888 = vld [vmem:[%s1948 + $0x28] sm:$0xff]
          %v2889 = vld [vmem:[%s1948 + $0x30] sm:$0xff]
          %v2890 = vld [vmem:[%s2403] sm:$0xff]
          %v2891 = vld [vmem:[%s2403 + $0x8] sm:$0xff]
          %v2892 = vld [vmem:[%s2403 + $0x10] sm:$0xff]
          %v2893 = vld [vmem:[%s2403 + $0x18] sm:$0xff]
          %v2894 = vld [vmem:[%s2403 + $0x20] sm:$0xff]
          %v2895 = vld [vmem:[%s2403 + $0x28] sm:$0xff]
          %v2896 = vld [vmem:[%s2403 + $0x30] sm:$0xff]
          %v2897 = vmax.f32 %v2883, %v2890
          %v2898 = vmax.f32 %v2884, %v2891
          %v2899 = vmax.f32 %v2885, %v2892
          %v2900 = vmax.f32 %v2886, %v2893
          %v2901 = vmax.f32 %v2887, %v2894
          %v2902 = vmax.f32 %v2888, %v2895
          %v2903 = vmax.f32 %v2889, %v2896
          %v2904 = vmax.f32 %v2876, %v2897
          %v2905 = vmax.f32 %v2877, %v2898
          %v2906 = vmax.f32 %v2878, %v2899
          %v2907 = vmax.f32 %v2879, %v2900
          %v2908 = vmax.f32 %v2880, %v2901
          %v2909 = vmax.f32 %v2881, %v2902
          %v2910 = vmax.f32 %v2882, %v2903
          %v2911 = vld [vmem:[%s485] sm:$0x1]
          %v2913 = vlaneseq
          %v2914 = vshrl.u32 %v2913, 7
          %v2915 = vsub.s32 0, %v2914
          %v2916 = vrot.slane %v2911, %v2915
          %v2918 = vadd.f32 %v2904, %v2916
          %v2919 = vadd.f32 %v2905, %v2916
          %v2920 = vadd.f32 %v2906, %v2916
          %v2921 = vadd.f32 %v2907, %v2916
          %v2922 = vadd.f32 %v2908, %v2916
          %v2923 = vadd.f32 %v2909, %v2916
          %v2924 = vadd.f32 %v2910, %v2916
          %v2925 = vmax.f32 %v2918, 0.0
          %v2926 = vmax.f32 %v2919, 0.0
          %v2927 = vmax.f32 %v2920, 0.0
          %v2928 = vmax.f32 %v2921, 0.0
          %v2929 = vmax.f32 %v2922, 0.0
          %v2930 = vmax.f32 %v2923, 0.0
          %v2931 = vmax.f32 %v2924, 0.0
          %v2932 = vpack.c.bf16 %v2926, %v2925
          %v2933 = vpack.c.bf16 %v2928, %v2927
          %v2934 = vpack.c.bf16 %v2930, %v2929
          %v2935 = vpack.c.bf16 %v2931, %v2931
          %v2940 = vunpack.c.l.b16 %v2932
          %v2941 = vunpack.c.h.b16 %v2932
          %v2942 = vunpack.c.l.b16 %v2933
          %v2943 = vunpack.c.h.b16 %v2933
          %v2944 = vunpack.c.l.b16 %v2934
          %v2945 = vunpack.c.h.b16 %v2934
          %v2946 = vunpack.c.l.b16 %v2935
          %v2947 = vpack.c.b16 %v2940, %v2940
          %v2948 = vpack.c.b16 %v2941, %v2941
          %v2949 = vpack.c.b16 %v2942, %v2942
          %v2950 = vpack.c.b16 %v2943, %v2943
          %v2951 = vpack.c.b16 %v2944, %v2944
          %v2952 = vpack.c.b16 %v2945, %v2945
          %v2953 = vpack.c.b16 %v2946, %v2946
          %2961 = vst [vmem:[%s493] sm:$0xf] %v2947
          %2962 = vst [vmem:[%s493 + $0x4] sm:$0xf] %v2948
          %2963 = vst [vmem:[%s493 + $0x8] sm:$0xf] %v2949
          %2964 = vst [vmem:[%s493 + $0xc] sm:$0xf] %v2950
          %2965 = vst [vmem:[%s493 + $0x10] sm:$0xf] %v2951
          %2966 = vst [vmem:[%s493 + $0x14] sm:$0xf] %v2952
          %2967 = vst [vmem:[%s493 + $0x18] sm:$0xf] %v2953
        $region63: #{convnetvis_forward.5} parent=50 // pred_fallthru
          _
        %s2968 = smul.u32 7, %s19
        %p2969 = scmp.lt.s32.totalorder %s2968, 6
        %s2970 = scalar_select %p2969, %s2968, 6
        %p2971 = scmp.lt.s32.totalorder %s20, 0
        %s2972 = scalar_select %p2971, %s20, 0
        %s2973 = sadd.s32 %s2972, %s2970
        %s2974 = smul.addr %s2973, 4
        %s2975 = scalar_lea.vmem %s3, %s2974
        // Predicated region
        $region64: #{convnetvis_forward.5} parent=50 // pred_check
          %p2976 = pneg %p135
        $region65: #{convnetvis_forward.5} parent=50 // pred_check_branch
          %2978 = sbr.rel (%p2976) target = $region67
        $region66: #{convnetvis_forward.5} parent=50 // pred_region
          %s2979 = smul.u32 7, %s19
        $region67: #{convnetvis_forward.5} parent=50 // pred_fallthru
          _
        // Predicated region
        $region68: #{convnetvis_forward.5} parent=50 // pred_check
          %p2980 = pneg %p135
        $region69: #{convnetvis_forward.5} parent=50 // pred_check_branch
          %2982 = sbr.rel (%p2980) target = $region71
        $region70: #{convnetvis_forward.5} parent=50 // pred_region
          %s2983 = smul.u32 7, %s19
          %p2984 = scmp.lt.s32.totalorder %s2983, 6
          %s2985 = scalar_select %p2984, %s2983, 6
          %p2986 = scmp.lt.s32.totalorder %s20, 0
          %s2987 = scalar_select %p2986, %s20, 0
          %s2988 = sadd.s32 %s2987, %s2985
          %s2989 = smul.addr %s2988, 4
          %s2990 = scalar_lea.vmem %s3, %s2989
        $region71: #{convnetvis_forward.5} parent=50 // pred_fallthru
          _
      $region51: #{convnetvis_forward.5} parent=5 // pred_fallthru
        _
      %p2991 = scmp.le.s32.totalorder 2, %s9
      // Predicated region
      $region72: #{convnetvis_forward.5} parent=5 // pred_check
        %p2992 = pneg %p2991
      $region73: #{convnetvis_forward.5} parent=5 // pred_check_branch
        %2994 = sbr.rel (%p2992) target = $region75
      $region74: #{convnetvis_forward.5} parent=5 // pred_region
        %s2995 = ssub.s32 %s9, 2
      $region75: #{convnetvis_forward.5} parent=5 // pred_fallthru
        _
    $region6: #{convnetvis_forward.5} parent=1 // loop_footer
      %s13 = sadd.s32 1, %s9
    $region7: #{convnetvis_forward.5} parent=1 // loop_footer_branch
      %8 = sbr.rel target = $region3
    $region8: #{convnetvis_forward.5} parent=1 // loop_exit
      _

// kernel: convnetvis_forward.7
$region0: #{convnetvis_forward.7}
  #allocation0 [shape = 'u32[]', space=smem, size = 0x4, offset = 0x4, fixed_abs, tag = 'smem constant byte address 0x4 - core index']
  #allocation1 [shape = 'u32[144,128]{1,0:T(1,128)}', space=vmem, size = 0x12000, scoped, tag = 'internal scratch']
  %s0 = inlined_call_operand.vmem [shape: f32[8,1024], index: 0, kind: input, shape index: {}]
  %s1 = inlined_call_operand.vmem [shape: f32[1024,2], index: 1, kind: input, shape index: {}]
  %s2 = inlined_call_operand.vmem [shape: f32[1,2], index: 2, kind: input, shape index: {}]
  %s3 = inlined_call_operand.vmem [shape: f32[2,10], index: 3, kind: input, shape index: {}]
  %s4 = inlined_call_operand.vmem [shape: f32[1,10], index: 4, kind: input, shape index: {}]
  %s5 = inlined_call_operand.vmem [shape: f32[2,128], index: 5, kind: input, shape index: {}]
  %s6 = inlined_call_operand.vmem [shape: f32[1,128], index: 6, kind: input, shape index: {}]
  %s7 = inlined_call_operand.vmem [shape: f32[8,10], index: 7, kind: output, shape index: {0}]
  %s8 = inlined_call_operand.hbm [shape: f32[8,128], index: 8, kind: output, shape index: {1}]
  %s9 = inlined_call_operand.hbm [shape: f32[8,2], index: 9, kind: output, shape index: {2}]
  %10 = xla_tuple %s7, %s8, %s9
  %s11 = sld [smem:[#allocation0]]
  $region54: #{convnetvis_forward.7} parent=0
    _
  %s13 = ssub.s32 1, %s11
  %s14 = scalar_select 0, %s13, %s11
  $region1: #{convnetvis_forward.7} parent=0
    #allocation2 [shape = 'u8[4096]{0}', space=vmem, size = 0x1000, scoped, tag = 'output window, operand 1, single buffered']
    #allocation3 [shape = 's32[1]{0}', space=sflag, size = 0x4, scoped, tag = 'scoped memory for convnetvis_forward.7']
    #allocation4 [shape = 'u8[4096]{0}', space=vmem, size = 0x1000, scoped, tag = 'output window, operand 2, single buffered']
    #allocation5 [shape = 's32[1]{0}', space=sflag, size = 0x4, scoped, tag = 'scoped memory for convnetvis_forward.7']
    %15 = vsyncpa [#allocation3], 0
    %16 = vsyncpa [#allocation5], 0
    // Predicated region
    $region2: #{convnetvis_forward.7} parent=1 // pred_check
      _
    $region3: #{convnetvis_forward.7} parent=1 // pred_check_branch
      %18 = sbr.rel (0) target = $region5
    $region4: #{convnetvis_forward.7} parent=1 // pred_region
      _
    $region5: #{convnetvis_forward.7} parent=1 // pred_fallthru
      _
    // Predicated region
    $region6: #{convnetvis_forward.7} parent=1 // pred_check
      _
    $region7: #{convnetvis_forward.7} parent=1 // pred_check_branch
      %20 = sbr.rel (0) target = $region9
    $region8: #{convnetvis_forward.7} parent=1 // pred_region
      _
    $region9: #{convnetvis_forward.7} parent=1 // pred_fallthru
      _
    // Predicated region
    $region10: #{convnetvis_forward.7} parent=1 // pred_check
      _
    $region11: #{convnetvis_forward.7} parent=1 // pred_check_branch
      %22 = sbr.rel (0) target = $region13
    $region12: #{convnetvis_forward.7} parent=1 // pred_region
      _
    $region13: #{convnetvis_forward.7} parent=1 // pred_fallthru
      _
    // Predicated region
    $region14: #{convnetvis_forward.7} parent=1 // pred_check
      _
    $region15: #{convnetvis_forward.7} parent=1 // pred_check_branch
      %24 = sbr.rel (0) target = $region17
    $region16: #{convnetvis_forward.7} parent=1 // pred_region
      _
    $region17: #{convnetvis_forward.7} parent=1 // pred_fallthru
      _
    // Predicated region
    $region18: #{convnetvis_forward.7} parent=1 // pred_check
      _
    $region19: #{convnetvis_forward.7} parent=1 // pred_check_branch
      %26 = sbr.rel (0) target = $region21
    $region20: #{convnetvis_forward.7} parent=1 // pred_region
      _
    $region21: #{convnetvis_forward.7} parent=1 // pred_fallthru
      _
    // Predicated region
    $region22: #{convnetvis_forward.7} parent=1 // pred_check
      _
    $region23: #{convnetvis_forward.7} parent=1 // pred_check_branch
      %28 = sbr.rel (0) target = $region25
    $region24: #{convnetvis_forward.7} parent=1 // pred_region
      _
    $region25: #{convnetvis_forward.7} parent=1 // pred_fallthru
      _
    // Predicated region
    $region26: #{convnetvis_forward.7} parent=1 // pred_check
      _
    $region27: #{convnetvis_forward.7} parent=1 // pred_check_branch
      %30 = sbr.rel (0) target = $region29
    $region28: #{convnetvis_forward.7} parent=1 // pred_region
      _
    $region29: #{convnetvis_forward.7} parent=1 // pred_fallthru
      _
    %v31 = vld [vmem:[%s0] sm:$0xff]
    %v32 = vld [vmem:[%s0 + $0x8] sm:$0xff]
    %v33 = vld [vmem:[%s0 + $0x10] sm:$0xff]
    %v34 = vld [vmem:[%s0 + $0x18] sm:$0xff]
    %v35 = vld [vmem:[%s0 + $0x20] sm:$0xff]
    %v36 = vld [vmem:[%s0 + $0x28] sm:$0xff]
    %v37 = vld [vmem:[%s0 + $0x30] sm:$0xff]
    %v38 = vld [vmem:[%s0 + $0x38] sm:$0xff]
    %v39 = vld [vmem:[%s1] sm:$0xff]
    %v40 = vld [vmem:[%s1 + $0x8] sm:$0xff]
    %v41 = vld [vmem:[%s1 + $0x10] sm:$0xff]
    %v42 = vld [vmem:[%s1 + $0x18] sm:$0xff]
    %v43 = vld [vmem:[%s1 + $0x20] sm:$0xff]
    %v44 = vld [vmem:[%s1 + $0x28] sm:$0xff]
    %v45 = vld [vmem:[%s1 + $0x30] sm:$0xff]
    %v46 = vld [vmem:[%s1 + $0x38] sm:$0xff]
    %v47 = vld [vmem:[%s1 + $0x40] sm:$0xff]
    %v48 = vld [vmem:[%s1 + $0x48] sm:$0xff]
    %v49 = vld [vmem:[%s1 + $0x50] sm:$0xff]
    %v50 = vld [vmem:[%s1 + $0x58] sm:$0xff]
    %v51 = vld [vmem:[%s1 + $0x60] sm:$0xff]
    %v52 = vld [vmem:[%s1 + $0x68] sm:$0xff]
    %v53 = vld [vmem:[%s1 + $0x70] sm:$0xff]
    %v54 = vld [vmem:[%s1 + $0x78] sm:$0xff]
    %v55 = vld [vmem:[%s1 + $0x80] sm:$0xff]
    %v56 = vld [vmem:[%s1 + $0x88] sm:$0xff]
    %v57 = vld [vmem:[%s1 + $0x90] sm:$0xff]
    %v58 = vld [vmem:[%s1 + $0x98] sm:$0xff]
    %v59 = vld [vmem:[%s1 + $0xa0] sm:$0xff]
    %v60 = vld [vmem:[%s1 + $0xa8] sm:$0xff]
    %v61 = vld [vmem:[%s1 + $0xb0] sm:$0xff]
    %v62 = vld [vmem:[%s1 + $0xb8] sm:$0xff]
    %v63 = vld [vmem:[%s1 + $0xc0] sm:$0xff]
    %v64 = vld [vmem:[%s1 + $0xc8] sm:$0xff]
    %v65 = vld [vmem:[%s1 + $0xd0] sm:$0xff]
    %v66 = vld [vmem:[%s1 + $0xd8] sm:$0xff]
    %v67 = vld [vmem:[%s1 + $0xe0] sm:$0xff]
    %v68 = vld [vmem:[%s1 + $0xe8] sm:$0xff]
    %v69 = vld [vmem:[%s1 + $0xf0] sm:$0xff]
    %v70 = vld [vmem:[%s1 + $0xf8] sm:$0xff]
    %v71 = vld [vmem:[%s1 + $0x100] sm:$0xff]
    %v72 = vld [vmem:[%s1 + $0x108] sm:$0xff]
    %v73 = vld [vmem:[%s1 + $0x110] sm:$0xff]
    %v74 = vld [vmem:[%s1 + $0x118] sm:$0xff]
    %v75 = vld [vmem:[%s1 + $0x120] sm:$0xff]
    %v76 = vld [vmem:[%s1 + $0x128] sm:$0xff]
    %v77 = vld [vmem:[%s1 + $0x130] sm:$0xff]
    %v78 = vld [vmem:[%s1 + $0x138] sm:$0xff]
    %v79 = vld [vmem:[%s1 + $0x140] sm:$0xff]
    %v80 = vld [vmem:[%s1 + $0x148] sm:$0xff]
    %v81 = vld [vmem:[%s1 + $0x150] sm:$0xff]
    %v82 = vld [vmem:[%s1 + $0x158] sm:$0xff]
    %v83 = vld [vmem:[%s1 + $0x160] sm:$0xff]
    %v84 = vld [vmem:[%s1 + $0x168] sm:$0xff]
    %v85 = vld [vmem:[%s1 + $0x170] sm:$0xff]
    %v86 = vld [vmem:[%s1 + $0x178] sm:$0xff]
    %v87 = vld [vmem:[%s1 + $0x180] sm:$0xff]
    %v88 = vld [vmem:[%s1 + $0x188] sm:$0xff]
    %v89 = vld [vmem:[%s1 + $0x190] sm:$0xff]
    %v90 = vld [vmem:[%s1 + $0x198] sm:$0xff]
    %v91 = vld [vmem:[%s1 + $0x1a0] sm:$0xff]
    %v92 = vld [vmem:[%s1 + $0x1a8] sm:$0xff]
    %v93 = vld [vmem:[%s1 + $0x1b0] sm:$0xff]
    %v94 = vld [vmem:[%s1 + $0x1b8] sm:$0xff]
    %v95 = vld [vmem:[%s1 + $0x1c0] sm:$0xff]
    %v96 = vld [vmem:[%s1 + $0x1c8] sm:$0xff]
    %v97 = vld [vmem:[%s1 + $0x1d0] sm:$0xff]
    %v98 = vld [vmem:[%s1 + $0x1d8] sm:$0xff]
    %v99 = vld [vmem:[%s1 + $0x1e0] sm:$0xff]
    %v100 = vld [vmem:[%s1 + $0x1e8] sm:$0xff]
    %v101 = vld [vmem:[%s1 + $0x1f0] sm:$0xff]
    %v102 = vld [vmem:[%s1 + $0x1f8] sm:$0xff]
    %v103 = vld [vmem:[%s1 + $0x200] sm:$0xff]
    %v104 = vld [vmem:[%s1 + $0x208] sm:$0xff]
    %v105 = vld [vmem:[%s1 + $0x210] sm:$0xff]
    %v106 = vld [vmem:[%s1 + $0x218] sm:$0xff]
    %v107 = vld [vmem:[%s1 + $0x220] sm:$0xff]
    %v108 = vld [vmem:[%s1 + $0x228] sm:$0xff]
    %v109 = vld [vmem:[%s1 + $0x230] sm:$0xff]
    %v110 = vld [vmem:[%s1 + $0x238] sm:$0xff]
    %v111 = vld [vmem:[%s1 + $0x240] sm:$0xff]
    %v112 = vld [vmem:[%s1 + $0x248] sm:$0xff]
    %v113 = vld [vmem:[%s1 + $0x250] sm:$0xff]
    %v114 = vld [vmem:[%s1 + $0x258] sm:$0xff]
    %v115 = vld [vmem:[%s1 + $0x260] sm:$0xff]
    %v116 = vld [vmem:[%s1 + $0x268] sm:$0xff]
    %v117 = vld [vmem:[%s1 + $0x270] sm:$0xff]
    %v118 = vld [vmem:[%s1 + $0x278] sm:$0xff]
    %v119 = vld [vmem:[%s1 + $0x280] sm:$0xff]
    %v120 = vld [vmem:[%s1 + $0x288] sm:$0xff]
    %v121 = vld [vmem:[%s1 + $0x290] sm:$0xff]
    %v122 = vld [vmem:[%s1 + $0x298] sm:$0xff]
    %v123 = vld [vmem:[%s1 + $0x2a0] sm:$0xff]
    %v124 = vld [vmem:[%s1 + $0x2a8] sm:$0xff]
    %v125 = vld [vmem:[%s1 + $0x2b0] sm:$0xff]
    %v126 = vld [vmem:[%s1 + $0x2b8] sm:$0xff]
    %v127 = vld [vmem:[%s1 + $0x2c0] sm:$0xff]
    %v128 = vld [vmem:[%s1 + $0x2c8] sm:$0xff]
    %v129 = vld [vmem:[%s1 + $0x2d0] sm:$0xff]
    %v130 = vld [vmem:[%s1 + $0x2d8] sm:$0xff]
    %v131 = vld [vmem:[%s1 + $0x2e0] sm:$0xff]
    %v132 = vld [vmem:[%s1 + $0x2e8] sm:$0xff]
    %v133 = vld [vmem:[%s1 + $0x2f0] sm:$0xff]
    %v134 = vld [vmem:[%s1 + $0x2f8] sm:$0xff]
    %v135 = vld [vmem:[%s1 + $0x300] sm:$0xff]
    %v136 = vld [vmem:[%s1 + $0x308] sm:$0xff]
    %v137 = vld [vmem:[%s1 + $0x310] sm:$0xff]
    %v138 = vld [vmem:[%s1 + $0x318] sm:$0xff]
    %v139 = vld [vmem:[%s1 + $0x320] sm:$0xff]
    %v140 = vld [vmem:[%s1 + $0x328] sm:$0xff]
    %v141 = vld [vmem:[%s1 + $0x330] sm:$0xff]
    %v142 = vld [vmem:[%s1 + $0x338] sm:$0xff]
    %v143 = vld [vmem:[%s1 + $0x340] sm:$0xff]
    %v144 = vld [vmem:[%s1 + $0x348] sm:$0xff]
    %v145 = vld [vmem:[%s1 + $0x350] sm:$0xff]
    %v146 = vld [vmem:[%s1 + $0x358] sm:$0xff]
    %v147 = vld [vmem:[%s1 + $0x360] sm:$0xff]
    %v148 = vld [vmem:[%s1 + $0x368] sm:$0xff]
    %v149 = vld [vmem:[%s1 + $0x370] sm:$0xff]
    %v150 = vld [vmem:[%s1 + $0x378] sm:$0xff]
    %v151 = vld [vmem:[%s1 + $0x380] sm:$0xff]
    %v152 = vld [vmem:[%s1 + $0x388] sm:$0xff]
    %v153 = vld [vmem:[%s1 + $0x390] sm:$0xff]
    %v154 = vld [vmem:[%s1 + $0x398] sm:$0xff]
    %v155 = vld [vmem:[%s1 + $0x3a0] sm:$0xff]
    %v156 = vld [vmem:[%s1 + $0x3a8] sm:$0xff]
    %v157 = vld [vmem:[%s1 + $0x3b0] sm:$0xff]
    %v158 = vld [vmem:[%s1 + $0x3b8] sm:$0xff]
    %v159 = vld [vmem:[%s1 + $0x3c0] sm:$0xff]
    %v160 = vld [vmem:[%s1 + $0x3c8] sm:$0xff]
    %v161 = vld [vmem:[%s1 + $0x3d0] sm:$0xff]
    %v162 = vld [vmem:[%s1 + $0x3d8] sm:$0xff]
    %v163 = vld [vmem:[%s1 + $0x3e0] sm:$0xff]
    %v164 = vld [vmem:[%s1 + $0x3e8] sm:$0xff]
    %v165 = vld [vmem:[%s1 + $0x3f0] sm:$0xff]
    %v166 = vld [vmem:[%s1 + $0x3f8] sm:$0xff]
    %v167 = vld [vmem:[%s2] sm:$0x1]
    %v169 = vlaneseq
    %v170 = vshrl.u32 %v169, 7
    %v171 = vsub.s32 0, %v170
    %v172 = vrot.slane %v167, %v171
    %174 = vmatprep.subr.mxu0 0.0
    %175 = vmatpush1.msra.mxu0 %v39
    %176 = vmatprep.subr.mxu0 0.0
    %177 = vmatpush1.msra.mxu0 %v40
    %178 = vmatprep.subr.mxu0 0.0
    %179 = vmatpush1.msra.mxu0 %v41
    %180 = vmatprep.subr.mxu0 0.0
    %181 = vmatpush1.msra.mxu0 %v42
    %182 = vmatprep.subr.mxu0 0.0
    %183 = vmatpush1.msra.mxu0 %v43
    %184 = vmatprep.subr.mxu0 0.0
    %185 = vmatpush1.msra.mxu0 %v44
    %186 = vmatprep.subr.mxu0 0.0
    %187 = vmatpush1.msra.mxu0 %v45
    %188 = vmatprep.subr.mxu0 0.0
    %189 = vmatpush1.msra.mxu0 %v46
    %190 = vmatprep.subr.mxu0 0.0
    %191 = vmatpush1.msra.mxu0 %v47
    %192 = vmatprep.subr.mxu0 0.0
    %193 = vmatpush1.msra.mxu0 %v48
    %194 = vmatprep.subr.mxu0 0.0
    %195 = vmatpush1.msra.mxu0 %v49
    %196 = vmatprep.subr.mxu0 0.0
    %197 = vmatpush1.msra.mxu0 %v50
    %198 = vmatprep.subr.mxu0 0.0
    %199 = vmatpush1.msra.mxu0 %v51
    %200 = vmatprep.subr.mxu0 0.0
    %201 = vmatpush1.msra.mxu0 %v52
    %202 = vmatprep.subr.mxu0 0.0
    %203 = vmatpush1.msra.mxu0 %v53
    %204 = vmatprep.subr.mxu0 0.0
    %205 = vmatpush1.msra.mxu0 %v54
    %206 = vmatprep.subr.mxu0 0.0
    %207 = vmatpush1.msra.mxu0 %v55
    %208 = vmatprep.subr.mxu0 0.0
    %209 = vmatpush1.msra.mxu0 %v56
    %210 = vmatprep.subr.mxu0 0.0
    %211 = vmatpush1.msra.mxu0 %v57
    %212 = vmatprep.subr.mxu0 0.0
    %213 = vmatpush1.msra.mxu0 %v58
    %214 = vmatprep.subr.mxu0 0.0
    %215 = vmatpush1.msra.mxu0 %v59
    %216 = vmatprep.subr.mxu0 0.0
    %217 = vmatpush1.msra.mxu0 %v60
    %218 = vmatprep.subr.mxu0 0.0
    %219 = vmatpush1.msra.mxu0 %v61
    %220 = vmatprep.subr.mxu0 0.0
    %221 = vmatpush1.msra.mxu0 %v62
    %222 = vmatprep.subr.mxu0 0.0
    %223 = vmatpush1.msra.mxu0 %v63
    %224 = vmatprep.subr.mxu0 0.0
    %225 = vmatpush1.msra.mxu0 %v64
    %226 = vmatprep.subr.mxu0 0.0
    %227 = vmatpush1.msra.mxu0 %v65
    %228 = vmatprep.subr.mxu0 0.0
    %229 = vmatpush1.msra.mxu0 %v66
    %230 = vmatprep.subr.mxu0 0.0
    %231 = vmatpush1.msra.mxu0 %v67
    %232 = vmatprep.subr.mxu0 0.0
    %233 = vmatpush1.msra.mxu0 %v68
    %234 = vmatprep.subr.mxu0 0.0
    %235 = vmatpush1.msra.mxu0 %v69
    %236 = vmatprep.subr.mxu0 0.0
    %237 = vmatpush1.msra.mxu0 %v70
    %238 = vmatprep.mubr.f32.mxu0 %v32
    %239 = vmatmul.mubr.f32.gmra.mrb[0].mxu0 %v31
    %v240 = vpop.f32.mrb[0].mxu0
    %v241 = vadd.f32 %v172, %v240
    %v242 = vpop.f32.mrb[0].mxu0
    %243 = vdwg.mxu0
    %244 = vmatprep.subr.mxu0 0.0
    %245 = vmatpush1.msra.mxu0 %v71
    %246 = vmatprep.subr.mxu0 0.0
    %247 = vmatpush1.msra.mxu0 %v72
    %248 = vmatprep.subr.mxu0 0.0
    %249 = vmatpush1.msra.mxu0 %v73
    %250 = vmatprep.subr.mxu0 0.0
    %251 = vmatpush1.msra.mxu0 %v74
    %252 = vmatprep.subr.mxu0 0.0
    %253 = vmatpush1.msra.mxu0 %v75
    %254 = vmatprep.subr.mxu0 0.0
    %255 = vmatpush1.msra.mxu0 %v76
    %256 = vmatprep.subr.mxu0 0.0
    %257 = vmatpush1.msra.mxu0 %v77
    %258 = vmatprep.subr.mxu0 0.0
    %259 = vmatpush1.msra.mxu0 %v78
    %260 = vmatprep.subr.mxu0 0.0
    %261 = vmatpush1.msra.mxu0 %v79
    %262 = vmatprep.subr.mxu0 0.0
    %263 = vmatpush1.msra.mxu0 %v80
    %264 = vmatprep.subr.mxu0 0.0
    %265 = vmatpush1.msra.mxu0 %v81
    %266 = vmatprep.subr.mxu0 0.0
    %267 = vmatpush1.msra.mxu0 %v82
    %268 = vmatprep.subr.mxu0 0.0
    %269 = vmatpush1.msra.mxu0 %v83
    %270 = vmatprep.subr.mxu0 0.0
    %271 = vmatpush1.msra.mxu0 %v84
    %272 = vmatprep.subr.mxu0 0.0
    %273 = vmatpush1.msra.mxu0 %v85
    %274 = vmatprep.subr.mxu0 0.0
    %275 = vmatpush1.msra.mxu0 %v86
    %276 = vmatprep.subr.mxu0 0.0
    %277 = vmatpush1.msra.mxu0 %v87
    %278 = vmatprep.subr.mxu0 0.0
    %279 = vmatpush1.msra.mxu0 %v88
    %280 = vmatprep.subr.mxu0 0.0
    %281 = vmatpush1.msra.mxu0 %v89
    %282 = vmatprep.subr.mxu0 0.0
    %283 = vmatpush1.msra.mxu0 %v90
    %284 = vmatprep.subr.mxu0 0.0
    %285 = vmatpush1.msra.mxu0 %v91
    %286 = vmatprep.subr.mxu0 0.0
    %287 = vmatpush1.msra.mxu0 %v92
    %288 = vmatprep.subr.mxu0 0.0
    %289 = vmatpush1.msra.mxu0 %v93
    %290 = vmatprep.subr.mxu0 0.0
    %291 = vmatpush1.msra.mxu0 %v94
    %292 = vmatprep.subr.mxu0 0.0
    %293 = vmatpush1.msra.mxu0 %v95
    %294 = vmatprep.subr.mxu0 0.0
    %295 = vmatpush1.msra.mxu0 %v96
    %296 = vmatprep.subr.mxu0 0.0
    %297 = vmatpush1.msra.mxu0 %v97
    %298 = vmatprep.subr.mxu0 0.0
    %299 = vmatpush1.msra.mxu0 %v98
    %300 = vmatprep.subr.mxu0 0.0
    %301 = vmatpush1.msra.mxu0 %v99
    %302 = vmatprep.subr.mxu0 0.0
    %303 = vmatpush1.msra.mxu0 %v100
    %304 = vmatprep.subr.mxu0 0.0
    %305 = vmatpush1.msra.mxu0 %v101
    %306 = vmatprep.subr.mxu0 0.0
    %307 = vmatpush1.msra.mxu0 %v102
    %308 = vmatprep.mubr.f32.mxu0 %v34
    %309 = vmatmul.mubr.f32.gmra.mrb[0].mxu0 %v33
    %v310 = vpop.f32.mrb[0].mxu0
    %v311 = vadd.f32 %v241, %v310
    %v312 = vpop.f32.mrb[0].mxu0
    %313 = vdwg.mxu0
    %314 = vmatprep.subr.mxu0 0.0
    %315 = vmatpush1.msra.mxu0 %v103
    %316 = vmatprep.subr.mxu0 0.0
    %317 = vmatpush1.msra.mxu0 %v104
    %318 = vmatprep.subr.mxu0 0.0
    %319 = vmatpush1.msra.mxu0 %v105
    %320 = vmatprep.subr.mxu0 0.0
    %321 = vmatpush1.msra.mxu0 %v106
    %322 = vmatprep.subr.mxu0 0.0
    %323 = vmatpush1.msra.mxu0 %v107
    %324 = vmatprep.subr.mxu0 0.0
    %325 = vmatpush1.msra.mxu0 %v108
    %326 = vmatprep.subr.mxu0 0.0
    %327 = vmatpush1.msra.mxu0 %v109
    %328 = vmatprep.subr.mxu0 0.0
    %329 = vmatpush1.msra.mxu0 %v110
    %330 = vmatprep.subr.mxu0 0.0
    %331 = vmatpush1.msra.mxu0 %v111
    %332 = vmatprep.subr.mxu0 0.0
    %333 = vmatpush1.msra.mxu0 %v112
    %334 = vmatprep.subr.mxu0 0.0
    %335 = vmatpush1.msra.mxu0 %v113
    %336 = vmatprep.subr.mxu0 0.0
    %337 = vmatpush1.msra.mxu0 %v114
    %338 = vmatprep.subr.mxu0 0.0
    %339 = vmatpush1.msra.mxu0 %v115
    %340 = vmatprep.subr.mxu0 0.0
    %341 = vmatpush1.msra.mxu0 %v116
    %342 = vmatprep.subr.mxu0 0.0
    %343 = vmatpush1.msra.mxu0 %v117
    %344 = vmatprep.subr.mxu0 0.0
    %345 = vmatpush1.msra.mxu0 %v118
    %346 = vmatprep.subr.mxu0 0.0
    %347 = vmatpush1.msra.mxu0 %v119
    %348 = vmatprep.subr.mxu0 0.0
    %349 = vmatpush1.msra.mxu0 %v120
    %350 = vmatprep.subr.mxu0 0.0
    %351 = vmatpush1.msra.mxu0 %v121
    %352 = vmatprep.subr.mxu0 0.0
    %353 = vmatpush1.msra.mxu0 %v122
    %354 = vmatprep.subr.mxu0 0.0
    %355 = vmatpush1.msra.mxu0 %v123
    %356 = vmatprep.subr.mxu0 0.0
    %357 = vmatpush1.msra.mxu0 %v124
    %358 = vmatprep.subr.mxu0 0.0
    %359 = vmatpush1.msra.mxu0 %v125
    %360 = vmatprep.subr.mxu0 0.0
    %361 = vmatpush1.msra.mxu0 %v126
    %362 = vmatprep.subr.mxu0 0.0
    %363 = vmatpush1.msra.mxu0 %v127
    %364 = vmatprep.subr.mxu0 0.0
    %365 = vmatpush1.msra.mxu0 %v128
    %366 = vmatprep.subr.mxu0 0.0
    %367 = vmatpush1.msra.mxu0 %v129
    %368 = vmatprep.subr.mxu0 0.0
    %369 = vmatpush1.msra.mxu0 %v130
    %370 = vmatprep.subr.mxu0 0.0
    %371 = vmatpush1.msra.mxu0 %v131
    %372 = vmatprep.subr.mxu0 0.0
    %373 = vmatpush1.msra.mxu0 %v132
    %374 = vmatprep.subr.mxu0 0.0
    %375 = vmatpush1.msra.mxu0 %v133
    %376 = vmatprep.subr.mxu0 0.0
    %377 = vmatpush1.msra.mxu0 %v134
    %378 = vmatprep.mubr.f32.mxu0 %v36
    %379 = vmatmul.mubr.f32.gmra.mrb[0].mxu0 %v35
    %v380 = vpop.f32.mrb[0].mxu0
    %v381 = vadd.f32 %v311, %v380
    %v382 = vpop.f32.mrb[0].mxu0
    %383 = vdwg.mxu0
    %384 = vmatprep.subr.mxu0 0.0
    %385 = vmatpush1.msra.mxu0 %v135
    %386 = vmatprep.subr.mxu0 0.0
    %387 = vmatpush1.msra.mxu0 %v136
    %388 = vmatprep.subr.mxu0 0.0
    %389 = vmatpush1.msra.mxu0 %v137
    %390 = vmatprep.subr.mxu0 0.0
    %391 = vmatpush1.msra.mxu0 %v138
    %392 = vmatprep.subr.mxu0 0.0
    %393 = vmatpush1.msra.mxu0 %v139
    %394 = vmatprep.subr.mxu0 0.0
    %395 = vmatpush1.msra.mxu0 %v140
    %396 = vmatprep.subr.mxu0 0.0
    %397 = vmatpush1.msra.mxu0 %v141
    %398 = vmatprep.subr.mxu0 0.0
    %399 = vmatpush1.msra.mxu0 %v142
    %400 = vmatprep.subr.mxu0 0.0
    %401 = vmatpush1.msra.mxu0 %v143
    %402 = vmatprep.subr.mxu0 0.0
    %403 = vmatpush1.msra.mxu0 %v144
    %404 = vmatprep.subr.mxu0 0.0
    %405 = vmatpush1.msra.mxu0 %v145
    %406 = vmatprep.subr.mxu0 0.0
    %407 = vmatpush1.msra.mxu0 %v146
    %408 = vmatprep.subr.mxu0 0.0
    %409 = vmatpush1.msra.mxu0 %v147
    %410 = vmatprep.subr.mxu0 0.0
    %411 = vmatpush1.msra.mxu0 %v148
    %412 = vmatprep.subr.mxu0 0.0
    %413 = vmatpush1.msra.mxu0 %v149
    %414 = vmatprep.subr.mxu0 0.0
    %415 = vmatpush1.msra.mxu0 %v150
    %416 = vmatprep.subr.mxu0 0.0
    %417 = vmatpush1.msra.mxu0 %v151
    %418 = vmatprep.subr.mxu0 0.0
    %419 = vmatpush1.msra.mxu0 %v152
    %420 = vmatprep.subr.mxu0 0.0
    %421 = vmatpush1.msra.mxu0 %v153
    %422 = vmatprep.subr.mxu0 0.0
    %423 = vmatpush1.msra.mxu0 %v154
    %424 = vmatprep.subr.mxu0 0.0
    %425 = vmatpush1.msra.mxu0 %v155
    %426 = vmatprep.subr.mxu0 0.0
    %427 = vmatpush1.msra.mxu0 %v156
    %428 = vmatprep.subr.mxu0 0.0
    %429 = vmatpush1.msra.mxu0 %v157
    %430 = vmatprep.subr.mxu0 0.0
    %431 = vmatpush1.msra.mxu0 %v158
    %432 = vmatprep.subr.mxu0 0.0
    %433 = vmatpush1.msra.mxu0 %v159
    %434 = vmatprep.subr.mxu0 0.0
    %435 = vmatpush1.msra.mxu0 %v160
    %436 = vmatprep.subr.mxu0 0.0
    %437 = vmatpush1.msra.mxu0 %v161
    %438 = vmatprep.subr.mxu0 0.0
    %439 = vmatpush1.msra.mxu0 %v162
    %440 = vmatprep.subr.mxu0 0.0
    %441 = vmatpush1.msra.mxu0 %v163
    %442 = vmatprep.subr.mxu0 0.0
    %443 = vmatpush1.msra.mxu0 %v164
    %444 = vmatprep.subr.mxu0 0.0
    %445 = vmatpush1.msra.mxu0 %v165
    %446 = vmatprep.subr.mxu0 0.0
    %447 = vmatpush1.msra.mxu0 %v166
    %448 = vmatprep.mubr.f32.mxu0 %v38
    %449 = vmatmul.mubr.f32.gmra.mrb[0].mxu0 %v37
    %v450 = vpop.f32.mrb[0].mxu0
    %v451 = vadd.f32 %v381, %v450
    %v452 = vpop.f32.mrb[0].mxu0
    %453 = vdwg.mxu0
    %v454 = vmax.f32 %v451, 0.0
    %vm455 = vcmask 15360
    %456 = vst.msk [vmem:[#allocation4] sm:$0xff] %vm455, %v454
    %v457 = vld [vmem:[%s3] sm:$0x3]
    %v458 = vld [vmem:[%s4] sm:$0x1]
    %v460 = vlaneseq
    %v461 = vshrl.u32 %v460, 7
    %v462 = vsub.s32 0, %v461
    %v463 = vrot.slane %v458, %v462
    %v466 = vsel %vm455, %v454, 0
    %vm468 = vcmask 1041408
    %v470 = vsel %vm468, %v457, 0
    %472 = vmatprep.subr.mxu0 0.0
    %473 = vmatpush1.msra.mxu0 %v470
    %474 = vmatprep.subr.mxu0 0.0
    %475 = vmatpush1.msra.mxu0 0.0
    %476 = vmatprep.subr.mxu0 0.0
    %477 = vmatpush1.msra.mxu0 0.0
    %478 = vmatprep.subr.mxu0 0.0
    %479 = vmatpush1.msra.mxu0 0.0
    %480 = vmatprep.subr.mxu0 0.0
    %481 = vmatpush1.msra.mxu0 0.0
    %482 = vmatprep.subr.mxu0 0.0
    %483 = vmatpush1.msra.mxu0 0.0
    %484 = vmatprep.subr.mxu0 0.0
    %485 = vmatpush1.msra.mxu0 0.0
    %486 = vmatprep.subr.mxu0 0.0
    %487 = vmatpush1.msra.mxu0 0.0
    %488 = vmatprep.subr.mxu0 0.0
    %489 = vmatpush1.msra.mxu0 0.0
    %490 = vmatprep.subr.mxu0 0.0
    %491 = vmatpush1.msra.mxu0 0.0
    %492 = vmatprep.subr.mxu0 0.0
    %493 = vmatpush1.msra.mxu0 0.0
    %494 = vmatprep.subr.mxu0 0.0
    %495 = vmatpush1.msra.mxu0 0.0
    %496 = vmatprep.subr.mxu0 0.0
    %497 = vmatpush1.msra.mxu0 0.0
    %498 = vmatprep.subr.mxu0 0.0
    %499 = vmatpush1.msra.mxu0 0.0
    %500 = vmatprep.subr.mxu0 0.0
    %501 = vmatpush1.msra.mxu0 0.0
    %502 = vmatprep.subr.mxu0 0.0
    %503 = vmatpush1.msra.mxu0 0.0
    %504 = vmatprep.subr.mxu0 0.0
    %505 = vmatpush1.msra.mxu0 0.0
    %506 = vmatprep.subr.mxu0 0.0
    %507 = vmatpush1.msra.mxu0 0.0
    %508 = vmatprep.subr.mxu0 0.0
    %509 = vmatpush1.msra.mxu0 0.0
    %510 = vmatprep.subr.mxu0 0.0
    %511 = vmatpush1.msra.mxu0 0.0
    %512 = vmatprep.subr.mxu0 0.0
    %513 = vmatpush1.msra.mxu0 0.0
    %514 = vmatprep.subr.mxu0 0.0
    %515 = vmatpush1.msra.mxu0 0.0
    %516 = vmatprep.subr.mxu0 0.0
    %517 = vmatpush1.msra.mxu0 0.0
    %518 = vmatprep.subr.mxu0 0.0
    %519 = vmatpush1.msra.mxu0 0.0
    %520 = vmatprep.subr.mxu0 0.0
    %521 = vmatpush1.msra.mxu0 0.0
    %522 = vmatprep.subr.mxu0 0.0
    %523 = vmatpush1.msra.mxu0 0.0
    %524 = vmatprep.subr.mxu0 0.0
    %525 = vmatpush1.msra.mxu0 0.0
    %526 = vmatprep.subr.mxu0 0.0
    %527 = vmatpush1.msra.mxu0 0.0
    %528 = vmatprep.subr.mxu0 0.0
    %529 = vmatpush1.msra.mxu0 0.0
    %530 = vmatprep.subr.mxu0 0.0
    %531 = vmatpush1.msra.mxu0 0.0
    %532 = vmatprep.subr.mxu0 0.0
    %533 = vmatpush1.msra.mxu0 0.0
    %534 = vmatprep.subr.mxu0 0.0
    %535 = vmatpush1.msra.mxu0 0.0
    %536 = vmatprep.mubr.f32.mxu0 0.0
    %537 = vmatmul.mubr.f32.gmra.mrb[0].mxu0 %v466
    %v538 = vpop.f32.mrb[0].mxu0
    %v539 = vadd.f32 %v463, %v538
    %v540 = vpop.f32.mrb[0].mxu0
    %541 = vdwg.mxu0
    %vm542 = vcmask 80896
    %543 = vst.msk [vmem:[%s7] sm:$0xff] %vm542, %v539
    %v544 = vld [vmem:[%s5] sm:$0x3]
    %v545 = vld [vmem:[%s6] sm:$0x1]
    %v547 = vlaneseq
    %v548 = vshrl.u32 %v547, 7
    %v549 = vsub.s32 0, %v548
    %v550 = vrot.slane %v545, %v549
    %v553 = vsel %vm468, %v544, 0
    %555 = vmatprep.subr.mxu0 0.0
    %556 = vmatpush1.msra.mxu0 %v553
    %557 = vmatprep.subr.mxu0 0.0
    %558 = vmatpush1.msra.mxu0 0.0
    %559 = vmatprep.subr.mxu0 0.0
    %560 = vmatpush1.msra.mxu0 0.0
    %561 = vmatprep.subr.mxu0 0.0
    %562 = vmatpush1.msra.mxu0 0.0
    %563 = vmatprep.subr.mxu0 0.0
    %564 = vmatpush1.msra.mxu0 0.0
    %565 = vmatprep.subr.mxu0 0.0
    %566 = vmatpush1.msra.mxu0 0.0
    %567 = vmatprep.subr.mxu0 0.0
    %568 = vmatpush1.msra.mxu0 0.0
    %569 = vmatprep.subr.mxu0 0.0
    %570 = vmatpush1.msra.mxu0 0.0
    %571 = vmatprep.subr.mxu0 0.0
    %572 = vmatpush1.msra.mxu0 0.0
    %573 = vmatprep.subr.mxu0 0.0
    %574 = vmatpush1.msra.mxu0 0.0
    %575 = vmatprep.subr.mxu0 0.0
    %576 = vmatpush1.msra.mxu0 0.0
    %577 = vmatprep.subr.mxu0 0.0
    %578 = vmatpush1.msra.mxu0 0.0
    %579 = vmatprep.subr.mxu0 0.0
    %580 = vmatpush1.msra.mxu0 0.0
    %581 = vmatprep.subr.mxu0 0.0
    %582 = vmatpush1.msra.mxu0 0.0
    %583 = vmatprep.subr.mxu0 0.0
    %584 = vmatpush1.msra.mxu0 0.0
    %585 = vmatprep.subr.mxu0 0.0
    %586 = vmatpush1.msra.mxu0 0.0
    %587 = vmatprep.subr.mxu0 0.0
    %588 = vmatpush1.msra.mxu0 0.0
    %589 = vmatprep.subr.mxu0 0.0
    %590 = vmatpush1.msra.mxu0 0.0
    %591 = vmatprep.subr.mxu0 0.0
    %592 = vmatpush1.msra.mxu0 0.0
    %593 = vmatprep.subr.mxu0 0.0
    %594 = vmatpush1.msra.mxu0 0.0
    %595 = vmatprep.subr.mxu0 0.0
    %596 = vmatpush1.msra.mxu0 0.0
    %597 = vmatprep.subr.mxu0 0.0
    %598 = vmatpush1.msra.mxu0 0.0
    %599 = vmatprep.subr.mxu0 0.0
    %600 = vmatpush1.msra.mxu0 0.0
    %601 = vmatprep.subr.mxu0 0.0
    %602 = vmatpush1.msra.mxu0 0.0
    %603 = vmatprep.subr.mxu0 0.0
    %604 = vmatpush1.msra.mxu0 0.0
    %605 = vmatprep.subr.mxu0 0.0
    %606 = vmatpush1.msra.mxu0 0.0
    %607 = vmatprep.subr.mxu0 0.0
    %608 = vmatpush1.msra.mxu0 0.0
    %609 = vmatprep.subr.mxu0 0.0
    %610 = vmatpush1.msra.mxu0 0.0
    %611 = vmatprep.subr.mxu0 0.0
    %612 = vmatpush1.msra.mxu0 0.0
    %613 = vmatprep.subr.mxu0 0.0
    %614 = vmatpush1.msra.mxu0 0.0
    %615 = vmatprep.subr.mxu0 0.0
    %616 = vmatpush1.msra.mxu0 0.0
    %617 = vmatprep.subr.mxu0 0.0
    %618 = vmatpush1.msra.mxu0 0.0
    %619 = vmatprep.mubr.f32.mxu0 0.0
    %620 = vmatmul.mubr.f32.gmra.mrb[0].mxu0 %v466
    %v621 = vpop.f32.mrb[0].mxu0
    %v622 = vadd.f32 %v550, %v621
    %v623 = vpop.f32.mrb[0].mxu0
    %624 = vdwg.mxu0
    %v625 = vmul.f32 %v622, %v622
    %626 = vadd.xlane.f32.xlu0 %v625
    %v627 = vpop.xlane.xlu0 %626
    %v628 = vmax.f32 %v627, 1e-24
    %v629 = vrsqrt.pop %v628
    %v630 = vmul.f32 %v622, %v629
    %631 = vst [vmem:[#allocation2] sm:$0xff] %v630
    // Predicated region
    $region30: #{convnetvis_forward.7} parent=1 // pred_check
      _
    $region31: #{convnetvis_forward.7} parent=1 // pred_check_branch
      %633 = sbr.rel (0) target = $region33
    $region32: #{convnetvis_forward.7} parent=1 // pred_region
      _
    $region33: #{convnetvis_forward.7} parent=1 // pred_fallthru
      _
    // Predicated region
    $region34: #{convnetvis_forward.7} parent=1 // pred_check
      _
    $region35: #{convnetvis_forward.7} parent=1 // pred_check_branch
      %635 = sbr.rel (0) target = $region37
    $region36: #{convnetvis_forward.7} parent=1 // pred_region
      %s637 = ssub.s32 128, 128
      %638 = vsyncadd [#allocation3], %s637
      %s640 = sshll.u32 [#allocation2], 4
      %s641 = int_to_ptr.vmem [resolvable:$true] %s640
      %643 = dma.vmem_to_hbm [thread:$0]  %s641, 128, %s8, [#allocation3]
    $region37: #{convnetvis_forward.7} parent=1 // pred_fallthru
      _
    // Predicated region
    $region38: #{convnetvis_forward.7} parent=1 // pred_check
      _
    $region39: #{convnetvis_forward.7} parent=1 // pred_check_branch
      %645 = sbr.rel (0) target = $region41
    $region40: #{convnetvis_forward.7} parent=1 // pred_region
      %s647 = ssub.s32 128, 128
      %648 = vsyncadd [#allocation5], %s647
      %s650 = sshll.u32 [#allocation4], 4
      %s651 = int_to_ptr.vmem [resolvable:$true] %s650
      %653 = dma.vmem_to_hbm [thread:$0]  %s651, 128, %s9, [#allocation5]
    $region41: #{convnetvis_forward.7} parent=1 // pred_fallthru
      _
    // Predicated region
    $region42: #{convnetvis_forward.7} parent=1 // pred_check
      _
    $region43: #{convnetvis_forward.7} parent=1 // pred_check_branch
      %655 = sbr.rel (0) target = $region45
    $region44: #{convnetvis_forward.7} parent=1 // pred_region
      _
    $region45: #{convnetvis_forward.7} parent=1 // pred_fallthru
      _
    // Predicated region
    $region46: #{convnetvis_forward.7} parent=1 // pred_check
      _
    $region47: #{convnetvis_forward.7} parent=1 // pred_check_branch
      %657 = sbr.rel (0) target = $region49
    $region48: #{convnetvis_forward.7} parent=1 // pred_region
      %658 = dma.done [#allocation3], 128
    $region49: #{convnetvis_forward.7} parent=1 // pred_fallthru
      _
    // Predicated region
    $region50: #{convnetvis_forward.7} parent=1 // pred_check
      _
    $region51: #{convnetvis_forward.7} parent=1 // pred_check_branch
      %660 = sbr.rel (0) target = $region53
    $region52: #{convnetvis_forward.7} parent=1 // pred_region
      %661 = dma.done [#allocation5], 128
    $region53: #{convnetvis_forward.7} parent=1 // pred_fallthru
      _
    %662 = vsyncpa [#allocation3], 1
    %663 = vsyncpa [#allocation5], 1

</llo_original>
